<compile_context>
chip_gen: v7x
topology: tpu7x:2x2x1
jax: 0.10.0
libtpu: 0.0.40
codegen_flags: <defaults>
</compile_context>

<pallas_src>
import numpy as np
import jax
import jax.numpy as jnp
from jax.experimental import pallas as pl
from jax.experimental.pallas import tpu as pltpu

LSTM_MEMORY = 128
BN_EPS = 1e-5
ACTION_SPACE = 6

# Geometry fixed by the module (fc1 = Linear(1280, 10) forces 84x84 input -> 10x10).
C_IN, H_IN = 4, 84
C1, K1, S1, P1 = 16, 8, 4, 2
H1 = (H_IN + 2 * P1 - K1) // S1 + 1          # 21
C2, K2, S2, P2 = 32, 4, 2, 1
H2 = (H1 + 2 * P2 - K2) // S2 + 1            # 10
N_POS1 = H1 * H1                             # 441
N_POS2 = H2 * H2                             # 100
SEQ = H2                                     # 10 (LSTM "seq" axis from the buggy view)
BATCH = H2                                   # 10 (LSTM "batch" axis from the buggy view)
FC1_OUT = 10

VMEM = pl.BlockSpec(memory_space=pltpu.MemorySpace.VMEM)


# ----------------------------------------------------------------------------
# Trace-time constants: conv2 im2col as 0/1 selection matrices (one per tap).
# sel[t, 21*i + j, 10*h + w] = 1  iff  (i, j) == (2h-1+ki, 2w-1+kj) with t = 4*ki+kj
# Padding positions simply select nothing (column of zeros) -> contributes 0.
# ----------------------------------------------------------------------------
def _build_conv2_selectors():
    sel = np.zeros((K2 * K2, N_POS1, N_POS2), np.float32)
    for ki in range(K2):
        for kj in range(K2):
            t = ki * K2 + kj
            for h in range(H2):
                for w in range(H2):
                    i = S2 * h - P2 + ki
                    j = S2 * w - P2 + kj
                    if 0 <= i < H1 and 0 <= j < H1:
                        sel[t, i * H1 + j, h * H2 + w] = 1.0
    return sel


_CONV2_SEL = jnp.asarray(_build_conv2_selectors(), dtype=jnp.bfloat16)  # 0/1 exact in bf16


# ----------------------------------------------------------------------------
# Kernel A: conv1 -> ReLU -> BN1 -> conv2 -> ReLU -> BN2, all channel-major.
# Output (32, 100) == the NCHW-contiguous buffer of the (1, 32, 10, 10) tensor.
# ----------------------------------------------------------------------------
def conv_stack_kernel(p1_ref, w1_ref, b1_ref, g1_ref, be1_ref,
                      sel_ref, w2_ref, b2_ref, g2_ref, be2_ref, o_ref):
    # conv1 (channel-major): (16,256) @ (256,441)
    y1 = jnp.dot(w1_ref[...], p1_ref[...], preferred_element_type=jnp.float32)
    y1 = jnp.maximum(y1 + b1_ref[...], 0.0)                       # bias + ReLU
    m1 = jnp.mean(y1, axis=1, keepdims=True)                      # BN1, batch stats, one pass
    v1 = jnp.mean(y1 * y1, axis=1, keepdims=True) - m1 * m1
    y1 = (y1 - m1) * jax.lax.rsqrt(v1 + BN_EPS) * g1_ref[...] + be1_ref[...]

    # conv2 im2col via 16 selection matmuls (K-order = (ki, kj, c))
    blocks = [
        jnp.dot(y1, sel_ref[t].astype(jnp.float32),
                preferred_element_type=jnp.float32)               # (16, 100)
        for t in range(K2 * K2)
    ]
    p2t = jnp.concatenate(blocks, axis=0)                         # (256, 100)

    # conv2 (channel-major): (32,256) @ (256,100)
    y2 = jnp.dot(w2_ref[...], p2t, preferred_element_type=jnp.float32)
    y2 = jnp.maximum(y2 + b2_ref[...], 0.0)
    m2 = jnp.mean(y2, axis=1, keepdims=True)
    v2 = jnp.mean(y2 * y2, axis=1, keepdims=True) - m2 * m2
    o_ref[...] = (y2 - m2) * jax.lax.rsqrt(v2 + BN_EPS) * g2_ref[...] + be2_ref[...]


def _im2col_conv1_t(x):
    """Transposed im2col for conv1: (C*K1*K1, 441), K-order (c, ki, kj)."""
    xp = jnp.pad(x, ((0, 0), (0, 0), (P1, P1), (P1, P1)))          # (1, 4, 88, 88)
    cols = []
    for ki in range(K1):
        for kj in range(K1):
            cols.append(xp[0, :, ki:ki + S1 * H1:S1, kj:kj + S1 * H1:S1])  # (4, 21, 21)
    pt = jnp.stack(cols, axis=1)                                   # (4, 64, 21, 21)
    return pt.reshape(C_IN * K1 * K1, N_POS1)


def conv_stack(x, params):
    p1t = _im2col_conv1_t(x)
    col = lambda v: v.reshape(-1, 1)
    flops = 2 * (C1 * 256 * N_POS1 + (K2 * K2) * C1 * N_POS1 * N_POS2 + C2 * 256 * N_POS2)
    return pl.pallas_call(
        conv_stack_kernel,
        out_shape=jax.ShapeDtypeStruct((C2, N_POS2), jnp.float32),
        in_specs=[VMEM] * 10,
        out_specs=VMEM,
        cost_estimate=pl.CostEstimate(
            flops=flops, transcendentals=0,
            bytes_accessed=p1t.size * 4 + _CONV2_SEL.size * 2 + 64 * 1024),
    )(p1t,
      params["conv1_w"].reshape(C1, -1),
      col(params["conv1_b"]), col(params["bn1_gamma"]), col(params["bn1_beta"]),
      _CONV2_SEL,
      params["conv2_w"].transpose(0, 2, 3, 1).reshape(C2, -1),
      col(params["conv2_b"]), col(params["bn2_gamma"]), col(params["bn2_beta"]))


# ----------------------------------------------------------------------------
# Kernel B: LSTM (hoisted input projection, unrolled T=10) + fc1 + ReLU + fc2.
# ----------------------------------------------------------------------------
def lstm_fc_kernel(x_ref, h0_ref, c0_ref, wih_ref, whh_ref, b_ref,
                   w1c_ref, b1_ref, w2_ref, b2_ref,
                   q_ref, hn_ref, cn_ref):
    H = LSTM_MEMORY
    # Hoisted input projection: one well-shaped matmul + one bias add.
    xproj = jnp.dot(x_ref[...], wih_ref[...],
                    preferred_element_type=jnp.float32) + b_ref[...]   # (100, 512)
    whh = whh_ref[...]
    h = h0_ref[...]
    c = c0_ref[...]
    hs = []
    for s in range(SEQ):                                  # fully unrolled recurrence
        gates = xproj[s * BATCH:(s + 1) * BATCH, :] + jnp.dot(
            h, whh, preferred_element_type=jnp.float32)   # (10, 512)
        i_g = jax.nn.sigmoid(gates[:, 0:H])
        f_g = jax.nn.sigmoid(gates[:, H:2 * H])
        g_g = jnp.tanh(gates[:, 2 * H:3 * H])
        o_g = jax.nn.sigmoid(gates[:, 3 * H:4 * H])
        c = f_g * c + i_g * g_g
        h = o_g * jnp.tanh(c)
        hs.append(h)
    hn_ref[...] = h
    cn_ref[...] = c

    # fc1 over torch.flatten(y, 1): out[s, n] = sum_{b,k} hs[s][b, k] * w1c[b, k, n]
    acc = jnp.zeros((SEQ, FC1_OUT), jnp.float32)
    for b in range(BATCH):
        vb = jnp.concatenate([hs[s][b:b + 1, :] for s in range(SEQ)], axis=0)  # (10, 128)
        acc = acc + jnp.dot(vb, w1c_ref[b], preferred_element_type=jnp.float32)
    h1 = jnp.maximum(acc + b1_ref[...], 0.0)
    q_ref[...] = jnp.dot(h1, w2_ref[...], preferred_element_type=jnp.float32) + b2_ref[...]


def lstm_fc(lstm_flat, h0, c0, params):
    A = params["fc2_w"].shape[0]
    # fc1_w[n, 128*b + k] -> w1c[b, k, n]
    w1c = params["fc1_w"].reshape(FC1_OUT, BATCH, LSTM_MEMORY).transpose(1, 2, 0)
    flops = 2 * (SEQ * BATCH * 32 * 4 * LSTM_MEMORY
                 + SEQ * BATCH * LSTM_MEMORY * 4 * LSTM_MEMORY
                 + SEQ * BATCH * LSTM_MEMORY * FC1_OUT
                 + SEQ * FC1_OUT * A)
    return pl.pallas_call(
        lstm_fc_kernel,
        out_shape=(jax.ShapeDtypeStruct((SEQ, A), jnp.float32),
                   jax.ShapeDtypeStruct((BATCH, LSTM_MEMORY), jnp.float32),
                   jax.ShapeDtypeStruct((BATCH, LSTM_MEMORY), jnp.float32)),
        in_specs=[VMEM] * 10,
        out_specs=(VMEM, VMEM, VMEM),
        cost_estimate=pl.CostEstimate(
            flops=flops,
            transcendentals=SEQ * BATCH * 5 * LSTM_MEMORY,
            bytes_accessed=4 * (SEQ * BATCH * 32 + 4 * BATCH * LSTM_MEMORY
                                + 32 * 512 + 128 * 512 + 512
                                + 1280 * FC1_OUT + FC1_OUT * A)),
    )(lstm_flat, h0, c0,
      params["w_ih"].T, params["w_hh"].T,
      (params["b_ih"] + params["b_hh"]).reshape(1, -1),
      w1c, params["fc1_b"].reshape(1, -1),
      params["fc2_w"].T, params["fc2_b"].reshape(1, -1))


# ----------------------------------------------------------------------------
# Full LSTMDQN forward
# ----------------------------------------------------------------------------
def lstm_dqn_forward(params, x, hidden_state, cell_state):
    y2t = conv_stack(x, params)                          # (32, 100) == NCHW-flat (1,32,10,10)
    # Faithful `x.view(x.size(2), x.size(3), 32)` on NCHW-contiguous memory:
    # a free row-major reinterpretation; rows are (seq*10 + batch).
    lstm_flat = y2t.reshape(SEQ * BATCH, 32)
    q, hn, cn = lstm_fc(lstm_flat, hidden_state[0], cell_state[0], params)
    return q, hn[None], cn[None]


def init_params(key, action_space):
    ks = jax.random.split(key, 12)

    def rnd(k, shape, fan_in):
        return jax.random.normal(k, shape, jnp.float32) / jnp.sqrt(float(fan_in))

    return {
        "conv1_w": rnd(ks[0], (16, 4, 8, 8), 4 * 8 * 8),
        "conv1_b": rnd(ks[1], (16,), 4 * 8 * 8),
        "bn1_gamma": 1.0 + 0.1 * jax.random.normal(ks[2], (16,), jnp.float32),
        "bn1_beta": 0.1 * jax.random.normal(ks[3], (16,), jnp.float32),
        "conv2_w": rnd(ks[4], (32, 16, 4, 4), 16 * 4 * 4),
        "conv2_b": rnd(ks[5], (32,), 16 * 4 * 4),
        "bn2_gamma": 1.0 + 0.1 * jax.random.normal(ks[6], (32,), jnp.float32),
        "bn2_beta": 0.1 * jax.random.normal(ks[7], (32,), jnp.float32),
        "w_ih": rnd(ks[8], (4 * LSTM_MEMORY, 32), LSTM_MEMORY),
        "w_hh": rnd(ks[9], (4 * LSTM_MEMORY, LSTM_MEMORY), LSTM_MEMORY),
        "b_ih": rnd(ks[10], (4 * LSTM_MEMORY,), LSTM_MEMORY),
        "b_hh": rnd(ks[11], (4 * LSTM_MEMORY,), LSTM_MEMORY),
        "fc1_w": rnd(jax.random.fold_in(key, 100), (10, 1280), 1280),
        "fc1_b": rnd(jax.random.fold_in(key, 101), (10,), 1280),
        "fc2_w": rnd(jax.random.fold_in(key, 102), (action_space, 10), 10),
        "fc2_b": rnd(jax.random.fold_in(key, 103), (action_space,), 10),
    }


if __name__ == "__main__":
    key = jax.random.PRNGKey(0)
    k_param, k_x = jax.random.split(key)

    params = init_params(k_param, ACTION_SPACE)

    # Shapes implied by the module: batch=1 (because of the .view), 84x84 input so
    # conv2 yields 10x10 (fc1 expects 10*128=1280 and init_states uses batch 10).
    x = jax.random.normal(k_x, (1, 4, 84, 84), jnp.float32)
    hidden_state = jnp.zeros((1, 10, LSTM_MEMORY), jnp.float32)
    cell_state = jnp.zeros((1, 10, LSTM_MEMORY), jnp.float32)

    fwd = jax.jit(lstm_dqn_forward)
    q, next_h, next_c = fwd(params, x, hidden_state, cell_state)
    jax.block_until_ready((q, next_h, next_c))

    assert q.shape == (10, ACTION_SPACE)
    assert next_h.shape == (1, 10, LSTM_MEMORY)
    assert next_c.shape == (1, 10, LSTM_MEMORY)
    print("KERNEL_OK")
</pallas_src>

<mosaic_0001>
module attributes {stable_mosaic.version = 11 : i64} {
  func.func @conv_stack_kernel(%arg0: memref<256x441xf32, #tpu.memory_space<vmem>>, %arg1: memref<16x256xf32, #tpu.memory_space<vmem>>, %arg2: memref<16x1xf32, #tpu.memory_space<vmem>>, %arg3: memref<16x1xf32, #tpu.memory_space<vmem>>, %arg4: memref<16x1xf32, #tpu.memory_space<vmem>>, %arg5: memref<16x441x100xbf16, #tpu.memory_space<vmem>>, %arg6: memref<32x256xf32, #tpu.memory_space<vmem>>, %arg7: memref<32x1xf32, #tpu.memory_space<vmem>>, %arg8: memref<32x1xf32, #tpu.memory_space<vmem>>, %arg9: memref<32x1xf32, #tpu.memory_space<vmem>>, %arg10: memref<32x100xf32, #tpu.memory_space<vmem>>) attributes {dimension_semantics = [], scalar_prefetch = 0 : i64, scratch_operands = 0 : i64, tpu.core_type = #tpu.core_type<tc>} {
    %c0 = arith.constant 0 : index
    %c0_0 = arith.constant 0 : index
    %0 = vector.load %arg1[%c0, %c0_0] : memref<16x256xf32, #tpu.memory_space<vmem>>, vector<16x256xf32>
    %c0_1 = arith.constant 0 : index
    %c0_2 = arith.constant 0 : index
    %1 = vector.load %arg0[%c0_1, %c0_2] : memref<256x441xf32, #tpu.memory_space<vmem>>, vector<256x441xf32>
    %cst = arith.constant dense<0.000000e+00> : vector<16x441xf32>
    %2 = tpu.matmul %0, %1, %cst {dimension_numbers = #tpu.dot_dimension_numbers<[1], [0], [0], [1], [0, 0, 1, 1], [], []>} : vector<16x256xf32>, vector<256x441xf32>, vector<16x441xf32> -> vector<16x441xf32>
    %c0_3 = arith.constant 0 : index
    %c0_4 = arith.constant 0 : index
    %3 = vector.load %arg2[%c0_3, %c0_4] : memref<16x1xf32, #tpu.memory_space<vmem>>, vector<16x1xf32>
    %4 = vector.broadcast %3 : vector<16x1xf32> to vector<16x441xf32>
    %5 = arith.addf %2, %4 : vector<16x441xf32>
    %cst_5 = arith.constant 0.000000e+00 : f32
    %6 = vector.broadcast %cst_5 : f32 to vector<16x441xf32>
    %7 = arith.maximumf %5, %6 : vector<16x441xf32>
    %cst_6 = arith.constant dense<0.000000e+00> : vector<16xf32>
    %8 = vector.multi_reduction <add>, %7, %cst_6 [1] : vector<16x441xf32> to vector<16xf32>
    %9 = vector.shape_cast %8 : vector<16xf32> to vector<16x1xf32>
    %cst_7 = arith.constant 4.410000e+02 : f32
    %10 = vector.broadcast %cst_7 : f32 to vector<16x1xf32>
    %11 = arith.divf %9, %10 : vector<16x1xf32>
    %12 = arith.mulf %7, %7 : vector<16x441xf32>
    %cst_8 = arith.constant dense<0.000000e+00> : vector<16xf32>
    %13 = vector.multi_reduction <add>, %12, %cst_8 [1] : vector<16x441xf32> to vector<16xf32>
    %14 = vector.shape_cast %13 : vector<16xf32> to vector<16x1xf32>
    %cst_9 = arith.constant 4.410000e+02 : f32
    %15 = vector.broadcast %cst_9 : f32 to vector<16x1xf32>
    %16 = arith.divf %14, %15 : vector<16x1xf32>
    %17 = arith.mulf %11, %11 : vector<16x1xf32>
    %18 = arith.subf %16, %17 : vector<16x1xf32>
    %19 = vector.broadcast %11 : vector<16x1xf32> to vector<16x441xf32>
    %20 = arith.subf %7, %19 : vector<16x441xf32>
    %cst_10 = arith.constant 9.99999974E-6 : f32
    %21 = vector.broadcast %cst_10 : f32 to vector<16x1xf32>
    %22 = arith.addf %18, %21 : vector<16x1xf32>
    %23 = math.rsqrt %22 : vector<16x1xf32>
    %24 = vector.broadcast %23 : vector<16x1xf32> to vector<16x441xf32>
    %25 = arith.mulf %20, %24 : vector<16x441xf32>
    %c0_11 = arith.constant 0 : index
    %c0_12 = arith.constant 0 : index
    %26 = vector.load %arg3[%c0_11, %c0_12] : memref<16x1xf32, #tpu.memory_space<vmem>>, vector<16x1xf32>
    %27 = vector.broadcast %26 : vector<16x1xf32> to vector<16x441xf32>
    %28 = arith.mulf %25, %27 : vector<16x441xf32>
    %c0_13 = arith.constant 0 : index
    %c0_14 = arith.constant 0 : index
    %29 = vector.load %arg4[%c0_13, %c0_14] : memref<16x1xf32, #tpu.memory_space<vmem>>, vector<16x1xf32>
    %30 = vector.broadcast %29 : vector<16x1xf32> to vector<16x441xf32>
    %31 = arith.addf %28, %30 : vector<16x441xf32>
    %c0_15 = arith.constant 0 : index
    %c0_16 = arith.constant 0 : index
    %c0_17 = arith.constant 0 : index
    %32 = vector.load %arg5[%c0_15, %c0_16, %c0_17] : memref<16x441x100xbf16, #tpu.memory_space<vmem>>, vector<1x441x100xbf16>
    %33 = vector.shape_cast %32 : vector<1x441x100xbf16> to vector<441x100xbf16>
    %34 = arith.extf %33 : vector<441x100xbf16> to vector<441x100xf32>
    %cst_18 = arith.constant dense<0.000000e+00> : vector<16x100xf32>
    %35 = tpu.matmul %31, %34, %cst_18 {dimension_numbers = #tpu.dot_dimension_numbers<[1], [0], [0], [1], [0, 0, 1, 1], [], []>} : vector<16x441xf32>, vector<441x100xf32>, vector<16x100xf32> -> vector<16x100xf32>
    %c1 = arith.constant 1 : index
    %c0_19 = arith.constant 0 : index
    %c0_20 = arith.constant 0 : index
    %36 = vector.load %arg5[%c1, %c0_19, %c0_20] : memref<16x441x100xbf16, #tpu.memory_space<vmem>>, vector<1x441x100xbf16>
    %37 = vector.shape_cast %36 : vector<1x441x100xbf16> to vector<441x100xbf16>
    %38 = arith.extf %37 : vector<441x100xbf16> to vector<441x100xf32>
    %cst_21 = arith.constant dense<0.000000e+00> : vector<16x100xf32>
    %39 = tpu.matmul %31, %38, %cst_21 {dimension_numbers = #tpu.dot_dimension_numbers<[1], [0], [0], [1], [0, 0, 1, 1], [], []>} : vector<16x441xf32>, vector<441x100xf32>, vector<16x100xf32> -> vector<16x100xf32>
    %c2 = arith.constant 2 : index
    %c0_22 = arith.constant 0 : index
    %c0_23 = arith.constant 0 : index
    %40 = vector.load %arg5[%c2, %c0_22, %c0_23] : memref<16x441x100xbf16, #tpu.memory_space<vmem>>, vector<1x441x100xbf16>
    %41 = vector.shape_cast %40 : vector<1x441x100xbf16> to vector<441x100xbf16>
    %42 = arith.extf %41 : vector<441x100xbf16> to vector<441x100xf32>
    %cst_24 = arith.constant dense<0.000000e+00> : vector<16x100xf32>
    %43 = tpu.matmul %31, %42, %cst_24 {dimension_numbers = #tpu.dot_dimension_numbers<[1], [0], [0], [1], [0, 0, 1, 1], [], []>} : vector<16x441xf32>, vector<441x100xf32>, vector<16x100xf32> -> vector<16x100xf32>
    %c3 = arith.constant 3 : index
    %c0_25 = arith.constant 0 : index
    %c0_26 = arith.constant 0 : index
    %44 = vector.load %arg5[%c3, %c0_25, %c0_26] : memref<16x441x100xbf16, #tpu.memory_space<vmem>>, vector<1x441x100xbf16>
    %45 = vector.shape_cast %44 : vector<1x441x100xbf16> to vector<441x100xbf16>
    %46 = arith.extf %45 : vector<441x100xbf16> to vector<441x100xf32>
    %cst_27 = arith.constant dense<0.000000e+00> : vector<16x100xf32>
    %47 = tpu.matmul %31, %46, %cst_27 {dimension_numbers = #tpu.dot_dimension_numbers<[1], [0], [0], [1], [0, 0, 1, 1], [], []>} : vector<16x441xf32>, vector<441x100xf32>, vector<16x100xf32> -> vector<16x100xf32>
    %c4 = arith.constant 4 : index
    %c0_28 = arith.constant 0 : index
    %c0_29 = arith.constant 0 : index
    %48 = vector.load %arg5[%c4, %c0_28, %c0_29] : memref<16x441x100xbf16, #tpu.memory_space<vmem>>, vector<1x441x100xbf16>
    %49 = vector.shape_cast %48 : vector<1x441x100xbf16> to vector<441x100xbf16>
    %50 = arith.extf %49 : vector<441x100xbf16> to vector<441x100xf32>
    %cst_30 = arith.constant dense<0.000000e+00> : vector<16x100xf32>
    %51 = tpu.matmul %31, %50, %cst_30 {dimension_numbers = #tpu.dot_dimension_numbers<[1], [0], [0], [1], [0, 0, 1, 1], [], []>} : vector<16x441xf32>, vector<441x100xf32>, vector<16x100xf32> -> vector<16x100xf32>
    %c5 = arith.constant 5 : index
    %c0_31 = arith.constant 0 : index
    %c0_32 = arith.constant 0 : index
    %52 = vector.load %arg5[%c5, %c0_31, %c0_32] : memref<16x441x100xbf16, #tpu.memory_space<vmem>>, vector<1x441x100xbf16>
    %53 = vector.shape_cast %52 : vector<1x441x100xbf16> to vector<441x100xbf16>
    %54 = arith.extf %53 : vector<441x100xbf16> to vector<441x100xf32>
    %cst_33 = arith.constant dense<0.000000e+00> : vector<16x100xf32>
    %55 = tpu.matmul %31, %54, %cst_33 {dimension_numbers = #tpu.dot_dimension_numbers<[1], [0], [0], [1], [0, 0, 1, 1], [], []>} : vector<16x441xf32>, vector<441x100xf32>, vector<16x100xf32> -> vector<16x100xf32>
    %c6 = arith.constant 6 : index
    %c0_34 = arith.constant 0 : index
    %c0_35 = arith.constant 0 : index
    %56 = vector.load %arg5[%c6, %c0_34, %c0_35] : memref<16x441x100xbf16, #tpu.memory_space<vmem>>, vector<1x441x100xbf16>
    %57 = vector.shape_cast %56 : vector<1x441x100xbf16> to vector<441x100xbf16>
    %58 = arith.extf %57 : vector<441x100xbf16> to vector<441x100xf32>
    %cst_36 = arith.constant dense<0.000000e+00> : vector<16x100xf32>
    %59 = tpu.matmul %31, %58, %cst_36 {dimension_numbers = #tpu.dot_dimension_numbers<[1], [0], [0], [1], [0, 0, 1, 1], [], []>} : vector<16x441xf32>, vector<441x100xf32>, vector<16x100xf32> -> vector<16x100xf32>
    %c7 = arith.constant 7 : index
    %c0_37 = arith.constant 0 : index
    %c0_38 = arith.constant 0 : index
    %60 = vector.load %arg5[%c7, %c0_37, %c0_38] : memref<16x441x100xbf16, #tpu.memory_space<vmem>>, vector<1x441x100xbf16>
    %61 = vector.shape_cast %60 : vector<1x441x100xbf16> to vector<441x100xbf16>
    %62 = arith.extf %61 : vector<441x100xbf16> to vector<441x100xf32>
    %cst_39 = arith.constant dense<0.000000e+00> : vector<16x100xf32>
    %63 = tpu.matmul %31, %62, %cst_39 {dimension_numbers = #tpu.dot_dimension_numbers<[1], [0], [0], [1], [0, 0, 1, 1], [], []>} : vector<16x441xf32>, vector<441x100xf32>, vector<16x100xf32> -> vector<16x100xf32>
    %c8 = arith.constant 8 : index
    %c0_40 = arith.constant 0 : index
    %c0_41 = arith.constant 0 : index
    %64 = vector.load %arg5[%c8, %c0_40, %c0_41] : memref<16x441x100xbf16, #tpu.memory_space<vmem>>, vector<1x441x100xbf16>
    %65 = vector.shape_cast %64 : vector<1x441x100xbf16> to vector<441x100xbf16>
    %66 = arith.extf %65 : vector<441x100xbf16> to vector<441x100xf32>
    %cst_42 = arith.constant dense<0.000000e+00> : vector<16x100xf32>
    %67 = tpu.matmul %31, %66, %cst_42 {dimension_numbers = #tpu.dot_dimension_numbers<[1], [0], [0], [1], [0, 0, 1, 1], [], []>} : vector<16x441xf32>, vector<441x100xf32>, vector<16x100xf32> -> vector<16x100xf32>
    %c9 = arith.constant 9 : index
    %c0_43 = arith.constant 0 : index
    %c0_44 = arith.constant 0 : index
    %68 = vector.load %arg5[%c9, %c0_43, %c0_44] : memref<16x441x100xbf16, #tpu.memory_space<vmem>>, vector<1x441x100xbf16>
    %69 = vector.shape_cast %68 : vector<1x441x100xbf16> to vector<441x100xbf16>
    %70 = arith.extf %69 : vector<441x100xbf16> to vector<441x100xf32>
    %cst_45 = arith.constant dense<0.000000e+00> : vector<16x100xf32>
    %71 = tpu.matmul %31, %70, %cst_45 {dimension_numbers = #tpu.dot_dimension_numbers<[1], [0], [0], [1], [0, 0, 1, 1], [], []>} : vector<16x441xf32>, vector<441x100xf32>, vector<16x100xf32> -> vector<16x100xf32>
    %c10 = arith.constant 10 : index
    %c0_46 = arith.constant 0 : index
    %c0_47 = arith.constant 0 : index
    %72 = vector.load %arg5[%c10, %c0_46, %c0_47] : memref<16x441x100xbf16, #tpu.memory_space<vmem>>, vector<1x441x100xbf16>
    %73 = vector.shape_cast %72 : vector<1x441x100xbf16> to vector<441x100xbf16>
    %74 = arith.extf %73 : vector<441x100xbf16> to vector<441x100xf32>
    %cst_48 = arith.constant dense<0.000000e+00> : vector<16x100xf32>
    %75 = tpu.matmul %31, %74, %cst_48 {dimension_numbers = #tpu.dot_dimension_numbers<[1], [0], [0], [1], [0, 0, 1, 1], [], []>} : vector<16x441xf32>, vector<441x100xf32>, vector<16x100xf32> -> vector<16x100xf32>
    %c11 = arith.constant 11 : index
    %c0_49 = arith.constant 0 : index
    %c0_50 = arith.constant 0 : index
    %76 = vector.load %arg5[%c11, %c0_49, %c0_50] : memref<16x441x100xbf16, #tpu.memory_space<vmem>>, vector<1x441x100xbf16>
    %77 = vector.shape_cast %76 : vector<1x441x100xbf16> to vector<441x100xbf16>
    %78 = arith.extf %77 : vector<441x100xbf16> to vector<441x100xf32>
    %cst_51 = arith.constant dense<0.000000e+00> : vector<16x100xf32>
    %79 = tpu.matmul %31, %78, %cst_51 {dimension_numbers = #tpu.dot_dimension_numbers<[1], [0], [0], [1], [0, 0, 1, 1], [], []>} : vector<16x441xf32>, vector<441x100xf32>, vector<16x100xf32> -> vector<16x100xf32>
    %c12 = arith.constant 12 : index
    %c0_52 = arith.constant 0 : index
    %c0_53 = arith.constant 0 : index
    %80 = vector.load %arg5[%c12, %c0_52, %c0_53] : memref<16x441x100xbf16, #tpu.memory_space<vmem>>, vector<1x441x100xbf16>
    %81 = vector.shape_cast %80 : vector<1x441x100xbf16> to vector<441x100xbf16>
    %82 = arith.extf %81 : vector<441x100xbf16> to vector<441x100xf32>
    %cst_54 = arith.constant dense<0.000000e+00> : vector<16x100xf32>
    %83 = tpu.matmul %31, %82, %cst_54 {dimension_numbers = #tpu.dot_dimension_numbers<[1], [0], [0], [1], [0, 0, 1, 1], [], []>} : vector<16x441xf32>, vector<441x100xf32>, vector<16x100xf32> -> vector<16x100xf32>
    %c13 = arith.constant 13 : index
    %c0_55 = arith.constant 0 : index
    %c0_56 = arith.constant 0 : index
    %84 = vector.load %arg5[%c13, %c0_55, %c0_56] : memref<16x441x100xbf16, #tpu.memory_space<vmem>>, vector<1x441x100xbf16>
    %85 = vector.shape_cast %84 : vector<1x441x100xbf16> to vector<441x100xbf16>
    %86 = arith.extf %85 : vector<441x100xbf16> to vector<441x100xf32>
    %cst_57 = arith.constant dense<0.000000e+00> : vector<16x100xf32>
    %87 = tpu.matmul %31, %86, %cst_57 {dimension_numbers = #tpu.dot_dimension_numbers<[1], [0], [0], [1], [0, 0, 1, 1], [], []>} : vector<16x441xf32>, vector<441x100xf32>, vector<16x100xf32> -> vector<16x100xf32>
    %c14 = arith.constant 14 : index
    %c0_58 = arith.constant 0 : index
    %c0_59 = arith.constant 0 : index
    %88 = vector.load %arg5[%c14, %c0_58, %c0_59] : memref<16x441x100xbf16, #tpu.memory_space<vmem>>, vector<1x441x100xbf16>
    %89 = vector.shape_cast %88 : vector<1x441x100xbf16> to vector<441x100xbf16>
    %90 = arith.extf %89 : vector<441x100xbf16> to vector<441x100xf32>
    %cst_60 = arith.constant dense<0.000000e+00> : vector<16x100xf32>
    %91 = tpu.matmul %31, %90, %cst_60 {dimension_numbers = #tpu.dot_dimension_numbers<[1], [0], [0], [1], [0, 0, 1, 1], [], []>} : vector<16x441xf32>, vector<441x100xf32>, vector<16x100xf32> -> vector<16x100xf32>
    %c15 = arith.constant 15 : index
    %c0_61 = arith.constant 0 : index
    %c0_62 = arith.constant 0 : index
    %92 = vector.load %arg5[%c15, %c0_61, %c0_62] : memref<16x441x100xbf16, #tpu.memory_space<vmem>>, vector<1x441x100xbf16>
    %93 = vector.shape_cast %92 : vector<1x441x100xbf16> to vector<441x100xbf16>
    %94 = arith.extf %93 : vector<441x100xbf16> to vector<441x100xf32>
    %cst_63 = arith.constant dense<0.000000e+00> : vector<16x100xf32>
    %95 = tpu.matmul %31, %94, %cst_63 {dimension_numbers = #tpu.dot_dimension_numbers<[1], [0], [0], [1], [0, 0, 1, 1], [], []>} : vector<16x441xf32>, vector<441x100xf32>, vector<16x100xf32> -> vector<16x100xf32>
    %96 = tpu.concatenate %35, %39, %43, %47, %51, %55, %59, %63, %67, %71, %75, %79, %83, %87, %91, %95 in 0 : vector<16x100xf32>, vector<16x100xf32>, vector<16x100xf32>, vector<16x100xf32>, vector<16x100xf32>, vector<16x100xf32>, vector<16x100xf32>, vector<16x100xf32>, vector<16x100xf32>, vector<16x100xf32>, vector<16x100xf32>, vector<16x100xf32>, vector<16x100xf32>, vector<16x100xf32>, vector<16x100xf32>, vector<16x100xf32> -> vector<256x100xf32>
    %c0_64 = arith.constant 0 : index
    %c0_65 = arith.constant 0 : index
    %97 = vector.load %arg6[%c0_64, %c0_65] : memref<32x256xf32, #tpu.memory_space<vmem>>, vector<32x256xf32>
    %cst_66 = arith.constant dense<0.000000e+00> : vector<32x100xf32>
    %98 = tpu.matmul %97, %96, %cst_66 {dimension_numbers = #tpu.dot_dimension_numbers<[1], [0], [0], [1], [0, 0, 1, 1], [], []>} : vector<32x256xf32>, vector<256x100xf32>, vector<32x100xf32> -> vector<32x100xf32>
    %c0_67 = arith.constant 0 : index
    %c0_68 = arith.constant 0 : index
    %99 = vector.load %arg7[%c0_67, %c0_68] : memref<32x1xf32, #tpu.memory_space<vmem>>, vector<32x1xf32>
    %100 = vector.broadcast %99 : vector<32x1xf32> to vector<32x100xf32>
    %101 = arith.addf %98, %100 : vector<32x100xf32>
    %cst_69 = arith.constant 0.000000e+00 : f32
    %102 = vector.broadcast %cst_69 : f32 to vector<32x100xf32>
    %103 = arith.maximumf %101, %102 : vector<32x100xf32>
    %cst_70 = arith.constant dense<0.000000e+00> : vector<32xf32>
    %104 = vector.multi_reduction <add>, %103, %cst_70 [1] : vector<32x100xf32> to vector<32xf32>
    %105 = vector.shape_cast %104 : vector<32xf32> to vector<32x1xf32>
    %cst_71 = arith.constant 1.000000e+02 : f32
    %106 = vector.broadcast %cst_71 : f32 to vector<32x1xf32>
    %107 = arith.divf %105, %106 : vector<32x1xf32>
    %108 = arith.mulf %103, %103 : vector<32x100xf32>
    %cst_72 = arith.constant dense<0.000000e+00> : vector<32xf32>
    %109 = vector.multi_reduction <add>, %108, %cst_72 [1] : vector<32x100xf32> to vector<32xf32>
    %110 = vector.shape_cast %109 : vector<32xf32> to vector<32x1xf32>
    %cst_73 = arith.constant 1.000000e+02 : f32
    %111 = vector.broadcast %cst_73 : f32 to vector<32x1xf32>
    %112 = arith.divf %110, %111 : vector<32x1xf32>
    %113 = arith.mulf %107, %107 : vector<32x1xf32>
    %114 = arith.subf %112, %113 : vector<32x1xf32>
    %115 = vector.broadcast %107 : vector<32x1xf32> to vector<32x100xf32>
    %116 = arith.subf %103, %115 : vector<32x100xf32>
    %cst_74 = arith.constant 9.99999974E-6 : f32
    %117 = vector.broadcast %cst_74 : f32 to vector<32x1xf32>
    %118 = arith.addf %114, %117 : vector<32x1xf32>
    %119 = math.rsqrt %118 : vector<32x1xf32>
    %120 = vector.broadcast %119 : vector<32x1xf32> to vector<32x100xf32>
    %121 = arith.mulf %116, %120 : vector<32x100xf32>
    %c0_75 = arith.constant 0 : index
    %c0_76 = arith.constant 0 : index
    %122 = vector.load %arg8[%c0_75, %c0_76] : memref<32x1xf32, #tpu.memory_space<vmem>>, vector<32x1xf32>
    %123 = vector.broadcast %122 : vector<32x1xf32> to vector<32x100xf32>
    %124 = arith.mulf %121, %123 : vector<32x100xf32>
    %c0_77 = arith.constant 0 : index
    %c0_78 = arith.constant 0 : index
    %125 = vector.load %arg9[%c0_77, %c0_78] : memref<32x1xf32, #tpu.memory_space<vmem>>, vector<32x1xf32>
    %126 = vector.broadcast %125 : vector<32x1xf32> to vector<32x100xf32>
    %127 = arith.addf %124, %126 : vector<32x100xf32>
    %c0_79 = arith.constant 0 : index
    %c0_80 = arith.constant 0 : index
    %128 = vector.load %arg10[%c0_79, %c0_80] : memref<32x100xf32, #tpu.memory_space<vmem>>, vector<32x100xf32>
    tpu.vector_store %arg10[%c0_79, %c0_80], %127 {strides = array<i32>} : memref<32x100xf32, #tpu.memory_space<vmem>>, vector<32x100xf32>,
    return
  }
}

module attributes {stable_mosaic.version = 11 : i64} {
  func.func @lstm_fc_kernel(%arg0: memref<100x32xf32, #tpu.memory_space<vmem>>, %arg1: memref<10x128xf32, #tpu.memory_space<vmem>>, %arg2: memref<10x128xf32, #tpu.memory_space<vmem>>, %arg3: memref<32x512xf32, #tpu.memory_space<vmem>>, %arg4: memref<128x512xf32, #tpu.memory_space<vmem>>, %arg5: memref<1x512xf32, #tpu.memory_space<vmem>>, %arg6: memref<10x128x10xf32, #tpu.memory_space<vmem>>, %arg7: memref<1x10xf32, #tpu.memory_space<vmem>>, %arg8: memref<10x6xf32, #tpu.memory_space<vmem>>, %arg9: memref<1x6xf32, #tpu.memory_space<vmem>>, %arg10: memref<10x6xf32, #tpu.memory_space<vmem>>, %arg11: memref<10x128xf32, #tpu.memory_space<vmem>>, %arg12: memref<10x128xf32, #tpu.memory_space<vmem>>) attributes {dimension_semantics = [], scalar_prefetch = 0 : i64, scratch_operands = 0 : i64, tpu.core_type = #tpu.core_type<tc>} {
    %c0 = arith.constant 0 : index
    %c0_0 = arith.constant 0 : index
    %0 = vector.load %arg0[%c0, %c0_0] : memref<100x32xf32, #tpu.memory_space<vmem>>, vector<100x32xf32>
    %c0_1 = arith.constant 0 : index
    %c0_2 = arith.constant 0 : index
    %1 = vector.load %arg3[%c0_1, %c0_2] : memref<32x512xf32, #tpu.memory_space<vmem>>, vector<32x512xf32>
    %cst = arith.constant dense<0.000000e+00> : vector<100x512xf32>
    %2 = tpu.matmul %0, %1, %cst {dimension_numbers = #tpu.dot_dimension_numbers<[1], [0], [0], [1], [0, 0, 1, 1], [], []>} : vector<100x32xf32>, vector<32x512xf32>, vector<100x512xf32> -> vector<100x512xf32>
    %c0_3 = arith.constant 0 : index
    %c0_4 = arith.constant 0 : index
    %3 = vector.load %arg5[%c0_3, %c0_4] : memref<1x512xf32, #tpu.memory_space<vmem>>, vector<1x512xf32>
    %4 = vector.broadcast %3 : vector<1x512xf32> to vector<100x512xf32>
    %5 = arith.addf %2, %4 : vector<100x512xf32>
    %c0_5 = arith.constant 0 : index
    %c0_6 = arith.constant 0 : index
    %6 = vector.load %arg4[%c0_5, %c0_6] : memref<128x512xf32, #tpu.memory_space<vmem>>, vector<128x512xf32>
    %c0_7 = arith.constant 0 : index
    %c0_8 = arith.constant 0 : index
    %7 = vector.load %arg1[%c0_7, %c0_8] : memref<10x128xf32, #tpu.memory_space<vmem>>, vector<10x128xf32>
    %c0_9 = arith.constant 0 : index
    %c0_10 = arith.constant 0 : index
    %8 = vector.load %arg2[%c0_9, %c0_10] : memref<10x128xf32, #tpu.memory_space<vmem>>, vector<10x128xf32>
    %9 = vector.extract_strided_slice %5 {offsets = [0, 0], sizes = [10, 512], strides = [1, 1]} : vector<100x512xf32> to vector<10x512xf32>
    %cst_11 = arith.constant dense<0.000000e+00> : vector<10x512xf32>
    %10 = tpu.matmul %7, %6, %cst_11 {dimension_numbers = #tpu.dot_dimension_numbers<[1], [0], [0], [1], [0, 0, 1, 1], [], []>} : vector<10x128xf32>, vector<128x512xf32>, vector<10x512xf32> -> vector<10x512xf32>
    %11 = arith.addf %9, %10 : vector<10x512xf32>
    %12 = vector.extract_strided_slice %11 {offsets = [0, 0], sizes = [10, 128], strides = [1, 1]} : vector<10x512xf32> to vector<10x128xf32>
    %13 = arith.negf %12 : vector<10x128xf32>
    %14 = math.exp %13 : vector<10x128xf32>
    %cst_12 = arith.constant 1.000000e+00 : f32
    %15 = vector.broadcast %cst_12 : f32 to vector<10x128xf32>
    %16 = arith.addf %15, %14 : vector<10x128xf32>
    %17 = arith.divf %15, %16 : vector<10x128xf32>
    %18 = vector.extract_strided_slice %11 {offsets = [0, 128], sizes = [10, 128], strides = [1, 1]} : vector<10x512xf32> to vector<10x128xf32>
    %19 = arith.negf %18 : vector<10x128xf32>
    %20 = math.exp %19 : vector<10x128xf32>
    %cst_13 = arith.constant 1.000000e+00 : f32
    %21 = vector.broadcast %cst_13 : f32 to vector<10x128xf32>
    %22 = arith.addf %21, %20 : vector<10x128xf32>
    %23 = arith.divf %21, %22 : vector<10x128xf32>
    %24 = vector.extract_strided_slice %11 {offsets = [0, 256], sizes = [10, 128], strides = [1, 1]} : vector<10x512xf32> to vector<10x128xf32>
    %25 = math.tanh %24 : vector<10x128xf32>
    %26 = vector.extract_strided_slice %11 {offsets = [0, 384], sizes = [10, 128], strides = [1, 1]} : vector<10x512xf32> to vector<10x128xf32>
    %27 = arith.negf %26 : vector<10x128xf32>
    %28 = math.exp %27 : vector<10x128xf32>
    %cst_14 = arith.constant 1.000000e+00 : f32
    %29 = vector.broadcast %cst_14 : f32 to vector<10x128xf32>
    %30 = arith.addf %29, %28 : vector<10x128xf32>
    %31 = arith.divf %29, %30 : vector<10x128xf32>
    %32 = arith.mulf %23, %8 : vector<10x128xf32>
    %33 = arith.mulf %17, %25 : vector<10x128xf32>
    %34 = arith.addf %32, %33 : vector<10x128xf32>
    %35 = math.tanh %34 : vector<10x128xf32>
    %36 = arith.mulf %31, %35 : vector<10x128xf32>
    %37 = vector.extract_strided_slice %5 {offsets = [10, 0], sizes = [10, 512], strides = [1, 1]} : vector<100x512xf32> to vector<10x512xf32>
    %cst_15 = arith.constant dense<0.000000e+00> : vector<10x512xf32>
    %38 = tpu.matmul %36, %6, %cst_15 {dimension_numbers = #tpu.dot_dimension_numbers<[1], [0], [0], [1], [0, 0, 1, 1], [], []>} : vector<10x128xf32>, vector<128x512xf32>, vector<10x512xf32> -> vector<10x512xf32>
    %39 = arith.addf %37, %38 : vector<10x512xf32>
    %40 = vector.extract_strided_slice %39 {offsets = [0, 0], sizes = [10, 128], strides = [1, 1]} : vector<10x512xf32> to vector<10x128xf32>
    %41 = arith.negf %40 : vector<10x128xf32>
    %42 = math.exp %41 : vector<10x128xf32>
    %cst_16 = arith.constant 1.000000e+00 : f32
    %43 = vector.broadcast %cst_16 : f32 to vector<10x128xf32>
    %44 = arith.addf %43, %42 : vector<10x128xf32>
    %45 = arith.divf %43, %44 : vector<10x128xf32>
    %46 = vector.extract_strided_slice %39 {offsets = [0, 128], sizes = [10, 128], strides = [1, 1]} : vector<10x512xf32> to vector<10x128xf32>
    %47 = arith.negf %46 : vector<10x128xf32>
    %48 = math.exp %47 : vector<10x128xf32>
    %cst_17 = arith.constant 1.000000e+00 : f32
    %49 = vector.broadcast %cst_17 : f32 to vector<10x128xf32>
    %50 = arith.addf %49, %48 : vector<10x128xf32>
    %51 = arith.divf %49, %50 : vector<10x128xf32>
    %52 = vector.extract_strided_slice %39 {offsets = [0, 256], sizes = [10, 128], strides = [1, 1]} : vector<10x512xf32> to vector<10x128xf32>
    %53 = math.tanh %52 : vector<10x128xf32>
    %54 = vector.extract_strided_slice %39 {offsets = [0, 384], sizes = [10, 128], strides = [1, 1]} : vector<10x512xf32> to vector<10x128xf32>
    %55 = arith.negf %54 : vector<10x128xf32>
    %56 = math.exp %55 : vector<10x128xf32>
    %cst_18 = arith.constant 1.000000e+00 : f32
    %57 = vector.broadcast %cst_18 : f32 to vector<10x128xf32>
    %58 = arith.addf %57, %56 : vector<10x128xf32>
    %59 = arith.divf %57, %58 : vector<10x128xf32>
    %60 = arith.mulf %51, %34 : vector<10x128xf32>
    %61 = arith.mulf %45, %53 : vector<10x128xf32>
    %62 = arith.addf %60, %61 : vector<10x128xf32>
    %63 = math.tanh %62 : vector<10x128xf32>
    %64 = arith.mulf %59, %63 : vector<10x128xf32>
    %65 = vector.extract_strided_slice %5 {offsets = [20, 0], sizes = [10, 512], strides = [1, 1]} : vector<100x512xf32> to vector<10x512xf32>
    %cst_19 = arith.constant dense<0.000000e+00> : vector<10x512xf32>
    %66 = tpu.matmul %64, %6, %cst_19 {dimension_numbers = #tpu.dot_dimension_numbers<[1], [0], [0], [1], [0, 0, 1, 1], [], []>} : vector<10x128xf32>, vector<128x512xf32>, vector<10x512xf32> -> vector<10x512xf32>
    %67 = arith.addf %65, %66 : vector<10x512xf32>
    %68 = vector.extract_strided_slice %67 {offsets = [0, 0], sizes = [10, 128], strides = [1, 1]} : vector<10x512xf32> to vector<10x128xf32>
    %69 = arith.negf %68 : vector<10x128xf32>
    %70 = math.exp %69 : vector<10x128xf32>
    %cst_20 = arith.constant 1.000000e+00 : f32
    %71 = vector.broadcast %cst_20 : f32 to vector<10x128xf32>
    %72 = arith.addf %71, %70 : vector<10x128xf32>
    %73 = arith.divf %71, %72 : vector<10x128xf32>
    %74 = vector.extract_strided_slice %67 {offsets = [0, 128], sizes = [10, 128], strides = [1, 1]} : vector<10x512xf32> to vector<10x128xf32>
    %75 = arith.negf %74 : vector<10x128xf32>
    %76 = math.exp %75 : vector<10x128xf32>
    %cst_21 = arith.constant 1.000000e+00 : f32
    %77 = vector.broadcast %cst_21 : f32 to vector<10x128xf32>
    %78 = arith.addf %77, %76 : vector<10x128xf32>
    %79 = arith.divf %77, %78 : vector<10x128xf32>
    %80 = vector.extract_strided_slice %67 {offsets = [0, 256], sizes = [10, 128], strides = [1, 1]} : vector<10x512xf32> to vector<10x128xf32>
    %81 = math.tanh %80 : vector<10x128xf32>
    %82 = vector.extract_strided_slice %67 {offsets = [0, 384], sizes = [10, 128], strides = [1, 1]} : vector<10x512xf32> to vector<10x128xf32>
    %83 = arith.negf %82 : vector<10x128xf32>
    %84 = math.exp %83 : vector<10x128xf32>
    %cst_22 = arith.constant 1.000000e+00 : f32
    %85 = vector.broadcast %cst_22 : f32 to vector<10x128xf32>
    %86 = arith.addf %85, %84 : vector<10x128xf32>
    %87 = arith.divf %85, %86 : vector<10x128xf32>
    %88 = arith.mulf %79, %62 : vector<10x128xf32>
    %89 = arith.mulf %73, %81 : vector<10x128xf32>
    %90 = arith.addf %88, %89 : vector<10x128xf32>
    %91 = math.tanh %90 : vector<10x128xf32>
    %92 = arith.mulf %87, %91 : vector<10x128xf32>
    %93 = vector.extract_strided_slice %5 {offsets = [30, 0], sizes = [10, 512], strides = [1, 1]} : vector<100x512xf32> to vector<10x512xf32>
    %cst_23 = arith.constant dense<0.000000e+00> : vector<10x512xf32>
    %94 = tpu.matmul %92, %6, %cst_23 {dimension_numbers = #tpu.dot_dimension_numbers<[1], [0], [0], [1], [0, 0, 1, 1], [], []>} : vector<10x128xf32>, vector<128x512xf32>, vector<10x512xf32> -> vector<10x512xf32>
    %95 = arith.addf %93, %94 : vector<10x512xf32>
    %96 = vector.extract_strided_slice %95 {offsets = [0, 0], sizes = [10, 128], strides = [1, 1]} : vector<10x512xf32> to vector<10x128xf32>
    %97 = arith.negf %96 : vector<10x128xf32>
    %98 = math.exp %97 : vector<10x128xf32>
    %cst_24 = arith.constant 1.000000e+00 : f32
    %99 = vector.broadcast %cst_24 : f32 to vector<10x128xf32>
    %100 = arith.addf %99, %98 : vector<10x128xf32>
    %101 = arith.divf %99, %100 : vector<10x128xf32>
    %102 = vector.extract_strided_slice %95 {offsets = [0, 128], sizes = [10, 128], strides = [1, 1]} : vector<10x512xf32> to vector<10x128xf32>
    %103 = arith.negf %102 : vector<10x128xf32>
    %104 = math.exp %103 : vector<10x128xf32>
    %cst_25 = arith.constant 1.000000e+00 : f32
    %105 = vector.broadcast %cst_25 : f32 to vector<10x128xf32>
    %106 = arith.addf %105, %104 : vector<10x128xf32>
    %107 = arith.divf %105, %106 : vector<10x128xf32>
    %108 = vector.extract_strided_slice %95 {offsets = [0, 256], sizes = [10, 128], strides = [1, 1]} : vector<10x512xf32> to vector<10x128xf32>
    %109 = math.tanh %108 : vector<10x128xf32>
    %110 = vector.extract_strided_slice %95 {offsets = [0, 384], sizes = [10, 128], strides = [1, 1]} : vector<10x512xf32> to vector<10x128xf32>
    %111 = arith.negf %110 : vector<10x128xf32>
    %112 = math.exp %111 : vector<10x128xf32>
    %cst_26 = arith.constant 1.000000e+00 : f32
    %113 = vector.broadcast %cst_26 : f32 to vector<10x128xf32>
    %114 = arith.addf %113, %112 : vector<10x128xf32>
    %115 = arith.divf %113, %114 : vector<10x128xf32>
    %116 = arith.mulf %107, %90 : vector<10x128xf32>
    %117 = arith.mulf %101, %109 : vector<10x128xf32>
    %118 = arith.addf %116, %117 : vector<10x128xf32>
    %119 = math.tanh %118 : vector<10x128xf32>
    %120 = arith.mulf %115, %119 : vector<10x128xf32>
    %121 = vector.extract_strided_slice %5 {offsets = [40, 0], sizes = [10, 512], strides = [1, 1]} : vector<100x512xf32> to vector<10x512xf32>
    %cst_27 = arith.constant dense<0.000000e+00> : vector<10x512xf32>
    %122 = tpu.matmul %120, %6, %cst_27 {dimension_numbers = #tpu.dot_dimension_numbers<[1], [0], [0], [1], [0, 0, 1, 1], [], []>} : vector<10x128xf32>, vector<128x512xf32>, vector<10x512xf32> -> vector<10x512xf32>
    %123 = arith.addf %121, %122 : vector<10x512xf32>
    %124 = vector.extract_strided_slice %123 {offsets = [0, 0], sizes = [10, 128], strides = [1, 1]} : vector<10x512xf32> to vector<10x128xf32>
    %125 = arith.negf %124 : vector<10x128xf32>
    %126 = math.exp %125 : vector<10x128xf32>
    %cst_28 = arith.constant 1.000000e+00 : f32
    %127 = vector.broadcast %cst_28 : f32 to vector<10x128xf32>
    %128 = arith.addf %127, %126 : vector<10x128xf32>
    %129 = arith.divf %127, %128 : vector<10x128xf32>
    %130 = vector.extract_strided_slice %123 {offsets = [0, 128], sizes = [10, 128], strides = [1, 1]} : vector<10x512xf32> to vector<10x128xf32>
    %131 = arith.negf %130 : vector<10x128xf32>
    %132 = math.exp %131 : vector<10x128xf32>
    %cst_29 = arith.constant 1.000000e+00 : f32
    %133 = vector.broadcast %cst_29 : f32 to vector<10x128xf32>
    %134 = arith.addf %133, %132 : vector<10x128xf32>
    %135 = arith.divf %133, %134 : vector<10x128xf32>
    %136 = vector.extract_strided_slice %123 {offsets = [0, 256], sizes = [10, 128], strides = [1, 1]} : vector<10x512xf32> to vector<10x128xf32>
    %137 = math.tanh %136 : vector<10x128xf32>
    %138 = vector.extract_strided_slice %123 {offsets = [0, 384], sizes = [10, 128], strides = [1, 1]} : vector<10x512xf32> to vector<10x128xf32>
    %139 = arith.negf %138 : vector<10x128xf32>
    %140 = math.exp %139 : vector<10x128xf32>
    %cst_30 = arith.constant 1.000000e+00 : f32
    %141 = vector.broadcast %cst_30 : f32 to vector<10x128xf32>
    %142 = arith.addf %141, %140 : vector<10x128xf32>
    %143 = arith.divf %141, %142 : vector<10x128xf32>
    %144 = arith.mulf %135, %118 : vector<10x128xf32>
    %145 = arith.mulf %129, %137 : vector<10x128xf32>
    %146 = arith.addf %144, %145 : vector<10x128xf32>
    %147 = math.tanh %146 : vector<10x128xf32>
    %148 = arith.mulf %143, %147 : vector<10x128xf32>
    %149 = vector.extract_strided_slice %5 {offsets = [50, 0], sizes = [10, 512], strides = [1, 1]} : vector<100x512xf32> to vector<10x512xf32>
    %cst_31 = arith.constant dense<0.000000e+00> : vector<10x512xf32>
    %150 = tpu.matmul %148, %6, %cst_31 {dimension_numbers = #tpu.dot_dimension_numbers<[1], [0], [0], [1], [0, 0, 1, 1], [], []>} : vector<10x128xf32>, vector<128x512xf32>, vector<10x512xf32> -> vector<10x512xf32>
    %151 = arith.addf %149, %150 : vector<10x512xf32>
    %152 = vector.extract_strided_slice %151 {offsets = [0, 0], sizes = [10, 128], strides = [1, 1]} : vector<10x512xf32> to vector<10x128xf32>
    %153 = arith.negf %152 : vector<10x128xf32>
    %154 = math.exp %153 : vector<10x128xf32>
    %cst_32 = arith.constant 1.000000e+00 : f32
    %155 = vector.broadcast %cst_32 : f32 to vector<10x128xf32>
    %156 = arith.addf %155, %154 : vector<10x128xf32>
    %157 = arith.divf %155, %156 : vector<10x128xf32>
    %158 = vector.extract_strided_slice %151 {offsets = [0, 128], sizes = [10, 128], strides = [1, 1]} : vector<10x512xf32> to vector<10x128xf32>
    %159 = arith.negf %158 : vector<10x128xf32>
    %160 = math.exp %159 : vector<10x128xf32>
    %cst_33 = arith.constant 1.000000e+00 : f32
    %161 = vector.broadcast %cst_33 : f32 to vector<10x128xf32>
    %162 = arith.addf %161, %160 : vector<10x128xf32>
    %163 = arith.divf %161, %162 : vector<10x128xf32>
    %164 = vector.extract_strided_slice %151 {offsets = [0, 256], sizes = [10, 128], strides = [1, 1]} : vector<10x512xf32> to vector<10x128xf32>
    %165 = math.tanh %164 : vector<10x128xf32>
    %166 = vector.extract_strided_slice %151 {offsets = [0, 384], sizes = [10, 128], strides = [1, 1]} : vector<10x512xf32> to vector<10x128xf32>
    %167 = arith.negf %166 : vector<10x128xf32>
    %168 = math.exp %167 : vector<10x128xf32>
    %cst_34 = arith.constant 1.000000e+00 : f32
    %169 = vector.broadcast %cst_34 : f32 to vector<10x128xf32>
    %170 = arith.addf %169, %168 : vector<10x128xf32>
    %171 = arith.divf %169, %170 : vector<10x128xf32>
    %172 = arith.mulf %163, %146 : vector<10x128xf32>
    %173 = arith.mulf %157, %165 : vector<10x128xf32>
    %174 = arith.addf %172, %173 : vector<10x128xf32>
    %175 = math.tanh %174 : vector<10x128xf32>
    %176 = arith.mulf %171, %175 : vector<10x128xf32>
    %177 = vector.extract_strided_slice %5 {offsets = [60, 0], sizes = [10, 512], strides = [1, 1]} : vector<100x512xf32> to vector<10x512xf32>
    %cst_35 = arith.constant dense<0.000000e+00> : vector<10x512xf32>
    %178 = tpu.matmul %176, %6, %cst_35 {dimension_numbers = #tpu.dot_dimension_numbers<[1], [0], [0], [1], [0, 0, 1, 1], [], []>} : vector<10x128xf32>, vector<128x512xf32>, vector<10x512xf32> -> vector<10x512xf32>
    %179 = arith.addf %177, %178 : vector<10x512xf32>
    %180 = vector.extract_strided_slice %179 {offsets = [0, 0], sizes = [10, 128], strides = [1, 1]} : vector<10x512xf32> to vector<10x128xf32>
    %181 = arith.negf %180 : vector<10x128xf32>
    %182 = math.exp %181 : vector<10x128xf32>
    %cst_36 = arith.constant 1.000000e+00 : f32
    %183 = vector.broadcast %cst_36 : f32 to vector<10x128xf32>
    %184 = arith.addf %183, %182 : vector<10x128xf32>
    %185 = arith.divf %183, %184 : vector<10x128xf32>
    %186 = vector.extract_strided_slice %179 {offsets = [0, 128], sizes = [10, 128], strides = [1, 1]} : vector<10x512xf32> to vector<10x128xf32>
    %187 = arith.negf %186 : vector<10x128xf32>
    %188 = math.exp %187 : vector<10x128xf32>
    %cst_37 = arith.constant 1.000000e+00 : f32
    %189 = vector.broadcast %cst_37 : f32 to vector<10x128xf32>
    %190 = arith.addf %189, %188 : vector<10x128xf32>
    %191 = arith.divf %189, %190 : vector<10x128xf32>
    %192 = vector.extract_strided_slice %179 {offsets = [0, 256], sizes = [10, 128], strides = [1, 1]} : vector<10x512xf32> to vector<10x128xf32>
    %193 = math.tanh %192 : vector<10x128xf32>
    %194 = vector.extract_strided_slice %179 {offsets = [0, 384], sizes = [10, 128], strides = [1, 1]} : vector<10x512xf32> to vector<10x128xf32>
    %195 = arith.negf %194 : vector<10x128xf32>
    %196 = math.exp %195 : vector<10x128xf32>
    %cst_38 = arith.constant 1.000000e+00 : f32
    %197 = vector.broadcast %cst_38 : f32 to vector<10x128xf32>
    %198 = arith.addf %197, %196 : vector<10x128xf32>
    %199 = arith.divf %197, %198 : vector<10x128xf32>
    %200 = arith.mulf %191, %174 : vector<10x128xf32>
    %201 = arith.mulf %185, %193 : vector<10x128xf32>
    %202 = arith.addf %200, %201 : vector<10x128xf32>
    %203 = math.tanh %202 : vector<10x128xf32>
    %204 = arith.mulf %199, %203 : vector<10x128xf32>
    %205 = vector.extract_strided_slice %5 {offsets = [70, 0], sizes = [10, 512], strides = [1, 1]} : vector<100x512xf32> to vector<10x512xf32>
    %cst_39 = arith.constant dense<0.000000e+00> : vector<10x512xf32>
    %206 = tpu.matmul %204, %6, %cst_39 {dimension_numbers = #tpu.dot_dimension_numbers<[1], [0], [0], [1], [0, 0, 1, 1], [], []>} : vector<10x128xf32>, vector<128x512xf32>, vector<10x512xf32> -> vector<10x512xf32>
    %207 = arith.addf %205, %206 : vector<10x512xf32>
    %208 = vector.extract_strided_slice %207 {offsets = [0, 0], sizes = [10, 128], strides = [1, 1]} : vector<10x512xf32> to vector<10x128xf32>
    %209 = arith.negf %208 : vector<10x128xf32>
    %210 = math.exp %209 : vector<10x128xf32>
    %cst_40 = arith.constant 1.000000e+00 : f32
    %211 = vector.broadcast %cst_40 : f32 to vector<10x128xf32>
    %212 = arith.addf %211, %210 : vector<10x128xf32>
    %213 = arith.divf %211, %212 : vector<10x128xf32>
    %214 = vector.extract_strided_slice %207 {offsets = [0, 128], sizes = [10, 128], strides = [1, 1]} : vector<10x512xf32> to vector<10x128xf32>
    %215 = arith.negf %214 : vector<10x128xf32>
    %216 = math.exp %215 : vector<10x128xf32>
    %cst_41 = arith.constant 1.000000e+00 : f32
    %217 = vector.broadcast %cst_41 : f32 to vector<10x128xf32>
    %218 = arith.addf %217, %216 : vector<10x128xf32>
    %219 = arith.divf %217, %218 : vector<10x128xf32>
    %220 = vector.extract_strided_slice %207 {offsets = [0, 256], sizes = [10, 128], strides = [1, 1]} : vector<10x512xf32> to vector<10x128xf32>
    %221 = math.tanh %220 : vector<10x128xf32>
    %222 = vector.extract_strided_slice %207 {offsets = [0, 384], sizes = [10, 128], strides = [1, 1]} : vector<10x512xf32> to vector<10x128xf32>
    %223 = arith.negf %222 : vector<10x128xf32>
    %224 = math.exp %223 : vector<10x128xf32>
    %cst_42 = arith.constant 1.000000e+00 : f32
    %225 = vector.broadcast %cst_42 : f32 to vector<10x128xf32>
    %226 = arith.addf %225, %224 : vector<10x128xf32>
    %227 = arith.divf %225, %226 : vector<10x128xf32>
    %228 = arith.mulf %219, %202 : vector<10x128xf32>
    %229 = arith.mulf %213, %221 : vector<10x128xf32>
    %230 = arith.addf %228, %229 : vector<10x128xf32>
    %231 = math.tanh %230 : vector<10x128xf32>
    %232 = arith.mulf %227, %231 : vector<10x128xf32>
    %233 = vector.extract_strided_slice %5 {offsets = [80, 0], sizes = [10, 512], strides = [1, 1]} : vector<100x512xf32> to vector<10x512xf32>
    %cst_43 = arith.constant dense<0.000000e+00> : vector<10x512xf32>
    %234 = tpu.matmul %232, %6, %cst_43 {dimension_numbers = #tpu.dot_dimension_numbers<[1], [0], [0], [1], [0, 0, 1, 1], [], []>} : vector<10x128xf32>, vector<128x512xf32>, vector<10x512xf32> -> vector<10x512xf32>
    %235 = arith.addf %233, %234 : vector<10x512xf32>
    %236 = vector.extract_strided_slice %235 {offsets = [0, 0], sizes = [10, 128], strides = [1, 1]} : vector<10x512xf32> to vector<10x128xf32>
    %237 = arith.negf %236 : vector<10x128xf32>
    %238 = math.exp %237 : vector<10x128xf32>
    %cst_44 = arith.constant 1.000000e+00 : f32
    %239 = vector.broadcast %cst_44 : f32 to vector<10x128xf32>
    %240 = arith.addf %239, %238 : vector<10x128xf32>
    %241 = arith.divf %239, %240 : vector<10x128xf32>
    %242 = vector.extract_strided_slice %235 {offsets = [0, 128], sizes = [10, 128], strides = [1, 1]} : vector<10x512xf32> to vector<10x128xf32>
    %243 = arith.negf %242 : vector<10x128xf32>
    %244 = math.exp %243 : vector<10x128xf32>
    %cst_45 = arith.constant 1.000000e+00 : f32
    %245 = vector.broadcast %cst_45 : f32 to vector<10x128xf32>
    %246 = arith.addf %245, %244 : vector<10x128xf32>
    %247 = arith.divf %245, %246 : vector<10x128xf32>
    %248 = vector.extract_strided_slice %235 {offsets = [0, 256], sizes = [10, 128], strides = [1, 1]} : vector<10x512xf32> to vector<10x128xf32>
    %249 = math.tanh %248 : vector<10x128xf32>
    %250 = vector.extract_strided_slice %235 {offsets = [0, 384], sizes = [10, 128], strides = [1, 1]} : vector<10x512xf32> to vector<10x128xf32>
    %251 = arith.negf %250 : vector<10x128xf32>
    %252 = math.exp %251 : vector<10x128xf32>
    %cst_46 = arith.constant 1.000000e+00 : f32
    %253 = vector.broadcast %cst_46 : f32 to vector<10x128xf32>
    %254 = arith.addf %253, %252 : vector<10x128xf32>
    %255 = arith.divf %253, %254 : vector<10x128xf32>
    %256 = arith.mulf %247, %230 : vector<10x128xf32>
    %257 = arith.mulf %241, %249 : vector<10x128xf32>
    %258 = arith.addf %256, %257 : vector<10x128xf32>
    %259 = math.tanh %258 : vector<10x128xf32>
    %260 = arith.mulf %255, %259 : vector<10x128xf32>
    %261 = vector.extract_strided_slice %5 {offsets = [90, 0], sizes = [10, 512], strides = [1, 1]} : vector<100x512xf32> to vector<10x512xf32>
    %cst_47 = arith.constant dense<0.000000e+00> : vector<10x512xf32>
    %262 = tpu.matmul %260, %6, %cst_47 {dimension_numbers = #tpu.dot_dimension_numbers<[1], [0], [0], [1], [0, 0, 1, 1], [], []>} : vector<10x128xf32>, vector<128x512xf32>, vector<10x512xf32> -> vector<10x512xf32>
    %263 = arith.addf %261, %262 : vector<10x512xf32>
    %264 = vector.extract_strided_slice %263 {offsets = [0, 0], sizes = [10, 128], strides = [1, 1]} : vector<10x512xf32> to vector<10x128xf32>
    %265 = arith.negf %264 : vector<10x128xf32>
    %266 = math.exp %265 : vector<10x128xf32>
    %cst_48 = arith.constant 1.000000e+00 : f32
    %267 = vector.broadcast %cst_48 : f32 to vector<10x128xf32>
    %268 = arith.addf %267, %266 : vector<10x128xf32>
    %269 = arith.divf %267, %268 : vector<10x128xf32>
    %270 = vector.extract_strided_slice %263 {offsets = [0, 128], sizes = [10, 128], strides = [1, 1]} : vector<10x512xf32> to vector<10x128xf32>
    %271 = arith.negf %270 : vector<10x128xf32>
    %272 = math.exp %271 : vector<10x128xf32>
    %cst_49 = arith.constant 1.000000e+00 : f32
    %273 = vector.broadcast %cst_49 : f32 to vector<10x128xf32>
    %274 = arith.addf %273, %272 : vector<10x128xf32>
    %275 = arith.divf %273, %274 : vector<10x128xf32>
    %276 = vector.extract_strided_slice %263 {offsets = [0, 256], sizes = [10, 128], strides = [1, 1]} : vector<10x512xf32> to vector<10x128xf32>
    %277 = math.tanh %276 : vector<10x128xf32>
    %278 = vector.extract_strided_slice %263 {offsets = [0, 384], sizes = [10, 128], strides = [1, 1]} : vector<10x512xf32> to vector<10x128xf32>
    %279 = arith.negf %278 : vector<10x128xf32>
    %280 = math.exp %279 : vector<10x128xf32>
    %cst_50 = arith.constant 1.000000e+00 : f32
    %281 = vector.broadcast %cst_50 : f32 to vector<10x128xf32>
    %282 = arith.addf %281, %280 : vector<10x128xf32>
    %283 = arith.divf %281, %282 : vector<10x128xf32>
    %284 = arith.mulf %275, %258 : vector<10x128xf32>
    %285 = arith.mulf %269, %277 : vector<10x128xf32>
    %286 = arith.addf %284, %285 : vector<10x128xf32>
    %287 = math.tanh %286 : vector<10x128xf32>
    %288 = arith.mulf %283, %287 : vector<10x128xf32>
    %c0_51 = arith.constant 0 : index
    %c0_52 = arith.constant 0 : index
    %289 = vector.load %arg11[%c0_51, %c0_52] : memref<10x128xf32, #tpu.memory_space<vmem>>, vector<10x128xf32>
    tpu.vector_store %arg11[%c0_51, %c0_52], %288 {strides = array<i32>} : memref<10x128xf32, #tpu.memory_space<vmem>>, vector<10x128xf32>,
    %c0_53 = arith.constant 0 : index
    %c0_54 = arith.constant 0 : index
    %290 = vector.load %arg12[%c0_53, %c0_54] : memref<10x128xf32, #tpu.memory_space<vmem>>, vector<10x128xf32>
    tpu.vector_store %arg12[%c0_53, %c0_54], %286 {strides = array<i32>} : memref<10x128xf32, #tpu.memory_space<vmem>>, vector<10x128xf32>,
    %cst_55 = arith.constant 0.000000e+00 : f32
    %291 = vector.broadcast %cst_55 : f32 to vector<10x10xf32>
    %292 = vector.extract_strided_slice %36 {offsets = [0, 0], sizes = [1, 128], strides = [1, 1]} : vector<10x128xf32> to vector<1x128xf32>
    %293 = vector.extract_strided_slice %64 {offsets = [0, 0], sizes = [1, 128], strides = [1, 1]} : vector<10x128xf32> to vector<1x128xf32>
    %294 = vector.extract_strided_slice %92 {offsets = [0, 0], sizes = [1, 128], strides = [1, 1]} : vector<10x128xf32> to vector<1x128xf32>
    %295 = vector.extract_strided_slice %120 {offsets = [0, 0], sizes = [1, 128], strides = [1, 1]} : vector<10x128xf32> to vector<1x128xf32>
    %296 = vector.extract_strided_slice %148 {offsets = [0, 0], sizes = [1, 128], strides = [1, 1]} : vector<10x128xf32> to vector<1x128xf32>
    %297 = vector.extract_strided_slice %176 {offsets = [0, 0], sizes = [1, 128], strides = [1, 1]} : vector<10x128xf32> to vector<1x128xf32>
    %298 = vector.extract_strided_slice %204 {offsets = [0, 0], sizes = [1, 128], strides = [1, 1]} : vector<10x128xf32> to vector<1x128xf32>
    %299 = vector.extract_strided_slice %232 {offsets = [0, 0], sizes = [1, 128], strides = [1, 1]} : vector<10x128xf32> to vector<1x128xf32>
    %300 = vector.extract_strided_slice %260 {offsets = [0, 0], sizes = [1, 128], strides = [1, 1]} : vector<10x128xf32> to vector<1x128xf32>
    %301 = vector.extract_strided_slice %288 {offsets = [0, 0], sizes = [1, 128], strides = [1, 1]} : vector<10x128xf32> to vector<1x128xf32>
    %302 = tpu.concatenate %292, %293, %294, %295, %296, %297, %298, %299, %300, %301 in 0 : vector<1x128xf32>, vector<1x128xf32>, vector<1x128xf32>, vector<1x128xf32>, vector<1x128xf32>, vector<1x128xf32>, vector<1x128xf32>, vector<1x128xf32>, vector<1x128xf32>, vector<1x128xf32> -> vector<10x128xf32>
    %c0_56 = arith.constant 0 : index
    %c0_57 = arith.constant 0 : index
    %c0_58 = arith.constant 0 : index
    %303 = vector.load %arg6[%c0_56, %c0_57, %c0_58] : memref<10x128x10xf32, #tpu.memory_space<vmem>>, vector<1x128x10xf32>
    %304 = vector.shape_cast %303 : vector<1x128x10xf32> to vector<128x10xf32>
    %cst_59 = arith.constant dense<0.000000e+00> : vector<10x10xf32>
    %305 = tpu.matmul %302, %304, %cst_59 {dimension_numbers = #tpu.dot_dimension_numbers<[1], [0], [0], [1], [0, 0, 1, 1], [], []>} : vector<10x128xf32>, vector<128x10xf32>, vector<10x10xf32> -> vector<10x10xf32>
    %306 = arith.addf %291, %305 : vector<10x10xf32>
    %307 = vector.extract_strided_slice %36 {offsets = [1, 0], sizes = [1, 128], strides = [1, 1]} : vector<10x128xf32> to vector<1x128xf32>
    %308 = vector.extract_strided_slice %64 {offsets = [1, 0], sizes = [1, 128], strides = [1, 1]} : vector<10x128xf32> to vector<1x128xf32>
    %309 = vector.extract_strided_slice %92 {offsets = [1, 0], sizes = [1, 128], strides = [1, 1]} : vector<10x128xf32> to vector<1x128xf32>
    %310 = vector.extract_strided_slice %120 {offsets = [1, 0], sizes = [1, 128], strides = [1, 1]} : vector<10x128xf32> to vector<1x128xf32>
    %311 = vector.extract_strided_slice %148 {offsets = [1, 0], sizes = [1, 128], strides = [1, 1]} : vector<10x128xf32> to vector<1x128xf32>
    %312 = vector.extract_strided_slice %176 {offsets = [1, 0], sizes = [1, 128], strides = [1, 1]} : vector<10x128xf32> to vector<1x128xf32>
    %313 = vector.extract_strided_slice %204 {offsets = [1, 0], sizes = [1, 128], strides = [1, 1]} : vector<10x128xf32> to vector<1x128xf32>
    %314 = vector.extract_strided_slice %232 {offsets = [1, 0], sizes = [1, 128], strides = [1, 1]} : vector<10x128xf32> to vector<1x128xf32>
    %315 = vector.extract_strided_slice %260 {offsets = [1, 0], sizes = [1, 128], strides = [1, 1]} : vector<10x128xf32> to vector<1x128xf32>
    %316 = vector.extract_strided_slice %288 {offsets = [1, 0], sizes = [1, 128], strides = [1, 1]} : vector<10x128xf32> to vector<1x128xf32>
    %317 = tpu.concatenate %307, %308, %309, %310, %311, %312, %313, %314, %315, %316 in 0 : vector<1x128xf32>, vector<1x128xf32>, vector<1x128xf32>, vector<1x128xf32>, vector<1x128xf32>, vector<1x128xf32>, vector<1x128xf32>, vector<1x128xf32>, vector<1x128xf32>, vector<1x128xf32> -> vector<10x128xf32>
    %c1 = arith.constant 1 : index
    %c0_60 = arith.constant 0 : index
    %c0_61 = arith.constant 0 : index
    %318 = vector.load %arg6[%c1, %c0_60, %c0_61] : memref<10x128x10xf32, #tpu.memory_space<vmem>>, vector<1x128x10xf32>
    %319 = vector.shape_cast %318 : vector<1x128x10xf32> to vector<128x10xf32>
    %cst_62 = arith.constant dense<0.000000e+00> : vector<10x10xf32>
    %320 = tpu.matmul %317, %319, %cst_62 {dimension_numbers = #tpu.dot_dimension_numbers<[1], [0], [0], [1], [0, 0, 1, 1], [], []>} : vector<10x128xf32>, vector<128x10xf32>, vector<10x10xf32> -> vector<10x10xf32>
    %321 = arith.addf %306, %320 : vector<10x10xf32>
    %322 = vector.extract_strided_slice %36 {offsets = [2, 0], sizes = [1, 128], strides = [1, 1]} : vector<10x128xf32> to vector<1x128xf32>
    %323 = vector.extract_strided_slice %64 {offsets = [2, 0], sizes = [1, 128], strides = [1, 1]} : vector<10x128xf32> to vector<1x128xf32>
    %324 = vector.extract_strided_slice %92 {offsets = [2, 0], sizes = [1, 128], strides = [1, 1]} : vector<10x128xf32> to vector<1x128xf32>
    %325 = vector.extract_strided_slice %120 {offsets = [2, 0], sizes = [1, 128], strides = [1, 1]} : vector<10x128xf32> to vector<1x128xf32>
    %326 = vector.extract_strided_slice %148 {offsets = [2, 0], sizes = [1, 128], strides = [1, 1]} : vector<10x128xf32> to vector<1x128xf32>
    %327 = vector.extract_strided_slice %176 {offsets = [2, 0], sizes = [1, 128], strides = [1, 1]} : vector<10x128xf32> to vector<1x128xf32>
    %328 = vector.extract_strided_slice %204 {offsets = [2, 0], sizes = [1, 128], strides = [1, 1]} : vector<10x128xf32> to vector<1x128xf32>
    %329 = vector.extract_strided_slice %232 {offsets = [2, 0], sizes = [1, 128], strides = [1, 1]} : vector<10x128xf32> to vector<1x128xf32>
    %330 = vector.extract_strided_slice %260 {offsets = [2, 0], sizes = [1, 128], strides = [1, 1]} : vector<10x128xf32> to vector<1x128xf32>
    %331 = vector.extract_strided_slice %288 {offsets = [2, 0], sizes = [1, 128], strides = [1, 1]} : vector<10x128xf32> to vector<1x128xf32>
    %332 = tpu.concatenate %322, %323, %324, %325, %326, %327, %328, %329, %330, %331 in 0 : vector<1x128xf32>, vector<1x128xf32>, vector<1x128xf32>, vector<1x128xf32>, vector<1x128xf32>, vector<1x128xf32>, vector<1x128xf32>, vector<1x128xf32>, vector<1x128xf32>, vector<1x128xf32> -> vector<10x128xf32>
    %c2 = arith.constant 2 : index
    %c0_63 = arith.constant 0 : index
    %c0_64 = arith.constant 0 : index
    %333 = vector.load %arg6[%c2, %c0_63, %c0_64] : memref<10x128x10xf32, #tpu.memory_space<vmem>>, vector<1x128x10xf32>
    %334 = vector.shape_cast %333 : vector<1x128x10xf32> to vector<128x10xf32>
    %cst_65 = arith.constant dense<0.000000e+00> : vector<10x10xf32>
    %335 = tpu.matmul %332, %334, %cst_65 {dimension_numbers = #tpu.dot_dimension_numbers<[1], [0], [0], [1], [0, 0, 1, 1], [], []>} : vector<10x128xf32>, vector<128x10xf32>, vector<10x10xf32> -> vector<10x10xf32>
    %336 = arith.addf %321, %335 : vector<10x10xf32>
    %337 = vector.extract_strided_slice %36 {offsets = [3, 0], sizes = [1, 128], strides = [1, 1]} : vector<10x128xf32> to vector<1x128xf32>
    %338 = vector.extract_strided_slice %64 {offsets = [3, 0], sizes = [1, 128], strides = [1, 1]} : vector<10x128xf32> to vector<1x128xf32>
    %339 = vector.extract_strided_slice %92 {offsets = [3, 0], sizes = [1, 128], strides = [1, 1]} : vector<10x128xf32> to vector<1x128xf32>
    %340 = vector.extract_strided_slice %120 {offsets = [3, 0], sizes = [1, 128], strides = [1, 1]} : vector<10x128xf32> to vector<1x128xf32>
    %341 = vector.extract_strided_slice %148 {offsets = [3, 0], sizes = [1, 128], strides = [1, 1]} : vector<10x128xf32> to vector<1x128xf32>
    %342 = vector.extract_strided_slice %176 {offsets = [3, 0], sizes = [1, 128], strides = [1, 1]} : vector<10x128xf32> to vector<1x128xf32>
    %343 = vector.extract_strided_slice %204 {offsets = [3, 0], sizes = [1, 128], strides = [1, 1]} : vector<10x128xf32> to vector<1x128xf32>
    %344 = vector.extract_strided_slice %232 {offsets = [3, 0], sizes = [1, 128], strides = [1, 1]} : vector<10x128xf32> to vector<1x128xf32>
    %345 = vector.extract_strided_slice %260 {offsets = [3, 0], sizes = [1, 128], strides = [1, 1]} : vector<10x128xf32> to vector<1x128xf32>
    %346 = vector.extract_strided_slice %288 {offsets = [3, 0], sizes = [1, 128], strides = [1, 1]} : vector<10x128xf32> to vector<1x128xf32>
    %347 = tpu.concatenate %337, %338, %339, %340, %341, %342, %343, %344, %345, %346 in 0 : vector<1x128xf32>, vector<1x128xf32>, vector<1x128xf32>, vector<1x128xf32>, vector<1x128xf32>, vector<1x128xf32>, vector<1x128xf32>, vector<1x128xf32>, vector<1x128xf32>, vector<1x128xf32> -> vector<10x128xf32>
    %c3 = arith.constant 3 : index
    %c0_66 = arith.constant 0 : index
    %c0_67 = arith.constant 0 : index
    %348 = vector.load %arg6[%c3, %c0_66, %c0_67] : memref<10x128x10xf32, #tpu.memory_space<vmem>>, vector<1x128x10xf32>
    %349 = vector.shape_cast %348 : vector<1x128x10xf32> to vector<128x10xf32>
    %cst_68 = arith.constant dense<0.000000e+00> : vector<10x10xf32>
    %350 = tpu.matmul %347, %349, %cst_68 {dimension_numbers = #tpu.dot_dimension_numbers<[1], [0], [0], [1], [0, 0, 1, 1], [], []>} : vector<10x128xf32>, vector<128x10xf32>, vector<10x10xf32> -> vector<10x10xf32>
    %351 = arith.addf %336, %350 : vector<10x10xf32>
    %352 = vector.extract_strided_slice %36 {offsets = [4, 0], sizes = [1, 128], strides = [1, 1]} : vector<10x128xf32> to vector<1x128xf32>
    %353 = vector.extract_strided_slice %64 {offsets = [4, 0], sizes = [1, 128], strides = [1, 1]} : vector<10x128xf32> to vector<1x128xf32>
    %354 = vector.extract_strided_slice %92 {offsets = [4, 0], sizes = [1, 128], strides = [1, 1]} : vector<10x128xf32> to vector<1x128xf32>
    %355 = vector.extract_strided_slice %120 {offsets = [4, 0], sizes = [1, 128], strides = [1, 1]} : vector<10x128xf32> to vector<1x128xf32>
    %356 = vector.extract_strided_slice %148 {offsets = [4, 0], sizes = [1, 128], strides = [1, 1]} : vector<10x128xf32> to vector<1x128xf32>
    %357 = vector.extract_strided_slice %176 {offsets = [4, 0], sizes = [1, 128], strides = [1, 1]} : vector<10x128xf32> to vector<1x128xf32>
    %358 = vector.extract_strided_slice %204 {offsets = [4, 0], sizes = [1, 128], strides = [1, 1]} : vector<10x128xf32> to vector<1x128xf32>
    %359 = vector.extract_strided_slice %232 {offsets = [4, 0], sizes = [1, 128], strides = [1, 1]} : vector<10x128xf32> to vector<1x128xf32>
    %360 = vector.extract_strided_slice %260 {offsets = [4, 0], sizes = [1, 128], strides = [1, 1]} : vector<10x128xf32> to vector<1x128xf32>
    %361 = vector.extract_strided_slice %288 {offsets = [4, 0], sizes = [1, 128], strides = [1, 1]} : vector<10x128xf32> to vector<1x128xf32>
    %362 = tpu.concatenate %352, %353, %354, %355, %356, %357, %358, %359, %360, %361 in 0 : vector<1x128xf32>, vector<1x128xf32>, vector<1x128xf32>, vector<1x128xf32>, vector<1x128xf32>, vector<1x128xf32>, vector<1x128xf32>, vector<1x128xf32>, vector<1x128xf32>, vector<1x128xf32> -> vector<10x128xf32>
    %c4 = arith.constant 4 : index
    %c0_69 = arith.constant 0 : index
    %c0_70 = arith.constant 0 : index
    %363 = vector.load %arg6[%c4, %c0_69, %c0_70] : memref<10x128x10xf32, #tpu.memory_space<vmem>>, vector<1x128x10xf32>
    %364 = vector.shape_cast %363 : vector<1x128x10xf32> to vector<128x10xf32>
    %cst_71 = arith.constant dense<0.000000e+00> : vector<10x10xf32>
    %365 = tpu.matmul %362, %364, %cst_71 {dimension_numbers = #tpu.dot_dimension_numbers<[1], [0], [0], [1], [0, 0, 1, 1], [], []>} : vector<10x128xf32>, vector<128x10xf32>, vector<10x10xf32> -> vector<10x10xf32>
    %366 = arith.addf %351, %365 : vector<10x10xf32>
    %367 = vector.extract_strided_slice %36 {offsets = [5, 0], sizes = [1, 128], strides = [1, 1]} : vector<10x128xf32> to vector<1x128xf32>
    %368 = vector.extract_strided_slice %64 {offsets = [5, 0], sizes = [1, 128], strides = [1, 1]} : vector<10x128xf32> to vector<1x128xf32>
    %369 = vector.extract_strided_slice %92 {offsets = [5, 0], sizes = [1, 128], strides = [1, 1]} : vector<10x128xf32> to vector<1x128xf32>
    %370 = vector.extract_strided_slice %120 {offsets = [5, 0], sizes = [1, 128], strides = [1, 1]} : vector<10x128xf32> to vector<1x128xf32>
    %371 = vector.extract_strided_slice %148 {offsets = [5, 0], sizes = [1, 128], strides = [1, 1]} : vector<10x128xf32> to vector<1x128xf32>
    %372 = vector.extract_strided_slice %176 {offsets = [5, 0], sizes = [1, 128], strides = [1, 1]} : vector<10x128xf32> to vector<1x128xf32>
    %373 = vector.extract_strided_slice %204 {offsets = [5, 0], sizes = [1, 128], strides = [1, 1]} : vector<10x128xf32> to vector<1x128xf32>
    %374 = vector.extract_strided_slice %232 {offsets = [5, 0], sizes = [1, 128], strides = [1, 1]} : vector<10x128xf32> to vector<1x128xf32>
    %375 = vector.extract_strided_slice %260 {offsets = [5, 0], sizes = [1, 128], strides = [1, 1]} : vector<10x128xf32> to vector<1x128xf32>
    %376 = vector.extract_strided_slice %288 {offsets = [5, 0], sizes = [1, 128], strides = [1, 1]} : vector<10x128xf32> to vector<1x128xf32>
    %377 = tpu.concatenate %367, %368, %369, %370, %371, %372, %373, %374, %375, %376 in 0 : vector<1x128xf32>, vector<1x128xf32>, vector<1x128xf32>, vector<1x128xf32>, vector<1x128xf32>, vector<1x128xf32>, vector<1x128xf32>, vector<1x128xf32>, vector<1x128xf32>, vector<1x128xf32> -> vector<10x128xf32>
    %c5 = arith.constant 5 : index
    %c0_72 = arith.constant 0 : index
    %c0_73 = arith.constant 0 : index
    %378 = vector.load %arg6[%c5, %c0_72, %c0_73] : memref<10x128x10xf32, #tpu.memory_space<vmem>>, vector<1x128x10xf32>
    %379 = vector.shape_cast %378 : vector<1x128x10xf32> to vector<128x10xf32>
    %cst_74 = arith.constant dense<0.000000e+00> : vector<10x10xf32>
    %380 = tpu.matmul %377, %379, %cst_74 {dimension_numbers = #tpu.dot_dimension_numbers<[1], [0], [0], [1], [0, 0, 1, 1], [], []>} : vector<10x128xf32>, vector<128x10xf32>, vector<10x10xf32> -> vector<10x10xf32>
    %381 = arith.addf %366, %380 : vector<10x10xf32>
    %382 = vector.extract_strided_slice %36 {offsets = [6, 0], sizes = [1, 128], strides = [1, 1]} : vector<10x128xf32> to vector<1x128xf32>
    %383 = vector.extract_strided_slice %64 {offsets = [6, 0], sizes = [1, 128], strides = [1, 1]} : vector<10x128xf32> to vector<1x128xf32>
    %384 = vector.extract_strided_slice %92 {offsets = [6, 0], sizes = [1, 128], strides = [1, 1]} : vector<10x128xf32> to vector<1x128xf32>
    %385 = vector.extract_strided_slice %120 {offsets = [6, 0], sizes = [1, 128], strides = [1, 1]} : vector<10x128xf32> to vector<1x128xf32>
    %386 = vector.extract_strided_slice %148 {offsets = [6, 0], sizes = [1, 128], strides = [1, 1]} : vector<10x128xf32> to vector<1x128xf32>
    %387 = vector.extract_strided_slice %176 {offsets = [6, 0], sizes = [1, 128], strides = [1, 1]} : vector<10x128xf32> to vector<1x128xf32>
    %388 = vector.extract_strided_slice %204 {offsets = [6, 0], sizes = [1, 128], strides = [1, 1]} : vector<10x128xf32> to vector<1x128xf32>
    %389 = vector.extract_strided_slice %232 {offsets = [6, 0], sizes = [1, 128], strides = [1, 1]} : vector<10x128xf32> to vector<1x128xf32>
    %390 = vector.extract_strided_slice %260 {offsets = [6, 0], sizes = [1, 128], strides = [1, 1]} : vector<10x128xf32> to vector<1x128xf32>
    %391 = vector.extract_strided_slice %288 {offsets = [6, 0], sizes = [1, 128], strides = [1, 1]} : vector<10x128xf32> to vector<1x128xf32>
    %392 = tpu.concatenate %382, %383, %384, %385, %386, %387, %388, %389, %390, %391 in 0 : vector<1x128xf32>, vector<1x128xf32>, vector<1x128xf32>, vector<1x128xf32>, vector<1x128xf32>, vector<1x128xf32>, vector<1x128xf32>, vector<1x128xf32>, vector<1x128xf32>, vector<1x128xf32> -> vector<10x128xf32>
    %c6 = arith.constant 6 : index
    %c0_75 = arith.constant 0 : index
    %c0_76 = arith.constant 0 : index
    %393 = vector.load %arg6[%c6, %c0_75, %c0_76] : memref<10x128x10xf32, #tpu.memory_space<vmem>>, vector<1x128x10xf32>
    %394 = vector.shape_cast %393 : vector<1x128x10xf32> to vector<128x10xf32>
    %cst_77 = arith.constant dense<0.000000e+00> : vector<10x10xf32>
    %395 = tpu.matmul %392, %394, %cst_77 {dimension_numbers = #tpu.dot_dimension_numbers<[1], [0], [0], [1], [0, 0, 1, 1], [], []>} : vector<10x128xf32>, vector<128x10xf32>, vector<10x10xf32> -> vector<10x10xf32>
    %396 = arith.addf %381, %395 : vector<10x10xf32>
    %397 = vector.extract_strided_slice %36 {offsets = [7, 0], sizes = [1, 128], strides = [1, 1]} : vector<10x128xf32> to vector<1x128xf32>
    %398 = vector.extract_strided_slice %64 {offsets = [7, 0], sizes = [1, 128], strides = [1, 1]} : vector<10x128xf32> to vector<1x128xf32>
    %399 = vector.extract_strided_slice %92 {offsets = [7, 0], sizes = [1, 128], strides = [1, 1]} : vector<10x128xf32> to vector<1x128xf32>
    %400 = vector.extract_strided_slice %120 {offsets = [7, 0], sizes = [1, 128], strides = [1, 1]} : vector<10x128xf32> to vector<1x128xf32>
    %401 = vector.extract_strided_slice %148 {offsets = [7, 0], sizes = [1, 128], strides = [1, 1]} : vector<10x128xf32> to vector<1x128xf32>
    %402 = vector.extract_strided_slice %176 {offsets = [7, 0], sizes = [1, 128], strides = [1, 1]} : vector<10x128xf32> to vector<1x128xf32>
    %403 = vector.extract_strided_slice %204 {offsets = [7, 0], sizes = [1, 128], strides = [1, 1]} : vector<10x128xf32> to vector<1x128xf32>
    %404 = vector.extract_strided_slice %232 {offsets = [7, 0], sizes = [1, 128], strides = [1, 1]} : vector<10x128xf32> to vector<1x128xf32>
    %405 = vector.extract_strided_slice %260 {offsets = [7, 0], sizes = [1, 128], strides = [1, 1]} : vector<10x128xf32> to vector<1x128xf32>
    %406 = vector.extract_strided_slice %288 {offsets = [7, 0], sizes = [1, 128], strides = [1, 1]} : vector<10x128xf32> to vector<1x128xf32>
    %407 = tpu.concatenate %397, %398, %399, %400, %401, %402, %403, %404, %405, %406 in 0 : vector<1x128xf32>, vector<1x128xf32>, vector<1x128xf32>, vector<1x128xf32>, vector<1x128xf32>, vector<1x128xf32>, vector<1x128xf32>, vector<1x128xf32>, vector<1x128xf32>, vector<1x128xf32> -> vector<10x128xf32>
    %c7 = arith.constant 7 : index
    %c0_78 = arith.constant 0 : index
    %c0_79 = arith.constant 0 : index
    %408 = vector.load %arg6[%c7, %c0_78, %c0_79] : memref<10x128x10xf32, #tpu.memory_space<vmem>>, vector<1x128x10xf32>
    %409 = vector.shape_cast %408 : vector<1x128x10xf32> to vector<128x10xf32>
    %cst_80 = arith.constant dense<0.000000e+00> : vector<10x10xf32>
    %410 = tpu.matmul %407, %409, %cst_80 {dimension_numbers = #tpu.dot_dimension_numbers<[1], [0], [0], [1], [0, 0, 1, 1], [], []>} : vector<10x128xf32>, vector<128x10xf32>, vector<10x10xf32> -> vector<10x10xf32>
    %411 = arith.addf %396, %410 : vector<10x10xf32>
    %412 = vector.extract_strided_slice %36 {offsets = [8, 0], sizes = [1, 128], strides = [1, 1]} : vector<10x128xf32> to vector<1x128xf32>
    %413 = vector.extract_strided_slice %64 {offsets = [8, 0], sizes = [1, 128], strides = [1, 1]} : vector<10x128xf32> to vector<1x128xf32>
    %414 = vector.extract_strided_slice %92 {offsets = [8, 0], sizes = [1, 128], strides = [1, 1]} : vector<10x128xf32> to vector<1x128xf32>
    %415 = vector.extract_strided_slice %120 {offsets = [8, 0], sizes = [1, 128], strides = [1, 1]} : vector<10x128xf32> to vector<1x128xf32>
    %416 = vector.extract_strided_slice %148 {offsets = [8, 0], sizes = [1, 128], strides = [1, 1]} : vector<10x128xf32> to vector<1x128xf32>
    %417 = vector.extract_strided_slice %176 {offsets = [8, 0], sizes = [1, 128], strides = [1, 1]} : vector<10x128xf32> to vector<1x128xf32>
    %418 = vector.extract_strided_slice %204 {offsets = [8, 0], sizes = [1, 128], strides = [1, 1]} : vector<10x128xf32> to vector<1x128xf32>
    %419 = vector.extract_strided_slice %232 {offsets = [8, 0], sizes = [1, 128], strides = [1, 1]} : vector<10x128xf32> to vector<1x128xf32>
    %420 = vector.extract_strided_slice %260 {offsets = [8, 0], sizes = [1, 128], strides = [1, 1]} : vector<10x128xf32> to vector<1x128xf32>
    %421 = vector.extract_strided_slice %288 {offsets = [8, 0], sizes = [1, 128], strides = [1, 1]} : vector<10x128xf32> to vector<1x128xf32>
    %422 = tpu.concatenate %412, %413, %414, %415, %416, %417, %418, %419, %420, %421 in 0 : vector<1x128xf32>, vector<1x128xf32>, vector<1x128xf32>, vector<1x128xf32>, vector<1x128xf32>, vector<1x128xf32>, vector<1x128xf32>, vector<1x128xf32>, vector<1x128xf32>, vector<1x128xf32> -> vector<10x128xf32>
    %c8 = arith.constant 8 : index
    %c0_81 = arith.constant 0 : index
    %c0_82 = arith.constant 0 : index
    %423 = vector.load %arg6[%c8, %c0_81, %c0_82] : memref<10x128x10xf32, #tpu.memory_space<vmem>>, vector<1x128x10xf32>
    %424 = vector.shape_cast %423 : vector<1x128x10xf32> to vector<128x10xf32>
    %cst_83 = arith.constant dense<0.000000e+00> : vector<10x10xf32>
    %425 = tpu.matmul %422, %424, %cst_83 {dimension_numbers = #tpu.dot_dimension_numbers<[1], [0], [0], [1], [0, 0, 1, 1], [], []>} : vector<10x128xf32>, vector<128x10xf32>, vector<10x10xf32> -> vector<10x10xf32>
    %426 = arith.addf %411, %425 : vector<10x10xf32>
    %427 = vector.extract_strided_slice %36 {offsets = [9, 0], sizes = [1, 128], strides = [1, 1]} : vector<10x128xf32> to vector<1x128xf32>
    %428 = vector.extract_strided_slice %64 {offsets = [9, 0], sizes = [1, 128], strides = [1, 1]} : vector<10x128xf32> to vector<1x128xf32>
    %429 = vector.extract_strided_slice %92 {offsets = [9, 0], sizes = [1, 128], strides = [1, 1]} : vector<10x128xf32> to vector<1x128xf32>
    %430 = vector.extract_strided_slice %120 {offsets = [9, 0], sizes = [1, 128], strides = [1, 1]} : vector<10x128xf32> to vector<1x128xf32>
    %431 = vector.extract_strided_slice %148 {offsets = [9, 0], sizes = [1, 128], strides = [1, 1]} : vector<10x128xf32> to vector<1x128xf32>
    %432 = vector.extract_strided_slice %176 {offsets = [9, 0], sizes = [1, 128], strides = [1, 1]} : vector<10x128xf32> to vector<1x128xf32>
    %433 = vector.extract_strided_slice %204 {offsets = [9, 0], sizes = [1, 128], strides = [1, 1]} : vector<10x128xf32> to vector<1x128xf32>
    %434 = vector.extract_strided_slice %232 {offsets = [9, 0], sizes = [1, 128], strides = [1, 1]} : vector<10x128xf32> to vector<1x128xf32>
    %435 = vector.extract_strided_slice %260 {offsets = [9, 0], sizes = [1, 128], strides = [1, 1]} : vector<10x128xf32> to vector<1x128xf32>
    %436 = vector.extract_strided_slice %288 {offsets = [9, 0], sizes = [1, 128], strides = [1, 1]} : vector<10x128xf32> to vector<1x128xf32>
    %437 = tpu.concatenate %427, %428, %429, %430, %431, %432, %433, %434, %435, %436 in 0 : vector<1x128xf32>, vector<1x128xf32>, vector<1x128xf32>, vector<1x128xf32>, vector<1x128xf32>, vector<1x128xf32>, vector<1x128xf32>, vector<1x128xf32>, vector<1x128xf32>, vector<1x128xf32> -> vector<10x128xf32>
    %c9 = arith.constant 9 : index
    %c0_84 = arith.constant 0 : index
    %c0_85 = arith.constant 0 : index
    %438 = vector.load %arg6[%c9, %c0_84, %c0_85] : memref<10x128x10xf32, #tpu.memory_space<vmem>>, vector<1x128x10xf32>
    %439 = vector.shape_cast %438 : vector<1x128x10xf32> to vector<128x10xf32>
    %cst_86 = arith.constant dense<0.000000e+00> : vector<10x10xf32>
    %440 = tpu.matmul %437, %439, %cst_86 {dimension_numbers = #tpu.dot_dimension_numbers<[1], [0], [0], [1], [0, 0, 1, 1], [], []>} : vector<10x128xf32>, vector<128x10xf32>, vector<10x10xf32> -> vector<10x10xf32>
    %441 = arith.addf %426, %440 : vector<10x10xf32>
    %c0_87 = arith.constant 0 : index
    %c0_88 = arith.constant 0 : index
    %442 = vector.load %arg7[%c0_87, %c0_88] : memref<1x10xf32, #tpu.memory_space<vmem>>, vector<1x10xf32>
    %443 = vector.broadcast %442 : vector<1x10xf32> to vector<10x10xf32>
    %444 = arith.addf %441, %443 : vector<10x10xf32>
    %cst_89 = arith.constant 0.000000e+00 : f32
    %445 = vector.broadcast %cst_89 : f32 to vector<10x10xf32>
    %446 = arith.maximumf %444, %445 : vector<10x10xf32>
    %c0_90 = arith.constant 0 : index
    %c0_91 = arith.constant 0 : index
    %447 = vector.load %arg8[%c0_90, %c0_91] : memref<10x6xf32, #tpu.memory_space<vmem>>, vector<10x6xf32>
    %cst_92 = arith.constant dense<0.000000e+00> : vector<10x6xf32>
    %448 = tpu.matmul %446, %447, %cst_92 {dimension_numbers = #tpu.dot_dimension_numbers<[1], [0], [0], [1], [0, 0, 1, 1], [], []>} : vector<10x10xf32>, vector<10x6xf32>, vector<10x6xf32> -> vector<10x6xf32>
    %c0_93 = arith.constant 0 : index
    %c0_94 = arith.constant 0 : index
    %449 = vector.load %arg9[%c0_93, %c0_94] : memref<1x6xf32, #tpu.memory_space<vmem>>, vector<1x6xf32>
    %450 = vector.broadcast %449 : vector<1x6xf32> to vector<10x6xf32>
    %451 = arith.addf %448, %450 : vector<10x6xf32>
    %c0_95 = arith.constant 0 : index
    %c0_96 = arith.constant 0 : index
    %452 = vector.load %arg10[%c0_95, %c0_96] : memref<10x6xf32, #tpu.memory_space<vmem>>, vector<10x6xf32>
    tpu.vector_store %arg10[%c0_95, %c0_96], %451 {strides = array<i32>} : memref<10x6xf32, #tpu.memory_space<vmem>>, vector<10x6xf32>,
    return
  }
}

</mosaic_0001>

<llo_original>
// kernel: lstm_dqn_forward.3
$region0: #{lstm_dqn_forward.3}
  #allocation0 [shape = 'u32[]', space=smem, size = 0x4, offset = 0x4, fixed_abs, tag = 'smem constant byte address 0x4 - core index']
  #allocation1 [shape = 'u32[144,128]{1,0:T(1,128)}', space=vmem, size = 0x12000, scoped, tag = 'internal scratch']
  %s0 = inlined_call_operand.vmem [shape: f32[100,32], index: 0, kind: input, shape index: {}]
  %s1 = inlined_call_operand.vmem [shape: f32[10,128], index: 1, kind: input, shape index: {}]
  %s2 = inlined_call_operand.vmem [shape: f32[10,128], index: 2, kind: input, shape index: {}]
  %s3 = inlined_call_operand.vmem [shape: f32[32,512], index: 3, kind: input, shape index: {}]
  %s4 = inlined_call_operand.vmem [shape: f32[128,512], index: 4, kind: input, shape index: {}]
  %s5 = inlined_call_operand.vmem [shape: f32[1,512], index: 5, kind: input, shape index: {}]
  %s6 = inlined_call_operand.vmem [shape: f32[10,128,10], index: 6, kind: input, shape index: {}]
  %s7 = inlined_call_operand.vmem [shape: f32[1,10], index: 7, kind: input, shape index: {}]
  %s8 = inlined_call_operand.vmem [shape: f32[10,6], index: 8, kind: input, shape index: {}]
  %s9 = inlined_call_operand.vmem [shape: f32[1,6], index: 9, kind: input, shape index: {}]
  %s10 = inlined_call_operand.vmem [shape: f32[10,6], index: 10, kind: output, shape index: {0}]
  %s11 = inlined_call_operand.vmem [shape: f32[10,128], index: 11, kind: output, shape index: {1}]
  %s12 = inlined_call_operand.vmem [shape: f32[10,128], index: 12, kind: output, shape index: {2}]
  %13 = xla_tuple %s10, %s11, %s12
  %s14 = sld [smem:[#allocation0]]
  $region66: #{lstm_dqn_forward.3} parent=0
    _
  %s16 = ssub.s32 1, %s14
  %s17 = scalar_select 0, %s16, %s14
  // Predicated region
  $region2: #{lstm_dqn_forward.3} parent=0 // pred_check
    _
  $region3: #{lstm_dqn_forward.3} parent=0 // pred_check_branch
    %19 = sbr.rel (0) target = $region5
  $region4: #{lstm_dqn_forward.3} parent=0 // pred_region
    _
  $region5: #{lstm_dqn_forward.3} parent=0 // pred_fallthru
    _
  // Predicated region
  $region6: #{lstm_dqn_forward.3} parent=0 // pred_check
    _
  $region7: #{lstm_dqn_forward.3} parent=0 // pred_check_branch
    %21 = sbr.rel (0) target = $region9
  $region8: #{lstm_dqn_forward.3} parent=0 // pred_region
    _
  $region9: #{lstm_dqn_forward.3} parent=0 // pred_fallthru
    _
  // Predicated region
  $region10: #{lstm_dqn_forward.3} parent=0 // pred_check
    _
  $region11: #{lstm_dqn_forward.3} parent=0 // pred_check_branch
    %23 = sbr.rel (0) target = $region13
  $region12: #{lstm_dqn_forward.3} parent=0 // pred_region
    _
  $region13: #{lstm_dqn_forward.3} parent=0 // pred_fallthru
    _
  // Predicated region
  $region14: #{lstm_dqn_forward.3} parent=0 // pred_check
    _
  $region15: #{lstm_dqn_forward.3} parent=0 // pred_check_branch
    %25 = sbr.rel (0) target = $region17
  $region16: #{lstm_dqn_forward.3} parent=0 // pred_region
    _
  $region17: #{lstm_dqn_forward.3} parent=0 // pred_fallthru
    _
  // Predicated region
  $region18: #{lstm_dqn_forward.3} parent=0 // pred_check
    _
  $region19: #{lstm_dqn_forward.3} parent=0 // pred_check_branch
    %27 = sbr.rel (0) target = $region21
  $region20: #{lstm_dqn_forward.3} parent=0 // pred_region
    _
  $region21: #{lstm_dqn_forward.3} parent=0 // pred_fallthru
    _
  // Predicated region
  $region22: #{lstm_dqn_forward.3} parent=0 // pred_check
    _
  $region23: #{lstm_dqn_forward.3} parent=0 // pred_check_branch
    %29 = sbr.rel (0) target = $region25
  $region24: #{lstm_dqn_forward.3} parent=0 // pred_region
    _
  $region25: #{lstm_dqn_forward.3} parent=0 // pred_fallthru
    _
  // Predicated region
  $region26: #{lstm_dqn_forward.3} parent=0 // pred_check
    _
  $region27: #{lstm_dqn_forward.3} parent=0 // pred_check_branch
    %31 = sbr.rel (0) target = $region29
  $region28: #{lstm_dqn_forward.3} parent=0 // pred_region
    _
  $region29: #{lstm_dqn_forward.3} parent=0 // pred_fallthru
    _
  // Predicated region
  $region30: #{lstm_dqn_forward.3} parent=0 // pred_check
    _
  $region31: #{lstm_dqn_forward.3} parent=0 // pred_check_branch
    %33 = sbr.rel (0) target = $region33
  $region32: #{lstm_dqn_forward.3} parent=0 // pred_region
    _
  $region33: #{lstm_dqn_forward.3} parent=0 // pred_fallthru
    _
  // Predicated region
  $region34: #{lstm_dqn_forward.3} parent=0 // pred_check
    _
  $region35: #{lstm_dqn_forward.3} parent=0 // pred_check_branch
    %35 = sbr.rel (0) target = $region37
  $region36: #{lstm_dqn_forward.3} parent=0 // pred_region
    _
  $region37: #{lstm_dqn_forward.3} parent=0 // pred_fallthru
    _
  // Predicated region
  $region38: #{lstm_dqn_forward.3} parent=0 // pred_check
    _
  $region39: #{lstm_dqn_forward.3} parent=0 // pred_check_branch
    %37 = sbr.rel (0) target = $region41
  $region40: #{lstm_dqn_forward.3} parent=0 // pred_region
    _
  $region41: #{lstm_dqn_forward.3} parent=0 // pred_fallthru
    _
  %v38 = vld [vmem:[%s0] sm:$0xff]
  %v39 = vld [vmem:[%s0 + $0x8] sm:$0xff]
  %v40 = vld [vmem:[%s0 + $0x10] sm:$0xff]
  %v41 = vld [vmem:[%s0 + $0x18] sm:$0xff]
  %v42 = vld [vmem:[%s0 + $0x20] sm:$0xff]
  %v43 = vld [vmem:[%s0 + $0x28] sm:$0xff]
  %v44 = vld [vmem:[%s0 + $0x30] sm:$0xff]
  %v45 = vld [vmem:[%s0 + $0x38] sm:$0xff]
  %v46 = vld [vmem:[%s0 + $0x40] sm:$0xff]
  %v47 = vld [vmem:[%s0 + $0x48] sm:$0xff]
  %v48 = vld [vmem:[%s0 + $0x50] sm:$0xff]
  %v49 = vld [vmem:[%s0 + $0x58] sm:$0xff]
  %v50 = vld [vmem:[%s0 + $0x60] sm:$0xf]
  %v51 = vld [vmem:[%s3] sm:$0xff]
  %v52 = vld [vmem:[%s3 + $0x8] sm:$0xff]
  %v53 = vld [vmem:[%s3 + $0x10] sm:$0xff]
  %v54 = vld [vmem:[%s3 + $0x18] sm:$0xff]
  %v55 = vld [vmem:[%s3 + $0x20] sm:$0xff]
  %v56 = vld [vmem:[%s3 + $0x28] sm:$0xff]
  %v57 = vld [vmem:[%s3 + $0x30] sm:$0xff]
  %v58 = vld [vmem:[%s3 + $0x38] sm:$0xff]
  %v59 = vld [vmem:[%s3 + $0x40] sm:$0xff]
  %v60 = vld [vmem:[%s3 + $0x48] sm:$0xff]
  %v61 = vld [vmem:[%s3 + $0x50] sm:$0xff]
  %v62 = vld [vmem:[%s3 + $0x58] sm:$0xff]
  %v63 = vld [vmem:[%s3 + $0x60] sm:$0xff]
  %v64 = vld [vmem:[%s3 + $0x68] sm:$0xff]
  %v65 = vld [vmem:[%s3 + $0x70] sm:$0xff]
  %v66 = vld [vmem:[%s3 + $0x78] sm:$0xff]
  %v67 = vld [vmem:[%s5] sm:$0xf]
  %v69 = vlaneseq
  %v70 = vshrl.u32 %v69, 7
  %v71 = vsub.s32 0, %v70
  %v72 = vrot.slane %v67, %v71
  %v73 = vlaneseq
  %v74 = vshrl.u32 %v73, 7
  %v75 = vsub.s32 1, %v74
  %v76 = vrot.slane %v67, %v75
  %v77 = vlaneseq
  %v78 = vshrl.u32 %v77, 7
  %v79 = vsub.s32 2, %v78
  %v80 = vrot.slane %v67, %v79
  %v81 = vlaneseq
  %v82 = vshrl.u32 %v81, 7
  %v83 = vsub.s32 3, %v82
  %v84 = vrot.slane %v67, %v83
  %vm89 = vcmask 261120
  %v91 = vsel %vm89, %v38, 0
  %v94 = vsel %vm89, %v39, 0
  %v97 = vsel %vm89, %v40, 0
  %v100 = vsel %vm89, %v41, 0
  %v103 = vsel %vm89, %v42, 0
  %v106 = vsel %vm89, %v43, 0
  %v109 = vsel %vm89, %v44, 0
  %v112 = vsel %vm89, %v45, 0
  %v115 = vsel %vm89, %v46, 0
  %v118 = vsel %vm89, %v47, 0
  %v121 = vsel %vm89, %v48, 0
  %v124 = vsel %vm89, %v49, 0
  %v127 = vsel %vm89, %v50, 0
  %129 = vmatprep.subr.mxu0 %v52
  %130 = vmatpush1.msra.mxu0 %v51
  %131 = vmatprep.subr.mxu0 %v56
  %132 = vmatpush1.msra.mxu0 %v55
  %133 = vmatprep.subr.mxu0 %v60
  %134 = vmatpush1.msra.mxu0 %v59
  %135 = vmatprep.subr.mxu0 %v64
  %136 = vmatpush1.msra.mxu0 %v63
  %137 = vmatprep.subr.mxu0 0.0
  %138 = vmatpush1.msra.mxu0 0.0
  %139 = vmatprep.subr.mxu0 0.0
  %140 = vmatpush1.msra.mxu0 0.0
  %141 = vmatprep.subr.mxu0 0.0
  %142 = vmatpush1.msra.mxu0 0.0
  %143 = vmatprep.subr.mxu0 0.0
  %144 = vmatpush1.msra.mxu0 0.0
  %145 = vmatprep.subr.mxu0 0.0
  %146 = vmatpush1.msra.mxu0 0.0
  %147 = vmatprep.subr.mxu0 0.0
  %148 = vmatpush1.msra.mxu0 0.0
  %149 = vmatprep.subr.mxu0 0.0
  %150 = vmatpush1.msra.mxu0 0.0
  %151 = vmatprep.subr.mxu0 0.0
  %152 = vmatpush1.msra.mxu0 0.0
  %153 = vmatprep.subr.mxu0 0.0
  %154 = vmatpush1.msra.mxu0 0.0
  %155 = vmatprep.subr.mxu0 0.0
  %156 = vmatpush1.msra.mxu0 0.0
  %157 = vmatprep.subr.mxu0 0.0
  %158 = vmatpush1.msra.mxu0 0.0
  %159 = vmatprep.subr.mxu0 0.0
  %160 = vmatpush1.msra.mxu0 0.0
  %161 = vmatprep.subr.mxu0 0.0
  %162 = vmatpush1.msra.mxu0 0.0
  %163 = vmatprep.subr.mxu0 0.0
  %164 = vmatpush1.msra.mxu0 0.0
  %165 = vmatprep.subr.mxu0 0.0
  %166 = vmatpush1.msra.mxu0 0.0
  %167 = vmatprep.subr.mxu0 0.0
  %168 = vmatpush1.msra.mxu0 0.0
  %169 = vmatprep.subr.mxu0 0.0
  %170 = vmatpush1.msra.mxu0 0.0
  %171 = vmatprep.subr.mxu0 0.0
  %172 = vmatpush1.msra.mxu0 0.0
  %173 = vmatprep.subr.mxu0 0.0
  %174 = vmatpush1.msra.mxu0 0.0
  %175 = vmatprep.subr.mxu0 0.0
  %176 = vmatpush1.msra.mxu0 0.0
  %177 = vmatprep.subr.mxu0 0.0
  %178 = vmatpush1.msra.mxu0 0.0
  %179 = vmatprep.subr.mxu0 0.0
  %180 = vmatpush1.msra.mxu0 0.0
  %181 = vmatprep.subr.mxu0 0.0
  %182 = vmatpush1.msra.mxu0 0.0
  %183 = vmatprep.subr.mxu0 0.0
  %184 = vmatpush1.msra.mxu0 0.0
  %185 = vmatprep.subr.mxu0 0.0
  %186 = vmatpush1.msra.mxu0 0.0
  %187 = vmatprep.subr.mxu0 0.0
  %188 = vmatpush1.msra.mxu0 0.0
  %189 = vmatprep.subr.mxu0 0.0
  %190 = vmatpush1.msra.mxu0 0.0
  %191 = vmatprep.subr.mxu0 0.0
  %192 = vmatpush1.msra.mxu0 0.0
  %193 = vmatprep.mubr.f32.mxu0 0.0
  %194 = vmatmul.mubr.f32.gmra.mrb[0].mxu0 %v91
  %v195 = vpop.f32.mrb[0].mxu0
  %v196 = vadd.f32 %v72, %v195
  %v197 = vpop.f32.mrb[0].mxu0
  %v198 = vadd.f32 %v76, %v197
  %199 = vmatprep.mubr.f32.mxu0 0.0
  %200 = vmatmul.mubr.f32.gmra.mrb[0].mxu0 %v94
  %v201 = vpop.f32.mrb[0].mxu0
  %v202 = vadd.f32 %v72, %v201
  %v203 = vpop.f32.mrb[0].mxu0
  %v204 = vadd.f32 %v76, %v203
  %205 = vmatprep.mubr.f32.mxu0 0.0
  %206 = vmatmul.mubr.f32.gmra.mrb[0].mxu0 %v97
  %v207 = vpop.f32.mrb[0].mxu0
  %v208 = vadd.f32 %v72, %v207
  %v209 = vpop.f32.mrb[0].mxu0
  %v210 = vadd.f32 %v76, %v209
  %211 = vmatprep.mubr.f32.mxu0 0.0
  %212 = vmatmul.mubr.f32.gmra.mrb[0].mxu0 %v100
  %v213 = vpop.f32.mrb[0].mxu0
  %v214 = vadd.f32 %v72, %v213
  %v215 = vpop.f32.mrb[0].mxu0
  %v216 = vadd.f32 %v76, %v215
  %217 = vmatprep.mubr.f32.mxu0 0.0
  %218 = vmatmul.mubr.f32.gmra.mrb[0].mxu0 %v103
  %v219 = vpop.f32.mrb[0].mxu0
  %v220 = vadd.f32 %v72, %v219
  %v221 = vpop.f32.mrb[0].mxu0
  %v222 = vadd.f32 %v76, %v221
  %223 = vmatprep.mubr.f32.mxu0 0.0
  %224 = vmatmul.mubr.f32.gmra.mrb[0].mxu0 %v106
  %v225 = vpop.f32.mrb[0].mxu0
  %v226 = vadd.f32 %v72, %v225
  %v227 = vpop.f32.mrb[0].mxu0
  %v228 = vadd.f32 %v76, %v227
  %229 = vmatprep.mubr.f32.mxu0 0.0
  %230 = vmatmul.mubr.f32.gmra.mrb[0].mxu0 %v109
  %v231 = vpop.f32.mrb[0].mxu0
  %v232 = vadd.f32 %v72, %v231
  %v233 = vpop.f32.mrb[0].mxu0
  %v234 = vadd.f32 %v76, %v233
  %235 = vmatprep.mubr.f32.mxu0 0.0
  %236 = vmatmul.mubr.f32.gmra.mrb[0].mxu0 %v112
  %v237 = vpop.f32.mrb[0].mxu0
  %v238 = vadd.f32 %v72, %v237
  %v239 = vpop.f32.mrb[0].mxu0
  %v240 = vadd.f32 %v76, %v239
  %241 = vmatprep.mubr.f32.mxu0 0.0
  %242 = vmatmul.mubr.f32.gmra.mrb[0].mxu0 %v115
  %v243 = vpop.f32.mrb[0].mxu0
  %v244 = vadd.f32 %v72, %v243
  %v245 = vpop.f32.mrb[0].mxu0
  %v246 = vadd.f32 %v76, %v245
  %247 = vmatprep.mubr.f32.mxu0 0.0
  %248 = vmatmul.mubr.f32.gmra.mrb[0].mxu0 %v118
  %v249 = vpop.f32.mrb[0].mxu0
  %v250 = vadd.f32 %v72, %v249
  %v251 = vpop.f32.mrb[0].mxu0
  %v252 = vadd.f32 %v76, %v251
  %253 = vmatprep.mubr.f32.mxu0 0.0
  %254 = vmatmul.mubr.f32.gmra.mrb[0].mxu0 %v121
  %v255 = vpop.f32.mrb[0].mxu0
  %v256 = vadd.f32 %v72, %v255
  %v257 = vpop.f32.mrb[0].mxu0
  %v258 = vadd.f32 %v76, %v257
  %259 = vmatprep.mubr.f32.mxu0 0.0
  %260 = vmatmul.mubr.f32.gmra.mrb[0].mxu0 %v124
  %v261 = vpop.f32.mrb[0].mxu0
  %v262 = vadd.f32 %v72, %v261
  %v263 = vpop.f32.mrb[0].mxu0
  %v264 = vadd.f32 %v76, %v263
  %265 = vmatprep.mubr.f32.mxu0 0.0
  %266 = vmatmul.mubr.f32.gmra.mrb[0].mxu0 %v127
  %v267 = vpop.f32.mrb[0].mxu0
  %v268 = vadd.f32 %v72, %v267
  %v269 = vpop.f32.mrb[0].mxu0
  %v270 = vadd.f32 %v76, %v269
  %271 = vdwg.mxu0
  %272 = vmatprep.subr.mxu0 %v54
  %273 = vmatpush1.msra.mxu0 %v53
  %274 = vmatprep.subr.mxu0 %v58
  %275 = vmatpush1.msra.mxu0 %v57
  %276 = vmatprep.subr.mxu0 %v62
  %277 = vmatpush1.msra.mxu0 %v61
  %278 = vmatprep.subr.mxu0 %v66
  %279 = vmatpush1.msra.mxu0 %v65
  %280 = vmatprep.subr.mxu0 0.0
  %281 = vmatpush1.msra.mxu0 0.0
  %282 = vmatprep.subr.mxu0 0.0
  %283 = vmatpush1.msra.mxu0 0.0
  %284 = vmatprep.subr.mxu0 0.0
  %285 = vmatpush1.msra.mxu0 0.0
  %286 = vmatprep.subr.mxu0 0.0
  %287 = vmatpush1.msra.mxu0 0.0
  %288 = vmatprep.subr.mxu0 0.0
  %289 = vmatpush1.msra.mxu0 0.0
  %290 = vmatprep.subr.mxu0 0.0
  %291 = vmatpush1.msra.mxu0 0.0
  %292 = vmatprep.subr.mxu0 0.0
  %293 = vmatpush1.msra.mxu0 0.0
  %294 = vmatprep.subr.mxu0 0.0
  %295 = vmatpush1.msra.mxu0 0.0
  %296 = vmatprep.subr.mxu0 0.0
  %297 = vmatpush1.msra.mxu0 0.0
  %298 = vmatprep.subr.mxu0 0.0
  %299 = vmatpush1.msra.mxu0 0.0
  %300 = vmatprep.subr.mxu0 0.0
  %301 = vmatpush1.msra.mxu0 0.0
  %302 = vmatprep.subr.mxu0 0.0
  %303 = vmatpush1.msra.mxu0 0.0
  %304 = vmatprep.subr.mxu0 0.0
  %305 = vmatpush1.msra.mxu0 0.0
  %306 = vmatprep.subr.mxu0 0.0
  %307 = vmatpush1.msra.mxu0 0.0
  %308 = vmatprep.subr.mxu0 0.0
  %309 = vmatpush1.msra.mxu0 0.0
  %310 = vmatprep.subr.mxu0 0.0
  %311 = vmatpush1.msra.mxu0 0.0
  %312 = vmatprep.subr.mxu0 0.0
  %313 = vmatpush1.msra.mxu0 0.0
  %314 = vmatprep.subr.mxu0 0.0
  %315 = vmatpush1.msra.mxu0 0.0
  %316 = vmatprep.subr.mxu0 0.0
  %317 = vmatpush1.msra.mxu0 0.0
  %318 = vmatprep.subr.mxu0 0.0
  %319 = vmatpush1.msra.mxu0 0.0
  %320 = vmatprep.subr.mxu0 0.0
  %321 = vmatpush1.msra.mxu0 0.0
  %322 = vmatprep.subr.mxu0 0.0
  %323 = vmatpush1.msra.mxu0 0.0
  %324 = vmatprep.subr.mxu0 0.0
  %325 = vmatpush1.msra.mxu0 0.0
  %326 = vmatprep.subr.mxu0 0.0
  %327 = vmatpush1.msra.mxu0 0.0
  %328 = vmatprep.subr.mxu0 0.0
  %329 = vmatpush1.msra.mxu0 0.0
  %330 = vmatprep.subr.mxu0 0.0
  %331 = vmatpush1.msra.mxu0 0.0
  %332 = vmatprep.subr.mxu0 0.0
  %333 = vmatpush1.msra.mxu0 0.0
  %334 = vmatprep.subr.mxu0 0.0
  %335 = vmatpush1.msra.mxu0 0.0
  %336 = vmatprep.mubr.f32.mxu0 0.0
  %337 = vmatmul.mubr.f32.gmra.mrb[0].mxu0 %v91
  %v338 = vpop.f32.mrb[0].mxu0
  %v339 = vadd.f32 %v80, %v338
  %v340 = vpop.f32.mrb[0].mxu0
  %v341 = vadd.f32 %v84, %v340
  %342 = vmatprep.mubr.f32.mxu0 0.0
  %343 = vmatmul.mubr.f32.gmra.mrb[0].mxu0 %v94
  %v344 = vpop.f32.mrb[0].mxu0
  %v345 = vadd.f32 %v80, %v344
  %v346 = vpop.f32.mrb[0].mxu0
  %v347 = vadd.f32 %v84, %v346
  %348 = vmatprep.mubr.f32.mxu0 0.0
  %349 = vmatmul.mubr.f32.gmra.mrb[0].mxu0 %v97
  %v350 = vpop.f32.mrb[0].mxu0
  %v351 = vadd.f32 %v80, %v350
  %v352 = vpop.f32.mrb[0].mxu0
  %v353 = vadd.f32 %v84, %v352
  %354 = vmatprep.mubr.f32.mxu0 0.0
  %355 = vmatmul.mubr.f32.gmra.mrb[0].mxu0 %v100
  %v356 = vpop.f32.mrb[0].mxu0
  %v357 = vadd.f32 %v80, %v356
  %v358 = vpop.f32.mrb[0].mxu0
  %v359 = vadd.f32 %v84, %v358
  %360 = vmatprep.mubr.f32.mxu0 0.0
  %361 = vmatmul.mubr.f32.gmra.mrb[0].mxu0 %v103
  %v362 = vpop.f32.mrb[0].mxu0
  %v363 = vadd.f32 %v80, %v362
  %v364 = vpop.f32.mrb[0].mxu0
  %v365 = vadd.f32 %v84, %v364
  %366 = vmatprep.mubr.f32.mxu0 0.0
  %367 = vmatmul.mubr.f32.gmra.mrb[0].mxu0 %v106
  %v368 = vpop.f32.mrb[0].mxu0
  %v369 = vadd.f32 %v80, %v368
  %v370 = vpop.f32.mrb[0].mxu0
  %v371 = vadd.f32 %v84, %v370
  %372 = vmatprep.mubr.f32.mxu0 0.0
  %373 = vmatmul.mubr.f32.gmra.mrb[0].mxu0 %v109
  %v374 = vpop.f32.mrb[0].mxu0
  %v375 = vadd.f32 %v80, %v374
  %v376 = vpop.f32.mrb[0].mxu0
  %v377 = vadd.f32 %v84, %v376
  %378 = vmatprep.mubr.f32.mxu0 0.0
  %379 = vmatmul.mubr.f32.gmra.mrb[0].mxu0 %v112
  %v380 = vpop.f32.mrb[0].mxu0
  %v381 = vadd.f32 %v80, %v380
  %v382 = vpop.f32.mrb[0].mxu0
  %v383 = vadd.f32 %v84, %v382
  %384 = vmatprep.mubr.f32.mxu0 0.0
  %385 = vmatmul.mubr.f32.gmra.mrb[0].mxu0 %v115
  %v386 = vpop.f32.mrb[0].mxu0
  %v387 = vadd.f32 %v80, %v386
  %v388 = vpop.f32.mrb[0].mxu0
  %v389 = vadd.f32 %v84, %v388
  %390 = vmatprep.mubr.f32.mxu0 0.0
  %391 = vmatmul.mubr.f32.gmra.mrb[0].mxu0 %v118
  %v392 = vpop.f32.mrb[0].mxu0
  %v393 = vadd.f32 %v80, %v392
  %v394 = vpop.f32.mrb[0].mxu0
  %v395 = vadd.f32 %v84, %v394
  %396 = vmatprep.mubr.f32.mxu0 0.0
  %397 = vmatmul.mubr.f32.gmra.mrb[0].mxu0 %v121
  %v398 = vpop.f32.mrb[0].mxu0
  %v399 = vadd.f32 %v80, %v398
  %v400 = vpop.f32.mrb[0].mxu0
  %v401 = vadd.f32 %v84, %v400
  %402 = vmatprep.mubr.f32.mxu0 0.0
  %403 = vmatmul.mubr.f32.gmra.mrb[0].mxu0 %v124
  %v404 = vpop.f32.mrb[0].mxu0
  %v405 = vadd.f32 %v80, %v404
  %v406 = vpop.f32.mrb[0].mxu0
  %v407 = vadd.f32 %v84, %v406
  %408 = vmatprep.mubr.f32.mxu0 0.0
  %409 = vmatmul.mubr.f32.gmra.mrb[0].mxu0 %v127
  %v410 = vpop.f32.mrb[0].mxu0
  %v411 = vadd.f32 %v80, %v410
  %v412 = vpop.f32.mrb[0].mxu0
  %v413 = vadd.f32 %v84, %v412
  %414 = vdwg.mxu0
  %v415 = vld [vmem:[%s4] sm:$0xff]
  %v416 = vld [vmem:[%s4 + $0x8] sm:$0xff]
  %v417 = vld [vmem:[%s4 + $0x10] sm:$0xff]
  %v418 = vld [vmem:[%s4 + $0x18] sm:$0xff]
  %v419 = vld [vmem:[%s4 + $0x20] sm:$0xff]
  %v420 = vld [vmem:[%s4 + $0x28] sm:$0xff]
  %v421 = vld [vmem:[%s4 + $0x30] sm:$0xff]
  %v422 = vld [vmem:[%s4 + $0x38] sm:$0xff]
  %v423 = vld [vmem:[%s4 + $0x40] sm:$0xff]
  %v424 = vld [vmem:[%s4 + $0x48] sm:$0xff]
  %v425 = vld [vmem:[%s4 + $0x50] sm:$0xff]
  %v426 = vld [vmem:[%s4 + $0x58] sm:$0xff]
  %v427 = vld [vmem:[%s4 + $0x60] sm:$0xff]
  %v428 = vld [vmem:[%s4 + $0x68] sm:$0xff]
  %v429 = vld [vmem:[%s4 + $0x70] sm:$0xff]
  %v430 = vld [vmem:[%s4 + $0x78] sm:$0xff]
  %v431 = vld [vmem:[%s4 + $0x80] sm:$0xff]
  %v432 = vld [vmem:[%s4 + $0x88] sm:$0xff]
  %v433 = vld [vmem:[%s4 + $0x90] sm:$0xff]
  %v434 = vld [vmem:[%s4 + $0x98] sm:$0xff]
  %v435 = vld [vmem:[%s4 + $0xa0] sm:$0xff]
  %v436 = vld [vmem:[%s4 + $0xa8] sm:$0xff]
  %v437 = vld [vmem:[%s4 + $0xb0] sm:$0xff]
  %v438 = vld [vmem:[%s4 + $0xb8] sm:$0xff]
  %v439 = vld [vmem:[%s4 + $0xc0] sm:$0xff]
  %v440 = vld [vmem:[%s4 + $0xc8] sm:$0xff]
  %v441 = vld [vmem:[%s4 + $0xd0] sm:$0xff]
  %v442 = vld [vmem:[%s4 + $0xd8] sm:$0xff]
  %v443 = vld [vmem:[%s4 + $0xe0] sm:$0xff]
  %v444 = vld [vmem:[%s4 + $0xe8] sm:$0xff]
  %v445 = vld [vmem:[%s4 + $0xf0] sm:$0xff]
  %v446 = vld [vmem:[%s4 + $0xf8] sm:$0xff]
  %v447 = vld [vmem:[%s4 + $0x100] sm:$0xff]
  %v448 = vld [vmem:[%s4 + $0x108] sm:$0xff]
  %v449 = vld [vmem:[%s4 + $0x110] sm:$0xff]
  %v450 = vld [vmem:[%s4 + $0x118] sm:$0xff]
  %v451 = vld [vmem:[%s4 + $0x120] sm:$0xff]
  %v452 = vld [vmem:[%s4 + $0x128] sm:$0xff]
  %v453 = vld [vmem:[%s4 + $0x130] sm:$0xff]
  %v454 = vld [vmem:[%s4 + $0x138] sm:$0xff]
  %v455 = vld [vmem:[%s4 + $0x140] sm:$0xff]
  %v456 = vld [vmem:[%s4 + $0x148] sm:$0xff]
  %v457 = vld [vmem:[%s4 + $0x150] sm:$0xff]
  %v458 = vld [vmem:[%s4 + $0x158] sm:$0xff]
  %v459 = vld [vmem:[%s4 + $0x160] sm:$0xff]
  %v460 = vld [vmem:[%s4 + $0x168] sm:$0xff]
  %v461 = vld [vmem:[%s4 + $0x170] sm:$0xff]
  %v462 = vld [vmem:[%s4 + $0x178] sm:$0xff]
  %v463 = vld [vmem:[%s4 + $0x180] sm:$0xff]
  %v464 = vld [vmem:[%s4 + $0x188] sm:$0xff]
  %v465 = vld [vmem:[%s4 + $0x190] sm:$0xff]
  %v466 = vld [vmem:[%s4 + $0x198] sm:$0xff]
  %v467 = vld [vmem:[%s4 + $0x1a0] sm:$0xff]
  %v468 = vld [vmem:[%s4 + $0x1a8] sm:$0xff]
  %v469 = vld [vmem:[%s4 + $0x1b0] sm:$0xff]
  %v470 = vld [vmem:[%s4 + $0x1b8] sm:$0xff]
  %v471 = vld [vmem:[%s4 + $0x1c0] sm:$0xff]
  %v472 = vld [vmem:[%s4 + $0x1c8] sm:$0xff]
  %v473 = vld [vmem:[%s4 + $0x1d0] sm:$0xff]
  %v474 = vld [vmem:[%s4 + $0x1d8] sm:$0xff]
  %v475 = vld [vmem:[%s4 + $0x1e0] sm:$0xff]
  %v476 = vld [vmem:[%s4 + $0x1e8] sm:$0xff]
  %v477 = vld [vmem:[%s4 + $0x1f0] sm:$0xff]
  %v478 = vld [vmem:[%s4 + $0x1f8] sm:$0xff]
  %v479 = vld [vmem:[%s1] sm:$0xff]
  %v480 = vld [vmem:[%s1 + $0x8] sm:$0x3]
  %v481 = vld [vmem:[%s2] sm:$0xff]
  %v482 = vld [vmem:[%s2 + $0x8] sm:$0x3]
  %483 = vmatprep.subr.mxu0 %v416
  %484 = vmatpush1.msra.mxu0 %v415
  %485 = vmatprep.subr.mxu0 %v420
  %486 = vmatpush1.msra.mxu0 %v419
  %487 = vmatprep.subr.mxu0 %v424
  %488 = vmatpush1.msra.mxu0 %v423
  %489 = vmatprep.subr.mxu0 %v428
  %490 = vmatpush1.msra.mxu0 %v427
  %491 = vmatprep.subr.mxu0 %v432
  %492 = vmatpush1.msra.mxu0 %v431
  %493 = vmatprep.subr.mxu0 %v436
  %494 = vmatpush1.msra.mxu0 %v435
  %495 = vmatprep.subr.mxu0 %v440
  %496 = vmatpush1.msra.mxu0 %v439
  %497 = vmatprep.subr.mxu0 %v444
  %498 = vmatpush1.msra.mxu0 %v443
  %499 = vmatprep.subr.mxu0 %v448
  %500 = vmatpush1.msra.mxu0 %v447
  %501 = vmatprep.subr.mxu0 %v452
  %502 = vmatpush1.msra.mxu0 %v451
  %503 = vmatprep.subr.mxu0 %v456
  %504 = vmatpush1.msra.mxu0 %v455
  %505 = vmatprep.subr.mxu0 %v460
  %506 = vmatpush1.msra.mxu0 %v459
  %507 = vmatprep.subr.mxu0 %v464
  %508 = vmatpush1.msra.mxu0 %v463
  %509 = vmatprep.subr.mxu0 %v468
  %510 = vmatpush1.msra.mxu0 %v467
  %511 = vmatprep.subr.mxu0 %v472
  %512 = vmatpush1.msra.mxu0 %v471
  %513 = vmatprep.subr.mxu0 %v476
  %514 = vmatpush1.msra.mxu0 %v475
  %515 = vmatprep.subr.mxu0 0.0
  %516 = vmatpush1.msra.mxu0 0.0
  %517 = vmatprep.subr.mxu0 0.0
  %518 = vmatpush1.msra.mxu0 0.0
  %519 = vmatprep.subr.mxu0 0.0
  %520 = vmatpush1.msra.mxu0 0.0
  %521 = vmatprep.subr.mxu0 0.0
  %522 = vmatpush1.msra.mxu0 0.0
  %523 = vmatprep.subr.mxu0 0.0
  %524 = vmatpush1.msra.mxu0 0.0
  %525 = vmatprep.subr.mxu0 0.0
  %526 = vmatpush1.msra.mxu0 0.0
  %527 = vmatprep.subr.mxu0 0.0
  %528 = vmatpush1.msra.mxu0 0.0
  %529 = vmatprep.subr.mxu0 0.0
  %530 = vmatpush1.msra.mxu0 0.0
  %531 = vmatprep.subr.mxu0 0.0
  %532 = vmatpush1.msra.mxu0 0.0
  %533 = vmatprep.subr.mxu0 0.0
  %534 = vmatpush1.msra.mxu0 0.0
  %535 = vmatprep.subr.mxu0 0.0
  %536 = vmatpush1.msra.mxu0 0.0
  %537 = vmatprep.subr.mxu0 0.0
  %538 = vmatpush1.msra.mxu0 0.0
  %539 = vmatprep.subr.mxu0 0.0
  %540 = vmatpush1.msra.mxu0 0.0
  %541 = vmatprep.subr.mxu0 0.0
  %542 = vmatpush1.msra.mxu0 0.0
  %543 = vmatprep.subr.mxu0 0.0
  %544 = vmatpush1.msra.mxu0 0.0
  %545 = vmatprep.subr.mxu0 0.0
  %546 = vmatpush1.msra.mxu0 0.0
  %547 = vmatprep.mubr.f32.mxu0 0.0
  %548 = vmatmul.mubr.f32.gmra.mrb[0].mxu0 %v479
  %v549 = vpop.f32.mrb[0].mxu0
  %v550 = vadd.f32 0.0, %v549
  %v551 = vpop.f32.mrb[0].mxu0
  %v552 = vadd.f32 0.0, %v551
  %553 = vmatprep.mubr.f32.mxu0 0.0
  %554 = vmatmul.mubr.f32.gmra.mrb[0].mxu0 %v480
  %v555 = vpop.f32.mrb[0].mxu0
  %v556 = vadd.f32 0.0, %v555
  %v557 = vpop.f32.mrb[0].mxu0
  %v558 = vadd.f32 0.0, %v557
  %559 = vdwg.mxu0
  %560 = vmatprep.subr.mxu0 %v418
  %561 = vmatpush1.msra.mxu0 %v417
  %562 = vmatprep.subr.mxu0 %v422
  %563 = vmatpush1.msra.mxu0 %v421
  %564 = vmatprep.subr.mxu0 %v426
  %565 = vmatpush1.msra.mxu0 %v425
  %566 = vmatprep.subr.mxu0 %v430
  %567 = vmatpush1.msra.mxu0 %v429
  %568 = vmatprep.subr.mxu0 %v434
  %569 = vmatpush1.msra.mxu0 %v433
  %570 = vmatprep.subr.mxu0 %v438
  %571 = vmatpush1.msra.mxu0 %v437
  %572 = vmatprep.subr.mxu0 %v442
  %573 = vmatpush1.msra.mxu0 %v441
  %574 = vmatprep.subr.mxu0 %v446
  %575 = vmatpush1.msra.mxu0 %v445
  %576 = vmatprep.subr.mxu0 %v450
  %577 = vmatpush1.msra.mxu0 %v449
  %578 = vmatprep.subr.mxu0 %v454
  %579 = vmatpush1.msra.mxu0 %v453
  %580 = vmatprep.subr.mxu0 %v458
  %581 = vmatpush1.msra.mxu0 %v457
  %582 = vmatprep.subr.mxu0 %v462
  %583 = vmatpush1.msra.mxu0 %v461
  %584 = vmatprep.subr.mxu0 %v466
  %585 = vmatpush1.msra.mxu0 %v465
  %586 = vmatprep.subr.mxu0 %v470
  %587 = vmatpush1.msra.mxu0 %v469
  %588 = vmatprep.subr.mxu0 %v474
  %589 = vmatpush1.msra.mxu0 %v473
  %590 = vmatprep.subr.mxu0 %v478
  %591 = vmatpush1.msra.mxu0 %v477
  %592 = vmatprep.subr.mxu0 0.0
  %593 = vmatpush1.msra.mxu0 0.0
  %594 = vmatprep.subr.mxu0 0.0
  %595 = vmatpush1.msra.mxu0 0.0
  %596 = vmatprep.subr.mxu0 0.0
  %597 = vmatpush1.msra.mxu0 0.0
  %598 = vmatprep.subr.mxu0 0.0
  %599 = vmatpush1.msra.mxu0 0.0
  %600 = vmatprep.subr.mxu0 0.0
  %601 = vmatpush1.msra.mxu0 0.0
  %602 = vmatprep.subr.mxu0 0.0
  %603 = vmatpush1.msra.mxu0 0.0
  %604 = vmatprep.subr.mxu0 0.0
  %605 = vmatpush1.msra.mxu0 0.0
  %606 = vmatprep.subr.mxu0 0.0
  %607 = vmatpush1.msra.mxu0 0.0
  %608 = vmatprep.subr.mxu0 0.0
  %609 = vmatpush1.msra.mxu0 0.0
  %610 = vmatprep.subr.mxu0 0.0
  %611 = vmatpush1.msra.mxu0 0.0
  %612 = vmatprep.subr.mxu0 0.0
  %613 = vmatpush1.msra.mxu0 0.0
  %614 = vmatprep.subr.mxu0 0.0
  %615 = vmatpush1.msra.mxu0 0.0
  %616 = vmatprep.subr.mxu0 0.0
  %617 = vmatpush1.msra.mxu0 0.0
  %618 = vmatprep.subr.mxu0 0.0
  %619 = vmatpush1.msra.mxu0 0.0
  %620 = vmatprep.subr.mxu0 0.0
  %621 = vmatpush1.msra.mxu0 0.0
  %622 = vmatprep.subr.mxu0 0.0
  %623 = vmatpush1.msra.mxu0 0.0
  %624 = vmatprep.mubr.f32.mxu0 0.0
  %625 = vmatmul.mubr.f32.gmra.mrb[0].mxu0 %v479
  %v626 = vpop.f32.mrb[0].mxu0
  %v627 = vadd.f32 0.0, %v626
  %v628 = vpop.f32.mrb[0].mxu0
  %v629 = vadd.f32 0.0, %v628
  %630 = vmatprep.mubr.f32.mxu0 0.0
  %631 = vmatmul.mubr.f32.gmra.mrb[0].mxu0 %v480
  %v632 = vpop.f32.mrb[0].mxu0
  %v633 = vadd.f32 0.0, %v632
  %v634 = vpop.f32.mrb[0].mxu0
  %v635 = vadd.f32 0.0, %v634
  %636 = vdwg.mxu0
  %v637 = vadd.f32 %v196, %v550
  %v638 = vadd.f32 %v198, %v552
  %v639 = vadd.f32 %v339, %v627
  %v640 = vadd.f32 %v341, %v629
  %v641 = vadd.f32 %v202, %v556
  %v642 = vadd.f32 %v204, %v558
  %v643 = vadd.f32 %v345, %v633
  %v644 = vadd.f32 %v347, %v635
  %v645 = vxor.u32 %v637, 2147483648
  %v646 = vxor.u32 %v641, 2147483648
  %v647 = vmul.f32 %v645, 1.442695
  %v648 = vpow.pop %v647
  %v649 = vmul.f32 %v646, 1.442695
  %v650 = vpow.pop %v649
  %v651 = vadd.f32 %v648, 1.0
  %v652 = vadd.f32 %v650, 1.0
  %v653 = vrcp.pop %v651
  %v654 = vmul.f32 1.0, %v653
  %v655 = vrcp.pop %v652
  %v656 = vmul.f32 1.0, %v655
  %v657 = vxor.u32 %v638, 2147483648
  %v658 = vxor.u32 %v642, 2147483648
  %v659 = vmul.f32 %v657, 1.442695
  %v660 = vpow.pop %v659
  %v661 = vmul.f32 %v658, 1.442695
  %v662 = vpow.pop %v661
  %v663 = vadd.f32 %v660, 1.0
  %v664 = vadd.f32 %v662, 1.0
  %v665 = vrcp.pop %v663
  %v666 = vmul.f32 1.0, %v665
  %v667 = vrcp.pop %v664
  %v668 = vmul.f32 1.0, %v667
  %v669 = vtanh.pop %v639
  %v670 = vtanh.pop %v643
  %v671 = vxor.u32 %v640, 2147483648
  %v672 = vxor.u32 %v644, 2147483648
  %v673 = vmul.f32 %v671, 1.442695
  %v674 = vpow.pop %v673
  %v675 = vmul.f32 %v672, 1.442695
  %v676 = vpow.pop %v675
  %v677 = vadd.f32 %v674, 1.0
  %v678 = vadd.f32 %v676, 1.0
  %v679 = vrcp.pop %v677
  %v680 = vmul.f32 1.0, %v679
  %v681 = vrcp.pop %v678
  %v682 = vmul.f32 1.0, %v681
  %v683 = vmul.f32 %v666, %v481
  %v684 = vmul.f32 %v668, %v482
  %v685 = vmul.f32 %v654, %v669
  %v686 = vmul.f32 %v656, %v670
  %v687 = vadd.f32 %v683, %v685
  %v688 = vadd.f32 %v684, %v686
  %v689 = vtanh.pop %v687
  %v690 = vtanh.pop %v688
  %v691 = vmul.f32 %v680, %v689
  %v692 = vmul.f32 %v682, %v690
  %693 = vmatprep.subr.mxu0 %v416
  %694 = vmatpush1.msra.mxu0 %v415
  %695 = vmatprep.subr.mxu0 %v420
  %696 = vmatpush1.msra.mxu0 %v419
  %697 = vmatprep.subr.mxu0 %v424
  %698 = vmatpush1.msra.mxu0 %v423
  %699 = vmatprep.subr.mxu0 %v428
  %700 = vmatpush1.msra.mxu0 %v427
  %701 = vmatprep.subr.mxu0 %v432
  %702 = vmatpush1.msra.mxu0 %v431
  %703 = vmatprep.subr.mxu0 %v436
  %704 = vmatpush1.msra.mxu0 %v435
  %705 = vmatprep.subr.mxu0 %v440
  %706 = vmatpush1.msra.mxu0 %v439
  %707 = vmatprep.subr.mxu0 %v444
  %708 = vmatpush1.msra.mxu0 %v443
  %709 = vmatprep.subr.mxu0 %v448
  %710 = vmatpush1.msra.mxu0 %v447
  %711 = vmatprep.subr.mxu0 %v452
  %712 = vmatpush1.msra.mxu0 %v451
  %713 = vmatprep.subr.mxu0 %v456
  %714 = vmatpush1.msra.mxu0 %v455
  %715 = vmatprep.subr.mxu0 %v460
  %716 = vmatpush1.msra.mxu0 %v459
  %717 = vmatprep.subr.mxu0 %v464
  %718 = vmatpush1.msra.mxu0 %v463
  %719 = vmatprep.subr.mxu0 %v468
  %720 = vmatpush1.msra.mxu0 %v467
  %721 = vmatprep.subr.mxu0 %v472
  %722 = vmatpush1.msra.mxu0 %v471
  %723 = vmatprep.subr.mxu0 %v476
  %724 = vmatpush1.msra.mxu0 %v475
  %725 = vmatprep.subr.mxu0 0.0
  %726 = vmatpush1.msra.mxu0 0.0
  %727 = vmatprep.subr.mxu0 0.0
  %728 = vmatpush1.msra.mxu0 0.0
  %729 = vmatprep.subr.mxu0 0.0
  %730 = vmatpush1.msra.mxu0 0.0
  %731 = vmatprep.subr.mxu0 0.0
  %732 = vmatpush1.msra.mxu0 0.0
  %733 = vmatprep.subr.mxu0 0.0
  %734 = vmatpush1.msra.mxu0 0.0
  %735 = vmatprep.subr.mxu0 0.0
  %736 = vmatpush1.msra.mxu0 0.0
  %737 = vmatprep.subr.mxu0 0.0
  %738 = vmatpush1.msra.mxu0 0.0
  %739 = vmatprep.subr.mxu0 0.0
  %740 = vmatpush1.msra.mxu0 0.0
  %741 = vmatprep.subr.mxu0 0.0
  %742 = vmatpush1.msra.mxu0 0.0
  %743 = vmatprep.subr.mxu0 0.0
  %744 = vmatpush1.msra.mxu0 0.0
  %745 = vmatprep.subr.mxu0 0.0
  %746 = vmatpush1.msra.mxu0 0.0
  %747 = vmatprep.subr.mxu0 0.0
  %748 = vmatpush1.msra.mxu0 0.0
  %749 = vmatprep.subr.mxu0 0.0
  %750 = vmatpush1.msra.mxu0 0.0
  %751 = vmatprep.subr.mxu0 0.0
  %752 = vmatpush1.msra.mxu0 0.0
  %753 = vmatprep.subr.mxu0 0.0
  %754 = vmatpush1.msra.mxu0 0.0
  %755 = vmatprep.subr.mxu0 0.0
  %756 = vmatpush1.msra.mxu0 0.0
  %757 = vmatprep.mubr.f32.mxu0 0.0
  %758 = vmatmul.mubr.f32.gmra.mrb[0].mxu0 %v691
  %v759 = vpop.f32.mrb[0].mxu0
  %v760 = vadd.f32 0.0, %v759
  %v761 = vpop.f32.mrb[0].mxu0
  %v762 = vadd.f32 0.0, %v761
  %763 = vmatprep.mubr.f32.mxu0 0.0
  %764 = vmatmul.mubr.f32.gmra.mrb[0].mxu0 %v692
  %v765 = vpop.f32.mrb[0].mxu0
  %v766 = vadd.f32 0.0, %v765
  %v767 = vpop.f32.mrb[0].mxu0
  %v768 = vadd.f32 0.0, %v767
  %769 = vdwg.mxu0
  %770 = vmatprep.subr.mxu0 %v418
  %771 = vmatpush1.msra.mxu0 %v417
  %772 = vmatprep.subr.mxu0 %v422
  %773 = vmatpush1.msra.mxu0 %v421
  %774 = vmatprep.subr.mxu0 %v426
  %775 = vmatpush1.msra.mxu0 %v425
  %776 = vmatprep.subr.mxu0 %v430
  %777 = vmatpush1.msra.mxu0 %v429
  %778 = vmatprep.subr.mxu0 %v434
  %779 = vmatpush1.msra.mxu0 %v433
  %780 = vmatprep.subr.mxu0 %v438
  %781 = vmatpush1.msra.mxu0 %v437
  %782 = vmatprep.subr.mxu0 %v442
  %783 = vmatpush1.msra.mxu0 %v441
  %784 = vmatprep.subr.mxu0 %v446
  %785 = vmatpush1.msra.mxu0 %v445
  %786 = vmatprep.subr.mxu0 %v450
  %787 = vmatpush1.msra.mxu0 %v449
  %788 = vmatprep.subr.mxu0 %v454
  %789 = vmatpush1.msra.mxu0 %v453
  %790 = vmatprep.subr.mxu0 %v458
  %791 = vmatpush1.msra.mxu0 %v457
  %792 = vmatprep.subr.mxu0 %v462
  %793 = vmatpush1.msra.mxu0 %v461
  %794 = vmatprep.subr.mxu0 %v466
  %795 = vmatpush1.msra.mxu0 %v465
  %796 = vmatprep.subr.mxu0 %v470
  %797 = vmatpush1.msra.mxu0 %v469
  %798 = vmatprep.subr.mxu0 %v474
  %799 = vmatpush1.msra.mxu0 %v473
  %800 = vmatprep.subr.mxu0 %v478
  %801 = vmatpush1.msra.mxu0 %v477
  %802 = vmatprep.subr.mxu0 0.0
  %803 = vmatpush1.msra.mxu0 0.0
  %804 = vmatprep.subr.mxu0 0.0
  %805 = vmatpush1.msra.mxu0 0.0
  %806 = vmatprep.subr.mxu0 0.0
  %807 = vmatpush1.msra.mxu0 0.0
  %808 = vmatprep.subr.mxu0 0.0
  %809 = vmatpush1.msra.mxu0 0.0
  %810 = vmatprep.subr.mxu0 0.0
  %811 = vmatpush1.msra.mxu0 0.0
  %812 = vmatprep.subr.mxu0 0.0
  %813 = vmatpush1.msra.mxu0 0.0
  %814 = vmatprep.subr.mxu0 0.0
  %815 = vmatpush1.msra.mxu0 0.0
  %816 = vmatprep.subr.mxu0 0.0
  %817 = vmatpush1.msra.mxu0 0.0
  %818 = vmatprep.subr.mxu0 0.0
  %819 = vmatpush1.msra.mxu0 0.0
  %820 = vmatprep.subr.mxu0 0.0
  %821 = vmatpush1.msra.mxu0 0.0
  %822 = vmatprep.subr.mxu0 0.0
  %823 = vmatpush1.msra.mxu0 0.0
  %824 = vmatprep.subr.mxu0 0.0
  %825 = vmatpush1.msra.mxu0 0.0
  %826 = vmatprep.subr.mxu0 0.0
  %827 = vmatpush1.msra.mxu0 0.0
  %828 = vmatprep.subr.mxu0 0.0
  %829 = vmatpush1.msra.mxu0 0.0
  %830 = vmatprep.subr.mxu0 0.0
  %831 = vmatpush1.msra.mxu0 0.0
  %832 = vmatprep.subr.mxu0 0.0
  %833 = vmatpush1.msra.mxu0 0.0
  %834 = vmatprep.mubr.f32.mxu0 0.0
  %835 = vmatmul.mubr.f32.gmra.mrb[0].mxu0 %v691
  %v836 = vpop.f32.mrb[0].mxu0
  %v837 = vadd.f32 0.0, %v836
  %v838 = vpop.f32.mrb[0].mxu0
  %v839 = vadd.f32 0.0, %v838
  %840 = vmatprep.mubr.f32.mxu0 0.0
  %841 = vmatmul.mubr.f32.gmra.mrb[0].mxu0 %v692
  %v842 = vpop.f32.mrb[0].mxu0
  %v843 = vadd.f32 0.0, %v842
  %v844 = vpop.f32.mrb[0].mxu0
  %v845 = vadd.f32 0.0, %v844
  %846 = vdwg.mxu0
  %vm855 = vcmask 1041408
  %v856 = vrot.slane %v760, 6
  %v857 = vrot.slane %v762, 6
  %v858 = vrot.slane %v837, 6
  %v859 = vrot.slane %v839, 6
  %v860 = vrot.slane %v766, 6
  %v861 = vsel %vm855, %v856, %v860
  %v862 = vrot.slane %v768, 6
  %v863 = vsel %vm855, %v857, %v862
  %v864 = vrot.slane %v843, 6
  %v865 = vsel %vm855, %v858, %v864
  %v866 = vrot.slane %v845, 6
  %v867 = vsel %vm855, %v859, %v866
  %v876 = vadd.f32 %v202, %v856
  %v877 = vadd.f32 %v204, %v857
  %v878 = vadd.f32 %v345, %v858
  %v879 = vadd.f32 %v347, %v859
  %v880 = vadd.f32 %v208, %v861
  %v881 = vadd.f32 %v210, %v863
  %v882 = vadd.f32 %v351, %v865
  %v883 = vadd.f32 %v353, %v867
  %v884 = vxor.u32 %v876, 2147483648
  %v885 = vxor.u32 %v880, 2147483648
  %v886 = vmul.f32 %v884, 1.442695
  %v887 = vpow.pop %v886
  %v888 = vmul.f32 %v885, 1.442695
  %v889 = vpow.pop %v888
  %v890 = vadd.f32 %v887, 1.0
  %v891 = vadd.f32 %v889, 1.0
  %v892 = vrcp.pop %v890
  %v893 = vmul.f32 1.0, %v892
  %v894 = vrcp.pop %v891
  %v895 = vmul.f32 1.0, %v894
  %v896 = vxor.u32 %v877, 2147483648
  %v897 = vxor.u32 %v881, 2147483648
  %v898 = vmul.f32 %v896, 1.442695
  %v899 = vpow.pop %v898
  %v900 = vmul.f32 %v897, 1.442695
  %v901 = vpow.pop %v900
  %v902 = vadd.f32 %v899, 1.0
  %v903 = vadd.f32 %v901, 1.0
  %v904 = vrcp.pop %v902
  %v905 = vmul.f32 1.0, %v904
  %v906 = vrcp.pop %v903
  %v907 = vmul.f32 1.0, %v906
  %v908 = vtanh.pop %v878
  %v909 = vtanh.pop %v882
  %v910 = vxor.u32 %v879, 2147483648
  %v911 = vxor.u32 %v883, 2147483648
  %v912 = vmul.f32 %v910, 1.442695
  %v913 = vpow.pop %v912
  %v914 = vmul.f32 %v911, 1.442695
  %v915 = vpow.pop %v914
  %v916 = vadd.f32 %v913, 1.0
  %v917 = vadd.f32 %v915, 1.0
  %v918 = vrcp.pop %v916
  %v919 = vmul.f32 1.0, %v918
  %v920 = vrcp.pop %v917
  %v921 = vmul.f32 1.0, %v920
  %v924 = vrot.slane %v687, 6
  %v925 = vrot.slane %v688, 6
  %v926 = vsel %vm855, %v924, %v925
  %v929 = vmul.f32 %v905, %v924
  %v930 = vmul.f32 %v907, %v926
  %v931 = vmul.f32 %v893, %v908
  %v932 = vmul.f32 %v895, %v909
  %v933 = vadd.f32 %v929, %v931
  %v934 = vadd.f32 %v930, %v932
  %v935 = vtanh.pop %v933
  %v936 = vtanh.pop %v934
  %v937 = vmul.f32 %v919, %v935
  %v938 = vmul.f32 %v921, %v936
  %vm941 = vcmask 1045504
  %v942 = vrot.slane %v937, 2
  %v943 = vrot.slane %v938, 2
  %v944 = vsel %vm941, %v942, %v943
  %947 = vmatprep.subr.mxu0 %v416
  %948 = vmatpush1.msra.mxu0 %v415
  %949 = vmatprep.subr.mxu0 %v420
  %950 = vmatpush1.msra.mxu0 %v419
  %951 = vmatprep.subr.mxu0 %v424
  %952 = vmatpush1.msra.mxu0 %v423
  %953 = vmatprep.subr.mxu0 %v428
  %954 = vmatpush1.msra.mxu0 %v427
  %955 = vmatprep.subr.mxu0 %v432
  %956 = vmatpush1.msra.mxu0 %v431
  %957 = vmatprep.subr.mxu0 %v436
  %958 = vmatpush1.msra.mxu0 %v435
  %959 = vmatprep.subr.mxu0 %v440
  %960 = vmatpush1.msra.mxu0 %v439
  %961 = vmatprep.subr.mxu0 %v444
  %962 = vmatpush1.msra.mxu0 %v443
  %963 = vmatprep.subr.mxu0 %v448
  %964 = vmatpush1.msra.mxu0 %v447
  %965 = vmatprep.subr.mxu0 %v452
  %966 = vmatpush1.msra.mxu0 %v451
  %967 = vmatprep.subr.mxu0 %v456
  %968 = vmatpush1.msra.mxu0 %v455
  %969 = vmatprep.subr.mxu0 %v460
  %970 = vmatpush1.msra.mxu0 %v459
  %971 = vmatprep.subr.mxu0 %v464
  %972 = vmatpush1.msra.mxu0 %v463
  %973 = vmatprep.subr.mxu0 %v468
  %974 = vmatpush1.msra.mxu0 %v467
  %975 = vmatprep.subr.mxu0 %v472
  %976 = vmatpush1.msra.mxu0 %v471
  %977 = vmatprep.subr.mxu0 %v476
  %978 = vmatpush1.msra.mxu0 %v475
  %979 = vmatprep.subr.mxu0 0.0
  %980 = vmatpush1.msra.mxu0 0.0
  %981 = vmatprep.subr.mxu0 0.0
  %982 = vmatpush1.msra.mxu0 0.0
  %983 = vmatprep.subr.mxu0 0.0
  %984 = vmatpush1.msra.mxu0 0.0
  %985 = vmatprep.subr.mxu0 0.0
  %986 = vmatpush1.msra.mxu0 0.0
  %987 = vmatprep.subr.mxu0 0.0
  %988 = vmatpush1.msra.mxu0 0.0
  %989 = vmatprep.subr.mxu0 0.0
  %990 = vmatpush1.msra.mxu0 0.0
  %991 = vmatprep.subr.mxu0 0.0
  %992 = vmatpush1.msra.mxu0 0.0
  %993 = vmatprep.subr.mxu0 0.0
  %994 = vmatpush1.msra.mxu0 0.0
  %995 = vmatprep.subr.mxu0 0.0
  %996 = vmatpush1.msra.mxu0 0.0
  %997 = vmatprep.subr.mxu0 0.0
  %998 = vmatpush1.msra.mxu0 0.0
  %999 = vmatprep.subr.mxu0 0.0
  %1000 = vmatpush1.msra.mxu0 0.0
  %1001 = vmatprep.subr.mxu0 0.0
  %1002 = vmatpush1.msra.mxu0 0.0
  %1003 = vmatprep.subr.mxu0 0.0
  %1004 = vmatpush1.msra.mxu0 0.0
  %1005 = vmatprep.subr.mxu0 0.0
  %1006 = vmatpush1.msra.mxu0 0.0
  %1007 = vmatprep.subr.mxu0 0.0
  %1008 = vmatpush1.msra.mxu0 0.0
  %1009 = vmatprep.subr.mxu0 0.0
  %1010 = vmatpush1.msra.mxu0 0.0
  %1011 = vmatprep.mubr.f32.mxu0 0.0
  %1012 = vmatmul.mubr.f32.gmra.mrb[0].mxu0 %v944
  %v1013 = vpop.f32.mrb[0].mxu0
  %v1014 = vadd.f32 0.0, %v1013
  %v1015 = vpop.f32.mrb[0].mxu0
  %v1016 = vadd.f32 0.0, %v1015
  %1017 = vmatprep.mubr.f32.mxu0 0.0
  %1018 = vmatmul.mubr.f32.gmra.mrb[0].mxu0 %v943
  %v1019 = vpop.f32.mrb[0].mxu0
  %v1020 = vadd.f32 0.0, %v1019
  %v1021 = vpop.f32.mrb[0].mxu0
  %v1022 = vadd.f32 0.0, %v1021
  %1023 = vdwg.mxu0
  %1024 = vmatprep.subr.mxu0 %v418
  %1025 = vmatpush1.msra.mxu0 %v417
  %1026 = vmatprep.subr.mxu0 %v422
  %1027 = vmatpush1.msra.mxu0 %v421
  %1028 = vmatprep.subr.mxu0 %v426
  %1029 = vmatpush1.msra.mxu0 %v425
  %1030 = vmatprep.subr.mxu0 %v430
  %1031 = vmatpush1.msra.mxu0 %v429
  %1032 = vmatprep.subr.mxu0 %v434
  %1033 = vmatpush1.msra.mxu0 %v433
  %1034 = vmatprep.subr.mxu0 %v438
  %1035 = vmatpush1.msra.mxu0 %v437
  %1036 = vmatprep.subr.mxu0 %v442
  %1037 = vmatpush1.msra.mxu0 %v441
  %1038 = vmatprep.subr.mxu0 %v446
  %1039 = vmatpush1.msra.mxu0 %v445
  %1040 = vmatprep.subr.mxu0 %v450
  %1041 = vmatpush1.msra.mxu0 %v449
  %1042 = vmatprep.subr.mxu0 %v454
  %1043 = vmatpush1.msra.mxu0 %v453
  %1044 = vmatprep.subr.mxu0 %v458
  %1045 = vmatpush1.msra.mxu0 %v457
  %1046 = vmatprep.subr.mxu0 %v462
  %1047 = vmatpush1.msra.mxu0 %v461
  %1048 = vmatprep.subr.mxu0 %v466
  %1049 = vmatpush1.msra.mxu0 %v465
  %1050 = vmatprep.subr.mxu0 %v470
  %1051 = vmatpush1.msra.mxu0 %v469
  %1052 = vmatprep.subr.mxu0 %v474
  %1053 = vmatpush1.msra.mxu0 %v473
  %1054 = vmatprep.subr.mxu0 %v478
  %1055 = vmatpush1.msra.mxu0 %v477
  %1056 = vmatprep.subr.mxu0 0.0
  %1057 = vmatpush1.msra.mxu0 0.0
  %1058 = vmatprep.subr.mxu0 0.0
  %1059 = vmatpush1.msra.mxu0 0.0
  %1060 = vmatprep.subr.mxu0 0.0
  %1061 = vmatpush1.msra.mxu0 0.0
  %1062 = vmatprep.subr.mxu0 0.0
  %1063 = vmatpush1.msra.mxu0 0.0
  %1064 = vmatprep.subr.mxu0 0.0
  %1065 = vmatpush1.msra.mxu0 0.0
  %1066 = vmatprep.subr.mxu0 0.0
  %1067 = vmatpush1.msra.mxu0 0.0
  %1068 = vmatprep.subr.mxu0 0.0
  %1069 = vmatpush1.msra.mxu0 0.0
  %1070 = vmatprep.subr.mxu0 0.0
  %1071 = vmatpush1.msra.mxu0 0.0
  %1072 = vmatprep.subr.mxu0 0.0
  %1073 = vmatpush1.msra.mxu0 0.0
  %1074 = vmatprep.subr.mxu0 0.0
  %1075 = vmatpush1.msra.mxu0 0.0
  %1076 = vmatprep.subr.mxu0 0.0
  %1077 = vmatpush1.msra.mxu0 0.0
  %1078 = vmatprep.subr.mxu0 0.0
  %1079 = vmatpush1.msra.mxu0 0.0
  %1080 = vmatprep.subr.mxu0 0.0
  %1081 = vmatpush1.msra.mxu0 0.0
  %1082 = vmatprep.subr.mxu0 0.0
  %1083 = vmatpush1.msra.mxu0 0.0
  %1084 = vmatprep.subr.mxu0 0.0
  %1085 = vmatpush1.msra.mxu0 0.0
  %1086 = vmatprep.subr.mxu0 0.0
  %1087 = vmatpush1.msra.mxu0 0.0
  %1088 = vmatprep.mubr.f32.mxu0 0.0
  %1089 = vmatmul.mubr.f32.gmra.mrb[0].mxu0 %v944
  %v1090 = vpop.f32.mrb[0].mxu0
  %v1091 = vadd.f32 0.0, %v1090
  %v1092 = vpop.f32.mrb[0].mxu0
  %v1093 = vadd.f32 0.0, %v1092
  %1094 = vmatprep.mubr.f32.mxu0 0.0
  %1095 = vmatmul.mubr.f32.gmra.mrb[0].mxu0 %v943
  %v1096 = vpop.f32.mrb[0].mxu0
  %v1097 = vadd.f32 0.0, %v1096
  %v1098 = vpop.f32.mrb[0].mxu0
  %v1099 = vadd.f32 0.0, %v1098
  %1100 = vdwg.mxu0
  %vm1109 = vcmask 1043456
  %v1110 = vrot.slane %v1014, 4
  %v1111 = vrot.slane %v1016, 4
  %v1112 = vrot.slane %v1091, 4
  %v1113 = vrot.slane %v1093, 4
  %v1114 = vrot.slane %v1020, 4
  %v1115 = vsel %vm1109, %v1110, %v1114
  %v1116 = vrot.slane %v1022, 4
  %v1117 = vsel %vm1109, %v1111, %v1116
  %v1118 = vrot.slane %v1097, 4
  %v1119 = vsel %vm1109, %v1112, %v1118
  %v1120 = vrot.slane %v1099, 4
  %v1121 = vsel %vm1109, %v1113, %v1120
  %v1130 = vadd.f32 %v208, %v1110
  %v1131 = vadd.f32 %v210, %v1111
  %v1132 = vadd.f32 %v351, %v1112
  %v1133 = vadd.f32 %v353, %v1113
  %v1134 = vadd.f32 %v214, %v1115
  %v1135 = vadd.f32 %v216, %v1117
  %v1136 = vadd.f32 %v357, %v1119
  %v1137 = vadd.f32 %v359, %v1121
  %v1138 = vxor.u32 %v1130, 2147483648
  %v1139 = vxor.u32 %v1134, 2147483648
  %v1140 = vmul.f32 %v1138, 1.442695
  %v1141 = vpow.pop %v1140
  %v1142 = vmul.f32 %v1139, 1.442695
  %v1143 = vpow.pop %v1142
  %v1144 = vadd.f32 %v1141, 1.0
  %v1145 = vadd.f32 %v1143, 1.0
  %v1146 = vrcp.pop %v1144
  %v1147 = vmul.f32 1.0, %v1146
  %v1148 = vrcp.pop %v1145
  %v1149 = vmul.f32 1.0, %v1148
  %v1150 = vxor.u32 %v1131, 2147483648
  %v1151 = vxor.u32 %v1135, 2147483648
  %v1152 = vmul.f32 %v1150, 1.442695
  %v1153 = vpow.pop %v1152
  %v1154 = vmul.f32 %v1151, 1.442695
  %v1155 = vpow.pop %v1154
  %v1156 = vadd.f32 %v1153, 1.0
  %v1157 = vadd.f32 %v1155, 1.0
  %v1158 = vrcp.pop %v1156
  %v1159 = vmul.f32 1.0, %v1158
  %v1160 = vrcp.pop %v1157
  %v1161 = vmul.f32 1.0, %v1160
  %v1162 = vtanh.pop %v1132
  %v1163 = vtanh.pop %v1136
  %v1164 = vxor.u32 %v1133, 2147483648
  %v1165 = vxor.u32 %v1137, 2147483648
  %v1166 = vmul.f32 %v1164, 1.442695
  %v1167 = vpow.pop %v1166
  %v1168 = vmul.f32 %v1165, 1.442695
  %v1169 = vpow.pop %v1168
  %v1170 = vadd.f32 %v1167, 1.0
  %v1171 = vadd.f32 %v1169, 1.0
  %v1172 = vrcp.pop %v1170
  %v1173 = vmul.f32 1.0, %v1172
  %v1174 = vrcp.pop %v1171
  %v1175 = vmul.f32 1.0, %v1174
  %v1178 = vrot.slane %v933, 6
  %v1179 = vrot.slane %v934, 6
  %v1180 = vsel %vm855, %v1178, %v1179
  %v1183 = vmul.f32 %v1159, %v1178
  %v1184 = vmul.f32 %v1161, %v1180
  %v1185 = vmul.f32 %v1147, %v1162
  %v1186 = vmul.f32 %v1149, %v1163
  %v1187 = vadd.f32 %v1183, %v1185
  %v1188 = vadd.f32 %v1184, %v1186
  %v1189 = vtanh.pop %v1187
  %v1190 = vtanh.pop %v1188
  %v1191 = vmul.f32 %v1173, %v1189
  %v1192 = vmul.f32 %v1175, %v1190
  %v1195 = vrot.slane %v1191, 4
  %v1196 = vrot.slane %v1192, 4
  %v1197 = vsel %vm1109, %v1195, %v1196
  %1200 = vmatprep.subr.mxu0 %v416
  %1201 = vmatpush1.msra.mxu0 %v415
  %1202 = vmatprep.subr.mxu0 %v420
  %1203 = vmatpush1.msra.mxu0 %v419
  %1204 = vmatprep.subr.mxu0 %v424
  %1205 = vmatpush1.msra.mxu0 %v423
  %1206 = vmatprep.subr.mxu0 %v428
  %1207 = vmatpush1.msra.mxu0 %v427
  %1208 = vmatprep.subr.mxu0 %v432
  %1209 = vmatpush1.msra.mxu0 %v431
  %1210 = vmatprep.subr.mxu0 %v436
  %1211 = vmatpush1.msra.mxu0 %v435
  %1212 = vmatprep.subr.mxu0 %v440
  %1213 = vmatpush1.msra.mxu0 %v439
  %1214 = vmatprep.subr.mxu0 %v444
  %1215 = vmatpush1.msra.mxu0 %v443
  %1216 = vmatprep.subr.mxu0 %v448
  %1217 = vmatpush1.msra.mxu0 %v447
  %1218 = vmatprep.subr.mxu0 %v452
  %1219 = vmatpush1.msra.mxu0 %v451
  %1220 = vmatprep.subr.mxu0 %v456
  %1221 = vmatpush1.msra.mxu0 %v455
  %1222 = vmatprep.subr.mxu0 %v460
  %1223 = vmatpush1.msra.mxu0 %v459
  %1224 = vmatprep.subr.mxu0 %v464
  %1225 = vmatpush1.msra.mxu0 %v463
  %1226 = vmatprep.subr.mxu0 %v468
  %1227 = vmatpush1.msra.mxu0 %v467
  %1228 = vmatprep.subr.mxu0 %v472
  %1229 = vmatpush1.msra.mxu0 %v471
  %1230 = vmatprep.subr.mxu0 %v476
  %1231 = vmatpush1.msra.mxu0 %v475
  %1232 = vmatprep.subr.mxu0 0.0
  %1233 = vmatpush1.msra.mxu0 0.0
  %1234 = vmatprep.subr.mxu0 0.0
  %1235 = vmatpush1.msra.mxu0 0.0
  %1236 = vmatprep.subr.mxu0 0.0
  %1237 = vmatpush1.msra.mxu0 0.0
  %1238 = vmatprep.subr.mxu0 0.0
  %1239 = vmatpush1.msra.mxu0 0.0
  %1240 = vmatprep.subr.mxu0 0.0
  %1241 = vmatpush1.msra.mxu0 0.0
  %1242 = vmatprep.subr.mxu0 0.0
  %1243 = vmatpush1.msra.mxu0 0.0
  %1244 = vmatprep.subr.mxu0 0.0
  %1245 = vmatpush1.msra.mxu0 0.0
  %1246 = vmatprep.subr.mxu0 0.0
  %1247 = vmatpush1.msra.mxu0 0.0
  %1248 = vmatprep.subr.mxu0 0.0
  %1249 = vmatpush1.msra.mxu0 0.0
  %1250 = vmatprep.subr.mxu0 0.0
  %1251 = vmatpush1.msra.mxu0 0.0
  %1252 = vmatprep.subr.mxu0 0.0
  %1253 = vmatpush1.msra.mxu0 0.0
  %1254 = vmatprep.subr.mxu0 0.0
  %1255 = vmatpush1.msra.mxu0 0.0
  %1256 = vmatprep.subr.mxu0 0.0
  %1257 = vmatpush1.msra.mxu0 0.0
  %1258 = vmatprep.subr.mxu0 0.0
  %1259 = vmatpush1.msra.mxu0 0.0
  %1260 = vmatprep.subr.mxu0 0.0
  %1261 = vmatpush1.msra.mxu0 0.0
  %1262 = vmatprep.subr.mxu0 0.0
  %1263 = vmatpush1.msra.mxu0 0.0
  %1264 = vmatprep.mubr.f32.mxu0 0.0
  %1265 = vmatmul.mubr.f32.gmra.mrb[0].mxu0 %v1197
  %v1266 = vpop.f32.mrb[0].mxu0
  %v1267 = vadd.f32 0.0, %v1266
  %v1268 = vpop.f32.mrb[0].mxu0
  %v1269 = vadd.f32 0.0, %v1268
  %1270 = vmatprep.mubr.f32.mxu0 0.0
  %1271 = vmatmul.mubr.f32.gmra.mrb[0].mxu0 %v1196
  %v1272 = vpop.f32.mrb[0].mxu0
  %v1273 = vadd.f32 0.0, %v1272
  %v1274 = vpop.f32.mrb[0].mxu0
  %v1275 = vadd.f32 0.0, %v1274
  %1276 = vdwg.mxu0
  %1277 = vmatprep.subr.mxu0 %v418
  %1278 = vmatpush1.msra.mxu0 %v417
  %1279 = vmatprep.subr.mxu0 %v422
  %1280 = vmatpush1.msra.mxu0 %v421
  %1281 = vmatprep.subr.mxu0 %v426
  %1282 = vmatpush1.msra.mxu0 %v425
  %1283 = vmatprep.subr.mxu0 %v430
  %1284 = vmatpush1.msra.mxu0 %v429
  %1285 = vmatprep.subr.mxu0 %v434
  %1286 = vmatpush1.msra.mxu0 %v433
  %1287 = vmatprep.subr.mxu0 %v438
  %1288 = vmatpush1.msra.mxu0 %v437
  %1289 = vmatprep.subr.mxu0 %v442
  %1290 = vmatpush1.msra.mxu0 %v441
  %1291 = vmatprep.subr.mxu0 %v446
  %1292 = vmatpush1.msra.mxu0 %v445
  %1293 = vmatprep.subr.mxu0 %v450
  %1294 = vmatpush1.msra.mxu0 %v449
  %1295 = vmatprep.subr.mxu0 %v454
  %1296 = vmatpush1.msra.mxu0 %v453
  %1297 = vmatprep.subr.mxu0 %v458
  %1298 = vmatpush1.msra.mxu0 %v457
  %1299 = vmatprep.subr.mxu0 %v462
  %1300 = vmatpush1.msra.mxu0 %v461
  %1301 = vmatprep.subr.mxu0 %v466
  %1302 = vmatpush1.msra.mxu0 %v465
  %1303 = vmatprep.subr.mxu0 %v470
  %1304 = vmatpush1.msra.mxu0 %v469
  %1305 = vmatprep.subr.mxu0 %v474
  %1306 = vmatpush1.msra.mxu0 %v473
  %1307 = vmatprep.subr.mxu0 %v478
  %1308 = vmatpush1.msra.mxu0 %v477
  %1309 = vmatprep.subr.mxu0 0.0
  %1310 = vmatpush1.msra.mxu0 0.0
  %1311 = vmatprep.subr.mxu0 0.0
  %1312 = vmatpush1.msra.mxu0 0.0
  %1313 = vmatprep.subr.mxu0 0.0
  %1314 = vmatpush1.msra.mxu0 0.0
  %1315 = vmatprep.subr.mxu0 0.0
  %1316 = vmatpush1.msra.mxu0 0.0
  %1317 = vmatprep.subr.mxu0 0.0
  %1318 = vmatpush1.msra.mxu0 0.0
  %1319 = vmatprep.subr.mxu0 0.0
  %1320 = vmatpush1.msra.mxu0 0.0
  %1321 = vmatprep.subr.mxu0 0.0
  %1322 = vmatpush1.msra.mxu0 0.0
  %1323 = vmatprep.subr.mxu0 0.0
  %1324 = vmatpush1.msra.mxu0 0.0
  %1325 = vmatprep.subr.mxu0 0.0
  %1326 = vmatpush1.msra.mxu0 0.0
  %1327 = vmatprep.subr.mxu0 0.0
  %1328 = vmatpush1.msra.mxu0 0.0
  %1329 = vmatprep.subr.mxu0 0.0
  %1330 = vmatpush1.msra.mxu0 0.0
  %1331 = vmatprep.subr.mxu0 0.0
  %1332 = vmatpush1.msra.mxu0 0.0
  %1333 = vmatprep.subr.mxu0 0.0
  %1334 = vmatpush1.msra.mxu0 0.0
  %1335 = vmatprep.subr.mxu0 0.0
  %1336 = vmatpush1.msra.mxu0 0.0
  %1337 = vmatprep.subr.mxu0 0.0
  %1338 = vmatpush1.msra.mxu0 0.0
  %1339 = vmatprep.subr.mxu0 0.0
  %1340 = vmatpush1.msra.mxu0 0.0
  %1341 = vmatprep.mubr.f32.mxu0 0.0
  %1342 = vmatmul.mubr.f32.gmra.mrb[0].mxu0 %v1197
  %v1343 = vpop.f32.mrb[0].mxu0
  %v1344 = vadd.f32 0.0, %v1343
  %v1345 = vpop.f32.mrb[0].mxu0
  %v1346 = vadd.f32 0.0, %v1345
  %1347 = vmatprep.mubr.f32.mxu0 0.0
  %1348 = vmatmul.mubr.f32.gmra.mrb[0].mxu0 %v1196
  %v1349 = vpop.f32.mrb[0].mxu0
  %v1350 = vadd.f32 0.0, %v1349
  %v1351 = vpop.f32.mrb[0].mxu0
  %v1352 = vadd.f32 0.0, %v1351
  %1353 = vdwg.mxu0
  %v1362 = vrot.slane %v1267, 2
  %v1363 = vrot.slane %v1269, 2
  %v1364 = vrot.slane %v1344, 2
  %v1365 = vrot.slane %v1346, 2
  %v1366 = vrot.slane %v1273, 2
  %v1367 = vsel %vm941, %v1362, %v1366
  %v1368 = vrot.slane %v1275, 2
  %v1369 = vsel %vm941, %v1363, %v1368
  %v1370 = vrot.slane %v1350, 2
  %v1371 = vsel %vm941, %v1364, %v1370
  %v1372 = vrot.slane %v1352, 2
  %v1373 = vsel %vm941, %v1365, %v1372
  %v1382 = vadd.f32 %v214, %v1362
  %v1383 = vadd.f32 %v216, %v1363
  %v1384 = vadd.f32 %v357, %v1364
  %v1385 = vadd.f32 %v359, %v1365
  %v1386 = vadd.f32 %v220, %v1367
  %v1387 = vadd.f32 %v222, %v1369
  %v1388 = vadd.f32 %v363, %v1371
  %v1389 = vadd.f32 %v365, %v1373
  %v1390 = vxor.u32 %v1382, 2147483648
  %v1391 = vxor.u32 %v1386, 2147483648
  %v1392 = vmul.f32 %v1390, 1.442695
  %v1393 = vpow.pop %v1392
  %v1394 = vmul.f32 %v1391, 1.442695
  %v1395 = vpow.pop %v1394
  %v1396 = vadd.f32 %v1393, 1.0
  %v1397 = vadd.f32 %v1395, 1.0
  %v1398 = vrcp.pop %v1396
  %v1399 = vmul.f32 1.0, %v1398
  %v1400 = vrcp.pop %v1397
  %v1401 = vmul.f32 1.0, %v1400
  %v1402 = vxor.u32 %v1383, 2147483648
  %v1403 = vxor.u32 %v1387, 2147483648
  %v1404 = vmul.f32 %v1402, 1.442695
  %v1405 = vpow.pop %v1404
  %v1406 = vmul.f32 %v1403, 1.442695
  %v1407 = vpow.pop %v1406
  %v1408 = vadd.f32 %v1405, 1.0
  %v1409 = vadd.f32 %v1407, 1.0
  %v1410 = vrcp.pop %v1408
  %v1411 = vmul.f32 1.0, %v1410
  %v1412 = vrcp.pop %v1409
  %v1413 = vmul.f32 1.0, %v1412
  %v1414 = vtanh.pop %v1384
  %v1415 = vtanh.pop %v1388
  %v1416 = vxor.u32 %v1385, 2147483648
  %v1417 = vxor.u32 %v1389, 2147483648
  %v1418 = vmul.f32 %v1416, 1.442695
  %v1419 = vpow.pop %v1418
  %v1420 = vmul.f32 %v1417, 1.442695
  %v1421 = vpow.pop %v1420
  %v1422 = vadd.f32 %v1419, 1.0
  %v1423 = vadd.f32 %v1421, 1.0
  %v1424 = vrcp.pop %v1422
  %v1425 = vmul.f32 1.0, %v1424
  %v1426 = vrcp.pop %v1423
  %v1427 = vmul.f32 1.0, %v1426
  %v1430 = vrot.slane %v1187, 6
  %v1431 = vrot.slane %v1188, 6
  %v1432 = vsel %vm855, %v1430, %v1431
  %v1435 = vmul.f32 %v1411, %v1430
  %v1436 = vmul.f32 %v1413, %v1432
  %v1437 = vmul.f32 %v1399, %v1414
  %v1438 = vmul.f32 %v1401, %v1415
  %v1439 = vadd.f32 %v1435, %v1437
  %v1440 = vadd.f32 %v1436, %v1438
  %v1441 = vtanh.pop %v1439
  %v1442 = vtanh.pop %v1440
  %v1443 = vmul.f32 %v1425, %v1441
  %v1444 = vmul.f32 %v1427, %v1442
  %v1447 = vrot.slane %v1443, 6
  %v1448 = vrot.slane %v1444, 6
  %v1449 = vsel %vm855, %v1447, %v1448
  %1452 = vmatprep.subr.mxu0 %v416
  %1453 = vmatpush1.msra.mxu0 %v415
  %1454 = vmatprep.subr.mxu0 %v420
  %1455 = vmatpush1.msra.mxu0 %v419
  %1456 = vmatprep.subr.mxu0 %v424
  %1457 = vmatpush1.msra.mxu0 %v423
  %1458 = vmatprep.subr.mxu0 %v428
  %1459 = vmatpush1.msra.mxu0 %v427
  %1460 = vmatprep.subr.mxu0 %v432
  %1461 = vmatpush1.msra.mxu0 %v431
  %1462 = vmatprep.subr.mxu0 %v436
  %1463 = vmatpush1.msra.mxu0 %v435
  %1464 = vmatprep.subr.mxu0 %v440
  %1465 = vmatpush1.msra.mxu0 %v439
  %1466 = vmatprep.subr.mxu0 %v444
  %1467 = vmatpush1.msra.mxu0 %v443
  %1468 = vmatprep.subr.mxu0 %v448
  %1469 = vmatpush1.msra.mxu0 %v447
  %1470 = vmatprep.subr.mxu0 %v452
  %1471 = vmatpush1.msra.mxu0 %v451
  %1472 = vmatprep.subr.mxu0 %v456
  %1473 = vmatpush1.msra.mxu0 %v455
  %1474 = vmatprep.subr.mxu0 %v460
  %1475 = vmatpush1.msra.mxu0 %v459
  %1476 = vmatprep.subr.mxu0 %v464
  %1477 = vmatpush1.msra.mxu0 %v463
  %1478 = vmatprep.subr.mxu0 %v468
  %1479 = vmatpush1.msra.mxu0 %v467
  %1480 = vmatprep.subr.mxu0 %v472
  %1481 = vmatpush1.msra.mxu0 %v471
  %1482 = vmatprep.subr.mxu0 %v476
  %1483 = vmatpush1.msra.mxu0 %v475
  %1484 = vmatprep.subr.mxu0 0.0
  %1485 = vmatpush1.msra.mxu0 0.0
  %1486 = vmatprep.subr.mxu0 0.0
  %1487 = vmatpush1.msra.mxu0 0.0
  %1488 = vmatprep.subr.mxu0 0.0
  %1489 = vmatpush1.msra.mxu0 0.0
  %1490 = vmatprep.subr.mxu0 0.0
  %1491 = vmatpush1.msra.mxu0 0.0
  %1492 = vmatprep.subr.mxu0 0.0
  %1493 = vmatpush1.msra.mxu0 0.0
  %1494 = vmatprep.subr.mxu0 0.0
  %1495 = vmatpush1.msra.mxu0 0.0
  %1496 = vmatprep.subr.mxu0 0.0
  %1497 = vmatpush1.msra.mxu0 0.0
  %1498 = vmatprep.subr.mxu0 0.0
  %1499 = vmatpush1.msra.mxu0 0.0
  %1500 = vmatprep.subr.mxu0 0.0
  %1501 = vmatpush1.msra.mxu0 0.0
  %1502 = vmatprep.subr.mxu0 0.0
  %1503 = vmatpush1.msra.mxu0 0.0
  %1504 = vmatprep.subr.mxu0 0.0
  %1505 = vmatpush1.msra.mxu0 0.0
  %1506 = vmatprep.subr.mxu0 0.0
  %1507 = vmatpush1.msra.mxu0 0.0
  %1508 = vmatprep.subr.mxu0 0.0
  %1509 = vmatpush1.msra.mxu0 0.0
  %1510 = vmatprep.subr.mxu0 0.0
  %1511 = vmatpush1.msra.mxu0 0.0
  %1512 = vmatprep.subr.mxu0 0.0
  %1513 = vmatpush1.msra.mxu0 0.0
  %1514 = vmatprep.subr.mxu0 0.0
  %1515 = vmatpush1.msra.mxu0 0.0
  %1516 = vmatprep.mubr.f32.mxu0 0.0
  %1517 = vmatmul.mubr.f32.gmra.mrb[0].mxu0 %v1449
  %v1518 = vpop.f32.mrb[0].mxu0
  %v1519 = vadd.f32 0.0, %v1518
  %v1520 = vpop.f32.mrb[0].mxu0
  %v1521 = vadd.f32 0.0, %v1520
  %1522 = vmatprep.mubr.f32.mxu0 0.0
  %1523 = vmatmul.mubr.f32.gmra.mrb[0].mxu0 %v1448
  %v1524 = vpop.f32.mrb[0].mxu0
  %v1525 = vadd.f32 0.0, %v1524
  %v1526 = vpop.f32.mrb[0].mxu0
  %v1527 = vadd.f32 0.0, %v1526
  %1528 = vdwg.mxu0
  %1529 = vmatprep.subr.mxu0 %v418
  %1530 = vmatpush1.msra.mxu0 %v417
  %1531 = vmatprep.subr.mxu0 %v422
  %1532 = vmatpush1.msra.mxu0 %v421
  %1533 = vmatprep.subr.mxu0 %v426
  %1534 = vmatpush1.msra.mxu0 %v425
  %1535 = vmatprep.subr.mxu0 %v430
  %1536 = vmatpush1.msra.mxu0 %v429
  %1537 = vmatprep.subr.mxu0 %v434
  %1538 = vmatpush1.msra.mxu0 %v433
  %1539 = vmatprep.subr.mxu0 %v438
  %1540 = vmatpush1.msra.mxu0 %v437
  %1541 = vmatprep.subr.mxu0 %v442
  %1542 = vmatpush1.msra.mxu0 %v441
  %1543 = vmatprep.subr.mxu0 %v446
  %1544 = vmatpush1.msra.mxu0 %v445
  %1545 = vmatprep.subr.mxu0 %v450
  %1546 = vmatpush1.msra.mxu0 %v449
  %1547 = vmatprep.subr.mxu0 %v454
  %1548 = vmatpush1.msra.mxu0 %v453
  %1549 = vmatprep.subr.mxu0 %v458
  %1550 = vmatpush1.msra.mxu0 %v457
  %1551 = vmatprep.subr.mxu0 %v462
  %1552 = vmatpush1.msra.mxu0 %v461
  %1553 = vmatprep.subr.mxu0 %v466
  %1554 = vmatpush1.msra.mxu0 %v465
  %1555 = vmatprep.subr.mxu0 %v470
  %1556 = vmatpush1.msra.mxu0 %v469
  %1557 = vmatprep.subr.mxu0 %v474
  %1558 = vmatpush1.msra.mxu0 %v473
  %1559 = vmatprep.subr.mxu0 %v478
  %1560 = vmatpush1.msra.mxu0 %v477
  %1561 = vmatprep.subr.mxu0 0.0
  %1562 = vmatpush1.msra.mxu0 0.0
  %1563 = vmatprep.subr.mxu0 0.0
  %1564 = vmatpush1.msra.mxu0 0.0
  %1565 = vmatprep.subr.mxu0 0.0
  %1566 = vmatpush1.msra.mxu0 0.0
  %1567 = vmatprep.subr.mxu0 0.0
  %1568 = vmatpush1.msra.mxu0 0.0
  %1569 = vmatprep.subr.mxu0 0.0
  %1570 = vmatpush1.msra.mxu0 0.0
  %1571 = vmatprep.subr.mxu0 0.0
  %1572 = vmatpush1.msra.mxu0 0.0
  %1573 = vmatprep.subr.mxu0 0.0
  %1574 = vmatpush1.msra.mxu0 0.0
  %1575 = vmatprep.subr.mxu0 0.0
  %1576 = vmatpush1.msra.mxu0 0.0
  %1577 = vmatprep.subr.mxu0 0.0
  %1578 = vmatpush1.msra.mxu0 0.0
  %1579 = vmatprep.subr.mxu0 0.0
  %1580 = vmatpush1.msra.mxu0 0.0
  %1581 = vmatprep.subr.mxu0 0.0
  %1582 = vmatpush1.msra.mxu0 0.0
  %1583 = vmatprep.subr.mxu0 0.0
  %1584 = vmatpush1.msra.mxu0 0.0
  %1585 = vmatprep.subr.mxu0 0.0
  %1586 = vmatpush1.msra.mxu0 0.0
  %1587 = vmatprep.subr.mxu0 0.0
  %1588 = vmatpush1.msra.mxu0 0.0
  %1589 = vmatprep.subr.mxu0 0.0
  %1590 = vmatpush1.msra.mxu0 0.0
  %1591 = vmatprep.subr.mxu0 0.0
  %1592 = vmatpush1.msra.mxu0 0.0
  %1593 = vmatprep.mubr.f32.mxu0 0.0
  %1594 = vmatmul.mubr.f32.gmra.mrb[0].mxu0 %v1449
  %v1595 = vpop.f32.mrb[0].mxu0
  %v1596 = vadd.f32 0.0, %v1595
  %v1597 = vpop.f32.mrb[0].mxu0
  %v1598 = vadd.f32 0.0, %v1597
  %1599 = vmatprep.mubr.f32.mxu0 0.0
  %1600 = vmatmul.mubr.f32.gmra.mrb[0].mxu0 %v1448
  %v1601 = vpop.f32.mrb[0].mxu0
  %v1602 = vadd.f32 0.0, %v1601
  %v1603 = vpop.f32.mrb[0].mxu0
  %v1604 = vadd.f32 0.0, %v1603
  %1605 = vdwg.mxu0
  %v1606 = vadd.f32 %v226, %v1519
  %v1607 = vadd.f32 %v228, %v1521
  %v1608 = vadd.f32 %v369, %v1596
  %v1609 = vadd.f32 %v371, %v1598
  %v1610 = vadd.f32 %v232, %v1525
  %v1611 = vadd.f32 %v234, %v1527
  %v1612 = vadd.f32 %v375, %v1602
  %v1613 = vadd.f32 %v377, %v1604
  %v1614 = vxor.u32 %v1606, 2147483648
  %v1615 = vxor.u32 %v1610, 2147483648
  %v1616 = vmul.f32 %v1614, 1.442695
  %v1617 = vpow.pop %v1616
  %v1618 = vmul.f32 %v1615, 1.442695
  %v1619 = vpow.pop %v1618
  %v1620 = vadd.f32 %v1617, 1.0
  %v1621 = vadd.f32 %v1619, 1.0
  %v1622 = vrcp.pop %v1620
  %v1623 = vmul.f32 1.0, %v1622
  %v1624 = vrcp.pop %v1621
  %v1625 = vmul.f32 1.0, %v1624
  %v1626 = vxor.u32 %v1607, 2147483648
  %v1627 = vxor.u32 %v1611, 2147483648
  %v1628 = vmul.f32 %v1626, 1.442695
  %v1629 = vpow.pop %v1628
  %v1630 = vmul.f32 %v1627, 1.442695
  %v1631 = vpow.pop %v1630
  %v1632 = vadd.f32 %v1629, 1.0
  %v1633 = vadd.f32 %v1631, 1.0
  %v1634 = vrcp.pop %v1632
  %v1635 = vmul.f32 1.0, %v1634
  %v1636 = vrcp.pop %v1633
  %v1637 = vmul.f32 1.0, %v1636
  %v1638 = vtanh.pop %v1608
  %v1639 = vtanh.pop %v1612
  %v1640 = vxor.u32 %v1609, 2147483648
  %v1641 = vxor.u32 %v1613, 2147483648
  %v1642 = vmul.f32 %v1640, 1.442695
  %v1643 = vpow.pop %v1642
  %v1644 = vmul.f32 %v1641, 1.442695
  %v1645 = vpow.pop %v1644
  %v1646 = vadd.f32 %v1643, 1.0
  %v1647 = vadd.f32 %v1645, 1.0
  %v1648 = vrcp.pop %v1646
  %v1649 = vmul.f32 1.0, %v1648
  %v1650 = vrcp.pop %v1647
  %v1651 = vmul.f32 1.0, %v1650
  %v1654 = vrot.slane %v1439, 6
  %v1655 = vrot.slane %v1440, 6
  %v1656 = vsel %vm855, %v1654, %v1655
  %v1659 = vmul.f32 %v1635, %v1656
  %v1660 = vmul.f32 %v1637, %v1655
  %v1661 = vmul.f32 %v1623, %v1638
  %v1662 = vmul.f32 %v1625, %v1639
  %v1663 = vadd.f32 %v1659, %v1661
  %v1664 = vadd.f32 %v1660, %v1662
  %v1665 = vtanh.pop %v1663
  %v1666 = vtanh.pop %v1664
  %v1667 = vmul.f32 %v1649, %v1665
  %v1668 = vmul.f32 %v1651, %v1666
  %1669 = vmatprep.subr.mxu0 %v416
  %1670 = vmatpush1.msra.mxu0 %v415
  %1671 = vmatprep.subr.mxu0 %v420
  %1672 = vmatpush1.msra.mxu0 %v419
  %1673 = vmatprep.subr.mxu0 %v424
  %1674 = vmatpush1.msra.mxu0 %v423
  %1675 = vmatprep.subr.mxu0 %v428
  %1676 = vmatpush1.msra.mxu0 %v427
  %1677 = vmatprep.subr.mxu0 %v432
  %1678 = vmatpush1.msra.mxu0 %v431
  %1679 = vmatprep.subr.mxu0 %v436
  %1680 = vmatpush1.msra.mxu0 %v435
  %1681 = vmatprep.subr.mxu0 %v440
  %1682 = vmatpush1.msra.mxu0 %v439
  %1683 = vmatprep.subr.mxu0 %v444
  %1684 = vmatpush1.msra.mxu0 %v443
  %1685 = vmatprep.subr.mxu0 %v448
  %1686 = vmatpush1.msra.mxu0 %v447
  %1687 = vmatprep.subr.mxu0 %v452
  %1688 = vmatpush1.msra.mxu0 %v451
  %1689 = vmatprep.subr.mxu0 %v456
  %1690 = vmatpush1.msra.mxu0 %v455
  %1691 = vmatprep.subr.mxu0 %v460
  %1692 = vmatpush1.msra.mxu0 %v459
  %1693 = vmatprep.subr.mxu0 %v464
  %1694 = vmatpush1.msra.mxu0 %v463
  %1695 = vmatprep.subr.mxu0 %v468
  %1696 = vmatpush1.msra.mxu0 %v467
  %1697 = vmatprep.subr.mxu0 %v472
  %1698 = vmatpush1.msra.mxu0 %v471
  %1699 = vmatprep.subr.mxu0 %v476
  %1700 = vmatpush1.msra.mxu0 %v475
  %1701 = vmatprep.subr.mxu0 0.0
  %1702 = vmatpush1.msra.mxu0 0.0
  %1703 = vmatprep.subr.mxu0 0.0
  %1704 = vmatpush1.msra.mxu0 0.0
  %1705 = vmatprep.subr.mxu0 0.0
  %1706 = vmatpush1.msra.mxu0 0.0
  %1707 = vmatprep.subr.mxu0 0.0
  %1708 = vmatpush1.msra.mxu0 0.0
  %1709 = vmatprep.subr.mxu0 0.0
  %1710 = vmatpush1.msra.mxu0 0.0
  %1711 = vmatprep.subr.mxu0 0.0
  %1712 = vmatpush1.msra.mxu0 0.0
  %1713 = vmatprep.subr.mxu0 0.0
  %1714 = vmatpush1.msra.mxu0 0.0
  %1715 = vmatprep.subr.mxu0 0.0
  %1716 = vmatpush1.msra.mxu0 0.0
  %1717 = vmatprep.subr.mxu0 0.0
  %1718 = vmatpush1.msra.mxu0 0.0
  %1719 = vmatprep.subr.mxu0 0.0
  %1720 = vmatpush1.msra.mxu0 0.0
  %1721 = vmatprep.subr.mxu0 0.0
  %1722 = vmatpush1.msra.mxu0 0.0
  %1723 = vmatprep.subr.mxu0 0.0
  %1724 = vmatpush1.msra.mxu0 0.0
  %1725 = vmatprep.subr.mxu0 0.0
  %1726 = vmatpush1.msra.mxu0 0.0
  %1727 = vmatprep.subr.mxu0 0.0
  %1728 = vmatpush1.msra.mxu0 0.0
  %1729 = vmatprep.subr.mxu0 0.0
  %1730 = vmatpush1.msra.mxu0 0.0
  %1731 = vmatprep.subr.mxu0 0.0
  %1732 = vmatpush1.msra.mxu0 0.0
  %1733 = vmatprep.mubr.f32.mxu0 0.0
  %1734 = vmatmul.mubr.f32.gmra.mrb[0].mxu0 %v1667
  %v1735 = vpop.f32.mrb[0].mxu0
  %v1736 = vadd.f32 0.0, %v1735
  %v1737 = vpop.f32.mrb[0].mxu0
  %v1738 = vadd.f32 0.0, %v1737
  %1739 = vmatprep.mubr.f32.mxu0 0.0
  %1740 = vmatmul.mubr.f32.gmra.mrb[0].mxu0 %v1668
  %v1741 = vpop.f32.mrb[0].mxu0
  %v1742 = vadd.f32 0.0, %v1741
  %v1743 = vpop.f32.mrb[0].mxu0
  %v1744 = vadd.f32 0.0, %v1743
  %1745 = vdwg.mxu0
  %1746 = vmatprep.subr.mxu0 %v418
  %1747 = vmatpush1.msra.mxu0 %v417
  %1748 = vmatprep.subr.mxu0 %v422
  %1749 = vmatpush1.msra.mxu0 %v421
  %1750 = vmatprep.subr.mxu0 %v426
  %1751 = vmatpush1.msra.mxu0 %v425
  %1752 = vmatprep.subr.mxu0 %v430
  %1753 = vmatpush1.msra.mxu0 %v429
  %1754 = vmatprep.subr.mxu0 %v434
  %1755 = vmatpush1.msra.mxu0 %v433
  %1756 = vmatprep.subr.mxu0 %v438
  %1757 = vmatpush1.msra.mxu0 %v437
  %1758 = vmatprep.subr.mxu0 %v442
  %1759 = vmatpush1.msra.mxu0 %v441
  %1760 = vmatprep.subr.mxu0 %v446
  %1761 = vmatpush1.msra.mxu0 %v445
  %1762 = vmatprep.subr.mxu0 %v450
  %1763 = vmatpush1.msra.mxu0 %v449
  %1764 = vmatprep.subr.mxu0 %v454
  %1765 = vmatpush1.msra.mxu0 %v453
  %1766 = vmatprep.subr.mxu0 %v458
  %1767 = vmatpush1.msra.mxu0 %v457
  %1768 = vmatprep.subr.mxu0 %v462
  %1769 = vmatpush1.msra.mxu0 %v461
  %1770 = vmatprep.subr.mxu0 %v466
  %1771 = vmatpush1.msra.mxu0 %v465
  %1772 = vmatprep.subr.mxu0 %v470
  %1773 = vmatpush1.msra.mxu0 %v469
  %1774 = vmatprep.subr.mxu0 %v474
  %1775 = vmatpush1.msra.mxu0 %v473
  %1776 = vmatprep.subr.mxu0 %v478
  %1777 = vmatpush1.msra.mxu0 %v477
  %1778 = vmatprep.subr.mxu0 0.0
  %1779 = vmatpush1.msra.mxu0 0.0
  %1780 = vmatprep.subr.mxu0 0.0
  %1781 = vmatpush1.msra.mxu0 0.0
  %1782 = vmatprep.subr.mxu0 0.0
  %1783 = vmatpush1.msra.mxu0 0.0
  %1784 = vmatprep.subr.mxu0 0.0
  %1785 = vmatpush1.msra.mxu0 0.0
  %1786 = vmatprep.subr.mxu0 0.0
  %1787 = vmatpush1.msra.mxu0 0.0
  %1788 = vmatprep.subr.mxu0 0.0
  %1789 = vmatpush1.msra.mxu0 0.0
  %1790 = vmatprep.subr.mxu0 0.0
  %1791 = vmatpush1.msra.mxu0 0.0
  %1792 = vmatprep.subr.mxu0 0.0
  %1793 = vmatpush1.msra.mxu0 0.0
  %1794 = vmatprep.subr.mxu0 0.0
  %1795 = vmatpush1.msra.mxu0 0.0
  %1796 = vmatprep.subr.mxu0 0.0
  %1797 = vmatpush1.msra.mxu0 0.0
  %1798 = vmatprep.subr.mxu0 0.0
  %1799 = vmatpush1.msra.mxu0 0.0
  %1800 = vmatprep.subr.mxu0 0.0
  %1801 = vmatpush1.msra.mxu0 0.0
  %1802 = vmatprep.subr.mxu0 0.0
  %1803 = vmatpush1.msra.mxu0 0.0
  %1804 = vmatprep.subr.mxu0 0.0
  %1805 = vmatpush1.msra.mxu0 0.0
  %1806 = vmatprep.subr.mxu0 0.0
  %1807 = vmatpush1.msra.mxu0 0.0
  %1808 = vmatprep.subr.mxu0 0.0
  %1809 = vmatpush1.msra.mxu0 0.0
  %1810 = vmatprep.mubr.f32.mxu0 0.0
  %1811 = vmatmul.mubr.f32.gmra.mrb[0].mxu0 %v1667
  %v1812 = vpop.f32.mrb[0].mxu0
  %v1813 = vadd.f32 0.0, %v1812
  %v1814 = vpop.f32.mrb[0].mxu0
  %v1815 = vadd.f32 0.0, %v1814
  %1816 = vmatprep.mubr.f32.mxu0 0.0
  %1817 = vmatmul.mubr.f32.gmra.mrb[0].mxu0 %v1668
  %v1818 = vpop.f32.mrb[0].mxu0
  %v1819 = vadd.f32 0.0, %v1818
  %v1820 = vpop.f32.mrb[0].mxu0
  %v1821 = vadd.f32 0.0, %v1820
  %1822 = vdwg.mxu0
  %v1831 = vrot.slane %v1736, 6
  %v1832 = vrot.slane %v1738, 6
  %v1833 = vrot.slane %v1813, 6
  %v1834 = vrot.slane %v1815, 6
  %v1835 = vrot.slane %v1742, 6
  %v1836 = vsel %vm855, %v1831, %v1835
  %v1837 = vrot.slane %v1744, 6
  %v1838 = vsel %vm855, %v1832, %v1837
  %v1839 = vrot.slane %v1819, 6
  %v1840 = vsel %vm855, %v1833, %v1839
  %v1841 = vrot.slane %v1821, 6
  %v1842 = vsel %vm855, %v1834, %v1841
  %v1851 = vadd.f32 %v232, %v1831
  %v1852 = vadd.f32 %v234, %v1832
  %v1853 = vadd.f32 %v375, %v1833
  %v1854 = vadd.f32 %v377, %v1834
  %v1855 = vadd.f32 %v238, %v1836
  %v1856 = vadd.f32 %v240, %v1838
  %v1857 = vadd.f32 %v381, %v1840
  %v1858 = vadd.f32 %v383, %v1842
  %v1859 = vxor.u32 %v1851, 2147483648
  %v1860 = vxor.u32 %v1855, 2147483648
  %v1861 = vmul.f32 %v1859, 1.442695
  %v1862 = vpow.pop %v1861
  %v1863 = vmul.f32 %v1860, 1.442695
  %v1864 = vpow.pop %v1863
  %v1865 = vadd.f32 %v1862, 1.0
  %v1866 = vadd.f32 %v1864, 1.0
  %v1867 = vrcp.pop %v1865
  %v1868 = vmul.f32 1.0, %v1867
  %v1869 = vrcp.pop %v1866
  %v1870 = vmul.f32 1.0, %v1869
  %v1871 = vxor.u32 %v1852, 2147483648
  %v1872 = vxor.u32 %v1856, 2147483648
  %v1873 = vmul.f32 %v1871, 1.442695
  %v1874 = vpow.pop %v1873
  %v1875 = vmul.f32 %v1872, 1.442695
  %v1876 = vpow.pop %v1875
  %v1877 = vadd.f32 %v1874, 1.0
  %v1878 = vadd.f32 %v1876, 1.0
  %v1879 = vrcp.pop %v1877
  %v1880 = vmul.f32 1.0, %v1879
  %v1881 = vrcp.pop %v1878
  %v1882 = vmul.f32 1.0, %v1881
  %v1883 = vtanh.pop %v1853
  %v1884 = vtanh.pop %v1857
  %v1885 = vxor.u32 %v1854, 2147483648
  %v1886 = vxor.u32 %v1858, 2147483648
  %v1887 = vmul.f32 %v1885, 1.442695
  %v1888 = vpow.pop %v1887
  %v1889 = vmul.f32 %v1886, 1.442695
  %v1890 = vpow.pop %v1889
  %v1891 = vadd.f32 %v1888, 1.0
  %v1892 = vadd.f32 %v1890, 1.0
  %v1893 = vrcp.pop %v1891
  %v1894 = vmul.f32 1.0, %v1893
  %v1895 = vrcp.pop %v1892
  %v1896 = vmul.f32 1.0, %v1895
  %v1899 = vrot.slane %v1663, 6
  %v1900 = vrot.slane %v1664, 6
  %v1901 = vsel %vm855, %v1899, %v1900
  %v1904 = vmul.f32 %v1880, %v1899
  %v1905 = vmul.f32 %v1882, %v1901
  %v1906 = vmul.f32 %v1868, %v1883
  %v1907 = vmul.f32 %v1870, %v1884
  %v1908 = vadd.f32 %v1904, %v1906
  %v1909 = vadd.f32 %v1905, %v1907
  %v1910 = vtanh.pop %v1908
  %v1911 = vtanh.pop %v1909
  %v1912 = vmul.f32 %v1894, %v1910
  %v1913 = vmul.f32 %v1896, %v1911
  %v1916 = vrot.slane %v1912, 2
  %v1917 = vrot.slane %v1913, 2
  %v1918 = vsel %vm941, %v1916, %v1917
  %1921 = vmatprep.subr.mxu0 %v416
  %1922 = vmatpush1.msra.mxu0 %v415
  %1923 = vmatprep.subr.mxu0 %v420
  %1924 = vmatpush1.msra.mxu0 %v419
  %1925 = vmatprep.subr.mxu0 %v424
  %1926 = vmatpush1.msra.mxu0 %v423
  %1927 = vmatprep.subr.mxu0 %v428
  %1928 = vmatpush1.msra.mxu0 %v427
  %1929 = vmatprep.subr.mxu0 %v432
  %1930 = vmatpush1.msra.mxu0 %v431
  %1931 = vmatprep.subr.mxu0 %v436
  %1932 = vmatpush1.msra.mxu0 %v435
  %1933 = vmatprep.subr.mxu0 %v440
  %1934 = vmatpush1.msra.mxu0 %v439
  %1935 = vmatprep.subr.mxu0 %v444
  %1936 = vmatpush1.msra.mxu0 %v443
  %1937 = vmatprep.subr.mxu0 %v448
  %1938 = vmatpush1.msra.mxu0 %v447
  %1939 = vmatprep.subr.mxu0 %v452
  %1940 = vmatpush1.msra.mxu0 %v451
  %1941 = vmatprep.subr.mxu0 %v456
  %1942 = vmatpush1.msra.mxu0 %v455
  %1943 = vmatprep.subr.mxu0 %v460
  %1944 = vmatpush1.msra.mxu0 %v459
  %1945 = vmatprep.subr.mxu0 %v464
  %1946 = vmatpush1.msra.mxu0 %v463
  %1947 = vmatprep.subr.mxu0 %v468
  %1948 = vmatpush1.msra.mxu0 %v467
  %1949 = vmatprep.subr.mxu0 %v472
  %1950 = vmatpush1.msra.mxu0 %v471
  %1951 = vmatprep.subr.mxu0 %v476
  %1952 = vmatpush1.msra.mxu0 %v475
  %1953 = vmatprep.subr.mxu0 0.0
  %1954 = vmatpush1.msra.mxu0 0.0
  %1955 = vmatprep.subr.mxu0 0.0
  %1956 = vmatpush1.msra.mxu0 0.0
  %1957 = vmatprep.subr.mxu0 0.0
  %1958 = vmatpush1.msra.mxu0 0.0
  %1959 = vmatprep.subr.mxu0 0.0
  %1960 = vmatpush1.msra.mxu0 0.0
  %1961 = vmatprep.subr.mxu0 0.0
  %1962 = vmatpush1.msra.mxu0 0.0
  %1963 = vmatprep.subr.mxu0 0.0
  %1964 = vmatpush1.msra.mxu0 0.0
  %1965 = vmatprep.subr.mxu0 0.0
  %1966 = vmatpush1.msra.mxu0 0.0
  %1967 = vmatprep.subr.mxu0 0.0
  %1968 = vmatpush1.msra.mxu0 0.0
  %1969 = vmatprep.subr.mxu0 0.0
  %1970 = vmatpush1.msra.mxu0 0.0
  %1971 = vmatprep.subr.mxu0 0.0
  %1972 = vmatpush1.msra.mxu0 0.0
  %1973 = vmatprep.subr.mxu0 0.0
  %1974 = vmatpush1.msra.mxu0 0.0
  %1975 = vmatprep.subr.mxu0 0.0
  %1976 = vmatpush1.msra.mxu0 0.0
  %1977 = vmatprep.subr.mxu0 0.0
  %1978 = vmatpush1.msra.mxu0 0.0
  %1979 = vmatprep.subr.mxu0 0.0
  %1980 = vmatpush1.msra.mxu0 0.0
  %1981 = vmatprep.subr.mxu0 0.0
  %1982 = vmatpush1.msra.mxu0 0.0
  %1983 = vmatprep.subr.mxu0 0.0
  %1984 = vmatpush1.msra.mxu0 0.0
  %1985 = vmatprep.mubr.f32.mxu0 0.0
  %1986 = vmatmul.mubr.f32.gmra.mrb[0].mxu0 %v1918
  %v1987 = vpop.f32.mrb[0].mxu0
  %v1988 = vadd.f32 0.0, %v1987
  %v1989 = vpop.f32.mrb[0].mxu0
  %v1990 = vadd.f32 0.0, %v1989
  %1991 = vmatprep.mubr.f32.mxu0 0.0
  %1992 = vmatmul.mubr.f32.gmra.mrb[0].mxu0 %v1917
  %v1993 = vpop.f32.mrb[0].mxu0
  %v1994 = vadd.f32 0.0, %v1993
  %v1995 = vpop.f32.mrb[0].mxu0
  %v1996 = vadd.f32 0.0, %v1995
  %1997 = vdwg.mxu0
  %1998 = vmatprep.subr.mxu0 %v418
  %1999 = vmatpush1.msra.mxu0 %v417
  %2000 = vmatprep.subr.mxu0 %v422
  %2001 = vmatpush1.msra.mxu0 %v421
  %2002 = vmatprep.subr.mxu0 %v426
  %2003 = vmatpush1.msra.mxu0 %v425
  %2004 = vmatprep.subr.mxu0 %v430
  %2005 = vmatpush1.msra.mxu0 %v429
  %2006 = vmatprep.subr.mxu0 %v434
  %2007 = vmatpush1.msra.mxu0 %v433
  %2008 = vmatprep.subr.mxu0 %v438
  %2009 = vmatpush1.msra.mxu0 %v437
  %2010 = vmatprep.subr.mxu0 %v442
  %2011 = vmatpush1.msra.mxu0 %v441
  %2012 = vmatprep.subr.mxu0 %v446
  %2013 = vmatpush1.msra.mxu0 %v445
  %2014 = vmatprep.subr.mxu0 %v450
  %2015 = vmatpush1.msra.mxu0 %v449
  %2016 = vmatprep.subr.mxu0 %v454
  %2017 = vmatpush1.msra.mxu0 %v453
  %2018 = vmatprep.subr.mxu0 %v458
  %2019 = vmatpush1.msra.mxu0 %v457
  %2020 = vmatprep.subr.mxu0 %v462
  %2021 = vmatpush1.msra.mxu0 %v461
  %2022 = vmatprep.subr.mxu0 %v466
  %2023 = vmatpush1.msra.mxu0 %v465
  %2024 = vmatprep.subr.mxu0 %v470
  %2025 = vmatpush1.msra.mxu0 %v469
  %2026 = vmatprep.subr.mxu0 %v474
  %2027 = vmatpush1.msra.mxu0 %v473
  %2028 = vmatprep.subr.mxu0 %v478
  %2029 = vmatpush1.msra.mxu0 %v477
  %2030 = vmatprep.subr.mxu0 0.0
  %2031 = vmatpush1.msra.mxu0 0.0
  %2032 = vmatprep.subr.mxu0 0.0
  %2033 = vmatpush1.msra.mxu0 0.0
  %2034 = vmatprep.subr.mxu0 0.0
  %2035 = vmatpush1.msra.mxu0 0.0
  %2036 = vmatprep.subr.mxu0 0.0
  %2037 = vmatpush1.msra.mxu0 0.0
  %2038 = vmatprep.subr.mxu0 0.0
  %2039 = vmatpush1.msra.mxu0 0.0
  %2040 = vmatprep.subr.mxu0 0.0
  %2041 = vmatpush1.msra.mxu0 0.0
  %2042 = vmatprep.subr.mxu0 0.0
  %2043 = vmatpush1.msra.mxu0 0.0
  %2044 = vmatprep.subr.mxu0 0.0
  %2045 = vmatpush1.msra.mxu0 0.0
  %2046 = vmatprep.subr.mxu0 0.0
  %2047 = vmatpush1.msra.mxu0 0.0
  %2048 = vmatprep.subr.mxu0 0.0
  %2049 = vmatpush1.msra.mxu0 0.0
  %2050 = vmatprep.subr.mxu0 0.0
  %2051 = vmatpush1.msra.mxu0 0.0
  %2052 = vmatprep.subr.mxu0 0.0
  %2053 = vmatpush1.msra.mxu0 0.0
  %2054 = vmatprep.subr.mxu0 0.0
  %2055 = vmatpush1.msra.mxu0 0.0
  %2056 = vmatprep.subr.mxu0 0.0
  %2057 = vmatpush1.msra.mxu0 0.0
  %2058 = vmatprep.subr.mxu0 0.0
  %2059 = vmatpush1.msra.mxu0 0.0
  %2060 = vmatprep.subr.mxu0 0.0
  %2061 = vmatpush1.msra.mxu0 0.0
  %2062 = vmatprep.mubr.f32.mxu0 0.0
  %2063 = vmatmul.mubr.f32.gmra.mrb[0].mxu0 %v1918
  %v2064 = vpop.f32.mrb[0].mxu0
  %v2065 = vadd.f32 0.0, %v2064
  %v2066 = vpop.f32.mrb[0].mxu0
  %v2067 = vadd.f32 0.0, %v2066
  %2068 = vmatprep.mubr.f32.mxu0 0.0
  %2069 = vmatmul.mubr.f32.gmra.mrb[0].mxu0 %v1917
  %v2070 = vpop.f32.mrb[0].mxu0
  %v2071 = vadd.f32 0.0, %v2070
  %v2072 = vpop.f32.mrb[0].mxu0
  %v2073 = vadd.f32 0.0, %v2072
  %2074 = vdwg.mxu0
  %v2083 = vrot.slane %v1988, 4
  %v2084 = vrot.slane %v1990, 4
  %v2085 = vrot.slane %v2065, 4
  %v2086 = vrot.slane %v2067, 4
  %v2087 = vrot.slane %v1994, 4
  %v2088 = vsel %vm1109, %v2083, %v2087
  %v2089 = vrot.slane %v1996, 4
  %v2090 = vsel %vm1109, %v2084, %v2089
  %v2091 = vrot.slane %v2071, 4
  %v2092 = vsel %vm1109, %v2085, %v2091
  %v2093 = vrot.slane %v2073, 4
  %v2094 = vsel %vm1109, %v2086, %v2093
  %v2103 = vadd.f32 %v238, %v2083
  %v2104 = vadd.f32 %v240, %v2084
  %v2105 = vadd.f32 %v381, %v2085
  %v2106 = vadd.f32 %v383, %v2086
  %v2107 = vadd.f32 %v244, %v2088
  %v2108 = vadd.f32 %v246, %v2090
  %v2109 = vadd.f32 %v387, %v2092
  %v2110 = vadd.f32 %v389, %v2094
  %v2111 = vxor.u32 %v2103, 2147483648
  %v2112 = vxor.u32 %v2107, 2147483648
  %v2113 = vmul.f32 %v2111, 1.442695
  %v2114 = vpow.pop %v2113
  %v2115 = vmul.f32 %v2112, 1.442695
  %v2116 = vpow.pop %v2115
  %v2117 = vadd.f32 %v2114, 1.0
  %v2118 = vadd.f32 %v2116, 1.0
  %v2119 = vrcp.pop %v2117
  %v2120 = vmul.f32 1.0, %v2119
  %v2121 = vrcp.pop %v2118
  %v2122 = vmul.f32 1.0, %v2121
  %v2123 = vxor.u32 %v2104, 2147483648
  %v2124 = vxor.u32 %v2108, 2147483648
  %v2125 = vmul.f32 %v2123, 1.442695
  %v2126 = vpow.pop %v2125
  %v2127 = vmul.f32 %v2124, 1.442695
  %v2128 = vpow.pop %v2127
  %v2129 = vadd.f32 %v2126, 1.0
  %v2130 = vadd.f32 %v2128, 1.0
  %v2131 = vrcp.pop %v2129
  %v2132 = vmul.f32 1.0, %v2131
  %v2133 = vrcp.pop %v2130
  %v2134 = vmul.f32 1.0, %v2133
  %v2135 = vtanh.pop %v2105
  %v2136 = vtanh.pop %v2109
  %v2137 = vxor.u32 %v2106, 2147483648
  %v2138 = vxor.u32 %v2110, 2147483648
  %v2139 = vmul.f32 %v2137, 1.442695
  %v2140 = vpow.pop %v2139
  %v2141 = vmul.f32 %v2138, 1.442695
  %v2142 = vpow.pop %v2141
  %v2143 = vadd.f32 %v2140, 1.0
  %v2144 = vadd.f32 %v2142, 1.0
  %v2145 = vrcp.pop %v2143
  %v2146 = vmul.f32 1.0, %v2145
  %v2147 = vrcp.pop %v2144
  %v2148 = vmul.f32 1.0, %v2147
  %v2151 = vrot.slane %v1908, 6
  %v2152 = vrot.slane %v1909, 6
  %v2153 = vsel %vm855, %v2151, %v2152
  %v2156 = vmul.f32 %v2132, %v2151
  %v2157 = vmul.f32 %v2134, %v2153
  %v2158 = vmul.f32 %v2120, %v2135
  %v2159 = vmul.f32 %v2122, %v2136
  %v2160 = vadd.f32 %v2156, %v2158
  %v2161 = vadd.f32 %v2157, %v2159
  %v2162 = vtanh.pop %v2160
  %v2163 = vtanh.pop %v2161
  %v2164 = vmul.f32 %v2146, %v2162
  %v2165 = vmul.f32 %v2148, %v2163
  %v2168 = vrot.slane %v2164, 4
  %v2169 = vrot.slane %v2165, 4
  %v2170 = vsel %vm1109, %v2168, %v2169
  %2173 = vmatprep.subr.mxu0 %v416
  %2174 = vmatpush1.msra.mxu0 %v415
  %2175 = vmatprep.subr.mxu0 %v420
  %2176 = vmatpush1.msra.mxu0 %v419
  %2177 = vmatprep.subr.mxu0 %v424
  %2178 = vmatpush1.msra.mxu0 %v423
  %2179 = vmatprep.subr.mxu0 %v428
  %2180 = vmatpush1.msra.mxu0 %v427
  %2181 = vmatprep.subr.mxu0 %v432
  %2182 = vmatpush1.msra.mxu0 %v431
  %2183 = vmatprep.subr.mxu0 %v436
  %2184 = vmatpush1.msra.mxu0 %v435
  %2185 = vmatprep.subr.mxu0 %v440
  %2186 = vmatpush1.msra.mxu0 %v439
  %2187 = vmatprep.subr.mxu0 %v444
  %2188 = vmatpush1.msra.mxu0 %v443
  %2189 = vmatprep.subr.mxu0 %v448
  %2190 = vmatpush1.msra.mxu0 %v447
  %2191 = vmatprep.subr.mxu0 %v452
  %2192 = vmatpush1.msra.mxu0 %v451
  %2193 = vmatprep.subr.mxu0 %v456
  %2194 = vmatpush1.msra.mxu0 %v455
  %2195 = vmatprep.subr.mxu0 %v460
  %2196 = vmatpush1.msra.mxu0 %v459
  %2197 = vmatprep.subr.mxu0 %v464
  %2198 = vmatpush1.msra.mxu0 %v463
  %2199 = vmatprep.subr.mxu0 %v468
  %2200 = vmatpush1.msra.mxu0 %v467
  %2201 = vmatprep.subr.mxu0 %v472
  %2202 = vmatpush1.msra.mxu0 %v471
  %2203 = vmatprep.subr.mxu0 %v476
  %2204 = vmatpush1.msra.mxu0 %v475
  %2205 = vmatprep.subr.mxu0 0.0
  %2206 = vmatpush1.msra.mxu0 0.0
  %2207 = vmatprep.subr.mxu0 0.0
  %2208 = vmatpush1.msra.mxu0 0.0
  %2209 = vmatprep.subr.mxu0 0.0
  %2210 = vmatpush1.msra.mxu0 0.0
  %2211 = vmatprep.subr.mxu0 0.0
  %2212 = vmatpush1.msra.mxu0 0.0
  %2213 = vmatprep.subr.mxu0 0.0
  %2214 = vmatpush1.msra.mxu0 0.0
  %2215 = vmatprep.subr.mxu0 0.0
  %2216 = vmatpush1.msra.mxu0 0.0
  %2217 = vmatprep.subr.mxu0 0.0
  %2218 = vmatpush1.msra.mxu0 0.0
  %2219 = vmatprep.subr.mxu0 0.0
  %2220 = vmatpush1.msra.mxu0 0.0
  %2221 = vmatprep.subr.mxu0 0.0
  %2222 = vmatpush1.msra.mxu0 0.0
  %2223 = vmatprep.subr.mxu0 0.0
  %2224 = vmatpush1.msra.mxu0 0.0
  %2225 = vmatprep.subr.mxu0 0.0
  %2226 = vmatpush1.msra.mxu0 0.0
  %2227 = vmatprep.subr.mxu0 0.0
  %2228 = vmatpush1.msra.mxu0 0.0
  %2229 = vmatprep.subr.mxu0 0.0
  %2230 = vmatpush1.msra.mxu0 0.0
  %2231 = vmatprep.subr.mxu0 0.0
  %2232 = vmatpush1.msra.mxu0 0.0
  %2233 = vmatprep.subr.mxu0 0.0
  %2234 = vmatpush1.msra.mxu0 0.0
  %2235 = vmatprep.subr.mxu0 0.0
  %2236 = vmatpush1.msra.mxu0 0.0
  %2237 = vmatprep.mubr.f32.mxu0 0.0
  %2238 = vmatmul.mubr.f32.gmra.mrb[0].mxu0 %v2170
  %v2239 = vpop.f32.mrb[0].mxu0
  %v2240 = vadd.f32 0.0, %v2239
  %v2241 = vpop.f32.mrb[0].mxu0
  %v2242 = vadd.f32 0.0, %v2241
  %2243 = vmatprep.mubr.f32.mxu0 0.0
  %2244 = vmatmul.mubr.f32.gmra.mrb[0].mxu0 %v2169
  %v2245 = vpop.f32.mrb[0].mxu0
  %v2246 = vadd.f32 0.0, %v2245
  %v2247 = vpop.f32.mrb[0].mxu0
  %v2248 = vadd.f32 0.0, %v2247
  %2249 = vdwg.mxu0
  %2250 = vmatprep.subr.mxu0 %v418
  %2251 = vmatpush1.msra.mxu0 %v417
  %2252 = vmatprep.subr.mxu0 %v422
  %2253 = vmatpush1.msra.mxu0 %v421
  %2254 = vmatprep.subr.mxu0 %v426
  %2255 = vmatpush1.msra.mxu0 %v425
  %2256 = vmatprep.subr.mxu0 %v430
  %2257 = vmatpush1.msra.mxu0 %v429
  %2258 = vmatprep.subr.mxu0 %v434
  %2259 = vmatpush1.msra.mxu0 %v433
  %2260 = vmatprep.subr.mxu0 %v438
  %2261 = vmatpush1.msra.mxu0 %v437
  %2262 = vmatprep.subr.mxu0 %v442
  %2263 = vmatpush1.msra.mxu0 %v441
  %2264 = vmatprep.subr.mxu0 %v446
  %2265 = vmatpush1.msra.mxu0 %v445
  %2266 = vmatprep.subr.mxu0 %v450
  %2267 = vmatpush1.msra.mxu0 %v449
  %2268 = vmatprep.subr.mxu0 %v454
  %2269 = vmatpush1.msra.mxu0 %v453
  %2270 = vmatprep.subr.mxu0 %v458
  %2271 = vmatpush1.msra.mxu0 %v457
  %2272 = vmatprep.subr.mxu0 %v462
  %2273 = vmatpush1.msra.mxu0 %v461
  %2274 = vmatprep.subr.mxu0 %v466
  %2275 = vmatpush1.msra.mxu0 %v465
  %2276 = vmatprep.subr.mxu0 %v470
  %2277 = vmatpush1.msra.mxu0 %v469
  %2278 = vmatprep.subr.mxu0 %v474
  %2279 = vmatpush1.msra.mxu0 %v473
  %2280 = vmatprep.subr.mxu0 %v478
  %2281 = vmatpush1.msra.mxu0 %v477
  %2282 = vmatprep.subr.mxu0 0.0
  %2283 = vmatpush1.msra.mxu0 0.0
  %2284 = vmatprep.subr.mxu0 0.0
  %2285 = vmatpush1.msra.mxu0 0.0
  %2286 = vmatprep.subr.mxu0 0.0
  %2287 = vmatpush1.msra.mxu0 0.0
  %2288 = vmatprep.subr.mxu0 0.0
  %2289 = vmatpush1.msra.mxu0 0.0
  %2290 = vmatprep.subr.mxu0 0.0
  %2291 = vmatpush1.msra.mxu0 0.0
  %2292 = vmatprep.subr.mxu0 0.0
  %2293 = vmatpush1.msra.mxu0 0.0
  %2294 = vmatprep.subr.mxu0 0.0
  %2295 = vmatpush1.msra.mxu0 0.0
  %2296 = vmatprep.subr.mxu0 0.0
  %2297 = vmatpush1.msra.mxu0 0.0
  %2298 = vmatprep.subr.mxu0 0.0
  %2299 = vmatpush1.msra.mxu0 0.0
  %2300 = vmatprep.subr.mxu0 0.0
  %2301 = vmatpush1.msra.mxu0 0.0
  %2302 = vmatprep.subr.mxu0 0.0
  %2303 = vmatpush1.msra.mxu0 0.0
  %2304 = vmatprep.subr.mxu0 0.0
  %2305 = vmatpush1.msra.mxu0 0.0
  %2306 = vmatprep.subr.mxu0 0.0
  %2307 = vmatpush1.msra.mxu0 0.0
  %2308 = vmatprep.subr.mxu0 0.0
  %2309 = vmatpush1.msra.mxu0 0.0
  %2310 = vmatprep.subr.mxu0 0.0
  %2311 = vmatpush1.msra.mxu0 0.0
  %2312 = vmatprep.subr.mxu0 0.0
  %2313 = vmatpush1.msra.mxu0 0.0
  %2314 = vmatprep.mubr.f32.mxu0 0.0
  %2315 = vmatmul.mubr.f32.gmra.mrb[0].mxu0 %v2170
  %v2316 = vpop.f32.mrb[0].mxu0
  %v2317 = vadd.f32 0.0, %v2316
  %v2318 = vpop.f32.mrb[0].mxu0
  %v2319 = vadd.f32 0.0, %v2318
  %2320 = vmatprep.mubr.f32.mxu0 0.0
  %2321 = vmatmul.mubr.f32.gmra.mrb[0].mxu0 %v2169
  %v2322 = vpop.f32.mrb[0].mxu0
  %v2323 = vadd.f32 0.0, %v2322
  %v2324 = vpop.f32.mrb[0].mxu0
  %v2325 = vadd.f32 0.0, %v2324
  %2326 = vdwg.mxu0
  %v2335 = vrot.slane %v2240, 2
  %v2336 = vrot.slane %v2242, 2
  %v2337 = vrot.slane %v2317, 2
  %v2338 = vrot.slane %v2319, 2
  %v2339 = vrot.slane %v2246, 2
  %v2340 = vsel %vm941, %v2335, %v2339
  %v2341 = vrot.slane %v2248, 2
  %v2342 = vsel %vm941, %v2336, %v2341
  %v2343 = vrot.slane %v2323, 2
  %v2344 = vsel %vm941, %v2337, %v2343
  %v2345 = vrot.slane %v2325, 2
  %v2346 = vsel %vm941, %v2338, %v2345
  %v2355 = vadd.f32 %v244, %v2335
  %v2356 = vadd.f32 %v246, %v2336
  %v2357 = vadd.f32 %v387, %v2337
  %v2358 = vadd.f32 %v389, %v2338
  %v2359 = vadd.f32 %v250, %v2340
  %v2360 = vadd.f32 %v252, %v2342
  %v2361 = vadd.f32 %v393, %v2344
  %v2362 = vadd.f32 %v395, %v2346
  %v2363 = vxor.u32 %v2355, 2147483648
  %v2364 = vxor.u32 %v2359, 2147483648
  %v2365 = vmul.f32 %v2363, 1.442695
  %v2366 = vpow.pop %v2365
  %v2367 = vmul.f32 %v2364, 1.442695
  %v2368 = vpow.pop %v2367
  %v2369 = vadd.f32 %v2366, 1.0
  %v2370 = vadd.f32 %v2368, 1.0
  %v2371 = vrcp.pop %v2369
  %v2372 = vmul.f32 1.0, %v2371
  %v2373 = vrcp.pop %v2370
  %v2374 = vmul.f32 1.0, %v2373
  %v2375 = vxor.u32 %v2356, 2147483648
  %v2376 = vxor.u32 %v2360, 2147483648
  %v2377 = vmul.f32 %v2375, 1.442695
  %v2378 = vpow.pop %v2377
  %v2379 = vmul.f32 %v2376, 1.442695
  %v2380 = vpow.pop %v2379
  %v2381 = vadd.f32 %v2378, 1.0
  %v2382 = vadd.f32 %v2380, 1.0
  %v2383 = vrcp.pop %v2381
  %v2384 = vmul.f32 1.0, %v2383
  %v2385 = vrcp.pop %v2382
  %v2386 = vmul.f32 1.0, %v2385
  %v2387 = vtanh.pop %v2357
  %v2388 = vtanh.pop %v2361
  %v2389 = vxor.u32 %v2358, 2147483648
  %v2390 = vxor.u32 %v2362, 2147483648
  %v2391 = vmul.f32 %v2389, 1.442695
  %v2392 = vpow.pop %v2391
  %v2393 = vmul.f32 %v2390, 1.442695
  %v2394 = vpow.pop %v2393
  %v2395 = vadd.f32 %v2392, 1.0
  %v2396 = vadd.f32 %v2394, 1.0
  %v2397 = vrcp.pop %v2395
  %v2398 = vmul.f32 1.0, %v2397
  %v2399 = vrcp.pop %v2396
  %v2400 = vmul.f32 1.0, %v2399
  %v2403 = vrot.slane %v2160, 6
  %v2404 = vrot.slane %v2161, 6
  %v2405 = vsel %vm855, %v2403, %v2404
  %v2408 = vmul.f32 %v2384, %v2403
  %v2409 = vmul.f32 %v2386, %v2405
  %v2410 = vmul.f32 %v2372, %v2387
  %v2411 = vmul.f32 %v2374, %v2388
  %v2412 = vadd.f32 %v2408, %v2410
  %v2413 = vadd.f32 %v2409, %v2411
  %v2414 = vtanh.pop %v2412
  %v2415 = vtanh.pop %v2413
  %v2416 = vmul.f32 %v2398, %v2414
  %v2417 = vmul.f32 %v2400, %v2415
  %v2420 = vrot.slane %v2416, 6
  %v2421 = vrot.slane %v2417, 6
  %v2422 = vsel %vm855, %v2420, %v2421
  %2425 = vmatprep.subr.mxu0 %v416
  %2426 = vmatpush1.msra.mxu0 %v415
  %2427 = vmatprep.subr.mxu0 %v420
  %2428 = vmatpush1.msra.mxu0 %v419
  %2429 = vmatprep.subr.mxu0 %v424
  %2430 = vmatpush1.msra.mxu0 %v423
  %2431 = vmatprep.subr.mxu0 %v428
  %2432 = vmatpush1.msra.mxu0 %v427
  %2433 = vmatprep.subr.mxu0 %v432
  %2434 = vmatpush1.msra.mxu0 %v431
  %2435 = vmatprep.subr.mxu0 %v436
  %2436 = vmatpush1.msra.mxu0 %v435
  %2437 = vmatprep.subr.mxu0 %v440
  %2438 = vmatpush1.msra.mxu0 %v439
  %2439 = vmatprep.subr.mxu0 %v444
  %2440 = vmatpush1.msra.mxu0 %v443
  %2441 = vmatprep.subr.mxu0 %v448
  %2442 = vmatpush1.msra.mxu0 %v447
  %2443 = vmatprep.subr.mxu0 %v452
  %2444 = vmatpush1.msra.mxu0 %v451
  %2445 = vmatprep.subr.mxu0 %v456
  %2446 = vmatpush1.msra.mxu0 %v455
  %2447 = vmatprep.subr.mxu0 %v460
  %2448 = vmatpush1.msra.mxu0 %v459
  %2449 = vmatprep.subr.mxu0 %v464
  %2450 = vmatpush1.msra.mxu0 %v463
  %2451 = vmatprep.subr.mxu0 %v468
  %2452 = vmatpush1.msra.mxu0 %v467
  %2453 = vmatprep.subr.mxu0 %v472
  %2454 = vmatpush1.msra.mxu0 %v471
  %2455 = vmatprep.subr.mxu0 %v476
  %2456 = vmatpush1.msra.mxu0 %v475
  %2457 = vmatprep.subr.mxu0 0.0
  %2458 = vmatpush1.msra.mxu0 0.0
  %2459 = vmatprep.subr.mxu0 0.0
  %2460 = vmatpush1.msra.mxu0 0.0
  %2461 = vmatprep.subr.mxu0 0.0
  %2462 = vmatpush1.msra.mxu0 0.0
  %2463 = vmatprep.subr.mxu0 0.0
  %2464 = vmatpush1.msra.mxu0 0.0
  %2465 = vmatprep.subr.mxu0 0.0
  %2466 = vmatpush1.msra.mxu0 0.0
  %2467 = vmatprep.subr.mxu0 0.0
  %2468 = vmatpush1.msra.mxu0 0.0
  %2469 = vmatprep.subr.mxu0 0.0
  %2470 = vmatpush1.msra.mxu0 0.0
  %2471 = vmatprep.subr.mxu0 0.0
  %2472 = vmatpush1.msra.mxu0 0.0
  %2473 = vmatprep.subr.mxu0 0.0
  %2474 = vmatpush1.msra.mxu0 0.0
  %2475 = vmatprep.subr.mxu0 0.0
  %2476 = vmatpush1.msra.mxu0 0.0
  %2477 = vmatprep.subr.mxu0 0.0
  %2478 = vmatpush1.msra.mxu0 0.0
  %2479 = vmatprep.subr.mxu0 0.0
  %2480 = vmatpush1.msra.mxu0 0.0
  %2481 = vmatprep.subr.mxu0 0.0
  %2482 = vmatpush1.msra.mxu0 0.0
  %2483 = vmatprep.subr.mxu0 0.0
  %2484 = vmatpush1.msra.mxu0 0.0
  %2485 = vmatprep.subr.mxu0 0.0
  %2486 = vmatpush1.msra.mxu0 0.0
  %2487 = vmatprep.subr.mxu0 0.0
  %2488 = vmatpush1.msra.mxu0 0.0
  %2489 = vmatprep.mubr.f32.mxu0 0.0
  %2490 = vmatmul.mubr.f32.gmra.mrb[0].mxu0 %v2422
  %v2491 = vpop.f32.mrb[0].mxu0
  %v2492 = vadd.f32 0.0, %v2491
  %v2493 = vpop.f32.mrb[0].mxu0
  %v2494 = vadd.f32 0.0, %v2493
  %2495 = vmatprep.mubr.f32.mxu0 0.0
  %2496 = vmatmul.mubr.f32.gmra.mrb[0].mxu0 %v2421
  %v2497 = vpop.f32.mrb[0].mxu0
  %v2498 = vadd.f32 0.0, %v2497
  %v2499 = vpop.f32.mrb[0].mxu0
  %v2500 = vadd.f32 0.0, %v2499
  %2501 = vdwg.mxu0
  %2502 = vmatprep.subr.mxu0 %v418
  %2503 = vmatpush1.msra.mxu0 %v417
  %2504 = vmatprep.subr.mxu0 %v422
  %2505 = vmatpush1.msra.mxu0 %v421
  %2506 = vmatprep.subr.mxu0 %v426
  %2507 = vmatpush1.msra.mxu0 %v425
  %2508 = vmatprep.subr.mxu0 %v430
  %2509 = vmatpush1.msra.mxu0 %v429
  %2510 = vmatprep.subr.mxu0 %v434
  %2511 = vmatpush1.msra.mxu0 %v433
  %2512 = vmatprep.subr.mxu0 %v438
  %2513 = vmatpush1.msra.mxu0 %v437
  %2514 = vmatprep.subr.mxu0 %v442
  %2515 = vmatpush1.msra.mxu0 %v441
  %2516 = vmatprep.subr.mxu0 %v446
  %2517 = vmatpush1.msra.mxu0 %v445
  %2518 = vmatprep.subr.mxu0 %v450
  %2519 = vmatpush1.msra.mxu0 %v449
  %2520 = vmatprep.subr.mxu0 %v454
  %2521 = vmatpush1.msra.mxu0 %v453
  %2522 = vmatprep.subr.mxu0 %v458
  %2523 = vmatpush1.msra.mxu0 %v457
  %2524 = vmatprep.subr.mxu0 %v462
  %2525 = vmatpush1.msra.mxu0 %v461
  %2526 = vmatprep.subr.mxu0 %v466
  %2527 = vmatpush1.msra.mxu0 %v465
  %2528 = vmatprep.subr.mxu0 %v470
  %2529 = vmatpush1.msra.mxu0 %v469
  %2530 = vmatprep.subr.mxu0 %v474
  %2531 = vmatpush1.msra.mxu0 %v473
  %2532 = vmatprep.subr.mxu0 %v478
  %2533 = vmatpush1.msra.mxu0 %v477
  %2534 = vmatprep.subr.mxu0 0.0
  %2535 = vmatpush1.msra.mxu0 0.0
  %2536 = vmatprep.subr.mxu0 0.0
  %2537 = vmatpush1.msra.mxu0 0.0
  %2538 = vmatprep.subr.mxu0 0.0
  %2539 = vmatpush1.msra.mxu0 0.0
  %2540 = vmatprep.subr.mxu0 0.0
  %2541 = vmatpush1.msra.mxu0 0.0
  %2542 = vmatprep.subr.mxu0 0.0
  %2543 = vmatpush1.msra.mxu0 0.0
  %2544 = vmatprep.subr.mxu0 0.0
  %2545 = vmatpush1.msra.mxu0 0.0
  %2546 = vmatprep.subr.mxu0 0.0
  %2547 = vmatpush1.msra.mxu0 0.0
  %2548 = vmatprep.subr.mxu0 0.0
  %2549 = vmatpush1.msra.mxu0 0.0
  %2550 = vmatprep.subr.mxu0 0.0
  %2551 = vmatpush1.msra.mxu0 0.0
  %2552 = vmatprep.subr.mxu0 0.0
  %2553 = vmatpush1.msra.mxu0 0.0
  %2554 = vmatprep.subr.mxu0 0.0
  %2555 = vmatpush1.msra.mxu0 0.0
  %2556 = vmatprep.subr.mxu0 0.0
  %2557 = vmatpush1.msra.mxu0 0.0
  %2558 = vmatprep.subr.mxu0 0.0
  %2559 = vmatpush1.msra.mxu0 0.0
  %2560 = vmatprep.subr.mxu0 0.0
  %2561 = vmatpush1.msra.mxu0 0.0
  %2562 = vmatprep.subr.mxu0 0.0
  %2563 = vmatpush1.msra.mxu0 0.0
  %2564 = vmatprep.subr.mxu0 0.0
  %2565 = vmatpush1.msra.mxu0 0.0
  %2566 = vmatprep.mubr.f32.mxu0 0.0
  %2567 = vmatmul.mubr.f32.gmra.mrb[0].mxu0 %v2422
  %v2568 = vpop.f32.mrb[0].mxu0
  %v2569 = vadd.f32 0.0, %v2568
  %v2570 = vpop.f32.mrb[0].mxu0
  %v2571 = vadd.f32 0.0, %v2570
  %2572 = vmatprep.mubr.f32.mxu0 0.0
  %2573 = vmatmul.mubr.f32.gmra.mrb[0].mxu0 %v2421
  %v2574 = vpop.f32.mrb[0].mxu0
  %v2575 = vadd.f32 0.0, %v2574
  %v2576 = vpop.f32.mrb[0].mxu0
  %v2577 = vadd.f32 0.0, %v2576
  %2578 = vdwg.mxu0
  %v2579 = vadd.f32 %v256, %v2492
  %v2580 = vadd.f32 %v258, %v2494
  %v2581 = vadd.f32 %v399, %v2569
  %v2582 = vadd.f32 %v401, %v2571
  %v2583 = vadd.f32 %v262, %v2498
  %v2584 = vadd.f32 %v264, %v2500
  %v2585 = vadd.f32 %v405, %v2575
  %v2586 = vadd.f32 %v407, %v2577
  %v2587 = vxor.u32 %v2579, 2147483648
  %v2588 = vxor.u32 %v2583, 2147483648
  %v2589 = vmul.f32 %v2587, 1.442695
  %v2590 = vpow.pop %v2589
  %v2591 = vmul.f32 %v2588, 1.442695
  %v2592 = vpow.pop %v2591
  %v2593 = vadd.f32 %v2590, 1.0
  %v2594 = vadd.f32 %v2592, 1.0
  %v2595 = vrcp.pop %v2593
  %v2596 = vmul.f32 1.0, %v2595
  %v2597 = vrcp.pop %v2594
  %v2598 = vmul.f32 1.0, %v2597
  %v2599 = vxor.u32 %v2580, 2147483648
  %v2600 = vxor.u32 %v2584, 2147483648
  %v2601 = vmul.f32 %v2599, 1.442695
  %v2602 = vpow.pop %v2601
  %v2603 = vmul.f32 %v2600, 1.442695
  %v2604 = vpow.pop %v2603
  %v2605 = vadd.f32 %v2602, 1.0
  %v2606 = vadd.f32 %v2604, 1.0
  %v2607 = vrcp.pop %v2605
  %v2608 = vmul.f32 1.0, %v2607
  %v2609 = vrcp.pop %v2606
  %v2610 = vmul.f32 1.0, %v2609
  %v2611 = vtanh.pop %v2581
  %v2612 = vtanh.pop %v2585
  %v2613 = vxor.u32 %v2582, 2147483648
  %v2614 = vxor.u32 %v2586, 2147483648
  %v2615 = vmul.f32 %v2613, 1.442695
  %v2616 = vpow.pop %v2615
  %v2617 = vmul.f32 %v2614, 1.442695
  %v2618 = vpow.pop %v2617
  %v2619 = vadd.f32 %v2616, 1.0
  %v2620 = vadd.f32 %v2618, 1.0
  %v2621 = vrcp.pop %v2619
  %v2622 = vmul.f32 1.0, %v2621
  %v2623 = vrcp.pop %v2620
  %v2624 = vmul.f32 1.0, %v2623
  %v2627 = vrot.slane %v2412, 6
  %v2628 = vrot.slane %v2413, 6
  %v2629 = vsel %vm855, %v2627, %v2628
  %v2632 = vmul.f32 %v2608, %v2629
  %v2633 = vmul.f32 %v2610, %v2628
  %v2634 = vmul.f32 %v2596, %v2611
  %v2635 = vmul.f32 %v2598, %v2612
  %v2636 = vadd.f32 %v2632, %v2634
  %v2637 = vadd.f32 %v2633, %v2635
  %v2638 = vtanh.pop %v2636
  %v2639 = vtanh.pop %v2637
  %v2640 = vmul.f32 %v2622, %v2638
  %v2641 = vmul.f32 %v2624, %v2639
  %2642 = vmatprep.subr.mxu0 %v416
  %2643 = vmatpush1.msra.mxu0 %v415
  %2644 = vmatprep.subr.mxu0 %v420
  %2645 = vmatpush1.msra.mxu0 %v419
  %2646 = vmatprep.subr.mxu0 %v424
  %2647 = vmatpush1.msra.mxu0 %v423
  %2648 = vmatprep.subr.mxu0 %v428
  %2649 = vmatpush1.msra.mxu0 %v427
  %2650 = vmatprep.subr.mxu0 %v432
  %2651 = vmatpush1.msra.mxu0 %v431
  %2652 = vmatprep.subr.mxu0 %v436
  %2653 = vmatpush1.msra.mxu0 %v435
  %2654 = vmatprep.subr.mxu0 %v440
  %2655 = vmatpush1.msra.mxu0 %v439
  %2656 = vmatprep.subr.mxu0 %v444
  %2657 = vmatpush1.msra.mxu0 %v443
  %2658 = vmatprep.subr.mxu0 %v448
  %2659 = vmatpush1.msra.mxu0 %v447
  %2660 = vmatprep.subr.mxu0 %v452
  %2661 = vmatpush1.msra.mxu0 %v451
  %2662 = vmatprep.subr.mxu0 %v456
  %2663 = vmatpush1.msra.mxu0 %v455
  %2664 = vmatprep.subr.mxu0 %v460
  %2665 = vmatpush1.msra.mxu0 %v459
  %2666 = vmatprep.subr.mxu0 %v464
  %2667 = vmatpush1.msra.mxu0 %v463
  %2668 = vmatprep.subr.mxu0 %v468
  %2669 = vmatpush1.msra.mxu0 %v467
  %2670 = vmatprep.subr.mxu0 %v472
  %2671 = vmatpush1.msra.mxu0 %v471
  %2672 = vmatprep.subr.mxu0 %v476
  %2673 = vmatpush1.msra.mxu0 %v475
  %2674 = vmatprep.subr.mxu0 0.0
  %2675 = vmatpush1.msra.mxu0 0.0
  %2676 = vmatprep.subr.mxu0 0.0
  %2677 = vmatpush1.msra.mxu0 0.0
  %2678 = vmatprep.subr.mxu0 0.0
  %2679 = vmatpush1.msra.mxu0 0.0
  %2680 = vmatprep.subr.mxu0 0.0
  %2681 = vmatpush1.msra.mxu0 0.0
  %2682 = vmatprep.subr.mxu0 0.0
  %2683 = vmatpush1.msra.mxu0 0.0
  %2684 = vmatprep.subr.mxu0 0.0
  %2685 = vmatpush1.msra.mxu0 0.0
  %2686 = vmatprep.subr.mxu0 0.0
  %2687 = vmatpush1.msra.mxu0 0.0
  %2688 = vmatprep.subr.mxu0 0.0
  %2689 = vmatpush1.msra.mxu0 0.0
  %2690 = vmatprep.subr.mxu0 0.0
  %2691 = vmatpush1.msra.mxu0 0.0
  %2692 = vmatprep.subr.mxu0 0.0
  %2693 = vmatpush1.msra.mxu0 0.0
  %2694 = vmatprep.subr.mxu0 0.0
  %2695 = vmatpush1.msra.mxu0 0.0
  %2696 = vmatprep.subr.mxu0 0.0
  %2697 = vmatpush1.msra.mxu0 0.0
  %2698 = vmatprep.subr.mxu0 0.0
  %2699 = vmatpush1.msra.mxu0 0.0
  %2700 = vmatprep.subr.mxu0 0.0
  %2701 = vmatpush1.msra.mxu0 0.0
  %2702 = vmatprep.subr.mxu0 0.0
  %2703 = vmatpush1.msra.mxu0 0.0
  %2704 = vmatprep.subr.mxu0 0.0
  %2705 = vmatpush1.msra.mxu0 0.0
  %2706 = vmatprep.mubr.f32.mxu0 0.0
  %2707 = vmatmul.mubr.f32.gmra.mrb[0].mxu0 %v2640
  %v2708 = vpop.f32.mrb[0].mxu0
  %v2709 = vadd.f32 0.0, %v2708
  %v2710 = vpop.f32.mrb[0].mxu0
  %v2711 = vadd.f32 0.0, %v2710
  %2712 = vmatprep.mubr.f32.mxu0 0.0
  %2713 = vmatmul.mubr.f32.gmra.mrb[0].mxu0 %v2641
  %v2714 = vpop.f32.mrb[0].mxu0
  %v2715 = vadd.f32 0.0, %v2714
  %v2716 = vpop.f32.mrb[0].mxu0
  %v2717 = vadd.f32 0.0, %v2716
  %2718 = vdwg.mxu0
  %2719 = vmatprep.subr.mxu0 %v418
  %2720 = vmatpush1.msra.mxu0 %v417
  %2721 = vmatprep.subr.mxu0 %v422
  %2722 = vmatpush1.msra.mxu0 %v421
  %2723 = vmatprep.subr.mxu0 %v426
  %2724 = vmatpush1.msra.mxu0 %v425
  %2725 = vmatprep.subr.mxu0 %v430
  %2726 = vmatpush1.msra.mxu0 %v429
  %2727 = vmatprep.subr.mxu0 %v434
  %2728 = vmatpush1.msra.mxu0 %v433
  %2729 = vmatprep.subr.mxu0 %v438
  %2730 = vmatpush1.msra.mxu0 %v437
  %2731 = vmatprep.subr.mxu0 %v442
  %2732 = vmatpush1.msra.mxu0 %v441
  %2733 = vmatprep.subr.mxu0 %v446
  %2734 = vmatpush1.msra.mxu0 %v445
  %2735 = vmatprep.subr.mxu0 %v450
  %2736 = vmatpush1.msra.mxu0 %v449
  %2737 = vmatprep.subr.mxu0 %v454
  %2738 = vmatpush1.msra.mxu0 %v453
  %2739 = vmatprep.subr.mxu0 %v458
  %2740 = vmatpush1.msra.mxu0 %v457
  %2741 = vmatprep.subr.mxu0 %v462
  %2742 = vmatpush1.msra.mxu0 %v461
  %2743 = vmatprep.subr.mxu0 %v466
  %2744 = vmatpush1.msra.mxu0 %v465
  %2745 = vmatprep.subr.mxu0 %v470
  %2746 = vmatpush1.msra.mxu0 %v469
  %2747 = vmatprep.subr.mxu0 %v474
  %2748 = vmatpush1.msra.mxu0 %v473
  %2749 = vmatprep.subr.mxu0 %v478
  %2750 = vmatpush1.msra.mxu0 %v477
  %2751 = vmatprep.subr.mxu0 0.0
  %2752 = vmatpush1.msra.mxu0 0.0
  %2753 = vmatprep.subr.mxu0 0.0
  %2754 = vmatpush1.msra.mxu0 0.0
  %2755 = vmatprep.subr.mxu0 0.0
  %2756 = vmatpush1.msra.mxu0 0.0
  %2757 = vmatprep.subr.mxu0 0.0
  %2758 = vmatpush1.msra.mxu0 0.0
  %2759 = vmatprep.subr.mxu0 0.0
  %2760 = vmatpush1.msra.mxu0 0.0
  %2761 = vmatprep.subr.mxu0 0.0
  %2762 = vmatpush1.msra.mxu0 0.0
  %2763 = vmatprep.subr.mxu0 0.0
  %2764 = vmatpush1.msra.mxu0 0.0
  %2765 = vmatprep.subr.mxu0 0.0
  %2766 = vmatpush1.msra.mxu0 0.0
  %2767 = vmatprep.subr.mxu0 0.0
  %2768 = vmatpush1.msra.mxu0 0.0
  %2769 = vmatprep.subr.mxu0 0.0
  %2770 = vmatpush1.msra.mxu0 0.0
  %2771 = vmatprep.subr.mxu0 0.0
  %2772 = vmatpush1.msra.mxu0 0.0
  %2773 = vmatprep.subr.mxu0 0.0
  %2774 = vmatpush1.msra.mxu0 0.0
  %2775 = vmatprep.subr.mxu0 0.0
  %2776 = vmatpush1.msra.mxu0 0.0
  %2777 = vmatprep.subr.mxu0 0.0
  %2778 = vmatpush1.msra.mxu0 0.0
  %2779 = vmatprep.subr.mxu0 0.0
  %2780 = vmatpush1.msra.mxu0 0.0
  %2781 = vmatprep.subr.mxu0 0.0
  %2782 = vmatpush1.msra.mxu0 0.0
  %2783 = vmatprep.mubr.f32.mxu0 0.0
  %2784 = vmatmul.mubr.f32.gmra.mrb[0].mxu0 %v2640
  %v2785 = vpop.f32.mrb[0].mxu0
  %v2786 = vadd.f32 0.0, %v2785
  %v2787 = vpop.f32.mrb[0].mxu0
  %v2788 = vadd.f32 0.0, %v2787
  %2789 = vmatprep.mubr.f32.mxu0 0.0
  %2790 = vmatmul.mubr.f32.gmra.mrb[0].mxu0 %v2641
  %v2791 = vpop.f32.mrb[0].mxu0
  %v2792 = vadd.f32 0.0, %v2791
  %v2793 = vpop.f32.mrb[0].mxu0
  %v2794 = vadd.f32 0.0, %v2793
  %2795 = vdwg.mxu0
  %v2804 = vrot.slane %v2709, 6
  %v2805 = vrot.slane %v2711, 6
  %v2806 = vrot.slane %v2786, 6
  %v2807 = vrot.slane %v2788, 6
  %v2808 = vrot.slane %v2715, 6
  %v2809 = vsel %vm855, %v2804, %v2808
  %v2810 = vrot.slane %v2717, 6
  %v2811 = vsel %vm855, %v2805, %v2810
  %v2812 = vrot.slane %v2792, 6
  %v2813 = vsel %vm855, %v2806, %v2812
  %v2814 = vrot.slane %v2794, 6
  %v2815 = vsel %vm855, %v2807, %v2814
  %v2824 = vadd.f32 %v262, %v2804
  %v2825 = vadd.f32 %v264, %v2805
  %v2826 = vadd.f32 %v405, %v2806
  %v2827 = vadd.f32 %v407, %v2807
  %v2828 = vadd.f32 %v268, %v2809
  %v2829 = vadd.f32 %v270, %v2811
  %v2830 = vadd.f32 %v411, %v2813
  %v2831 = vadd.f32 %v413, %v2815
  %v2832 = vxor.u32 %v2824, 2147483648
  %v2833 = vxor.u32 %v2828, 2147483648
  %v2834 = vmul.f32 %v2832, 1.442695
  %v2835 = vpow.pop %v2834
  %v2836 = vmul.f32 %v2833, 1.442695
  %v2837 = vpow.pop %v2836
  %v2838 = vadd.f32 %v2835, 1.0
  %v2839 = vadd.f32 %v2837, 1.0
  %v2840 = vrcp.pop %v2838
  %v2841 = vmul.f32 1.0, %v2840
  %v2842 = vrcp.pop %v2839
  %v2843 = vmul.f32 1.0, %v2842
  %v2844 = vxor.u32 %v2825, 2147483648
  %v2845 = vxor.u32 %v2829, 2147483648
  %v2846 = vmul.f32 %v2844, 1.442695
  %v2847 = vpow.pop %v2846
  %v2848 = vmul.f32 %v2845, 1.442695
  %v2849 = vpow.pop %v2848
  %v2850 = vadd.f32 %v2847, 1.0
  %v2851 = vadd.f32 %v2849, 1.0
  %v2852 = vrcp.pop %v2850
  %v2853 = vmul.f32 1.0, %v2852
  %v2854 = vrcp.pop %v2851
  %v2855 = vmul.f32 1.0, %v2854
  %v2856 = vtanh.pop %v2826
  %v2857 = vtanh.pop %v2830
  %v2858 = vxor.u32 %v2827, 2147483648
  %v2859 = vxor.u32 %v2831, 2147483648
  %v2860 = vmul.f32 %v2858, 1.442695
  %v2861 = vpow.pop %v2860
  %v2862 = vmul.f32 %v2859, 1.442695
  %v2863 = vpow.pop %v2862
  %v2864 = vadd.f32 %v2861, 1.0
  %v2865 = vadd.f32 %v2863, 1.0
  %v2866 = vrcp.pop %v2864
  %v2867 = vmul.f32 1.0, %v2866
  %v2868 = vrcp.pop %v2865
  %v2869 = vmul.f32 1.0, %v2868
  %v2872 = vrot.slane %v2636, 6
  %v2873 = vrot.slane %v2637, 6
  %v2874 = vsel %vm855, %v2872, %v2873
  %v2877 = vmul.f32 %v2853, %v2872
  %v2878 = vmul.f32 %v2855, %v2874
  %v2879 = vmul.f32 %v2841, %v2856
  %v2880 = vmul.f32 %v2843, %v2857
  %v2881 = vadd.f32 %v2877, %v2879
  %v2882 = vadd.f32 %v2878, %v2880
  %v2883 = vtanh.pop %v2881
  %v2884 = vtanh.pop %v2882
  %v2885 = vmul.f32 %v2867, %v2883
  %v2886 = vmul.f32 %v2869, %v2884
  %2887 = vst [vmem:[%s11 - $0x2] sm:$0xfc] %v2885
  %2888 = vst [vmem:[%s11 + $0x6] sm:$0xf] %v2886
  %2889 = vst [vmem:[%s12 - $0x2] sm:$0xfc] %v2881
  %2890 = vst [vmem:[%s12 + $0x6] sm:$0xf] %v2882
  %v2891 = vrot.slane %v937, 1
  %v2893 = vrot.slane %v1191, 2
  %v2895 = vrot.slane %v1443, 3
  %v2898 = vrot.slane %v1667, 4
  %v2900 = vrot.slane %v1912, 5
  %v2902 = vrot.slane %v2164, 6
  %v2904 = vrot.slane %v2416, 7
  %v2907 = vrot.slane %v2885, 1
  %vm2909 = vcmask 1040384
  %v2910 = vsel %vm2909, %v691, %v2891
  %v2911 = vsel %vm855, %v2910, %v2893
  %vm2912 = vcmask 1042432
  %v2913 = vsel %vm2912, %v2911, %v2895
  %v2914 = vsel %vm1109, %v2913, %v2898
  %vm2915 = vcmask 1044480
  %v2916 = vsel %vm2915, %v2914, %v2900
  %v2917 = vsel %vm941, %v2916, %v2902
  %vm2918 = vcmask 1046528
  %v2919 = vsel %vm2918, %v2917, %v2904
  %v2920 = vsel %vm2909, %v2640, %v2907
  %v2921 = vld [vmem:[%s6] sm:$0xff]
  %v2922 = vld [vmem:[%s6 + $0x8] sm:$0xff]
  %v2923 = vld [vmem:[%s6 + $0x10] sm:$0xff]
  %v2924 = vld [vmem:[%s6 + $0x18] sm:$0xff]
  %v2925 = vld [vmem:[%s6 + $0x20] sm:$0xff]
  %v2926 = vld [vmem:[%s6 + $0x28] sm:$0xff]
  %v2927 = vld [vmem:[%s6 + $0x30] sm:$0xff]
  %v2928 = vld [vmem:[%s6 + $0x38] sm:$0xff]
  %v2929 = vld [vmem:[%s6 + $0x40] sm:$0xff]
  %v2930 = vld [vmem:[%s6 + $0x48] sm:$0xff]
  %v2931 = vld [vmem:[%s6 + $0x50] sm:$0xff]
  %v2932 = vld [vmem:[%s6 + $0x58] sm:$0xff]
  %v2933 = vld [vmem:[%s6 + $0x60] sm:$0xff]
  %v2934 = vld [vmem:[%s6 + $0x68] sm:$0xff]
  %v2935 = vld [vmem:[%s6 + $0x70] sm:$0xff]
  %v2936 = vld [vmem:[%s6 + $0x78] sm:$0xff]
  %v2938 = vrot.slane %v691, 1
  %v2941 = vrot.slane %v1191, 3
  %v2943 = vrot.slane %v1443, 4
  %v2945 = vrot.slane %v1667, 5
  %v2947 = vrot.slane %v1912, 6
  %v2949 = vrot.slane %v2164, 7
  %v2952 = vrot.slane %v2640, 1
  %v2954 = vrot.slane %v2885, 2
  %v2956 = vsel %vm2909, %v2938, %v942
  %v2957 = vsel %vm855, %v2956, %v2941
  %v2958 = vsel %vm2912, %v2957, %v2943
  %v2959 = vsel %vm1109, %v2958, %v2945
  %v2960 = vsel %vm2915, %v2959, %v2947
  %v2961 = vsel %vm941, %v2960, %v2949
  %v2962 = vsel %vm2918, %v2961, %v2416
  %v2963 = vsel %vm2909, %v2952, %v2954
  %s2964 = scalar_lea.vmem %s6, 128
  %v2965 = vld [vmem:[%s2964] sm:$0xff]
  %v2966 = vld [vmem:[%s2964 + $0x8] sm:$0xff]
  %v2967 = vld [vmem:[%s2964 + $0x10] sm:$0xff]
  %v2968 = vld [vmem:[%s2964 + $0x18] sm:$0xff]
  %v2969 = vld [vmem:[%s2964 + $0x20] sm:$0xff]
  %v2970 = vld [vmem:[%s2964 + $0x28] sm:$0xff]
  %v2971 = vld [vmem:[%s2964 + $0x30] sm:$0xff]
  %v2972 = vld [vmem:[%s2964 + $0x38] sm:$0xff]
  %v2973 = vld [vmem:[%s2964 + $0x40] sm:$0xff]
  %v2974 = vld [vmem:[%s2964 + $0x48] sm:$0xff]
  %v2975 = vld [vmem:[%s2964 + $0x50] sm:$0xff]
  %v2976 = vld [vmem:[%s2964 + $0x58] sm:$0xff]
  %v2977 = vld [vmem:[%s2964 + $0x60] sm:$0xff]
  %v2978 = vld [vmem:[%s2964 + $0x68] sm:$0xff]
  %v2979 = vld [vmem:[%s2964 + $0x70] sm:$0xff]
  %v2980 = vld [vmem:[%s2964 + $0x78] sm:$0xff]
  %2981 = vmatprep.subr.mxu0 0.0
  %2982 = vmatpush1.msra.mxu0 %v2965
  %2983 = vmatprep.subr.mxu0 0.0
  %2984 = vmatpush1.msra.mxu0 %v2966
  %2985 = vmatprep.subr.mxu0 0.0
  %2986 = vmatpush1.msra.mxu0 %v2967
  %2987 = vmatprep.subr.mxu0 0.0
  %2988 = vmatpush1.msra.mxu0 %v2968
  %2989 = vmatprep.subr.mxu0 0.0
  %2990 = vmatpush1.msra.mxu0 %v2969
  %2991 = vmatprep.subr.mxu0 0.0
  %2992 = vmatpush1.msra.mxu0 %v2970
  %2993 = vmatprep.subr.mxu0 0.0
  %2994 = vmatpush1.msra.mxu0 %v2971
  %2995 = vmatprep.subr.mxu0 0.0
  %2996 = vmatpush1.msra.mxu0 %v2972
  %2997 = vmatprep.subr.mxu0 0.0
  %2998 = vmatpush1.msra.mxu0 %v2973
  %2999 = vmatprep.subr.mxu0 0.0
  %3000 = vmatpush1.msra.mxu0 %v2974
  %3001 = vmatprep.subr.mxu0 0.0
  %3002 = vmatpush1.msra.mxu0 %v2975
  %3003 = vmatprep.subr.mxu0 0.0
  %3004 = vmatpush1.msra.mxu0 %v2976
  %3005 = vmatprep.subr.mxu0 0.0
  %3006 = vmatpush1.msra.mxu0 %v2977
  %3007 = vmatprep.subr.mxu0 0.0
  %3008 = vmatpush1.msra.mxu0 %v2978
  %3009 = vmatprep.subr.mxu0 0.0
  %3010 = vmatpush1.msra.mxu0 %v2979
  %3011 = vmatprep.subr.mxu0 0.0
  %3012 = vmatpush1.msra.mxu0 %v2980
  %3013 = vmatprep.subr.mxu0 0.0
  %3014 = vmatpush1.msra.mxu0 0.0
  %3015 = vmatprep.subr.mxu0 0.0
  %3016 = vmatpush1.msra.mxu0 0.0
  %3017 = vmatprep.subr.mxu0 0.0
  %3018 = vmatpush1.msra.mxu0 0.0
  %3019 = vmatprep.subr.mxu0 0.0
  %3020 = vmatpush1.msra.mxu0 0.0
  %3021 = vmatprep.subr.mxu0 0.0
  %3022 = vmatpush1.msra.mxu0 0.0
  %3023 = vmatprep.subr.mxu0 0.0
  %3024 = vmatpush1.msra.mxu0 0.0
  %3025 = vmatprep.subr.mxu0 0.0
  %3026 = vmatpush1.msra.mxu0 0.0
  %3027 = vmatprep.subr.mxu0 0.0
  %3028 = vmatpush1.msra.mxu0 0.0
  %3029 = vmatprep.subr.mxu0 0.0
  %3030 = vmatpush1.msra.mxu0 0.0
  %3031 = vmatprep.subr.mxu0 0.0
  %3032 = vmatpush1.msra.mxu0 0.0
  %3033 = vmatprep.subr.mxu0 0.0
  %3034 = vmatpush1.msra.mxu0 0.0
  %3035 = vmatprep.subr.mxu0 0.0
  %3036 = vmatpush1.msra.mxu0 0.0
  %3037 = vmatprep.subr.mxu0 0.0
  %3038 = vmatpush1.msra.mxu0 0.0
  %3039 = vmatprep.subr.mxu0 0.0
  %3040 = vmatpush1.msra.mxu0 0.0
  %3041 = vmatprep.subr.mxu0 0.0
  %3042 = vmatpush1.msra.mxu0 0.0
  %3043 = vmatprep.subr.mxu0 0.0
  %3044 = vmatpush1.msra.mxu0 0.0
  %3045 = vmatprep.mubr.f32.mxu0 0.0
  %3046 = vmatmul.mubr.f32.gmra.mrb[0].mxu0 %v2962
  %v3047 = vpop.f32.mrb[0].mxu0
  %v3048 = vadd.f32 0.0, %v3047
  %v3049 = vpop.f32.mrb[0].mxu0
  %3050 = vmatprep.mubr.f32.mxu0 0.0
  %3051 = vmatmul.mubr.f32.gmra.mrb[0].mxu0 %v2963
  %v3052 = vpop.f32.mrb[0].mxu0
  %v3053 = vadd.f32 0.0, %v3052
  %v3054 = vpop.f32.mrb[0].mxu0
  %3055 = vdwg.mxu0
  %3056 = vmatprep.subr.mxu0 0.0
  %3057 = vmatpush1.msra.mxu0 %v2921
  %3058 = vmatprep.subr.mxu0 0.0
  %3059 = vmatpush1.msra.mxu0 %v2922
  %3060 = vmatprep.subr.mxu0 0.0
  %3061 = vmatpush1.msra.mxu0 %v2923
  %3062 = vmatprep.subr.mxu0 0.0
  %3063 = vmatpush1.msra.mxu0 %v2924
  %3064 = vmatprep.subr.mxu0 0.0
  %3065 = vmatpush1.msra.mxu0 %v2925
  %3066 = vmatprep.subr.mxu0 0.0
  %3067 = vmatpush1.msra.mxu0 %v2926
  %3068 = vmatprep.subr.mxu0 0.0
  %3069 = vmatpush1.msra.mxu0 %v2927
  %3070 = vmatprep.subr.mxu0 0.0
  %3071 = vmatpush1.msra.mxu0 %v2928
  %3072 = vmatprep.subr.mxu0 0.0
  %3073 = vmatpush1.msra.mxu0 %v2929
  %3074 = vmatprep.subr.mxu0 0.0
  %3075 = vmatpush1.msra.mxu0 %v2930
  %3076 = vmatprep.subr.mxu0 0.0
  %3077 = vmatpush1.msra.mxu0 %v2931
  %3078 = vmatprep.subr.mxu0 0.0
  %3079 = vmatpush1.msra.mxu0 %v2932
  %3080 = vmatprep.subr.mxu0 0.0
  %3081 = vmatpush1.msra.mxu0 %v2933
  %3082 = vmatprep.subr.mxu0 0.0
  %3083 = vmatpush1.msra.mxu0 %v2934
  %3084 = vmatprep.subr.mxu0 0.0
  %3085 = vmatpush1.msra.mxu0 %v2935
  %3086 = vmatprep.subr.mxu0 0.0
  %3087 = vmatpush1.msra.mxu0 %v2936
  %3088 = vmatprep.subr.mxu0 0.0
  %3089 = vmatpush1.msra.mxu0 0.0
  %3090 = vmatprep.subr.mxu0 0.0
  %3091 = vmatpush1.msra.mxu0 0.0
  %3092 = vmatprep.subr.mxu0 0.0
  %3093 = vmatpush1.msra.mxu0 0.0
  %3094 = vmatprep.subr.mxu0 0.0
  %3095 = vmatpush1.msra.mxu0 0.0
  %3096 = vmatprep.subr.mxu0 0.0
  %3097 = vmatpush1.msra.mxu0 0.0
  %3098 = vmatprep.subr.mxu0 0.0
  %3099 = vmatpush1.msra.mxu0 0.0
  %3100 = vmatprep.subr.mxu0 0.0
  %3101 = vmatpush1.msra.mxu0 0.0
  %3102 = vmatprep.subr.mxu0 0.0
  %3103 = vmatpush1.msra.mxu0 0.0
  %3104 = vmatprep.subr.mxu0 0.0
  %3105 = vmatpush1.msra.mxu0 0.0
  %3106 = vmatprep.subr.mxu0 0.0
  %3107 = vmatpush1.msra.mxu0 0.0
  %3108 = vmatprep.subr.mxu0 0.0
  %3109 = vmatpush1.msra.mxu0 0.0
  %3110 = vmatprep.subr.mxu0 0.0
  %3111 = vmatpush1.msra.mxu0 0.0
  %3112 = vmatprep.subr.mxu0 0.0
  %3113 = vmatpush1.msra.mxu0 0.0
  %3114 = vmatprep.subr.mxu0 0.0
  %3115 = vmatpush1.msra.mxu0 0.0
  %3116 = vmatprep.subr.mxu0 0.0
  %3117 = vmatpush1.msra.mxu0 0.0
  %3118 = vmatprep.subr.mxu0 0.0
  %3119 = vmatpush1.msra.mxu0 0.0
  %3120 = vmatprep.mubr.f32.mxu0 0.0
  %3121 = vmatmul.mubr.f32.gmra.mrb[0].mxu0 %v2919
  %v3122 = vpop.f32.mrb[0].mxu0
  %v3123 = vadd.f32 %v3048, %v3122
  %v3124 = vpop.f32.mrb[0].mxu0
  %3125 = vmatprep.mubr.f32.mxu0 0.0
  %3126 = vmatmul.mubr.f32.gmra.mrb[0].mxu0 %v2920
  %v3127 = vpop.f32.mrb[0].mxu0
  %v3128 = vadd.f32 %v3053, %v3127
  %v3129 = vpop.f32.mrb[0].mxu0
  %3130 = vdwg.mxu0
  %v3131 = vrot.slane %v691, 2
  %v3133 = vrot.slane %v937, 3
  %v3136 = vrot.slane %v1444, 5
  %v3138 = vrot.slane %v1667, 6
  %v3140 = vrot.slane %v1912, 7
  %v3142 = vrot.slane %v2417, 1
  %v3144 = vrot.slane %v2640, 2
  %v3146 = vrot.slane %v2885, 3
  %v3148 = vsel %vm2909, %v3131, %v3133
  %v3149 = vsel %vm855, %v3148, %v1195
  %v3150 = vsel %vm2912, %v3149, %v3136
  %v3151 = vsel %vm1109, %v3150, %v3138
  %v3152 = vsel %vm2915, %v3151, %v3140
  %v3153 = vsel %vm941, %v3152, %v2164
  %v3154 = vsel %vm2918, %v3153, %v3142
  %v3155 = vsel %vm2909, %v3144, %v3146
  %s3156 = scalar_lea.vmem %s6, 256
  %v3157 = vld [vmem:[%s3156] sm:$0xff]
  %v3158 = vld [vmem:[%s3156 + $0x8] sm:$0xff]
  %v3159 = vld [vmem:[%s3156 + $0x10] sm:$0xff]
  %v3160 = vld [vmem:[%s3156 + $0x18] sm:$0xff]
  %v3161 = vld [vmem:[%s3156 + $0x20] sm:$0xff]
  %v3162 = vld [vmem:[%s3156 + $0x28] sm:$0xff]
  %v3163 = vld [vmem:[%s3156 + $0x30] sm:$0xff]
  %v3164 = vld [vmem:[%s3156 + $0x38] sm:$0xff]
  %v3165 = vld [vmem:[%s3156 + $0x40] sm:$0xff]
  %v3166 = vld [vmem:[%s3156 + $0x48] sm:$0xff]
  %v3167 = vld [vmem:[%s3156 + $0x50] sm:$0xff]
  %v3168 = vld [vmem:[%s3156 + $0x58] sm:$0xff]
  %v3169 = vld [vmem:[%s3156 + $0x60] sm:$0xff]
  %v3170 = vld [vmem:[%s3156 + $0x68] sm:$0xff]
  %v3171 = vld [vmem:[%s3156 + $0x70] sm:$0xff]
  %v3172 = vld [vmem:[%s3156 + $0x78] sm:$0xff]
  %3173 = vmatprep.subr.mxu0 0.0
  %3174 = vmatpush1.msra.mxu0 %v3157
  %3175 = vmatprep.subr.mxu0 0.0
  %3176 = vmatpush1.msra.mxu0 %v3158
  %3177 = vmatprep.subr.mxu0 0.0
  %3178 = vmatpush1.msra.mxu0 %v3159
  %3179 = vmatprep.subr.mxu0 0.0
  %3180 = vmatpush1.msra.mxu0 %v3160
  %3181 = vmatprep.subr.mxu0 0.0
  %3182 = vmatpush1.msra.mxu0 %v3161
  %3183 = vmatprep.subr.mxu0 0.0
  %3184 = vmatpush1.msra.mxu0 %v3162
  %3185 = vmatprep.subr.mxu0 0.0
  %3186 = vmatpush1.msra.mxu0 %v3163
  %3187 = vmatprep.subr.mxu0 0.0
  %3188 = vmatpush1.msra.mxu0 %v3164
  %3189 = vmatprep.subr.mxu0 0.0
  %3190 = vmatpush1.msra.mxu0 %v3165
  %3191 = vmatprep.subr.mxu0 0.0
  %3192 = vmatpush1.msra.mxu0 %v3166
  %3193 = vmatprep.subr.mxu0 0.0
  %3194 = vmatpush1.msra.mxu0 %v3167
  %3195 = vmatprep.subr.mxu0 0.0
  %3196 = vmatpush1.msra.mxu0 %v3168
  %3197 = vmatprep.subr.mxu0 0.0
  %3198 = vmatpush1.msra.mxu0 %v3169
  %3199 = vmatprep.subr.mxu0 0.0
  %3200 = vmatpush1.msra.mxu0 %v3170
  %3201 = vmatprep.subr.mxu0 0.0
  %3202 = vmatpush1.msra.mxu0 %v3171
  %3203 = vmatprep.subr.mxu0 0.0
  %3204 = vmatpush1.msra.mxu0 %v3172
  %3205 = vmatprep.subr.mxu0 0.0
  %3206 = vmatpush1.msra.mxu0 0.0
  %3207 = vmatprep.subr.mxu0 0.0
  %3208 = vmatpush1.msra.mxu0 0.0
  %3209 = vmatprep.subr.mxu0 0.0
  %3210 = vmatpush1.msra.mxu0 0.0
  %3211 = vmatprep.subr.mxu0 0.0
  %3212 = vmatpush1.msra.mxu0 0.0
  %3213 = vmatprep.subr.mxu0 0.0
  %3214 = vmatpush1.msra.mxu0 0.0
  %3215 = vmatprep.subr.mxu0 0.0
  %3216 = vmatpush1.msra.mxu0 0.0
  %3217 = vmatprep.subr.mxu0 0.0
  %3218 = vmatpush1.msra.mxu0 0.0
  %3219 = vmatprep.subr.mxu0 0.0
  %3220 = vmatpush1.msra.mxu0 0.0
  %3221 = vmatprep.subr.mxu0 0.0
  %3222 = vmatpush1.msra.mxu0 0.0
  %3223 = vmatprep.subr.mxu0 0.0
  %3224 = vmatpush1.msra.mxu0 0.0
  %3225 = vmatprep.subr.mxu0 0.0
  %3226 = vmatpush1.msra.mxu0 0.0
  %3227 = vmatprep.subr.mxu0 0.0
  %3228 = vmatpush1.msra.mxu0 0.0
  %3229 = vmatprep.subr.mxu0 0.0
  %3230 = vmatpush1.msra.mxu0 0.0
  %3231 = vmatprep.subr.mxu0 0.0
  %3232 = vmatpush1.msra.mxu0 0.0
  %3233 = vmatprep.subr.mxu0 0.0
  %3234 = vmatpush1.msra.mxu0 0.0
  %3235 = vmatprep.subr.mxu0 0.0
  %3236 = vmatpush1.msra.mxu0 0.0
  %3237 = vmatprep.mubr.f32.mxu0 0.0
  %3238 = vmatmul.mubr.f32.gmra.mrb[0].mxu0 %v3154
  %v3239 = vpop.f32.mrb[0].mxu0
  %v3240 = vadd.f32 0.0, %v3239
  %v3241 = vpop.f32.mrb[0].mxu0
  %3242 = vmatprep.mubr.f32.mxu0 0.0
  %3243 = vmatmul.mubr.f32.gmra.mrb[0].mxu0 %v3155
  %v3244 = vpop.f32.mrb[0].mxu0
  %v3245 = vadd.f32 0.0, %v3244
  %v3246 = vpop.f32.mrb[0].mxu0
  %3247 = vdwg.mxu0
  %v3248 = vadd.f32 %v3123, %v3240
  %v3249 = vadd.f32 %v3128, %v3245
  %v3250 = vrot.slane %v691, 3
  %v3252 = vrot.slane %v937, 4
  %v3254 = vrot.slane %v1191, 5
  %v3256 = vrot.slane %v1667, 7
  %v3258 = vrot.slane %v2164, 1
  %v3260 = vrot.slane %v2417, 2
  %v3262 = vrot.slane %v2640, 3
  %v3264 = vrot.slane %v2885, 4
  %v3266 = vsel %vm2909, %v3250, %v3252
  %v3267 = vsel %vm855, %v3266, %v3254
  %v3268 = vsel %vm2912, %v3267, %v1448
  %v3269 = vsel %vm1109, %v3268, %v3256
  %v3270 = vsel %vm2915, %v3269, %v1912
  %v3271 = vsel %vm941, %v3270, %v3258
  %v3272 = vsel %vm2918, %v3271, %v3260
  %v3273 = vsel %vm2909, %v3262, %v3264
  %s3274 = scalar_lea.vmem %s6, 384
  %v3275 = vld [vmem:[%s3274] sm:$0xff]
  %v3276 = vld [vmem:[%s3274 + $0x8] sm:$0xff]
  %v3277 = vld [vmem:[%s3274 + $0x10] sm:$0xff]
  %v3278 = vld [vmem:[%s3274 + $0x18] sm:$0xff]
  %v3279 = vld [vmem:[%s3274 + $0x20] sm:$0xff]
  %v3280 = vld [vmem:[%s3274 + $0x28] sm:$0xff]
  %v3281 = vld [vmem:[%s3274 + $0x30] sm:$0xff]
  %v3282 = vld [vmem:[%s3274 + $0x38] sm:$0xff]
  %v3283 = vld [vmem:[%s3274 + $0x40] sm:$0xff]
  %v3284 = vld [vmem:[%s3274 + $0x48] sm:$0xff]
  %v3285 = vld [vmem:[%s3274 + $0x50] sm:$0xff]
  %v3286 = vld [vmem:[%s3274 + $0x58] sm:$0xff]
  %v3287 = vld [vmem:[%s3274 + $0x60] sm:$0xff]
  %v3288 = vld [vmem:[%s3274 + $0x68] sm:$0xff]
  %v3289 = vld [vmem:[%s3274 + $0x70] sm:$0xff]
  %v3290 = vld [vmem:[%s3274 + $0x78] sm:$0xff]
  %3291 = vmatprep.subr.mxu0 0.0
  %3292 = vmatpush1.msra.mxu0 %v3275
  %3293 = vmatprep.subr.mxu0 0.0
  %3294 = vmatpush1.msra.mxu0 %v3276
  %3295 = vmatprep.subr.mxu0 0.0
  %3296 = vmatpush1.msra.mxu0 %v3277
  %3297 = vmatprep.subr.mxu0 0.0
  %3298 = vmatpush1.msra.mxu0 %v3278
  %3299 = vmatprep.subr.mxu0 0.0
  %3300 = vmatpush1.msra.mxu0 %v3279
  %3301 = vmatprep.subr.mxu0 0.0
  %3302 = vmatpush1.msra.mxu0 %v3280
  %3303 = vmatprep.subr.mxu0 0.0
  %3304 = vmatpush1.msra.mxu0 %v3281
  %3305 = vmatprep.subr.mxu0 0.0
  %3306 = vmatpush1.msra.mxu0 %v3282
  %3307 = vmatprep.subr.mxu0 0.0
  %3308 = vmatpush1.msra.mxu0 %v3283
  %3309 = vmatprep.subr.mxu0 0.0
  %3310 = vmatpush1.msra.mxu0 %v3284
  %3311 = vmatprep.subr.mxu0 0.0
  %3312 = vmatpush1.msra.mxu0 %v3285
  %3313 = vmatprep.subr.mxu0 0.0
  %3314 = vmatpush1.msra.mxu0 %v3286
  %3315 = vmatprep.subr.mxu0 0.0
  %3316 = vmatpush1.msra.mxu0 %v3287
  %3317 = vmatprep.subr.mxu0 0.0
  %3318 = vmatpush1.msra.mxu0 %v3288
  %3319 = vmatprep.subr.mxu0 0.0
  %3320 = vmatpush1.msra.mxu0 %v3289
  %3321 = vmatprep.subr.mxu0 0.0
  %3322 = vmatpush1.msra.mxu0 %v3290
  %3323 = vmatprep.subr.mxu0 0.0
  %3324 = vmatpush1.msra.mxu0 0.0
  %3325 = vmatprep.subr.mxu0 0.0
  %3326 = vmatpush1.msra.mxu0 0.0
  %3327 = vmatprep.subr.mxu0 0.0
  %3328 = vmatpush1.msra.mxu0 0.0
  %3329 = vmatprep.subr.mxu0 0.0
  %3330 = vmatpush1.msra.mxu0 0.0
  %3331 = vmatprep.subr.mxu0 0.0
  %3332 = vmatpush1.msra.mxu0 0.0
  %3333 = vmatprep.subr.mxu0 0.0
  %3334 = vmatpush1.msra.mxu0 0.0
  %3335 = vmatprep.subr.mxu0 0.0
  %3336 = vmatpush1.msra.mxu0 0.0
  %3337 = vmatprep.subr.mxu0 0.0
  %3338 = vmatpush1.msra.mxu0 0.0
  %3339 = vmatprep.subr.mxu0 0.0
  %3340 = vmatpush1.msra.mxu0 0.0
  %3341 = vmatprep.subr.mxu0 0.0
  %3342 = vmatpush1.msra.mxu0 0.0
  %3343 = vmatprep.subr.mxu0 0.0
  %3344 = vmatpush1.msra.mxu0 0.0
  %3345 = vmatprep.subr.mxu0 0.0
  %3346 = vmatpush1.msra.mxu0 0.0
  %3347 = vmatprep.subr.mxu0 0.0
  %3348 = vmatpush1.msra.mxu0 0.0
  %3349 = vmatprep.subr.mxu0 0.0
  %3350 = vmatpush1.msra.mxu0 0.0
  %3351 = vmatprep.subr.mxu0 0.0
  %3352 = vmatpush1.msra.mxu0 0.0
  %3353 = vmatprep.subr.mxu0 0.0
  %3354 = vmatpush1.msra.mxu0 0.0
  %3355 = vmatprep.mubr.f32.mxu0 0.0
  %3356 = vmatmul.mubr.f32.gmra.mrb[0].mxu0 %v3272
  %v3357 = vpop.f32.mrb[0].mxu0
  %v3358 = vadd.f32 0.0, %v3357
  %v3359 = vpop.f32.mrb[0].mxu0
  %3360 = vmatprep.mubr.f32.mxu0 0.0
  %3361 = vmatmul.mubr.f32.gmra.mrb[0].mxu0 %v3273
  %v3362 = vpop.f32.mrb[0].mxu0
  %v3363 = vadd.f32 0.0, %v3362
  %v3364 = vpop.f32.mrb[0].mxu0
  %3365 = vdwg.mxu0
  %v3366 = vadd.f32 %v3248, %v3358
  %v3367 = vadd.f32 %v3249, %v3363
  %v3368 = vrot.slane %v691, 4
  %v3370 = vrot.slane %v937, 5
  %v3372 = vrot.slane %v1192, 6
  %v3374 = vrot.slane %v1444, 7
  %v3376 = vrot.slane %v1912, 1
  %v3378 = vrot.slane %v2165, 2
  %v3380 = vrot.slane %v2417, 3
  %v3382 = vrot.slane %v2640, 4
  %v3384 = vrot.slane %v2885, 5
  %v3386 = vsel %vm2909, %v3368, %v3370
  %v3387 = vsel %vm855, %v3386, %v3372
  %v3388 = vsel %vm2912, %v3387, %v3374
  %v3389 = vsel %vm1109, %v3388, %v1667
  %v3390 = vsel %vm2915, %v3389, %v3376
  %v3391 = vsel %vm941, %v3390, %v3378
  %v3392 = vsel %vm2918, %v3391, %v3380
  %v3393 = vsel %vm2909, %v3382, %v3384
  %s3394 = scalar_lea.vmem %s6, 512
  %v3395 = vld [vmem:[%s3394] sm:$0xff]
  %v3396 = vld [vmem:[%s3394 + $0x8] sm:$0xff]
  %v3397 = vld [vmem:[%s3394 + $0x10] sm:$0xff]
  %v3398 = vld [vmem:[%s3394 + $0x18] sm:$0xff]
  %v3399 = vld [vmem:[%s3394 + $0x20] sm:$0xff]
  %v3400 = vld [vmem:[%s3394 + $0x28] sm:$0xff]
  %v3401 = vld [vmem:[%s3394 + $0x30] sm:$0xff]
  %v3402 = vld [vmem:[%s3394 + $0x38] sm:$0xff]
  %v3403 = vld [vmem:[%s3394 + $0x40] sm:$0xff]
  %v3404 = vld [vmem:[%s3394 + $0x48] sm:$0xff]
  %v3405 = vld [vmem:[%s3394 + $0x50] sm:$0xff]
  %v3406 = vld [vmem:[%s3394 + $0x58] sm:$0xff]
  %v3407 = vld [vmem:[%s3394 + $0x60] sm:$0xff]
  %v3408 = vld [vmem:[%s3394 + $0x68] sm:$0xff]
  %v3409 = vld [vmem:[%s3394 + $0x70] sm:$0xff]
  %v3410 = vld [vmem:[%s3394 + $0x78] sm:$0xff]
  %3411 = vmatprep.subr.mxu0 0.0
  %3412 = vmatpush1.msra.mxu0 %v3395
  %3413 = vmatprep.subr.mxu0 0.0
  %3414 = vmatpush1.msra.mxu0 %v3396
  %3415 = vmatprep.subr.mxu0 0.0
  %3416 = vmatpush1.msra.mxu0 %v3397
  %3417 = vmatprep.subr.mxu0 0.0
  %3418 = vmatpush1.msra.mxu0 %v3398
  %3419 = vmatprep.subr.mxu0 0.0
  %3420 = vmatpush1.msra.mxu0 %v3399
  %3421 = vmatprep.subr.mxu0 0.0
  %3422 = vmatpush1.msra.mxu0 %v3400
  %3423 = vmatprep.subr.mxu0 0.0
  %3424 = vmatpush1.msra.mxu0 %v3401
  %3425 = vmatprep.subr.mxu0 0.0
  %3426 = vmatpush1.msra.mxu0 %v3402
  %3427 = vmatprep.subr.mxu0 0.0
  %3428 = vmatpush1.msra.mxu0 %v3403
  %3429 = vmatprep.subr.mxu0 0.0
  %3430 = vmatpush1.msra.mxu0 %v3404
  %3431 = vmatprep.subr.mxu0 0.0
  %3432 = vmatpush1.msra.mxu0 %v3405
  %3433 = vmatprep.subr.mxu0 0.0
  %3434 = vmatpush1.msra.mxu0 %v3406
  %3435 = vmatprep.subr.mxu0 0.0
  %3436 = vmatpush1.msra.mxu0 %v3407
  %3437 = vmatprep.subr.mxu0 0.0
  %3438 = vmatpush1.msra.mxu0 %v3408
  %3439 = vmatprep.subr.mxu0 0.0
  %3440 = vmatpush1.msra.mxu0 %v3409
  %3441 = vmatprep.subr.mxu0 0.0
  %3442 = vmatpush1.msra.mxu0 %v3410
  %3443 = vmatprep.subr.mxu0 0.0
  %3444 = vmatpush1.msra.mxu0 0.0
  %3445 = vmatprep.subr.mxu0 0.0
  %3446 = vmatpush1.msra.mxu0 0.0
  %3447 = vmatprep.subr.mxu0 0.0
  %3448 = vmatpush1.msra.mxu0 0.0
  %3449 = vmatprep.subr.mxu0 0.0
  %3450 = vmatpush1.msra.mxu0 0.0
  %3451 = vmatprep.subr.mxu0 0.0
  %3452 = vmatpush1.msra.mxu0 0.0
  %3453 = vmatprep.subr.mxu0 0.0
  %3454 = vmatpush1.msra.mxu0 0.0
  %3455 = vmatprep.subr.mxu0 0.0
  %3456 = vmatpush1.msra.mxu0 0.0
  %3457 = vmatprep.subr.mxu0 0.0
  %3458 = vmatpush1.msra.mxu0 0.0
  %3459 = vmatprep.subr.mxu0 0.0
  %3460 = vmatpush1.msra.mxu0 0.0
  %3461 = vmatprep.subr.mxu0 0.0
  %3462 = vmatpush1.msra.mxu0 0.0
  %3463 = vmatprep.subr.mxu0 0.0
  %3464 = vmatpush1.msra.mxu0 0.0
  %3465 = vmatprep.subr.mxu0 0.0
  %3466 = vmatpush1.msra.mxu0 0.0
  %3467 = vmatprep.subr.mxu0 0.0
  %3468 = vmatpush1.msra.mxu0 0.0
  %3469 = vmatprep.subr.mxu0 0.0
  %3470 = vmatpush1.msra.mxu0 0.0
  %3471 = vmatprep.subr.mxu0 0.0
  %3472 = vmatpush1.msra.mxu0 0.0
  %3473 = vmatprep.subr.mxu0 0.0
  %3474 = vmatpush1.msra.mxu0 0.0
  %3475 = vmatprep.mubr.f32.mxu0 0.0
  %3476 = vmatmul.mubr.f32.gmra.mrb[0].mxu0 %v3392
  %v3477 = vpop.f32.mrb[0].mxu0
  %v3478 = vadd.f32 0.0, %v3477
  %v3479 = vpop.f32.mrb[0].mxu0
  %3480 = vmatprep.mubr.f32.mxu0 0.0
  %3481 = vmatmul.mubr.f32.gmra.mrb[0].mxu0 %v3393
  %v3482 = vpop.f32.mrb[0].mxu0
  %v3483 = vadd.f32 0.0, %v3482
  %v3484 = vpop.f32.mrb[0].mxu0
  %3485 = vdwg.mxu0
  %v3486 = vadd.f32 %v3366, %v3478
  %v3487 = vadd.f32 %v3367, %v3483
  %v3488 = vrot.slane %v691, 5
  %v3490 = vrot.slane %v937, 6
  %v3492 = vrot.slane %v1192, 7
  %v3494 = vrot.slane %v1667, 1
  %v3497 = vrot.slane %v2165, 3
  %v3499 = vrot.slane %v2417, 4
  %v3501 = vrot.slane %v2640, 5
  %v3503 = vrot.slane %v2885, 6
  %v3505 = vsel %vm2909, %v3488, %v3490
  %v3506 = vsel %vm855, %v3505, %v3492
  %v3507 = vsel %vm2912, %v3506, %v1444
  %v3508 = vsel %vm1109, %v3507, %v3494
  %v3509 = vsel %vm2915, %v3508, %v1916
  %v3510 = vsel %vm941, %v3509, %v3497
  %v3511 = vsel %vm2918, %v3510, %v3499
  %v3512 = vsel %vm2909, %v3501, %v3503
  %s3513 = scalar_lea.vmem %s6, 640
  %v3514 = vld [vmem:[%s3513] sm:$0xff]
  %v3515 = vld [vmem:[%s3513 + $0x8] sm:$0xff]
  %v3516 = vld [vmem:[%s3513 + $0x10] sm:$0xff]
  %v3517 = vld [vmem:[%s3513 + $0x18] sm:$0xff]
  %v3518 = vld [vmem:[%s3513 + $0x20] sm:$0xff]
  %v3519 = vld [vmem:[%s3513 + $0x28] sm:$0xff]
  %v3520 = vld [vmem:[%s3513 + $0x30] sm:$0xff]
  %v3521 = vld [vmem:[%s3513 + $0x38] sm:$0xff]
  %v3522 = vld [vmem:[%s3513 + $0x40] sm:$0xff]
  %v3523 = vld [vmem:[%s3513 + $0x48] sm:$0xff]
  %v3524 = vld [vmem:[%s3513 + $0x50] sm:$0xff]
  %v3525 = vld [vmem:[%s3513 + $0x58] sm:$0xff]
  %v3526 = vld [vmem:[%s3513 + $0x60] sm:$0xff]
  %v3527 = vld [vmem:[%s3513 + $0x68] sm:$0xff]
  %v3528 = vld [vmem:[%s3513 + $0x70] sm:$0xff]
  %v3529 = vld [vmem:[%s3513 + $0x78] sm:$0xff]
  %3530 = vmatprep.subr.mxu0 0.0
  %3531 = vmatpush1.msra.mxu0 %v3514
  %3532 = vmatprep.subr.mxu0 0.0
  %3533 = vmatpush1.msra.mxu0 %v3515
  %3534 = vmatprep.subr.mxu0 0.0
  %3535 = vmatpush1.msra.mxu0 %v3516
  %3536 = vmatprep.subr.mxu0 0.0
  %3537 = vmatpush1.msra.mxu0 %v3517
  %3538 = vmatprep.subr.mxu0 0.0
  %3539 = vmatpush1.msra.mxu0 %v3518
  %3540 = vmatprep.subr.mxu0 0.0
  %3541 = vmatpush1.msra.mxu0 %v3519
  %3542 = vmatprep.subr.mxu0 0.0
  %3543 = vmatpush1.msra.mxu0 %v3520
  %3544 = vmatprep.subr.mxu0 0.0
  %3545 = vmatpush1.msra.mxu0 %v3521
  %3546 = vmatprep.subr.mxu0 0.0
  %3547 = vmatpush1.msra.mxu0 %v3522
  %3548 = vmatprep.subr.mxu0 0.0
  %3549 = vmatpush1.msra.mxu0 %v3523
  %3550 = vmatprep.subr.mxu0 0.0
  %3551 = vmatpush1.msra.mxu0 %v3524
  %3552 = vmatprep.subr.mxu0 0.0
  %3553 = vmatpush1.msra.mxu0 %v3525
  %3554 = vmatprep.subr.mxu0 0.0
  %3555 = vmatpush1.msra.mxu0 %v3526
  %3556 = vmatprep.subr.mxu0 0.0
  %3557 = vmatpush1.msra.mxu0 %v3527
  %3558 = vmatprep.subr.mxu0 0.0
  %3559 = vmatpush1.msra.mxu0 %v3528
  %3560 = vmatprep.subr.mxu0 0.0
  %3561 = vmatpush1.msra.mxu0 %v3529
  %3562 = vmatprep.subr.mxu0 0.0
  %3563 = vmatpush1.msra.mxu0 0.0
  %3564 = vmatprep.subr.mxu0 0.0
  %3565 = vmatpush1.msra.mxu0 0.0
  %3566 = vmatprep.subr.mxu0 0.0
  %3567 = vmatpush1.msra.mxu0 0.0
  %3568 = vmatprep.subr.mxu0 0.0
  %3569 = vmatpush1.msra.mxu0 0.0
  %3570 = vmatprep.subr.mxu0 0.0
  %3571 = vmatpush1.msra.mxu0 0.0
  %3572 = vmatprep.subr.mxu0 0.0
  %3573 = vmatpush1.msra.mxu0 0.0
  %3574 = vmatprep.subr.mxu0 0.0
  %3575 = vmatpush1.msra.mxu0 0.0
  %3576 = vmatprep.subr.mxu0 0.0
  %3577 = vmatpush1.msra.mxu0 0.0
  %3578 = vmatprep.subr.mxu0 0.0
  %3579 = vmatpush1.msra.mxu0 0.0
  %3580 = vmatprep.subr.mxu0 0.0
  %3581 = vmatpush1.msra.mxu0 0.0
  %3582 = vmatprep.subr.mxu0 0.0
  %3583 = vmatpush1.msra.mxu0 0.0
  %3584 = vmatprep.subr.mxu0 0.0
  %3585 = vmatpush1.msra.mxu0 0.0
  %3586 = vmatprep.subr.mxu0 0.0
  %3587 = vmatpush1.msra.mxu0 0.0
  %3588 = vmatprep.subr.mxu0 0.0
  %3589 = vmatpush1.msra.mxu0 0.0
  %3590 = vmatprep.subr.mxu0 0.0
  %3591 = vmatpush1.msra.mxu0 0.0
  %3592 = vmatprep.subr.mxu0 0.0
  %3593 = vmatpush1.msra.mxu0 0.0
  %3594 = vmatprep.mubr.f32.mxu0 0.0
  %3595 = vmatmul.mubr.f32.gmra.mrb[0].mxu0 %v3511
  %v3596 = vpop.f32.mrb[0].mxu0
  %v3597 = vadd.f32 0.0, %v3596
  %v3598 = vpop.f32.mrb[0].mxu0
  %3599 = vmatprep.mubr.f32.mxu0 0.0
  %3600 = vmatmul.mubr.f32.gmra.mrb[0].mxu0 %v3512
  %v3601 = vpop.f32.mrb[0].mxu0
  %v3602 = vadd.f32 0.0, %v3601
  %v3603 = vpop.f32.mrb[0].mxu0
  %3604 = vdwg.mxu0
  %v3605 = vadd.f32 %v3486, %v3597
  %v3606 = vadd.f32 %v3487, %v3602
  %v3607 = vrot.slane %v691, 6
  %v3609 = vrot.slane %v938, 7
  %v3611 = vrot.slane %v1444, 1
  %v3613 = vrot.slane %v1667, 2
  %v3615 = vrot.slane %v1913, 3
  %v3617 = vrot.slane %v2417, 5
  %v3619 = vrot.slane %v2640, 6
  %v3622 = vrot.slane %v2886, 7
  %v3624 = vsel %vm2909, %v3607, %v3609
  %v3625 = vsel %vm855, %v3624, %v1192
  %v3626 = vsel %vm2912, %v3625, %v3611
  %v3627 = vsel %vm1109, %v3626, %v3613
  %v3628 = vsel %vm2915, %v3627, %v3615
  %v3629 = vsel %vm941, %v3628, %v2169
  %v3630 = vsel %vm2918, %v3629, %v3617
  %v3631 = vsel %vm2909, %v3619, %v3622
  %s3632 = scalar_lea.vmem %s6, 768
  %v3633 = vld [vmem:[%s3632] sm:$0xff]
  %v3634 = vld [vmem:[%s3632 + $0x8] sm:$0xff]
  %v3635 = vld [vmem:[%s3632 + $0x10] sm:$0xff]
  %v3636 = vld [vmem:[%s3632 + $0x18] sm:$0xff]
  %v3637 = vld [vmem:[%s3632 + $0x20] sm:$0xff]
  %v3638 = vld [vmem:[%s3632 + $0x28] sm:$0xff]
  %v3639 = vld [vmem:[%s3632 + $0x30] sm:$0xff]
  %v3640 = vld [vmem:[%s3632 + $0x38] sm:$0xff]
  %v3641 = vld [vmem:[%s3632 + $0x40] sm:$0xff]
  %v3642 = vld [vmem:[%s3632 + $0x48] sm:$0xff]
  %v3643 = vld [vmem:[%s3632 + $0x50] sm:$0xff]
  %v3644 = vld [vmem:[%s3632 + $0x58] sm:$0xff]
  %v3645 = vld [vmem:[%s3632 + $0x60] sm:$0xff]
  %v3646 = vld [vmem:[%s3632 + $0x68] sm:$0xff]
  %v3647 = vld [vmem:[%s3632 + $0x70] sm:$0xff]
  %v3648 = vld [vmem:[%s3632 + $0x78] sm:$0xff]
  %3649 = vmatprep.subr.mxu0 0.0
  %3650 = vmatpush1.msra.mxu0 %v3633
  %3651 = vmatprep.subr.mxu0 0.0
  %3652 = vmatpush1.msra.mxu0 %v3634
  %3653 = vmatprep.subr.mxu0 0.0
  %3654 = vmatpush1.msra.mxu0 %v3635
  %3655 = vmatprep.subr.mxu0 0.0
  %3656 = vmatpush1.msra.mxu0 %v3636
  %3657 = vmatprep.subr.mxu0 0.0
  %3658 = vmatpush1.msra.mxu0 %v3637
  %3659 = vmatprep.subr.mxu0 0.0
  %3660 = vmatpush1.msra.mxu0 %v3638
  %3661 = vmatprep.subr.mxu0 0.0
  %3662 = vmatpush1.msra.mxu0 %v3639
  %3663 = vmatprep.subr.mxu0 0.0
  %3664 = vmatpush1.msra.mxu0 %v3640
  %3665 = vmatprep.subr.mxu0 0.0
  %3666 = vmatpush1.msra.mxu0 %v3641
  %3667 = vmatprep.subr.mxu0 0.0
  %3668 = vmatpush1.msra.mxu0 %v3642
  %3669 = vmatprep.subr.mxu0 0.0
  %3670 = vmatpush1.msra.mxu0 %v3643
  %3671 = vmatprep.subr.mxu0 0.0
  %3672 = vmatpush1.msra.mxu0 %v3644
  %3673 = vmatprep.subr.mxu0 0.0
  %3674 = vmatpush1.msra.mxu0 %v3645
  %3675 = vmatprep.subr.mxu0 0.0
  %3676 = vmatpush1.msra.mxu0 %v3646
  %3677 = vmatprep.subr.mxu0 0.0
  %3678 = vmatpush1.msra.mxu0 %v3647
  %3679 = vmatprep.subr.mxu0 0.0
  %3680 = vmatpush1.msra.mxu0 %v3648
  %3681 = vmatprep.subr.mxu0 0.0
  %3682 = vmatpush1.msra.mxu0 0.0
  %3683 = vmatprep.subr.mxu0 0.0
  %3684 = vmatpush1.msra.mxu0 0.0
  %3685 = vmatprep.subr.mxu0 0.0
  %3686 = vmatpush1.msra.mxu0 0.0
  %3687 = vmatprep.subr.mxu0 0.0
  %3688 = vmatpush1.msra.mxu0 0.0
  %3689 = vmatprep.subr.mxu0 0.0
  %3690 = vmatpush1.msra.mxu0 0.0
  %3691 = vmatprep.subr.mxu0 0.0
  %3692 = vmatpush1.msra.mxu0 0.0
  %3693 = vmatprep.subr.mxu0 0.0
  %3694 = vmatpush1.msra.mxu0 0.0
  %3695 = vmatprep.subr.mxu0 0.0
  %3696 = vmatpush1.msra.mxu0 0.0
  %3697 = vmatprep.subr.mxu0 0.0
  %3698 = vmatpush1.msra.mxu0 0.0
  %3699 = vmatprep.subr.mxu0 0.0
  %3700 = vmatpush1.msra.mxu0 0.0
  %3701 = vmatprep.subr.mxu0 0.0
  %3702 = vmatpush1.msra.mxu0 0.0
  %3703 = vmatprep.subr.mxu0 0.0
  %3704 = vmatpush1.msra.mxu0 0.0
  %3705 = vmatprep.subr.mxu0 0.0
  %3706 = vmatpush1.msra.mxu0 0.0
  %3707 = vmatprep.subr.mxu0 0.0
  %3708 = vmatpush1.msra.mxu0 0.0
  %3709 = vmatprep.subr.mxu0 0.0
  %3710 = vmatpush1.msra.mxu0 0.0
  %3711 = vmatprep.subr.mxu0 0.0
  %3712 = vmatpush1.msra.mxu0 0.0
  %3713 = vmatprep.mubr.f32.mxu0 0.0
  %3714 = vmatmul.mubr.f32.gmra.mrb[0].mxu0 %v3630
  %v3715 = vpop.f32.mrb[0].mxu0
  %v3716 = vadd.f32 0.0, %v3715
  %v3717 = vpop.f32.mrb[0].mxu0
  %3718 = vmatprep.mubr.f32.mxu0 0.0
  %3719 = vmatmul.mubr.f32.gmra.mrb[0].mxu0 %v3631
  %v3720 = vpop.f32.mrb[0].mxu0
  %v3721 = vadd.f32 0.0, %v3720
  %v3722 = vpop.f32.mrb[0].mxu0
  %3723 = vdwg.mxu0
  %v3724 = vadd.f32 %v3605, %v3716
  %v3725 = vadd.f32 %v3606, %v3721
  %v3726 = vrot.slane %v691, 7
  %v3728 = vrot.slane %v1192, 1
  %v3730 = vrot.slane %v1444, 2
  %v3732 = vrot.slane %v1667, 3
  %v3734 = vrot.slane %v1913, 4
  %v3736 = vrot.slane %v2165, 5
  %v3738 = vrot.slane %v2640, 7
  %v3740 = vsel %vm2909, %v3726, %v938
  %v3741 = vsel %vm855, %v3740, %v3728
  %v3742 = vsel %vm2912, %v3741, %v3730
  %v3743 = vsel %vm1109, %v3742, %v3732
  %v3744 = vsel %vm2915, %v3743, %v3734
  %v3745 = vsel %vm941, %v3744, %v3736
  %v3746 = vsel %vm2918, %v3745, %v2421
  %v3747 = vsel %vm2909, %v3738, %v2886
  %s3748 = scalar_lea.vmem %s6, 896
  %v3749 = vld [vmem:[%s3748] sm:$0xff]
  %v3750 = vld [vmem:[%s3748 + $0x8] sm:$0xff]
  %v3751 = vld [vmem:[%s3748 + $0x10] sm:$0xff]
  %v3752 = vld [vmem:[%s3748 + $0x18] sm:$0xff]
  %v3753 = vld [vmem:[%s3748 + $0x20] sm:$0xff]
  %v3754 = vld [vmem:[%s3748 + $0x28] sm:$0xff]
  %v3755 = vld [vmem:[%s3748 + $0x30] sm:$0xff]
  %v3756 = vld [vmem:[%s3748 + $0x38] sm:$0xff]
  %v3757 = vld [vmem:[%s3748 + $0x40] sm:$0xff]
  %v3758 = vld [vmem:[%s3748 + $0x48] sm:$0xff]
  %v3759 = vld [vmem:[%s3748 + $0x50] sm:$0xff]
  %v3760 = vld [vmem:[%s3748 + $0x58] sm:$0xff]
  %v3761 = vld [vmem:[%s3748 + $0x60] sm:$0xff]
  %v3762 = vld [vmem:[%s3748 + $0x68] sm:$0xff]
  %v3763 = vld [vmem:[%s3748 + $0x70] sm:$0xff]
  %v3764 = vld [vmem:[%s3748 + $0x78] sm:$0xff]
  %3765 = vmatprep.subr.mxu0 0.0
  %3766 = vmatpush1.msra.mxu0 %v3749
  %3767 = vmatprep.subr.mxu0 0.0
  %3768 = vmatpush1.msra.mxu0 %v3750
  %3769 = vmatprep.subr.mxu0 0.0
  %3770 = vmatpush1.msra.mxu0 %v3751
  %3771 = vmatprep.subr.mxu0 0.0
  %3772 = vmatpush1.msra.mxu0 %v3752
  %3773 = vmatprep.subr.mxu0 0.0
  %3774 = vmatpush1.msra.mxu0 %v3753
  %3775 = vmatprep.subr.mxu0 0.0
  %3776 = vmatpush1.msra.mxu0 %v3754
  %3777 = vmatprep.subr.mxu0 0.0
  %3778 = vmatpush1.msra.mxu0 %v3755
  %3779 = vmatprep.subr.mxu0 0.0
  %3780 = vmatpush1.msra.mxu0 %v3756
  %3781 = vmatprep.subr.mxu0 0.0
  %3782 = vmatpush1.msra.mxu0 %v3757
  %3783 = vmatprep.subr.mxu0 0.0
  %3784 = vmatpush1.msra.mxu0 %v3758
  %3785 = vmatprep.subr.mxu0 0.0
  %3786 = vmatpush1.msra.mxu0 %v3759
  %3787 = vmatprep.subr.mxu0 0.0
  %3788 = vmatpush1.msra.mxu0 %v3760
  %3789 = vmatprep.subr.mxu0 0.0
  %3790 = vmatpush1.msra.mxu0 %v3761
  %3791 = vmatprep.subr.mxu0 0.0
  %3792 = vmatpush1.msra.mxu0 %v3762
  %3793 = vmatprep.subr.mxu0 0.0
  %3794 = vmatpush1.msra.mxu0 %v3763
  %3795 = vmatprep.subr.mxu0 0.0
  %3796 = vmatpush1.msra.mxu0 %v3764
  %3797 = vmatprep.subr.mxu0 0.0
  %3798 = vmatpush1.msra.mxu0 0.0
  %3799 = vmatprep.subr.mxu0 0.0
  %3800 = vmatpush1.msra.mxu0 0.0
  %3801 = vmatprep.subr.mxu0 0.0
  %3802 = vmatpush1.msra.mxu0 0.0
  %3803 = vmatprep.subr.mxu0 0.0
  %3804 = vmatpush1.msra.mxu0 0.0
  %3805 = vmatprep.subr.mxu0 0.0
  %3806 = vmatpush1.msra.mxu0 0.0
  %3807 = vmatprep.subr.mxu0 0.0
  %3808 = vmatpush1.msra.mxu0 0.0
  %3809 = vmatprep.subr.mxu0 0.0
  %3810 = vmatpush1.msra.mxu0 0.0
  %3811 = vmatprep.subr.mxu0 0.0
  %3812 = vmatpush1.msra.mxu0 0.0
  %3813 = vmatprep.subr.mxu0 0.0
  %3814 = vmatpush1.msra.mxu0 0.0
  %3815 = vmatprep.subr.mxu0 0.0
  %3816 = vmatpush1.msra.mxu0 0.0
  %3817 = vmatprep.subr.mxu0 0.0
  %3818 = vmatpush1.msra.mxu0 0.0
  %3819 = vmatprep.subr.mxu0 0.0
  %3820 = vmatpush1.msra.mxu0 0.0
  %3821 = vmatprep.subr.mxu0 0.0
  %3822 = vmatpush1.msra.mxu0 0.0
  %3823 = vmatprep.subr.mxu0 0.0
  %3824 = vmatpush1.msra.mxu0 0.0
  %3825 = vmatprep.subr.mxu0 0.0
  %3826 = vmatpush1.msra.mxu0 0.0
  %3827 = vmatprep.subr.mxu0 0.0
  %3828 = vmatpush1.msra.mxu0 0.0
  %3829 = vmatprep.mubr.f32.mxu0 0.0
  %3830 = vmatmul.mubr.f32.gmra.mrb[0].mxu0 %v3746
  %v3831 = vpop.f32.mrb[0].mxu0
  %v3832 = vadd.f32 0.0, %v3831
  %v3833 = vpop.f32.mrb[0].mxu0
  %3834 = vmatprep.mubr.f32.mxu0 0.0
  %3835 = vmatmul.mubr.f32.gmra.mrb[0].mxu0 %v3747
  %v3836 = vpop.f32.mrb[0].mxu0
  %v3837 = vadd.f32 0.0, %v3836
  %v3838 = vpop.f32.mrb[0].mxu0
  %3839 = vdwg.mxu0
  %v3840 = vadd.f32 %v3724, %v3832
  %v3841 = vadd.f32 %v3725, %v3837
  %v3842 = vrot.slane %v938, 1
  %v3844 = vrot.slane %v1192, 2
  %v3846 = vrot.slane %v1444, 3
  %v3849 = vrot.slane %v1668, 4
  %v3851 = vrot.slane %v1913, 5
  %v3853 = vrot.slane %v2165, 6
  %v3855 = vrot.slane %v2417, 7
  %v3857 = vrot.slane %v2886, 1
  %v3859 = vsel %vm2909, %v692, %v3842
  %v3860 = vsel %vm855, %v3859, %v3844
  %v3861 = vsel %vm2912, %v3860, %v3846
  %v3862 = vsel %vm1109, %v3861, %v3849
  %v3863 = vsel %vm2915, %v3862, %v3851
  %v3864 = vsel %vm941, %v3863, %v3853
  %v3865 = vsel %vm2918, %v3864, %v3855
  %v3866 = vsel %vm2909, %v2641, %v3857
  %s3867 = scalar_lea.vmem %s6, 1024
  %v3868 = vld [vmem:[%s3867] sm:$0xff]
  %v3869 = vld [vmem:[%s3867 + $0x8] sm:$0xff]
  %v3870 = vld [vmem:[%s3867 + $0x10] sm:$0xff]
  %v3871 = vld [vmem:[%s3867 + $0x18] sm:$0xff]
  %v3872 = vld [vmem:[%s3867 + $0x20] sm:$0xff]
  %v3873 = vld [vmem:[%s3867 + $0x28] sm:$0xff]
  %v3874 = vld [vmem:[%s3867 + $0x30] sm:$0xff]
  %v3875 = vld [vmem:[%s3867 + $0x38] sm:$0xff]
  %v3876 = vld [vmem:[%s3867 + $0x40] sm:$0xff]
  %v3877 = vld [vmem:[%s3867 + $0x48] sm:$0xff]
  %v3878 = vld [vmem:[%s3867 + $0x50] sm:$0xff]
  %v3879 = vld [vmem:[%s3867 + $0x58] sm:$0xff]
  %v3880 = vld [vmem:[%s3867 + $0x60] sm:$0xff]
  %v3881 = vld [vmem:[%s3867 + $0x68] sm:$0xff]
  %v3882 = vld [vmem:[%s3867 + $0x70] sm:$0xff]
  %v3883 = vld [vmem:[%s3867 + $0x78] sm:$0xff]
  %3884 = vmatprep.subr.mxu0 0.0
  %3885 = vmatpush1.msra.mxu0 %v3868
  %3886 = vmatprep.subr.mxu0 0.0
  %3887 = vmatpush1.msra.mxu0 %v3869
  %3888 = vmatprep.subr.mxu0 0.0
  %3889 = vmatpush1.msra.mxu0 %v3870
  %3890 = vmatprep.subr.mxu0 0.0
  %3891 = vmatpush1.msra.mxu0 %v3871
  %3892 = vmatprep.subr.mxu0 0.0
  %3893 = vmatpush1.msra.mxu0 %v3872
  %3894 = vmatprep.subr.mxu0 0.0
  %3895 = vmatpush1.msra.mxu0 %v3873
  %3896 = vmatprep.subr.mxu0 0.0
  %3897 = vmatpush1.msra.mxu0 %v3874
  %3898 = vmatprep.subr.mxu0 0.0
  %3899 = vmatpush1.msra.mxu0 %v3875
  %3900 = vmatprep.subr.mxu0 0.0
  %3901 = vmatpush1.msra.mxu0 %v3876
  %3902 = vmatprep.subr.mxu0 0.0
  %3903 = vmatpush1.msra.mxu0 %v3877
  %3904 = vmatprep.subr.mxu0 0.0
  %3905 = vmatpush1.msra.mxu0 %v3878
  %3906 = vmatprep.subr.mxu0 0.0
  %3907 = vmatpush1.msra.mxu0 %v3879
  %3908 = vmatprep.subr.mxu0 0.0
  %3909 = vmatpush1.msra.mxu0 %v3880
  %3910 = vmatprep.subr.mxu0 0.0
  %3911 = vmatpush1.msra.mxu0 %v3881
  %3912 = vmatprep.subr.mxu0 0.0
  %3913 = vmatpush1.msra.mxu0 %v3882
  %3914 = vmatprep.subr.mxu0 0.0
  %3915 = vmatpush1.msra.mxu0 %v3883
  %3916 = vmatprep.subr.mxu0 0.0
  %3917 = vmatpush1.msra.mxu0 0.0
  %3918 = vmatprep.subr.mxu0 0.0
  %3919 = vmatpush1.msra.mxu0 0.0
  %3920 = vmatprep.subr.mxu0 0.0
  %3921 = vmatpush1.msra.mxu0 0.0
  %3922 = vmatprep.subr.mxu0 0.0
  %3923 = vmatpush1.msra.mxu0 0.0
  %3924 = vmatprep.subr.mxu0 0.0
  %3925 = vmatpush1.msra.mxu0 0.0
  %3926 = vmatprep.subr.mxu0 0.0
  %3927 = vmatpush1.msra.mxu0 0.0
  %3928 = vmatprep.subr.mxu0 0.0
  %3929 = vmatpush1.msra.mxu0 0.0
  %3930 = vmatprep.subr.mxu0 0.0
  %3931 = vmatpush1.msra.mxu0 0.0
  %3932 = vmatprep.subr.mxu0 0.0
  %3933 = vmatpush1.msra.mxu0 0.0
  %3934 = vmatprep.subr.mxu0 0.0
  %3935 = vmatpush1.msra.mxu0 0.0
  %3936 = vmatprep.subr.mxu0 0.0
  %3937 = vmatpush1.msra.mxu0 0.0
  %3938 = vmatprep.subr.mxu0 0.0
  %3939 = vmatpush1.msra.mxu0 0.0
  %3940 = vmatprep.subr.mxu0 0.0
  %3941 = vmatpush1.msra.mxu0 0.0
  %3942 = vmatprep.subr.mxu0 0.0
  %3943 = vmatpush1.msra.mxu0 0.0
  %3944 = vmatprep.subr.mxu0 0.0
  %3945 = vmatpush1.msra.mxu0 0.0
  %3946 = vmatprep.subr.mxu0 0.0
  %3947 = vmatpush1.msra.mxu0 0.0
  %3948 = vmatprep.mubr.f32.mxu0 0.0
  %3949 = vmatmul.mubr.f32.gmra.mrb[0].mxu0 %v3865
  %v3950 = vpop.f32.mrb[0].mxu0
  %v3951 = vadd.f32 0.0, %v3950
  %v3952 = vpop.f32.mrb[0].mxu0
  %3953 = vmatprep.mubr.f32.mxu0 0.0
  %3954 = vmatmul.mubr.f32.gmra.mrb[0].mxu0 %v3866
  %v3955 = vpop.f32.mrb[0].mxu0
  %v3956 = vadd.f32 0.0, %v3955
  %v3957 = vpop.f32.mrb[0].mxu0
  %3958 = vdwg.mxu0
  %v3959 = vadd.f32 %v3840, %v3951
  %v3960 = vadd.f32 %v3841, %v3956
  %v3962 = vrot.slane %v692, 1
  %v3964 = vrot.slane %v1192, 3
  %v3966 = vrot.slane %v1444, 4
  %v3968 = vrot.slane %v1668, 5
  %v3970 = vrot.slane %v1913, 6
  %v3972 = vrot.slane %v2165, 7
  %v3975 = vrot.slane %v2641, 1
  %v3977 = vrot.slane %v2886, 2
  %v3979 = vsel %vm2909, %v3962, %v943
  %v3980 = vsel %vm855, %v3979, %v3964
  %v3981 = vsel %vm2912, %v3980, %v3966
  %v3982 = vsel %vm1109, %v3981, %v3968
  %v3983 = vsel %vm2915, %v3982, %v3970
  %v3984 = vsel %vm941, %v3983, %v3972
  %v3985 = vsel %vm2918, %v3984, %v2417
  %v3986 = vsel %vm2909, %v3975, %v3977
  %s3987 = scalar_lea.vmem %s6, 1152
  %v3988 = vld [vmem:[%s3987] sm:$0xff]
  %v3989 = vld [vmem:[%s3987 + $0x8] sm:$0xff]
  %v3990 = vld [vmem:[%s3987 + $0x10] sm:$0xff]
  %v3991 = vld [vmem:[%s3987 + $0x18] sm:$0xff]
  %v3992 = vld [vmem:[%s3987 + $0x20] sm:$0xff]
  %v3993 = vld [vmem:[%s3987 + $0x28] sm:$0xff]
  %v3994 = vld [vmem:[%s3987 + $0x30] sm:$0xff]
  %v3995 = vld [vmem:[%s3987 + $0x38] sm:$0xff]
  %v3996 = vld [vmem:[%s3987 + $0x40] sm:$0xff]
  %v3997 = vld [vmem:[%s3987 + $0x48] sm:$0xff]
  %v3998 = vld [vmem:[%s3987 + $0x50] sm:$0xff]
  %v3999 = vld [vmem:[%s3987 + $0x58] sm:$0xff]
  %v4000 = vld [vmem:[%s3987 + $0x60] sm:$0xff]
  %v4001 = vld [vmem:[%s3987 + $0x68] sm:$0xff]
  %v4002 = vld [vmem:[%s3987 + $0x70] sm:$0xff]
  %v4003 = vld [vmem:[%s3987 + $0x78] sm:$0xff]
  %4004 = vmatprep.subr.mxu0 0.0
  %4005 = vmatpush1.msra.mxu0 %v3988
  %4006 = vmatprep.subr.mxu0 0.0
  %4007 = vmatpush1.msra.mxu0 %v3989
  %4008 = vmatprep.subr.mxu0 0.0
  %4009 = vmatpush1.msra.mxu0 %v3990
  %4010 = vmatprep.subr.mxu0 0.0
  %4011 = vmatpush1.msra.mxu0 %v3991
  %4012 = vmatprep.subr.mxu0 0.0
  %4013 = vmatpush1.msra.mxu0 %v3992
  %4014 = vmatprep.subr.mxu0 0.0
  %4015 = vmatpush1.msra.mxu0 %v3993
  %4016 = vmatprep.subr.mxu0 0.0
  %4017 = vmatpush1.msra.mxu0 %v3994
  %4018 = vmatprep.subr.mxu0 0.0
  %4019 = vmatpush1.msra.mxu0 %v3995
  %4020 = vmatprep.subr.mxu0 0.0
  %4021 = vmatpush1.msra.mxu0 %v3996
  %4022 = vmatprep.subr.mxu0 0.0
  %4023 = vmatpush1.msra.mxu0 %v3997
  %4024 = vmatprep.subr.mxu0 0.0
  %4025 = vmatpush1.msra.mxu0 %v3998
  %4026 = vmatprep.subr.mxu0 0.0
  %4027 = vmatpush1.msra.mxu0 %v3999
  %4028 = vmatprep.subr.mxu0 0.0
  %4029 = vmatpush1.msra.mxu0 %v4000
  %4030 = vmatprep.subr.mxu0 0.0
  %4031 = vmatpush1.msra.mxu0 %v4001
  %4032 = vmatprep.subr.mxu0 0.0
  %4033 = vmatpush1.msra.mxu0 %v4002
  %4034 = vmatprep.subr.mxu0 0.0
  %4035 = vmatpush1.msra.mxu0 %v4003
  %4036 = vmatprep.subr.mxu0 0.0
  %4037 = vmatpush1.msra.mxu0 0.0
  %4038 = vmatprep.subr.mxu0 0.0
  %4039 = vmatpush1.msra.mxu0 0.0
  %4040 = vmatprep.subr.mxu0 0.0
  %4041 = vmatpush1.msra.mxu0 0.0
  %4042 = vmatprep.subr.mxu0 0.0
  %4043 = vmatpush1.msra.mxu0 0.0
  %4044 = vmatprep.subr.mxu0 0.0
  %4045 = vmatpush1.msra.mxu0 0.0
  %4046 = vmatprep.subr.mxu0 0.0
  %4047 = vmatpush1.msra.mxu0 0.0
  %4048 = vmatprep.subr.mxu0 0.0
  %4049 = vmatpush1.msra.mxu0 0.0
  %4050 = vmatprep.subr.mxu0 0.0
  %4051 = vmatpush1.msra.mxu0 0.0
  %4052 = vmatprep.subr.mxu0 0.0
  %4053 = vmatpush1.msra.mxu0 0.0
  %4054 = vmatprep.subr.mxu0 0.0
  %4055 = vmatpush1.msra.mxu0 0.0
  %4056 = vmatprep.subr.mxu0 0.0
  %4057 = vmatpush1.msra.mxu0 0.0
  %4058 = vmatprep.subr.mxu0 0.0
  %4059 = vmatpush1.msra.mxu0 0.0
  %4060 = vmatprep.subr.mxu0 0.0
  %4061 = vmatpush1.msra.mxu0 0.0
  %4062 = vmatprep.subr.mxu0 0.0
  %4063 = vmatpush1.msra.mxu0 0.0
  %4064 = vmatprep.subr.mxu0 0.0
  %4065 = vmatpush1.msra.mxu0 0.0
  %4066 = vmatprep.subr.mxu0 0.0
  %4067 = vmatpush1.msra.mxu0 0.0
  %4068 = vmatprep.mubr.f32.mxu0 0.0
  %4069 = vmatmul.mubr.f32.gmra.mrb[0].mxu0 %v3985
  %v4070 = vpop.f32.mrb[0].mxu0
  %v4071 = vadd.f32 0.0, %v4070
  %v4072 = vpop.f32.mrb[0].mxu0
  %4073 = vmatprep.mubr.f32.mxu0 0.0
  %4074 = vmatmul.mubr.f32.gmra.mrb[0].mxu0 %v3986
  %v4075 = vpop.f32.mrb[0].mxu0
  %v4076 = vadd.f32 0.0, %v4075
  %v4077 = vpop.f32.mrb[0].mxu0
  %4078 = vdwg.mxu0
  %v4079 = vadd.f32 %v3959, %v4071
  %v4080 = vadd.f32 %v3960, %v4076
  %v4081 = vld [vmem:[%s7] sm:$0x1]
  %v4083 = vlaneseq
  %v4084 = vshrl.u32 %v4083, 7
  %v4085 = vsub.s32 0, %v4084
  %v4086 = vrot.slane %v4081, %v4085
  %v4088 = vadd.f32 %v4079, %v4086
  %v4089 = vadd.f32 %v4080, %v4086
  %v4090 = vmax.f32 %v4088, 0.0
  %v4091 = vmax.f32 %v4089, 0.0
  %v4092 = vld [vmem:[%s8] sm:$0xff]
  %v4093 = vld [vmem:[%s8 + $0x8] sm:$0x3]
  %v4094 = vld [vmem:[%s9] sm:$0x1]
  %v4096 = vlaneseq
  %v4097 = vshrl.u32 %v4096, 7
  %v4098 = vsub.s32 0, %v4097
  %v4099 = vrot.slane %v4094, %v4098
  %vm4101 = vcmask 80896
  %v4103 = vsel %vm4101, %v4090, 0
  %v4106 = vsel %vm4101, %v4091, 0
  %v4109 = vsel %vm855, %v4093, 0
  %4111 = vmatprep.subr.mxu0 0.0
  %4112 = vmatpush1.msra.mxu0 %v4092
  %4113 = vmatprep.subr.mxu0 0.0
  %4114 = vmatpush1.msra.mxu0 %v4109
  %4115 = vmatprep.subr.mxu0 0.0
  %4116 = vmatpush1.msra.mxu0 0.0
  %4117 = vmatprep.subr.mxu0 0.0
  %4118 = vmatpush1.msra.mxu0 0.0
  %4119 = vmatprep.subr.mxu0 0.0
  %4120 = vmatpush1.msra.mxu0 0.0
  %4121 = vmatprep.subr.mxu0 0.0
  %4122 = vmatpush1.msra.mxu0 0.0
  %4123 = vmatprep.subr.mxu0 0.0
  %4124 = vmatpush1.msra.mxu0 0.0
  %4125 = vmatprep.subr.mxu0 0.0
  %4126 = vmatpush1.msra.mxu0 0.0
  %4127 = vmatprep.subr.mxu0 0.0
  %4128 = vmatpush1.msra.mxu0 0.0
  %4129 = vmatprep.subr.mxu0 0.0
  %4130 = vmatpush1.msra.mxu0 0.0
  %4131 = vmatprep.subr.mxu0 0.0
  %4132 = vmatpush1.msra.mxu0 0.0
  %4133 = vmatprep.subr.mxu0 0.0
  %4134 = vmatpush1.msra.mxu0 0.0
  %4135 = vmatprep.subr.mxu0 0.0
  %4136 = vmatpush1.msra.mxu0 0.0
  %4137 = vmatprep.subr.mxu0 0.0
  %4138 = vmatpush1.msra.mxu0 0.0
  %4139 = vmatprep.subr.mxu0 0.0
  %4140 = vmatpush1.msra.mxu0 0.0
  %4141 = vmatprep.subr.mxu0 0.0
  %4142 = vmatpush1.msra.mxu0 0.0
  %4143 = vmatprep.subr.mxu0 0.0
  %4144 = vmatpush1.msra.mxu0 0.0
  %4145 = vmatprep.subr.mxu0 0.0
  %4146 = vmatpush1.msra.mxu0 0.0
  %4147 = vmatprep.subr.mxu0 0.0
  %4148 = vmatpush1.msra.mxu0 0.0
  %4149 = vmatprep.subr.mxu0 0.0
  %4150 = vmatpush1.msra.mxu0 0.0
  %4151 = vmatprep.subr.mxu0 0.0
  %4152 = vmatpush1.msra.mxu0 0.0
  %4153 = vmatprep.subr.mxu0 0.0
  %4154 = vmatpush1.msra.mxu0 0.0
  %4155 = vmatprep.subr.mxu0 0.0
  %4156 = vmatpush1.msra.mxu0 0.0
  %4157 = vmatprep.subr.mxu0 0.0
  %4158 = vmatpush1.msra.mxu0 0.0
  %4159 = vmatprep.subr.mxu0 0.0
  %4160 = vmatpush1.msra.mxu0 0.0
  %4161 = vmatprep.subr.mxu0 0.0
  %4162 = vmatpush1.msra.mxu0 0.0
  %4163 = vmatprep.subr.mxu0 0.0
  %4164 = vmatpush1.msra.mxu0 0.0
  %4165 = vmatprep.subr.mxu0 0.0
  %4166 = vmatpush1.msra.mxu0 0.0
  %4167 = vmatprep.subr.mxu0 0.0
  %4168 = vmatpush1.msra.mxu0 0.0
  %4169 = vmatprep.subr.mxu0 0.0
  %4170 = vmatpush1.msra.mxu0 0.0
  %4171 = vmatprep.subr.mxu0 0.0
  %4172 = vmatpush1.msra.mxu0 0.0
  %4173 = vmatprep.subr.mxu0 0.0
  %4174 = vmatpush1.msra.mxu0 0.0
  %4175 = vmatprep.mubr.f32.mxu0 0.0
  %4176 = vmatmul.mubr.f32.gmra.mrb[0].mxu0 %v4103
  %v4177 = vpop.f32.mrb[0].mxu0
  %v4178 = vadd.f32 %v4099, %v4177
  %v4179 = vpop.f32.mrb[0].mxu0
  %4180 = vmatprep.mubr.f32.mxu0 0.0
  %4181 = vmatmul.mubr.f32.gmra.mrb[0].mxu0 %v4106
  %v4182 = vpop.f32.mrb[0].mxu0
  %v4183 = vadd.f32 %v4099, %v4182
  %v4184 = vpop.f32.mrb[0].mxu0
  %4185 = vdwg.mxu0
  %vm4186 = vcmask 48128
  %4187 = vst.msk [vmem:[%s10] sm:$0xff] %vm4186, %v4178
  %vm4188 = vcmask 41984
  %4189 = vst.msk [vmem:[%s10 + $0x8] sm:$0x3] %vm4188, %v4183
  // Predicated region
  $region42: #{lstm_dqn_forward.3} parent=0 // pred_check
    _
  $region43: #{lstm_dqn_forward.3} parent=0 // pred_check_branch
    %4191 = sbr.rel (0) target = $region45
  $region44: #{lstm_dqn_forward.3} parent=0 // pred_region
    _
  $region45: #{lstm_dqn_forward.3} parent=0 // pred_fallthru
    _
  // Predicated region
  $region46: #{lstm_dqn_forward.3} parent=0 // pred_check
    _
  $region47: #{lstm_dqn_forward.3} parent=0 // pred_check_branch
    %4193 = sbr.rel (0) target = $region49
  $region48: #{lstm_dqn_forward.3} parent=0 // pred_region
    _
  $region49: #{lstm_dqn_forward.3} parent=0 // pred_fallthru
    _
  // Predicated region
  $region50: #{lstm_dqn_forward.3} parent=0 // pred_check
    _
  $region51: #{lstm_dqn_forward.3} parent=0 // pred_check_branch
    %4195 = sbr.rel (0) target = $region53
  $region52: #{lstm_dqn_forward.3} parent=0 // pred_region
    _
  $region53: #{lstm_dqn_forward.3} parent=0 // pred_fallthru
    _
  // Predicated region
  $region54: #{lstm_dqn_forward.3} parent=0 // pred_check
    _
  $region55: #{lstm_dqn_forward.3} parent=0 // pred_check_branch
    %4197 = sbr.rel (0) target = $region57
  $region56: #{lstm_dqn_forward.3} parent=0 // pred_region
    _
  $region57: #{lstm_dqn_forward.3} parent=0 // pred_fallthru
    _
  // Predicated region
  $region58: #{lstm_dqn_forward.3} parent=0 // pred_check
    _
  $region59: #{lstm_dqn_forward.3} parent=0 // pred_check_branch
    %4199 = sbr.rel (0) target = $region61
  $region60: #{lstm_dqn_forward.3} parent=0 // pred_region
    _
  $region61: #{lstm_dqn_forward.3} parent=0 // pred_fallthru
    _
  // Predicated region
  $region62: #{lstm_dqn_forward.3} parent=0 // pred_check
    _
  $region63: #{lstm_dqn_forward.3} parent=0 // pred_check_branch
    %4201 = sbr.rel (0) target = $region65
  $region64: #{lstm_dqn_forward.3} parent=0 // pred_region
    _
  $region65: #{lstm_dqn_forward.3} parent=0 // pred_fallthru
    _

// kernel: lstm_dqn_forward.2
$region0: #{lstm_dqn_forward.2}
  #allocation0 [shape = 'u32[]', space=smem, size = 0x4, offset = 0x4, fixed_abs, tag = 'smem constant byte address 0x4 - core index']
  #allocation1 [shape = 'u32[144,128]{1,0:T(1,128)}', space=vmem, size = 0x12000, scoped, tag = 'internal scratch']
  %s0 = inlined_call_operand.vmem [shape: f32[256,441], index: 0, kind: input, shape index: {}]
  %s1 = inlined_call_operand.vmem [shape: f32[16,256], index: 1, kind: input, shape index: {}]
  %s2 = inlined_call_operand.vmem [shape: f32[16,1], index: 2, kind: input, shape index: {}]
  %s3 = inlined_call_operand.vmem [shape: f32[16,1], index: 3, kind: input, shape index: {}]
  %s4 = inlined_call_operand.vmem [shape: f32[16,1], index: 4, kind: input, shape index: {}]
  %s5 = inlined_call_operand.vmem [shape: bf16[16,441,100], index: 5, kind: input, shape index: {}]
  %s6 = inlined_call_operand.vmem [shape: f32[32,256], index: 6, kind: input, shape index: {}]
  %s7 = inlined_call_operand.vmem [shape: f32[32,1], index: 7, kind: input, shape index: {}]
  %s8 = inlined_call_operand.vmem [shape: f32[32,1], index: 8, kind: input, shape index: {}]
  %s9 = inlined_call_operand.vmem [shape: f32[32,1], index: 9, kind: input, shape index: {}]
  %s10 = inlined_call_operand.vmem [shape: f32[32,100], index: 10, kind: output, shape index: {}]
  %s11 = sld [smem:[#allocation0]]
  $region50: #{lstm_dqn_forward.2} parent=0
    _
  %s13 = ssub.s32 1, %s11
  %s14 = scalar_select 0, %s13, %s11
  // Predicated region
  $region2: #{lstm_dqn_forward.2} parent=0 // pred_check
    _
  $region3: #{lstm_dqn_forward.2} parent=0 // pred_check_branch
    %16 = sbr.rel (0) target = $region5
  $region4: #{lstm_dqn_forward.2} parent=0 // pred_region
    _
  $region5: #{lstm_dqn_forward.2} parent=0 // pred_fallthru
    _
  // Predicated region
  $region6: #{lstm_dqn_forward.2} parent=0 // pred_check
    _
  $region7: #{lstm_dqn_forward.2} parent=0 // pred_check_branch
    %18 = sbr.rel (0) target = $region9
  $region8: #{lstm_dqn_forward.2} parent=0 // pred_region
    _
  $region9: #{lstm_dqn_forward.2} parent=0 // pred_fallthru
    _
  // Predicated region
  $region10: #{lstm_dqn_forward.2} parent=0 // pred_check
    _
  $region11: #{lstm_dqn_forward.2} parent=0 // pred_check_branch
    %20 = sbr.rel (0) target = $region13
  $region12: #{lstm_dqn_forward.2} parent=0 // pred_region
    _
  $region13: #{lstm_dqn_forward.2} parent=0 // pred_fallthru
    _
  // Predicated region
  $region14: #{lstm_dqn_forward.2} parent=0 // pred_check
    _
  $region15: #{lstm_dqn_forward.2} parent=0 // pred_check_branch
    %22 = sbr.rel (0) target = $region17
  $region16: #{lstm_dqn_forward.2} parent=0 // pred_region
    _
  $region17: #{lstm_dqn_forward.2} parent=0 // pred_fallthru
    _
  // Predicated region
  $region18: #{lstm_dqn_forward.2} parent=0 // pred_check
    _
  $region19: #{lstm_dqn_forward.2} parent=0 // pred_check_branch
    %24 = sbr.rel (0) target = $region21
  $region20: #{lstm_dqn_forward.2} parent=0 // pred_region
    _
  $region21: #{lstm_dqn_forward.2} parent=0 // pred_fallthru
    _
  // Predicated region
  $region22: #{lstm_dqn_forward.2} parent=0 // pred_check
    _
  $region23: #{lstm_dqn_forward.2} parent=0 // pred_check_branch
    %26 = sbr.rel (0) target = $region25
  $region24: #{lstm_dqn_forward.2} parent=0 // pred_region
    _
  $region25: #{lstm_dqn_forward.2} parent=0 // pred_fallthru
    _
  // Predicated region
  $region26: #{lstm_dqn_forward.2} parent=0 // pred_check
    _
  $region27: #{lstm_dqn_forward.2} parent=0 // pred_check_branch
    %28 = sbr.rel (0) target = $region29
  $region28: #{lstm_dqn_forward.2} parent=0 // pred_region
    _
  $region29: #{lstm_dqn_forward.2} parent=0 // pred_fallthru
    _
  // Predicated region
  $region30: #{lstm_dqn_forward.2} parent=0 // pred_check
    _
  $region31: #{lstm_dqn_forward.2} parent=0 // pred_check_branch
    %30 = sbr.rel (0) target = $region33
  $region32: #{lstm_dqn_forward.2} parent=0 // pred_region
    _
  $region33: #{lstm_dqn_forward.2} parent=0 // pred_fallthru
    _
  // Predicated region
  $region34: #{lstm_dqn_forward.2} parent=0 // pred_check
    _
  $region35: #{lstm_dqn_forward.2} parent=0 // pred_check_branch
    %32 = sbr.rel (0) target = $region37
  $region36: #{lstm_dqn_forward.2} parent=0 // pred_region
    _
  $region37: #{lstm_dqn_forward.2} parent=0 // pred_fallthru
    _
  // Predicated region
  $region38: #{lstm_dqn_forward.2} parent=0 // pred_check
    _
  $region39: #{lstm_dqn_forward.2} parent=0 // pred_check_branch
    %34 = sbr.rel (0) target = $region41
  $region40: #{lstm_dqn_forward.2} parent=0 // pred_region
    _
  $region41: #{lstm_dqn_forward.2} parent=0 // pred_fallthru
    _
  %v35 = vld [vmem:[%s1] sm:$0xff]
  %v36 = vld [vmem:[%s1 + $0x8] sm:$0xff]
  %v37 = vld [vmem:[%s1 + $0x10] sm:$0xff]
  %v38 = vld [vmem:[%s1 + $0x18] sm:$0xff]
  %v39 = vld [vmem:[%s0] sm:$0xff]
  %v40 = vld [vmem:[%s0 + $0x8] sm:$0xff]
  %v41 = vld [vmem:[%s0 + $0x10] sm:$0xff]
  %v42 = vld [vmem:[%s0 + $0x18] sm:$0xff]
  %v43 = vld [vmem:[%s0 + $0x20] sm:$0xff]
  %v44 = vld [vmem:[%s0 + $0x28] sm:$0xff]
  %v45 = vld [vmem:[%s0 + $0x30] sm:$0xff]
  %v46 = vld [vmem:[%s0 + $0x38] sm:$0xff]
  %v47 = vld [vmem:[%s0 + $0x40] sm:$0xff]
  %v48 = vld [vmem:[%s0 + $0x48] sm:$0xff]
  %v49 = vld [vmem:[%s0 + $0x50] sm:$0xff]
  %v50 = vld [vmem:[%s0 + $0x58] sm:$0xff]
  %v51 = vld [vmem:[%s0 + $0x60] sm:$0xff]
  %v52 = vld [vmem:[%s0 + $0x68] sm:$0xff]
  %v53 = vld [vmem:[%s0 + $0x70] sm:$0xff]
  %v54 = vld [vmem:[%s0 + $0x78] sm:$0xff]
  %v55 = vld [vmem:[%s0 + $0x80] sm:$0xff]
  %v56 = vld [vmem:[%s0 + $0x88] sm:$0xff]
  %v57 = vld [vmem:[%s0 + $0x90] sm:$0xff]
  %v58 = vld [vmem:[%s0 + $0x98] sm:$0xff]
  %v59 = vld [vmem:[%s0 + $0xa0] sm:$0xff]
  %v60 = vld [vmem:[%s0 + $0xa8] sm:$0xff]
  %v61 = vld [vmem:[%s0 + $0xb0] sm:$0xff]
  %v62 = vld [vmem:[%s0 + $0xb8] sm:$0xff]
  %v63 = vld [vmem:[%s0 + $0xc0] sm:$0xff]
  %v64 = vld [vmem:[%s0 + $0xc8] sm:$0xff]
  %v65 = vld [vmem:[%s0 + $0xd0] sm:$0xff]
  %v66 = vld [vmem:[%s0 + $0xd8] sm:$0xff]
  %v67 = vld [vmem:[%s0 + $0xe0] sm:$0xff]
  %v68 = vld [vmem:[%s0 + $0xe8] sm:$0xff]
  %v69 = vld [vmem:[%s0 + $0xf0] sm:$0xff]
  %v70 = vld [vmem:[%s0 + $0xf8] sm:$0xff]
  %v71 = vld [vmem:[%s0 + $0x100] sm:$0xff]
  %v72 = vld [vmem:[%s0 + $0x108] sm:$0xff]
  %v73 = vld [vmem:[%s0 + $0x110] sm:$0xff]
  %v74 = vld [vmem:[%s0 + $0x118] sm:$0xff]
  %v75 = vld [vmem:[%s0 + $0x120] sm:$0xff]
  %v76 = vld [vmem:[%s0 + $0x128] sm:$0xff]
  %v77 = vld [vmem:[%s0 + $0x130] sm:$0xff]
  %v78 = vld [vmem:[%s0 + $0x138] sm:$0xff]
  %v79 = vld [vmem:[%s0 + $0x140] sm:$0xff]
  %v80 = vld [vmem:[%s0 + $0x148] sm:$0xff]
  %v81 = vld [vmem:[%s0 + $0x150] sm:$0xff]
  %v82 = vld [vmem:[%s0 + $0x158] sm:$0xff]
  %v83 = vld [vmem:[%s0 + $0x160] sm:$0xff]
  %v84 = vld [vmem:[%s0 + $0x168] sm:$0xff]
  %v85 = vld [vmem:[%s0 + $0x170] sm:$0xff]
  %v86 = vld [vmem:[%s0 + $0x178] sm:$0xff]
  %v87 = vld [vmem:[%s0 + $0x180] sm:$0xff]
  %v88 = vld [vmem:[%s0 + $0x188] sm:$0xff]
  %v89 = vld [vmem:[%s0 + $0x190] sm:$0xff]
  %v90 = vld [vmem:[%s0 + $0x198] sm:$0xff]
  %v91 = vld [vmem:[%s0 + $0x1a0] sm:$0xff]
  %v92 = vld [vmem:[%s0 + $0x1a8] sm:$0xff]
  %v93 = vld [vmem:[%s0 + $0x1b0] sm:$0xff]
  %v94 = vld [vmem:[%s0 + $0x1b8] sm:$0xff]
  %v95 = vld [vmem:[%s0 + $0x1c0] sm:$0xff]
  %v96 = vld [vmem:[%s0 + $0x1c8] sm:$0xff]
  %v97 = vld [vmem:[%s0 + $0x1d0] sm:$0xff]
  %v98 = vld [vmem:[%s0 + $0x1d8] sm:$0xff]
  %v99 = vld [vmem:[%s0 + $0x1e0] sm:$0xff]
  %v100 = vld [vmem:[%s0 + $0x1e8] sm:$0xff]
  %v101 = vld [vmem:[%s0 + $0x1f0] sm:$0xff]
  %v102 = vld [vmem:[%s0 + $0x1f8] sm:$0xff]
  %v103 = vld [vmem:[%s0 + $0x200] sm:$0xff]
  %v104 = vld [vmem:[%s0 + $0x208] sm:$0xff]
  %v105 = vld [vmem:[%s0 + $0x210] sm:$0xff]
  %v106 = vld [vmem:[%s0 + $0x218] sm:$0xff]
  %v107 = vld [vmem:[%s0 + $0x220] sm:$0xff]
  %v108 = vld [vmem:[%s0 + $0x228] sm:$0xff]
  %v109 = vld [vmem:[%s0 + $0x230] sm:$0xff]
  %v110 = vld [vmem:[%s0 + $0x238] sm:$0xff]
  %v111 = vld [vmem:[%s0 + $0x240] sm:$0xff]
  %v112 = vld [vmem:[%s0 + $0x248] sm:$0xff]
  %v113 = vld [vmem:[%s0 + $0x250] sm:$0xff]
  %v114 = vld [vmem:[%s0 + $0x258] sm:$0xff]
  %v115 = vld [vmem:[%s0 + $0x260] sm:$0xff]
  %v116 = vld [vmem:[%s0 + $0x268] sm:$0xff]
  %v117 = vld [vmem:[%s0 + $0x270] sm:$0xff]
  %v118 = vld [vmem:[%s0 + $0x278] sm:$0xff]
  %v119 = vld [vmem:[%s0 + $0x280] sm:$0xff]
  %v120 = vld [vmem:[%s0 + $0x288] sm:$0xff]
  %v121 = vld [vmem:[%s0 + $0x290] sm:$0xff]
  %v122 = vld [vmem:[%s0 + $0x298] sm:$0xff]
  %v123 = vld [vmem:[%s0 + $0x2a0] sm:$0xff]
  %v124 = vld [vmem:[%s0 + $0x2a8] sm:$0xff]
  %v125 = vld [vmem:[%s0 + $0x2b0] sm:$0xff]
  %v126 = vld [vmem:[%s0 + $0x2b8] sm:$0xff]
  %v127 = vld [vmem:[%s0 + $0x2c0] sm:$0xff]
  %v128 = vld [vmem:[%s0 + $0x2c8] sm:$0xff]
  %v129 = vld [vmem:[%s0 + $0x2d0] sm:$0xff]
  %v130 = vld [vmem:[%s0 + $0x2d8] sm:$0xff]
  %v131 = vld [vmem:[%s0 + $0x2e0] sm:$0xff]
  %v132 = vld [vmem:[%s0 + $0x2e8] sm:$0xff]
  %v133 = vld [vmem:[%s0 + $0x2f0] sm:$0xff]
  %v134 = vld [vmem:[%s0 + $0x2f8] sm:$0xff]
  %v135 = vld [vmem:[%s0 + $0x300] sm:$0xff]
  %v136 = vld [vmem:[%s0 + $0x308] sm:$0xff]
  %v137 = vld [vmem:[%s0 + $0x310] sm:$0xff]
  %v138 = vld [vmem:[%s0 + $0x318] sm:$0xff]
  %v139 = vld [vmem:[%s0 + $0x320] sm:$0xff]
  %v140 = vld [vmem:[%s0 + $0x328] sm:$0xff]
  %v141 = vld [vmem:[%s0 + $0x330] sm:$0xff]
  %v142 = vld [vmem:[%s0 + $0x338] sm:$0xff]
  %v143 = vld [vmem:[%s0 + $0x340] sm:$0xff]
  %v144 = vld [vmem:[%s0 + $0x348] sm:$0xff]
  %v145 = vld [vmem:[%s0 + $0x350] sm:$0xff]
  %v146 = vld [vmem:[%s0 + $0x358] sm:$0xff]
  %v147 = vld [vmem:[%s0 + $0x360] sm:$0xff]
  %v148 = vld [vmem:[%s0 + $0x368] sm:$0xff]
  %v149 = vld [vmem:[%s0 + $0x370] sm:$0xff]
  %v150 = vld [vmem:[%s0 + $0x378] sm:$0xff]
  %v151 = vld [vmem:[%s0 + $0x380] sm:$0xff]
  %v152 = vld [vmem:[%s0 + $0x388] sm:$0xff]
  %v153 = vld [vmem:[%s0 + $0x390] sm:$0xff]
  %v154 = vld [vmem:[%s0 + $0x398] sm:$0xff]
  %v155 = vld [vmem:[%s0 + $0x3a0] sm:$0xff]
  %v156 = vld [vmem:[%s0 + $0x3a8] sm:$0xff]
  %v157 = vld [vmem:[%s0 + $0x3b0] sm:$0xff]
  %v158 = vld [vmem:[%s0 + $0x3b8] sm:$0xff]
  %v159 = vld [vmem:[%s0 + $0x3c0] sm:$0xff]
  %v160 = vld [vmem:[%s0 + $0x3c8] sm:$0xff]
  %v161 = vld [vmem:[%s0 + $0x3d0] sm:$0xff]
  %v162 = vld [vmem:[%s0 + $0x3d8] sm:$0xff]
  %v163 = vld [vmem:[%s0 + $0x3e0] sm:$0xff]
  %v164 = vld [vmem:[%s0 + $0x3e8] sm:$0xff]
  %v165 = vld [vmem:[%s0 + $0x3f0] sm:$0xff]
  %v166 = vld [vmem:[%s0 + $0x3f8] sm:$0xff]
  %v167 = vld [vmem:[%s2] sm:$0xff]
  %v168 = vld [vmem:[%s2 + $0x8] sm:$0xff]
  %170 = vset.pattern.permute.xlu0 0
  %171 = vperm.xlu0 %170, %v167
  %v172 = vpop.permute.xlu0 %171
  %175 = vset.pattern.permute.xlu0 0
  %176 = vperm.xlu0 %175, %v168
  %v177 = vpop.permute.xlu0 %176
  %179 = vmatprep.subr.mxu0 %v40
  %180 = vmatpush1.msra.mxu0 %v39
  %181 = vmatprep.subr.mxu0 %v44
  %182 = vmatpush1.msra.mxu0 %v43
  %183 = vmatprep.subr.mxu0 %v48
  %184 = vmatpush1.msra.mxu0 %v47
  %185 = vmatprep.subr.mxu0 %v52
  %186 = vmatpush1.msra.mxu0 %v51
  %187 = vmatprep.subr.mxu0 %v56
  %188 = vmatpush1.msra.mxu0 %v55
  %189 = vmatprep.subr.mxu0 %v60
  %190 = vmatpush1.msra.mxu0 %v59
  %191 = vmatprep.subr.mxu0 %v64
  %192 = vmatpush1.msra.mxu0 %v63
  %193 = vmatprep.subr.mxu0 %v68
  %194 = vmatpush1.msra.mxu0 %v67
  %195 = vmatprep.subr.mxu0 %v72
  %196 = vmatpush1.msra.mxu0 %v71
  %197 = vmatprep.subr.mxu0 %v76
  %198 = vmatpush1.msra.mxu0 %v75
  %199 = vmatprep.subr.mxu0 %v80
  %200 = vmatpush1.msra.mxu0 %v79
  %201 = vmatprep.subr.mxu0 %v84
  %202 = vmatpush1.msra.mxu0 %v83
  %203 = vmatprep.subr.mxu0 %v88
  %204 = vmatpush1.msra.mxu0 %v87
  %205 = vmatprep.subr.mxu0 %v92
  %206 = vmatpush1.msra.mxu0 %v91
  %207 = vmatprep.subr.mxu0 %v96
  %208 = vmatpush1.msra.mxu0 %v95
  %209 = vmatprep.subr.mxu0 %v100
  %210 = vmatpush1.msra.mxu0 %v99
  %211 = vmatprep.subr.mxu0 %v104
  %212 = vmatpush1.msra.mxu0 %v103
  %213 = vmatprep.subr.mxu0 %v108
  %214 = vmatpush1.msra.mxu0 %v107
  %215 = vmatprep.subr.mxu0 %v112
  %216 = vmatpush1.msra.mxu0 %v111
  %217 = vmatprep.subr.mxu0 %v116
  %218 = vmatpush1.msra.mxu0 %v115
  %219 = vmatprep.subr.mxu0 %v120
  %220 = vmatpush1.msra.mxu0 %v119
  %221 = vmatprep.subr.mxu0 %v124
  %222 = vmatpush1.msra.mxu0 %v123
  %223 = vmatprep.subr.mxu0 %v128
  %224 = vmatpush1.msra.mxu0 %v127
  %225 = vmatprep.subr.mxu0 %v132
  %226 = vmatpush1.msra.mxu0 %v131
  %227 = vmatprep.subr.mxu0 %v136
  %228 = vmatpush1.msra.mxu0 %v135
  %229 = vmatprep.subr.mxu0 %v140
  %230 = vmatpush1.msra.mxu0 %v139
  %231 = vmatprep.subr.mxu0 %v144
  %232 = vmatpush1.msra.mxu0 %v143
  %233 = vmatprep.subr.mxu0 %v148
  %234 = vmatpush1.msra.mxu0 %v147
  %235 = vmatprep.subr.mxu0 %v152
  %236 = vmatpush1.msra.mxu0 %v151
  %237 = vmatprep.subr.mxu0 %v156
  %238 = vmatpush1.msra.mxu0 %v155
  %239 = vmatprep.subr.mxu0 %v160
  %240 = vmatpush1.msra.mxu0 %v159
  %241 = vmatprep.subr.mxu0 %v164
  %242 = vmatpush1.msra.mxu0 %v163
  %243 = vmatprep.mubr.f32.mxu0 %v36
  %244 = vmatmul.mubr.f32.gmra.mrb[0].mxu0 %v35
  %v245 = vpop.f32.mrb[0].mxu0
  %v246 = vadd.f32 %v172, %v245
  %v247 = vpop.f32.mrb[0].mxu0
  %v248 = vadd.f32 %v172, %v247
  %249 = vmatprep.mubr.f32.mxu0 %v38
  %250 = vmatmul.mubr.f32.gmra.mrb[0].mxu0 %v37
  %v251 = vpop.f32.mrb[0].mxu0
  %v252 = vadd.f32 %v177, %v251
  %v253 = vpop.f32.mrb[0].mxu0
  %v254 = vadd.f32 %v177, %v253
  %255 = vdwg.mxu0
  %256 = vmatprep.subr.mxu0 %v42
  %257 = vmatpush1.msra.mxu0 %v41
  %258 = vmatprep.subr.mxu0 %v46
  %259 = vmatpush1.msra.mxu0 %v45
  %260 = vmatprep.subr.mxu0 %v50
  %261 = vmatpush1.msra.mxu0 %v49
  %262 = vmatprep.subr.mxu0 %v54
  %263 = vmatpush1.msra.mxu0 %v53
  %264 = vmatprep.subr.mxu0 %v58
  %265 = vmatpush1.msra.mxu0 %v57
  %266 = vmatprep.subr.mxu0 %v62
  %267 = vmatpush1.msra.mxu0 %v61
  %268 = vmatprep.subr.mxu0 %v66
  %269 = vmatpush1.msra.mxu0 %v65
  %270 = vmatprep.subr.mxu0 %v70
  %271 = vmatpush1.msra.mxu0 %v69
  %272 = vmatprep.subr.mxu0 %v74
  %273 = vmatpush1.msra.mxu0 %v73
  %274 = vmatprep.subr.mxu0 %v78
  %275 = vmatpush1.msra.mxu0 %v77
  %276 = vmatprep.subr.mxu0 %v82
  %277 = vmatpush1.msra.mxu0 %v81
  %278 = vmatprep.subr.mxu0 %v86
  %279 = vmatpush1.msra.mxu0 %v85
  %280 = vmatprep.subr.mxu0 %v90
  %281 = vmatpush1.msra.mxu0 %v89
  %282 = vmatprep.subr.mxu0 %v94
  %283 = vmatpush1.msra.mxu0 %v93
  %284 = vmatprep.subr.mxu0 %v98
  %285 = vmatpush1.msra.mxu0 %v97
  %286 = vmatprep.subr.mxu0 %v102
  %287 = vmatpush1.msra.mxu0 %v101
  %288 = vmatprep.subr.mxu0 %v106
  %289 = vmatpush1.msra.mxu0 %v105
  %290 = vmatprep.subr.mxu0 %v110
  %291 = vmatpush1.msra.mxu0 %v109
  %292 = vmatprep.subr.mxu0 %v114
  %293 = vmatpush1.msra.mxu0 %v113
  %294 = vmatprep.subr.mxu0 %v118
  %295 = vmatpush1.msra.mxu0 %v117
  %296 = vmatprep.subr.mxu0 %v122
  %297 = vmatpush1.msra.mxu0 %v121
  %298 = vmatprep.subr.mxu0 %v126
  %299 = vmatpush1.msra.mxu0 %v125
  %300 = vmatprep.subr.mxu0 %v130
  %301 = vmatpush1.msra.mxu0 %v129
  %302 = vmatprep.subr.mxu0 %v134
  %303 = vmatpush1.msra.mxu0 %v133
  %304 = vmatprep.subr.mxu0 %v138
  %305 = vmatpush1.msra.mxu0 %v137
  %306 = vmatprep.subr.mxu0 %v142
  %307 = vmatpush1.msra.mxu0 %v141
  %308 = vmatprep.subr.mxu0 %v146
  %309 = vmatpush1.msra.mxu0 %v145
  %310 = vmatprep.subr.mxu0 %v150
  %311 = vmatpush1.msra.mxu0 %v149
  %312 = vmatprep.subr.mxu0 %v154
  %313 = vmatpush1.msra.mxu0 %v153
  %314 = vmatprep.subr.mxu0 %v158
  %315 = vmatpush1.msra.mxu0 %v157
  %316 = vmatprep.subr.mxu0 %v162
  %317 = vmatpush1.msra.mxu0 %v161
  %318 = vmatprep.subr.mxu0 %v166
  %319 = vmatpush1.msra.mxu0 %v165
  %320 = vmatprep.mubr.f32.mxu0 %v36
  %321 = vmatmul.mubr.f32.gmra.mrb[0].mxu0 %v35
  %v322 = vpop.f32.mrb[0].mxu0
  %v323 = vadd.f32 %v172, %v322
  %v324 = vpop.f32.mrb[0].mxu0
  %v325 = vadd.f32 %v172, %v324
  %326 = vmatprep.mubr.f32.mxu0 %v38
  %327 = vmatmul.mubr.f32.gmra.mrb[0].mxu0 %v37
  %v328 = vpop.f32.mrb[0].mxu0
  %v329 = vadd.f32 %v177, %v328
  %v330 = vpop.f32.mrb[0].mxu0
  %v331 = vadd.f32 %v177, %v330
  %332 = vdwg.mxu0
  %v333 = vmax.f32 %v246, 0.0
  %v334 = vmax.f32 %v248, 0.0
  %v335 = vmax.f32 %v323, 0.0
  %v336 = vmax.f32 %v325, 0.0
  %v337 = vmax.f32 %v252, 0.0
  %v338 = vmax.f32 %v254, 0.0
  %v339 = vmax.f32 %v329, 0.0
  %v340 = vmax.f32 %v331, 0.0
  %v341 = vadd.f32 %v333, %v334
  %v342 = vadd.f32 %v341, %v335
  %vm343 = vcmask 465920
  %v344 = vsel %vm343, %v336, 0.0
  %v345 = vadd.f32 %v342, %v344
  %346 = vadd.xlane.f32.xlu0 %v345
  %v347 = vpop.xlane.xlu0 %346
  %v348 = vadd.f32 %v337, %v338
  %v349 = vadd.f32 %v348, %v339
  %v350 = vsel %vm343, %v340, 0.0
  %v351 = vadd.f32 %v349, %v350
  %352 = vadd.xlane.f32.xlu0 %v351
  %v353 = vpop.xlane.xlu0 %352
  %v354 = vrcp.pop 441.0
  %v355 = vmul.f32 %v347, %v354
  %v356 = vmul.f32 %v353, %v354
  %v357 = vmul.f32 %v333, %v333
  %v358 = vmul.f32 %v334, %v334
  %v359 = vmul.f32 %v335, %v335
  %v360 = vmul.f32 %v336, %v336
  %v361 = vmul.f32 %v337, %v337
  %v362 = vmul.f32 %v338, %v338
  %v363 = vmul.f32 %v339, %v339
  %v364 = vmul.f32 %v340, %v340
  %v365 = vadd.f32 %v357, %v358
  %v366 = vadd.f32 %v365, %v359
  %v367 = vsel %vm343, %v360, 0.0
  %v368 = vadd.f32 %v366, %v367
  %369 = vadd.xlane.f32.xlu0 %v368
  %v370 = vpop.xlane.xlu0 %369
  %v371 = vadd.f32 %v361, %v362
  %v372 = vadd.f32 %v371, %v363
  %v373 = vsel %vm343, %v364, 0.0
  %v374 = vadd.f32 %v372, %v373
  %375 = vadd.xlane.f32.xlu0 %v374
  %v376 = vpop.xlane.xlu0 %375
  %v377 = vmul.f32 %v370, %v354
  %v378 = vmul.f32 %v376, %v354
  %v379 = vmul.f32 %v355, %v355
  %v380 = vmul.f32 %v356, %v356
  %v381 = vsub.f32 %v377, %v379
  %v382 = vsub.f32 %v378, %v380
  %v383 = vsub.f32 %v333, %v355
  %v384 = vsub.f32 %v334, %v355
  %v385 = vsub.f32 %v335, %v355
  %v386 = vsub.f32 %v336, %v355
  %v387 = vsub.f32 %v337, %v356
  %v388 = vsub.f32 %v338, %v356
  %v389 = vsub.f32 %v339, %v356
  %v390 = vsub.f32 %v340, %v356
  %v391 = vadd.f32 %v381, 1e-05
  %v392 = vadd.f32 %v382, 1e-05
  %v393 = vrsqrt.pop %v391
  %v394 = vrsqrt.pop %v392
  %v395 = vmul.f32 %v383, %v393
  %v396 = vmul.f32 %v384, %v393
  %v397 = vmul.f32 %v385, %v393
  %v398 = vmul.f32 %v386, %v393
  %v399 = vmul.f32 %v387, %v394
  %v400 = vmul.f32 %v388, %v394
  %v401 = vmul.f32 %v389, %v394
  %v402 = vmul.f32 %v390, %v394
  %v403 = vld [vmem:[%s3] sm:$0xff]
  %v404 = vld [vmem:[%s3 + $0x8] sm:$0xff]
  %406 = vset.pattern.permute.xlu0 0
  %407 = vperm.xlu0 %406, %v403
  %v408 = vpop.permute.xlu0 %407
  %411 = vset.pattern.permute.xlu0 0
  %412 = vperm.xlu0 %411, %v404
  %v413 = vpop.permute.xlu0 %412
  %v415 = vmul.f32 %v395, %v408
  %v416 = vmul.f32 %v396, %v408
  %v417 = vmul.f32 %v397, %v408
  %v418 = vmul.f32 %v398, %v408
  %v419 = vmul.f32 %v399, %v413
  %v420 = vmul.f32 %v400, %v413
  %v421 = vmul.f32 %v401, %v413
  %v422 = vmul.f32 %v402, %v413
  %v423 = vld [vmem:[%s4] sm:$0xff]
  %v424 = vld [vmem:[%s4 + $0x8] sm:$0xff]
  %426 = vset.pattern.permute.xlu0 0
  %427 = vperm.xlu0 %426, %v423
  %v428 = vpop.permute.xlu0 %427
  %431 = vset.pattern.permute.xlu0 0
  %432 = vperm.xlu0 %431, %v424
  %v433 = vpop.permute.xlu0 %432
  %v435 = vadd.f32 %v415, %v428
  %v436 = vadd.f32 %v416, %v428
  %v437 = vadd.f32 %v417, %v428
  %v438 = vadd.f32 %v418, %v428
  %v439 = vadd.f32 %v419, %v433
  %v440 = vadd.f32 %v420, %v433
  %v441 = vadd.f32 %v421, %v433
  %v442 = vadd.f32 %v422, %v433
  %v443 = vld [vmem:[%s5] sm:$0xf]
  %v444 = vld [vmem:[%s5 + $0x4] sm:$0xf]
  %v445 = vld [vmem:[%s5 + $0x8] sm:$0xf]
  %v446 = vld [vmem:[%s5 + $0xc] sm:$0xf]
  %v447 = vld [vmem:[%s5 + $0x10] sm:$0xf]
  %v448 = vld [vmem:[%s5 + $0x14] sm:$0xf]
  %v449 = vld [vmem:[%s5 + $0x18] sm:$0xf]
  %v450 = vld [vmem:[%s5 + $0x1c] sm:$0xf]
  %v451 = vld [vmem:[%s5 + $0x20] sm:$0xf]
  %v452 = vld [vmem:[%s5 + $0x24] sm:$0xf]
  %v453 = vld [vmem:[%s5 + $0x28] sm:$0xf]
  %v454 = vld [vmem:[%s5 + $0x2c] sm:$0xf]
  %v455 = vld [vmem:[%s5 + $0x30] sm:$0xf]
  %v456 = vld [vmem:[%s5 + $0x34] sm:$0xf]
  %v457 = vld [vmem:[%s5 + $0x38] sm:$0xf]
  %v458 = vld [vmem:[%s5 + $0x3c] sm:$0xf]
  %v459 = vld [vmem:[%s5 + $0x40] sm:$0xf]
  %v460 = vld [vmem:[%s5 + $0x44] sm:$0xf]
  %v461 = vld [vmem:[%s5 + $0x48] sm:$0xf]
  %v462 = vld [vmem:[%s5 + $0x4c] sm:$0xf]
  %v463 = vld [vmem:[%s5 + $0x50] sm:$0xf]
  %v464 = vld [vmem:[%s5 + $0x54] sm:$0xf]
  %v465 = vld [vmem:[%s5 + $0x58] sm:$0xf]
  %v466 = vld [vmem:[%s5 + $0x5c] sm:$0xf]
  %v467 = vld [vmem:[%s5 + $0x60] sm:$0xf]
  %v468 = vld [vmem:[%s5 + $0x64] sm:$0xf]
  %v469 = vld [vmem:[%s5 + $0x68] sm:$0xf]
  %v470 = vld [vmem:[%s5 + $0x6c] sm:$0xf]
  %v471 = vld [vmem:[%s5 + $0x70] sm:$0xf]
  %v472 = vld [vmem:[%s5 + $0x74] sm:$0xf]
  %v473 = vld [vmem:[%s5 + $0x78] sm:$0xf]
  %v474 = vld [vmem:[%s5 + $0x7c] sm:$0xf]
  %v475 = vld [vmem:[%s5 + $0x80] sm:$0xf]
  %v476 = vld [vmem:[%s5 + $0x84] sm:$0xf]
  %v477 = vld [vmem:[%s5 + $0x88] sm:$0xf]
  %v478 = vld [vmem:[%s5 + $0x8c] sm:$0xf]
  %v479 = vld [vmem:[%s5 + $0x90] sm:$0xf]
  %v480 = vld [vmem:[%s5 + $0x94] sm:$0xf]
  %v481 = vld [vmem:[%s5 + $0x98] sm:$0xf]
  %v482 = vld [vmem:[%s5 + $0x9c] sm:$0xf]
  %v483 = vld [vmem:[%s5 + $0xa0] sm:$0xf]
  %v484 = vld [vmem:[%s5 + $0xa4] sm:$0xf]
  %v485 = vld [vmem:[%s5 + $0xa8] sm:$0xf]
  %v486 = vld [vmem:[%s5 + $0xac] sm:$0xf]
  %v487 = vld [vmem:[%s5 + $0xb0] sm:$0xf]
  %v488 = vld [vmem:[%s5 + $0xb4] sm:$0xf]
  %v489 = vld [vmem:[%s5 + $0xb8] sm:$0xf]
  %v490 = vld [vmem:[%s5 + $0xbc] sm:$0xf]
  %v491 = vld [vmem:[%s5 + $0xc0] sm:$0xf]
  %v492 = vld [vmem:[%s5 + $0xc4] sm:$0xf]
  %v493 = vld [vmem:[%s5 + $0xc8] sm:$0xf]
  %v494 = vld [vmem:[%s5 + $0xcc] sm:$0xf]
  %v495 = vld [vmem:[%s5 + $0xd0] sm:$0xf]
  %v496 = vld [vmem:[%s5 + $0xd4] sm:$0xf]
  %v497 = vld [vmem:[%s5 + $0xd8] sm:$0xf]
  %v498 = vld [vmem:[%s5 + $0xdc] sm:$0x1]
  %v499 = vunpack.c.l.bf16 %v443
  %v500 = vunpack.c.l.bf16 %v444
  %v501 = vunpack.c.l.bf16 %v445
  %v502 = vunpack.c.l.bf16 %v446
  %v503 = vunpack.c.l.bf16 %v447
  %v504 = vunpack.c.l.bf16 %v448
  %v505 = vunpack.c.l.bf16 %v449
  %v506 = vunpack.c.l.bf16 %v450
  %v507 = vunpack.c.l.bf16 %v451
  %v508 = vunpack.c.l.bf16 %v452
  %v509 = vunpack.c.l.bf16 %v453
  %v510 = vunpack.c.l.bf16 %v454
  %v511 = vunpack.c.l.bf16 %v455
  %v512 = vunpack.c.l.bf16 %v456
  %v513 = vunpack.c.l.bf16 %v457
  %v514 = vunpack.c.l.bf16 %v458
  %v515 = vunpack.c.l.bf16 %v459
  %v516 = vunpack.c.l.bf16 %v460
  %v517 = vunpack.c.l.bf16 %v461
  %v518 = vunpack.c.l.bf16 %v462
  %v519 = vunpack.c.l.bf16 %v463
  %v520 = vunpack.c.l.bf16 %v464
  %v521 = vunpack.c.l.bf16 %v465
  %v522 = vunpack.c.l.bf16 %v466
  %v523 = vunpack.c.l.bf16 %v467
  %v524 = vunpack.c.l.bf16 %v468
  %v525 = vunpack.c.l.bf16 %v469
  %v526 = vunpack.c.l.bf16 %v470
  %v527 = vunpack.c.l.bf16 %v471
  %v528 = vunpack.c.l.bf16 %v472
  %v529 = vunpack.c.l.bf16 %v473
  %v530 = vunpack.c.l.bf16 %v474
  %v531 = vunpack.c.l.bf16 %v475
  %v532 = vunpack.c.l.bf16 %v476
  %v533 = vunpack.c.l.bf16 %v477
  %v534 = vunpack.c.l.bf16 %v478
  %v535 = vunpack.c.l.bf16 %v479
  %v536 = vunpack.c.l.bf16 %v480
  %v537 = vunpack.c.l.bf16 %v481
  %v538 = vunpack.c.l.bf16 %v482
  %v539 = vunpack.c.l.bf16 %v483
  %v540 = vunpack.c.l.bf16 %v484
  %v541 = vunpack.c.l.bf16 %v485
  %v542 = vunpack.c.l.bf16 %v486
  %v543 = vunpack.c.l.bf16 %v487
  %v544 = vunpack.c.l.bf16 %v488
  %v545 = vunpack.c.l.bf16 %v489
  %v546 = vunpack.c.l.bf16 %v490
  %v547 = vunpack.c.l.bf16 %v491
  %v548 = vunpack.c.l.bf16 %v492
  %v549 = vunpack.c.l.bf16 %v493
  %v550 = vunpack.c.l.bf16 %v494
  %v551 = vunpack.c.l.bf16 %v495
  %v552 = vunpack.c.l.bf16 %v496
  %v553 = vunpack.c.l.bf16 %v497
  %v554 = vunpack.c.l.bf16 %v498
  %v556 = vsel %vm343, %v438, 0
  %v559 = vsel %vm343, %v442, 0
  %vm561 = vcmask 1040384
  %v563 = vsel %vm561, %v554, 0
  %565 = vmatprep.subr.mxu0 0.0
  %566 = vmatpush1.msra.mxu0 %v499
  %567 = vmatprep.subr.mxu0 0.0
  %568 = vmatpush1.msra.mxu0 %v500
  %569 = vmatprep.subr.mxu0 0.0
  %570 = vmatpush1.msra.mxu0 %v501
  %571 = vmatprep.subr.mxu0 0.0
  %572 = vmatpush1.msra.mxu0 %v502
  %573 = vmatprep.subr.mxu0 0.0
  %574 = vmatpush1.msra.mxu0 %v503
  %575 = vmatprep.subr.mxu0 0.0
  %576 = vmatpush1.msra.mxu0 %v504
  %577 = vmatprep.subr.mxu0 0.0
  %578 = vmatpush1.msra.mxu0 %v505
  %579 = vmatprep.subr.mxu0 0.0
  %580 = vmatpush1.msra.mxu0 %v506
  %581 = vmatprep.subr.mxu0 0.0
  %582 = vmatpush1.msra.mxu0 %v507
  %583 = vmatprep.subr.mxu0 0.0
  %584 = vmatpush1.msra.mxu0 %v508
  %585 = vmatprep.subr.mxu0 0.0
  %586 = vmatpush1.msra.mxu0 %v509
  %587 = vmatprep.subr.mxu0 0.0
  %588 = vmatpush1.msra.mxu0 %v510
  %589 = vmatprep.subr.mxu0 0.0
  %590 = vmatpush1.msra.mxu0 %v511
  %591 = vmatprep.subr.mxu0 0.0
  %592 = vmatpush1.msra.mxu0 %v512
  %593 = vmatprep.subr.mxu0 0.0
  %594 = vmatpush1.msra.mxu0 %v513
  %595 = vmatprep.subr.mxu0 0.0
  %596 = vmatpush1.msra.mxu0 %v514
  %597 = vmatprep.subr.mxu0 0.0
  %598 = vmatpush1.msra.mxu0 %v515
  %599 = vmatprep.subr.mxu0 0.0
  %600 = vmatpush1.msra.mxu0 %v516
  %601 = vmatprep.subr.mxu0 0.0
  %602 = vmatpush1.msra.mxu0 %v517
  %603 = vmatprep.subr.mxu0 0.0
  %604 = vmatpush1.msra.mxu0 %v518
  %605 = vmatprep.subr.mxu0 0.0
  %606 = vmatpush1.msra.mxu0 %v519
  %607 = vmatprep.subr.mxu0 0.0
  %608 = vmatpush1.msra.mxu0 %v520
  %609 = vmatprep.subr.mxu0 0.0
  %610 = vmatpush1.msra.mxu0 %v521
  %611 = vmatprep.subr.mxu0 0.0
  %612 = vmatpush1.msra.mxu0 %v522
  %613 = vmatprep.subr.mxu0 0.0
  %614 = vmatpush1.msra.mxu0 %v523
  %615 = vmatprep.subr.mxu0 0.0
  %616 = vmatpush1.msra.mxu0 %v524
  %617 = vmatprep.subr.mxu0 0.0
  %618 = vmatpush1.msra.mxu0 %v525
  %619 = vmatprep.subr.mxu0 0.0
  %620 = vmatpush1.msra.mxu0 %v526
  %621 = vmatprep.subr.mxu0 0.0
  %622 = vmatpush1.msra.mxu0 %v527
  %623 = vmatprep.subr.mxu0 0.0
  %624 = vmatpush1.msra.mxu0 %v528
  %625 = vmatprep.subr.mxu0 0.0
  %626 = vmatpush1.msra.mxu0 %v529
  %627 = vmatprep.subr.mxu0 0.0
  %628 = vmatpush1.msra.mxu0 %v530
  %629 = vmatprep.mubr.f32.mxu0 %v436
  %630 = vmatmul.mubr.f32.gmra.mrb[0].mxu0 %v435
  %v631 = vpop.f32.mrb[0].mxu0
  %v632 = vadd.f32 0.0, %v631
  %v633 = vpop.f32.mrb[0].mxu0
  %634 = vmatprep.mubr.f32.mxu0 %v440
  %635 = vmatmul.mubr.f32.gmra.mrb[0].mxu0 %v439
  %v636 = vpop.f32.mrb[0].mxu0
  %v637 = vadd.f32 0.0, %v636
  %v638 = vpop.f32.mrb[0].mxu0
  %639 = vdwg.mxu0
  %640 = vmatprep.subr.mxu0 0.0
  %641 = vmatpush1.msra.mxu0 %v531
  %642 = vmatprep.subr.mxu0 0.0
  %643 = vmatpush1.msra.mxu0 %v532
  %644 = vmatprep.subr.mxu0 0.0
  %645 = vmatpush1.msra.mxu0 %v533
  %646 = vmatprep.subr.mxu0 0.0
  %647 = vmatpush1.msra.mxu0 %v534
  %648 = vmatprep.subr.mxu0 0.0
  %649 = vmatpush1.msra.mxu0 %v535
  %650 = vmatprep.subr.mxu0 0.0
  %651 = vmatpush1.msra.mxu0 %v536
  %652 = vmatprep.subr.mxu0 0.0
  %653 = vmatpush1.msra.mxu0 %v537
  %654 = vmatprep.subr.mxu0 0.0
  %655 = vmatpush1.msra.mxu0 %v538
  %656 = vmatprep.subr.mxu0 0.0
  %657 = vmatpush1.msra.mxu0 %v539
  %658 = vmatprep.subr.mxu0 0.0
  %659 = vmatpush1.msra.mxu0 %v540
  %660 = vmatprep.subr.mxu0 0.0
  %661 = vmatpush1.msra.mxu0 %v541
  %662 = vmatprep.subr.mxu0 0.0
  %663 = vmatpush1.msra.mxu0 %v542
  %664 = vmatprep.subr.mxu0 0.0
  %665 = vmatpush1.msra.mxu0 %v543
  %666 = vmatprep.subr.mxu0 0.0
  %667 = vmatpush1.msra.mxu0 %v544
  %668 = vmatprep.subr.mxu0 0.0
  %669 = vmatpush1.msra.mxu0 %v545
  %670 = vmatprep.subr.mxu0 0.0
  %671 = vmatpush1.msra.mxu0 %v546
  %672 = vmatprep.subr.mxu0 0.0
  %673 = vmatpush1.msra.mxu0 %v547
  %674 = vmatprep.subr.mxu0 0.0
  %675 = vmatpush1.msra.mxu0 %v548
  %676 = vmatprep.subr.mxu0 0.0
  %677 = vmatpush1.msra.mxu0 %v549
  %678 = vmatprep.subr.mxu0 0.0
  %679 = vmatpush1.msra.mxu0 %v550
  %680 = vmatprep.subr.mxu0 0.0
  %681 = vmatpush1.msra.mxu0 %v551
  %682 = vmatprep.subr.mxu0 0.0
  %683 = vmatpush1.msra.mxu0 %v552
  %684 = vmatprep.subr.mxu0 0.0
  %685 = vmatpush1.msra.mxu0 %v553
  %686 = vmatprep.subr.mxu0 0.0
  %687 = vmatpush1.msra.mxu0 %v563
  %688 = vmatprep.subr.mxu0 0.0
  %689 = vmatpush1.msra.mxu0 0.0
  %690 = vmatprep.subr.mxu0 0.0
  %691 = vmatpush1.msra.mxu0 0.0
  %692 = vmatprep.subr.mxu0 0.0
  %693 = vmatpush1.msra.mxu0 0.0
  %694 = vmatprep.subr.mxu0 0.0
  %695 = vmatpush1.msra.mxu0 0.0
  %696 = vmatprep.subr.mxu0 0.0
  %697 = vmatpush1.msra.mxu0 0.0
  %698 = vmatprep.subr.mxu0 0.0
  %699 = vmatpush1.msra.mxu0 0.0
  %700 = vmatprep.subr.mxu0 0.0
  %701 = vmatpush1.msra.mxu0 0.0
  %702 = vmatprep.subr.mxu0 0.0
  %703 = vmatpush1.msra.mxu0 0.0
  %704 = vmatprep.mubr.f32.mxu0 %v556
  %705 = vmatmul.mubr.f32.gmra.mrb[0].mxu0 %v437
  %v706 = vpop.f32.mrb[0].mxu0
  %v707 = vadd.f32 %v632, %v706
  %v708 = vpop.f32.mrb[0].mxu0
  %709 = vmatprep.mubr.f32.mxu0 %v559
  %710 = vmatmul.mubr.f32.gmra.mrb[0].mxu0 %v441
  %v711 = vpop.f32.mrb[0].mxu0
  %v712 = vadd.f32 %v637, %v711
  %v713 = vpop.f32.mrb[0].mxu0
  %714 = vdwg.mxu0
  %s715 = scalar_lea.vmem %s5, 224
  %v716 = vld [vmem:[%s715] sm:$0xf]
  %v717 = vld [vmem:[%s715 + $0x4] sm:$0xf]
  %v718 = vld [vmem:[%s715 + $0x8] sm:$0xf]
  %v719 = vld [vmem:[%s715 + $0xc] sm:$0xf]
  %v720 = vld [vmem:[%s715 + $0x10] sm:$0xf]
  %v721 = vld [vmem:[%s715 + $0x14] sm:$0xf]
  %v722 = vld [vmem:[%s715 + $0x18] sm:$0xf]
  %v723 = vld [vmem:[%s715 + $0x1c] sm:$0xf]
  %v724 = vld [vmem:[%s715 + $0x20] sm:$0xf]
  %v725 = vld [vmem:[%s715 + $0x24] sm:$0xf]
  %v726 = vld [vmem:[%s715 + $0x28] sm:$0xf]
  %v727 = vld [vmem:[%s715 + $0x2c] sm:$0xf]
  %v728 = vld [vmem:[%s715 + $0x30] sm:$0xf]
  %v729 = vld [vmem:[%s715 + $0x34] sm:$0xf]
  %v730 = vld [vmem:[%s715 + $0x38] sm:$0xf]
  %v731 = vld [vmem:[%s715 + $0x3c] sm:$0xf]
  %v732 = vld [vmem:[%s715 + $0x40] sm:$0xf]
  %v733 = vld [vmem:[%s715 + $0x44] sm:$0xf]
  %v734 = vld [vmem:[%s715 + $0x48] sm:$0xf]
  %v735 = vld [vmem:[%s715 + $0x4c] sm:$0xf]
  %v736 = vld [vmem:[%s715 + $0x50] sm:$0xf]
  %v737 = vld [vmem:[%s715 + $0x54] sm:$0xf]
  %v738 = vld [vmem:[%s715 + $0x58] sm:$0xf]
  %v739 = vld [vmem:[%s715 + $0x5c] sm:$0xf]
  %v740 = vld [vmem:[%s715 + $0x60] sm:$0xf]
  %v741 = vld [vmem:[%s715 + $0x64] sm:$0xf]
  %v742 = vld [vmem:[%s715 + $0x68] sm:$0xf]
  %v743 = vld [vmem:[%s715 + $0x6c] sm:$0xf]
  %v744 = vld [vmem:[%s715 + $0x70] sm:$0xf]
  %v745 = vld [vmem:[%s715 + $0x74] sm:$0xf]
  %v746 = vld [vmem:[%s715 + $0x78] sm:$0xf]
  %v747 = vld [vmem:[%s715 + $0x7c] sm:$0xf]
  %v748 = vld [vmem:[%s715 + $0x80] sm:$0xf]
  %v749 = vld [vmem:[%s715 + $0x84] sm:$0xf]
  %v750 = vld [vmem:[%s715 + $0x88] sm:$0xf]
  %v751 = vld [vmem:[%s715 + $0x8c] sm:$0xf]
  %v752 = vld [vmem:[%s715 + $0x90] sm:$0xf]
  %v753 = vld [vmem:[%s715 + $0x94] sm:$0xf]
  %v754 = vld [vmem:[%s715 + $0x98] sm:$0xf]
  %v755 = vld [vmem:[%s715 + $0x9c] sm:$0xf]
  %v756 = vld [vmem:[%s715 + $0xa0] sm:$0xf]
  %v757 = vld [vmem:[%s715 + $0xa4] sm:$0xf]
  %v758 = vld [vmem:[%s715 + $0xa8] sm:$0xf]
  %v759 = vld [vmem:[%s715 + $0xac] sm:$0xf]
  %v760 = vld [vmem:[%s715 + $0xb0] sm:$0xf]
  %v761 = vld [vmem:[%s715 + $0xb4] sm:$0xf]
  %v762 = vld [vmem:[%s715 + $0xb8] sm:$0xf]
  %v763 = vld [vmem:[%s715 + $0xbc] sm:$0xf]
  %v764 = vld [vmem:[%s715 + $0xc0] sm:$0xf]
  %v765 = vld [vmem:[%s715 + $0xc4] sm:$0xf]
  %v766 = vld [vmem:[%s715 + $0xc8] sm:$0xf]
  %v767 = vld [vmem:[%s715 + $0xcc] sm:$0xf]
  %v768 = vld [vmem:[%s715 + $0xd0] sm:$0xf]
  %v769 = vld [vmem:[%s715 + $0xd4] sm:$0xf]
  %v770 = vld [vmem:[%s715 + $0xd8] sm:$0xf]
  %v771 = vld [vmem:[%s715 + $0xdc] sm:$0x1]
  %v772 = vunpack.c.l.bf16 %v716
  %v773 = vunpack.c.l.bf16 %v717
  %v774 = vunpack.c.l.bf16 %v718
  %v775 = vunpack.c.l.bf16 %v719
  %v776 = vunpack.c.l.bf16 %v720
  %v777 = vunpack.c.l.bf16 %v721
  %v778 = vunpack.c.l.bf16 %v722
  %v779 = vunpack.c.l.bf16 %v723
  %v780 = vunpack.c.l.bf16 %v724
  %v781 = vunpack.c.l.bf16 %v725
  %v782 = vunpack.c.l.bf16 %v726
  %v783 = vunpack.c.l.bf16 %v727
  %v784 = vunpack.c.l.bf16 %v728
  %v785 = vunpack.c.l.bf16 %v729
  %v786 = vunpack.c.l.bf16 %v730
  %v787 = vunpack.c.l.bf16 %v731
  %v788 = vunpack.c.l.bf16 %v732
  %v789 = vunpack.c.l.bf16 %v733
  %v790 = vunpack.c.l.bf16 %v734
  %v791 = vunpack.c.l.bf16 %v735
  %v792 = vunpack.c.l.bf16 %v736
  %v793 = vunpack.c.l.bf16 %v737
  %v794 = vunpack.c.l.bf16 %v738
  %v795 = vunpack.c.l.bf16 %v739
  %v796 = vunpack.c.l.bf16 %v740
  %v797 = vunpack.c.l.bf16 %v741
  %v798 = vunpack.c.l.bf16 %v742
  %v799 = vunpack.c.l.bf16 %v743
  %v800 = vunpack.c.l.bf16 %v744
  %v801 = vunpack.c.l.bf16 %v745
  %v802 = vunpack.c.l.bf16 %v746
  %v803 = vunpack.c.l.bf16 %v747
  %v804 = vunpack.c.l.bf16 %v748
  %v805 = vunpack.c.l.bf16 %v749
  %v806 = vunpack.c.l.bf16 %v750
  %v807 = vunpack.c.l.bf16 %v751
  %v808 = vunpack.c.l.bf16 %v752
  %v809 = vunpack.c.l.bf16 %v753
  %v810 = vunpack.c.l.bf16 %v754
  %v811 = vunpack.c.l.bf16 %v755
  %v812 = vunpack.c.l.bf16 %v756
  %v813 = vunpack.c.l.bf16 %v757
  %v814 = vunpack.c.l.bf16 %v758
  %v815 = vunpack.c.l.bf16 %v759
  %v816 = vunpack.c.l.bf16 %v760
  %v817 = vunpack.c.l.bf16 %v761
  %v818 = vunpack.c.l.bf16 %v762
  %v819 = vunpack.c.l.bf16 %v763
  %v820 = vunpack.c.l.bf16 %v764
  %v821 = vunpack.c.l.bf16 %v765
  %v822 = vunpack.c.l.bf16 %v766
  %v823 = vunpack.c.l.bf16 %v767
  %v824 = vunpack.c.l.bf16 %v768
  %v825 = vunpack.c.l.bf16 %v769
  %v826 = vunpack.c.l.bf16 %v770
  %v827 = vunpack.c.l.bf16 %v771
  %v829 = vsel %vm561, %v827, 0
  %831 = vmatprep.subr.mxu0 0.0
  %832 = vmatpush1.msra.mxu0 %v772
  %833 = vmatprep.subr.mxu0 0.0
  %834 = vmatpush1.msra.mxu0 %v773
  %835 = vmatprep.subr.mxu0 0.0
  %836 = vmatpush1.msra.mxu0 %v774
  %837 = vmatprep.subr.mxu0 0.0
  %838 = vmatpush1.msra.mxu0 %v775
  %839 = vmatprep.subr.mxu0 0.0
  %840 = vmatpush1.msra.mxu0 %v776
  %841 = vmatprep.subr.mxu0 0.0
  %842 = vmatpush1.msra.mxu0 %v777
  %843 = vmatprep.subr.mxu0 0.0
  %844 = vmatpush1.msra.mxu0 %v778
  %845 = vmatprep.subr.mxu0 0.0
  %846 = vmatpush1.msra.mxu0 %v779
  %847 = vmatprep.subr.mxu0 0.0
  %848 = vmatpush1.msra.mxu0 %v780
  %849 = vmatprep.subr.mxu0 0.0
  %850 = vmatpush1.msra.mxu0 %v781
  %851 = vmatprep.subr.mxu0 0.0
  %852 = vmatpush1.msra.mxu0 %v782
  %853 = vmatprep.subr.mxu0 0.0
  %854 = vmatpush1.msra.mxu0 %v783
  %855 = vmatprep.subr.mxu0 0.0
  %856 = vmatpush1.msra.mxu0 %v784
  %857 = vmatprep.subr.mxu0 0.0
  %858 = vmatpush1.msra.mxu0 %v785
  %859 = vmatprep.subr.mxu0 0.0
  %860 = vmatpush1.msra.mxu0 %v786
  %861 = vmatprep.subr.mxu0 0.0
  %862 = vmatpush1.msra.mxu0 %v787
  %863 = vmatprep.subr.mxu0 0.0
  %864 = vmatpush1.msra.mxu0 %v788
  %865 = vmatprep.subr.mxu0 0.0
  %866 = vmatpush1.msra.mxu0 %v789
  %867 = vmatprep.subr.mxu0 0.0
  %868 = vmatpush1.msra.mxu0 %v790
  %869 = vmatprep.subr.mxu0 0.0
  %870 = vmatpush1.msra.mxu0 %v791
  %871 = vmatprep.subr.mxu0 0.0
  %872 = vmatpush1.msra.mxu0 %v792
  %873 = vmatprep.subr.mxu0 0.0
  %874 = vmatpush1.msra.mxu0 %v793
  %875 = vmatprep.subr.mxu0 0.0
  %876 = vmatpush1.msra.mxu0 %v794
  %877 = vmatprep.subr.mxu0 0.0
  %878 = vmatpush1.msra.mxu0 %v795
  %879 = vmatprep.subr.mxu0 0.0
  %880 = vmatpush1.msra.mxu0 %v796
  %881 = vmatprep.subr.mxu0 0.0
  %882 = vmatpush1.msra.mxu0 %v797
  %883 = vmatprep.subr.mxu0 0.0
  %884 = vmatpush1.msra.mxu0 %v798
  %885 = vmatprep.subr.mxu0 0.0
  %886 = vmatpush1.msra.mxu0 %v799
  %887 = vmatprep.subr.mxu0 0.0
  %888 = vmatpush1.msra.mxu0 %v800
  %889 = vmatprep.subr.mxu0 0.0
  %890 = vmatpush1.msra.mxu0 %v801
  %891 = vmatprep.subr.mxu0 0.0
  %892 = vmatpush1.msra.mxu0 %v802
  %893 = vmatprep.subr.mxu0 0.0
  %894 = vmatpush1.msra.mxu0 %v803
  %895 = vmatprep.mubr.f32.mxu0 %v436
  %896 = vmatmul.mubr.f32.gmra.mrb[0].mxu0 %v435
  %v897 = vpop.f32.mrb[0].mxu0
  %v898 = vadd.f32 0.0, %v897
  %v899 = vpop.f32.mrb[0].mxu0
  %900 = vmatprep.mubr.f32.mxu0 %v440
  %901 = vmatmul.mubr.f32.gmra.mrb[0].mxu0 %v439
  %v902 = vpop.f32.mrb[0].mxu0
  %v903 = vadd.f32 0.0, %v902
  %v904 = vpop.f32.mrb[0].mxu0
  %905 = vdwg.mxu0
  %906 = vmatprep.subr.mxu0 0.0
  %907 = vmatpush1.msra.mxu0 %v804
  %908 = vmatprep.subr.mxu0 0.0
  %909 = vmatpush1.msra.mxu0 %v805
  %910 = vmatprep.subr.mxu0 0.0
  %911 = vmatpush1.msra.mxu0 %v806
  %912 = vmatprep.subr.mxu0 0.0
  %913 = vmatpush1.msra.mxu0 %v807
  %914 = vmatprep.subr.mxu0 0.0
  %915 = vmatpush1.msra.mxu0 %v808
  %916 = vmatprep.subr.mxu0 0.0
  %917 = vmatpush1.msra.mxu0 %v809
  %918 = vmatprep.subr.mxu0 0.0
  %919 = vmatpush1.msra.mxu0 %v810
  %920 = vmatprep.subr.mxu0 0.0
  %921 = vmatpush1.msra.mxu0 %v811
  %922 = vmatprep.subr.mxu0 0.0
  %923 = vmatpush1.msra.mxu0 %v812
  %924 = vmatprep.subr.mxu0 0.0
  %925 = vmatpush1.msra.mxu0 %v813
  %926 = vmatprep.subr.mxu0 0.0
  %927 = vmatpush1.msra.mxu0 %v814
  %928 = vmatprep.subr.mxu0 0.0
  %929 = vmatpush1.msra.mxu0 %v815
  %930 = vmatprep.subr.mxu0 0.0
  %931 = vmatpush1.msra.mxu0 %v816
  %932 = vmatprep.subr.mxu0 0.0
  %933 = vmatpush1.msra.mxu0 %v817
  %934 = vmatprep.subr.mxu0 0.0
  %935 = vmatpush1.msra.mxu0 %v818
  %936 = vmatprep.subr.mxu0 0.0
  %937 = vmatpush1.msra.mxu0 %v819
  %938 = vmatprep.subr.mxu0 0.0
  %939 = vmatpush1.msra.mxu0 %v820
  %940 = vmatprep.subr.mxu0 0.0
  %941 = vmatpush1.msra.mxu0 %v821
  %942 = vmatprep.subr.mxu0 0.0
  %943 = vmatpush1.msra.mxu0 %v822
  %944 = vmatprep.subr.mxu0 0.0
  %945 = vmatpush1.msra.mxu0 %v823
  %946 = vmatprep.subr.mxu0 0.0
  %947 = vmatpush1.msra.mxu0 %v824
  %948 = vmatprep.subr.mxu0 0.0
  %949 = vmatpush1.msra.mxu0 %v825
  %950 = vmatprep.subr.mxu0 0.0
  %951 = vmatpush1.msra.mxu0 %v826
  %952 = vmatprep.subr.mxu0 0.0
  %953 = vmatpush1.msra.mxu0 %v829
  %954 = vmatprep.subr.mxu0 0.0
  %955 = vmatpush1.msra.mxu0 0.0
  %956 = vmatprep.subr.mxu0 0.0
  %957 = vmatpush1.msra.mxu0 0.0
  %958 = vmatprep.subr.mxu0 0.0
  %959 = vmatpush1.msra.mxu0 0.0
  %960 = vmatprep.subr.mxu0 0.0
  %961 = vmatpush1.msra.mxu0 0.0
  %962 = vmatprep.subr.mxu0 0.0
  %963 = vmatpush1.msra.mxu0 0.0
  %964 = vmatprep.subr.mxu0 0.0
  %965 = vmatpush1.msra.mxu0 0.0
  %966 = vmatprep.subr.mxu0 0.0
  %967 = vmatpush1.msra.mxu0 0.0
  %968 = vmatprep.subr.mxu0 0.0
  %969 = vmatpush1.msra.mxu0 0.0
  %970 = vmatprep.mubr.f32.mxu0 %v556
  %971 = vmatmul.mubr.f32.gmra.mrb[0].mxu0 %v437
  %v972 = vpop.f32.mrb[0].mxu0
  %v973 = vadd.f32 %v898, %v972
  %v974 = vpop.f32.mrb[0].mxu0
  %975 = vmatprep.mubr.f32.mxu0 %v559
  %976 = vmatmul.mubr.f32.gmra.mrb[0].mxu0 %v441
  %v977 = vpop.f32.mrb[0].mxu0
  %v978 = vadd.f32 %v903, %v977
  %v979 = vpop.f32.mrb[0].mxu0
  %980 = vdwg.mxu0
  %s981 = scalar_lea.vmem %s5, 448
  %v982 = vld [vmem:[%s981] sm:$0xf]
  %v983 = vld [vmem:[%s981 + $0x4] sm:$0xf]
  %v984 = vld [vmem:[%s981 + $0x8] sm:$0xf]
  %v985 = vld [vmem:[%s981 + $0xc] sm:$0xf]
  %v986 = vld [vmem:[%s981 + $0x10] sm:$0xf]
  %v987 = vld [vmem:[%s981 + $0x14] sm:$0xf]
  %v988 = vld [vmem:[%s981 + $0x18] sm:$0xf]
  %v989 = vld [vmem:[%s981 + $0x1c] sm:$0xf]
  %v990 = vld [vmem:[%s981 + $0x20] sm:$0xf]
  %v991 = vld [vmem:[%s981 + $0x24] sm:$0xf]
  %v992 = vld [vmem:[%s981 + $0x28] sm:$0xf]
  %v993 = vld [vmem:[%s981 + $0x2c] sm:$0xf]
  %v994 = vld [vmem:[%s981 + $0x30] sm:$0xf]
  %v995 = vld [vmem:[%s981 + $0x34] sm:$0xf]
  %v996 = vld [vmem:[%s981 + $0x38] sm:$0xf]
  %v997 = vld [vmem:[%s981 + $0x3c] sm:$0xf]
  %v998 = vld [vmem:[%s981 + $0x40] sm:$0xf]
  %v999 = vld [vmem:[%s981 + $0x44] sm:$0xf]
  %v1000 = vld [vmem:[%s981 + $0x48] sm:$0xf]
  %v1001 = vld [vmem:[%s981 + $0x4c] sm:$0xf]
  %v1002 = vld [vmem:[%s981 + $0x50] sm:$0xf]
  %v1003 = vld [vmem:[%s981 + $0x54] sm:$0xf]
  %v1004 = vld [vmem:[%s981 + $0x58] sm:$0xf]
  %v1005 = vld [vmem:[%s981 + $0x5c] sm:$0xf]
  %v1006 = vld [vmem:[%s981 + $0x60] sm:$0xf]
  %v1007 = vld [vmem:[%s981 + $0x64] sm:$0xf]
  %v1008 = vld [vmem:[%s981 + $0x68] sm:$0xf]
  %v1009 = vld [vmem:[%s981 + $0x6c] sm:$0xf]
  %v1010 = vld [vmem:[%s981 + $0x70] sm:$0xf]
  %v1011 = vld [vmem:[%s981 + $0x74] sm:$0xf]
  %v1012 = vld [vmem:[%s981 + $0x78] sm:$0xf]
  %v1013 = vld [vmem:[%s981 + $0x7c] sm:$0xf]
  %v1014 = vld [vmem:[%s981 + $0x80] sm:$0xf]
  %v1015 = vld [vmem:[%s981 + $0x84] sm:$0xf]
  %v1016 = vld [vmem:[%s981 + $0x88] sm:$0xf]
  %v1017 = vld [vmem:[%s981 + $0x8c] sm:$0xf]
  %v1018 = vld [vmem:[%s981 + $0x90] sm:$0xf]
  %v1019 = vld [vmem:[%s981 + $0x94] sm:$0xf]
  %v1020 = vld [vmem:[%s981 + $0x98] sm:$0xf]
  %v1021 = vld [vmem:[%s981 + $0x9c] sm:$0xf]
  %v1022 = vld [vmem:[%s981 + $0xa0] sm:$0xf]
  %v1023 = vld [vmem:[%s981 + $0xa4] sm:$0xf]
  %v1024 = vld [vmem:[%s981 + $0xa8] sm:$0xf]
  %v1025 = vld [vmem:[%s981 + $0xac] sm:$0xf]
  %v1026 = vld [vmem:[%s981 + $0xb0] sm:$0xf]
  %v1027 = vld [vmem:[%s981 + $0xb4] sm:$0xf]
  %v1028 = vld [vmem:[%s981 + $0xb8] sm:$0xf]
  %v1029 = vld [vmem:[%s981 + $0xbc] sm:$0xf]
  %v1030 = vld [vmem:[%s981 + $0xc0] sm:$0xf]
  %v1031 = vld [vmem:[%s981 + $0xc4] sm:$0xf]
  %v1032 = vld [vmem:[%s981 + $0xc8] sm:$0xf]
  %v1033 = vld [vmem:[%s981 + $0xcc] sm:$0xf]
  %v1034 = vld [vmem:[%s981 + $0xd0] sm:$0xf]
  %v1035 = vld [vmem:[%s981 + $0xd4] sm:$0xf]
  %v1036 = vld [vmem:[%s981 + $0xd8] sm:$0xf]
  %v1037 = vld [vmem:[%s981 + $0xdc] sm:$0x1]
  %v1038 = vunpack.c.l.bf16 %v982
  %v1039 = vunpack.c.l.bf16 %v983
  %v1040 = vunpack.c.l.bf16 %v984
  %v1041 = vunpack.c.l.bf16 %v985
  %v1042 = vunpack.c.l.bf16 %v986
  %v1043 = vunpack.c.l.bf16 %v987
  %v1044 = vunpack.c.l.bf16 %v988
  %v1045 = vunpack.c.l.bf16 %v989
  %v1046 = vunpack.c.l.bf16 %v990
  %v1047 = vunpack.c.l.bf16 %v991
  %v1048 = vunpack.c.l.bf16 %v992
  %v1049 = vunpack.c.l.bf16 %v993
  %v1050 = vunpack.c.l.bf16 %v994
  %v1051 = vunpack.c.l.bf16 %v995
  %v1052 = vunpack.c.l.bf16 %v996
  %v1053 = vunpack.c.l.bf16 %v997
  %v1054 = vunpack.c.l.bf16 %v998
  %v1055 = vunpack.c.l.bf16 %v999
  %v1056 = vunpack.c.l.bf16 %v1000
  %v1057 = vunpack.c.l.bf16 %v1001
  %v1058 = vunpack.c.l.bf16 %v1002
  %v1059 = vunpack.c.l.bf16 %v1003
  %v1060 = vunpack.c.l.bf16 %v1004
  %v1061 = vunpack.c.l.bf16 %v1005
  %v1062 = vunpack.c.l.bf16 %v1006
  %v1063 = vunpack.c.l.bf16 %v1007
  %v1064 = vunpack.c.l.bf16 %v1008
  %v1065 = vunpack.c.l.bf16 %v1009
  %v1066 = vunpack.c.l.bf16 %v1010
  %v1067 = vunpack.c.l.bf16 %v1011
  %v1068 = vunpack.c.l.bf16 %v1012
  %v1069 = vunpack.c.l.bf16 %v1013
  %v1070 = vunpack.c.l.bf16 %v1014
  %v1071 = vunpack.c.l.bf16 %v1015
  %v1072 = vunpack.c.l.bf16 %v1016
  %v1073 = vunpack.c.l.bf16 %v1017
  %v1074 = vunpack.c.l.bf16 %v1018
  %v1075 = vunpack.c.l.bf16 %v1019
  %v1076 = vunpack.c.l.bf16 %v1020
  %v1077 = vunpack.c.l.bf16 %v1021
  %v1078 = vunpack.c.l.bf16 %v1022
  %v1079 = vunpack.c.l.bf16 %v1023
  %v1080 = vunpack.c.l.bf16 %v1024
  %v1081 = vunpack.c.l.bf16 %v1025
  %v1082 = vunpack.c.l.bf16 %v1026
  %v1083 = vunpack.c.l.bf16 %v1027
  %v1084 = vunpack.c.l.bf16 %v1028
  %v1085 = vunpack.c.l.bf16 %v1029
  %v1086 = vunpack.c.l.bf16 %v1030
  %v1087 = vunpack.c.l.bf16 %v1031
  %v1088 = vunpack.c.l.bf16 %v1032
  %v1089 = vunpack.c.l.bf16 %v1033
  %v1090 = vunpack.c.l.bf16 %v1034
  %v1091 = vunpack.c.l.bf16 %v1035
  %v1092 = vunpack.c.l.bf16 %v1036
  %v1093 = vunpack.c.l.bf16 %v1037
  %v1095 = vsel %vm561, %v1093, 0
  %1097 = vmatprep.subr.mxu0 0.0
  %1098 = vmatpush1.msra.mxu0 %v1038
  %1099 = vmatprep.subr.mxu0 0.0
  %1100 = vmatpush1.msra.mxu0 %v1039
  %1101 = vmatprep.subr.mxu0 0.0
  %1102 = vmatpush1.msra.mxu0 %v1040
  %1103 = vmatprep.subr.mxu0 0.0
  %1104 = vmatpush1.msra.mxu0 %v1041
  %1105 = vmatprep.subr.mxu0 0.0
  %1106 = vmatpush1.msra.mxu0 %v1042
  %1107 = vmatprep.subr.mxu0 0.0
  %1108 = vmatpush1.msra.mxu0 %v1043
  %1109 = vmatprep.subr.mxu0 0.0
  %1110 = vmatpush1.msra.mxu0 %v1044
  %1111 = vmatprep.subr.mxu0 0.0
  %1112 = vmatpush1.msra.mxu0 %v1045
  %1113 = vmatprep.subr.mxu0 0.0
  %1114 = vmatpush1.msra.mxu0 %v1046
  %1115 = vmatprep.subr.mxu0 0.0
  %1116 = vmatpush1.msra.mxu0 %v1047
  %1117 = vmatprep.subr.mxu0 0.0
  %1118 = vmatpush1.msra.mxu0 %v1048
  %1119 = vmatprep.subr.mxu0 0.0
  %1120 = vmatpush1.msra.mxu0 %v1049
  %1121 = vmatprep.subr.mxu0 0.0
  %1122 = vmatpush1.msra.mxu0 %v1050
  %1123 = vmatprep.subr.mxu0 0.0
  %1124 = vmatpush1.msra.mxu0 %v1051
  %1125 = vmatprep.subr.mxu0 0.0
  %1126 = vmatpush1.msra.mxu0 %v1052
  %1127 = vmatprep.subr.mxu0 0.0
  %1128 = vmatpush1.msra.mxu0 %v1053
  %1129 = vmatprep.subr.mxu0 0.0
  %1130 = vmatpush1.msra.mxu0 %v1054
  %1131 = vmatprep.subr.mxu0 0.0
  %1132 = vmatpush1.msra.mxu0 %v1055
  %1133 = vmatprep.subr.mxu0 0.0
  %1134 = vmatpush1.msra.mxu0 %v1056
  %1135 = vmatprep.subr.mxu0 0.0
  %1136 = vmatpush1.msra.mxu0 %v1057
  %1137 = vmatprep.subr.mxu0 0.0
  %1138 = vmatpush1.msra.mxu0 %v1058
  %1139 = vmatprep.subr.mxu0 0.0
  %1140 = vmatpush1.msra.mxu0 %v1059
  %1141 = vmatprep.subr.mxu0 0.0
  %1142 = vmatpush1.msra.mxu0 %v1060
  %1143 = vmatprep.subr.mxu0 0.0
  %1144 = vmatpush1.msra.mxu0 %v1061
  %1145 = vmatprep.subr.mxu0 0.0
  %1146 = vmatpush1.msra.mxu0 %v1062
  %1147 = vmatprep.subr.mxu0 0.0
  %1148 = vmatpush1.msra.mxu0 %v1063
  %1149 = vmatprep.subr.mxu0 0.0
  %1150 = vmatpush1.msra.mxu0 %v1064
  %1151 = vmatprep.subr.mxu0 0.0
  %1152 = vmatpush1.msra.mxu0 %v1065
  %1153 = vmatprep.subr.mxu0 0.0
  %1154 = vmatpush1.msra.mxu0 %v1066
  %1155 = vmatprep.subr.mxu0 0.0
  %1156 = vmatpush1.msra.mxu0 %v1067
  %1157 = vmatprep.subr.mxu0 0.0
  %1158 = vmatpush1.msra.mxu0 %v1068
  %1159 = vmatprep.subr.mxu0 0.0
  %1160 = vmatpush1.msra.mxu0 %v1069
  %1161 = vmatprep.mubr.f32.mxu0 %v436
  %1162 = vmatmul.mubr.f32.gmra.mrb[0].mxu0 %v435
  %v1163 = vpop.f32.mrb[0].mxu0
  %v1164 = vadd.f32 0.0, %v1163
  %v1165 = vpop.f32.mrb[0].mxu0
  %1166 = vmatprep.mubr.f32.mxu0 %v440
  %1167 = vmatmul.mubr.f32.gmra.mrb[0].mxu0 %v439
  %v1168 = vpop.f32.mrb[0].mxu0
  %v1169 = vadd.f32 0.0, %v1168
  %v1170 = vpop.f32.mrb[0].mxu0
  %1171 = vdwg.mxu0
  %1172 = vmatprep.subr.mxu0 0.0
  %1173 = vmatpush1.msra.mxu0 %v1070
  %1174 = vmatprep.subr.mxu0 0.0
  %1175 = vmatpush1.msra.mxu0 %v1071
  %1176 = vmatprep.subr.mxu0 0.0
  %1177 = vmatpush1.msra.mxu0 %v1072
  %1178 = vmatprep.subr.mxu0 0.0
  %1179 = vmatpush1.msra.mxu0 %v1073
  %1180 = vmatprep.subr.mxu0 0.0
  %1181 = vmatpush1.msra.mxu0 %v1074
  %1182 = vmatprep.subr.mxu0 0.0
  %1183 = vmatpush1.msra.mxu0 %v1075
  %1184 = vmatprep.subr.mxu0 0.0
  %1185 = vmatpush1.msra.mxu0 %v1076
  %1186 = vmatprep.subr.mxu0 0.0
  %1187 = vmatpush1.msra.mxu0 %v1077
  %1188 = vmatprep.subr.mxu0 0.0
  %1189 = vmatpush1.msra.mxu0 %v1078
  %1190 = vmatprep.subr.mxu0 0.0
  %1191 = vmatpush1.msra.mxu0 %v1079
  %1192 = vmatprep.subr.mxu0 0.0
  %1193 = vmatpush1.msra.mxu0 %v1080
  %1194 = vmatprep.subr.mxu0 0.0
  %1195 = vmatpush1.msra.mxu0 %v1081
  %1196 = vmatprep.subr.mxu0 0.0
  %1197 = vmatpush1.msra.mxu0 %v1082
  %1198 = vmatprep.subr.mxu0 0.0
  %1199 = vmatpush1.msra.mxu0 %v1083
  %1200 = vmatprep.subr.mxu0 0.0
  %1201 = vmatpush1.msra.mxu0 %v1084
  %1202 = vmatprep.subr.mxu0 0.0
  %1203 = vmatpush1.msra.mxu0 %v1085
  %1204 = vmatprep.subr.mxu0 0.0
  %1205 = vmatpush1.msra.mxu0 %v1086
  %1206 = vmatprep.subr.mxu0 0.0
  %1207 = vmatpush1.msra.mxu0 %v1087
  %1208 = vmatprep.subr.mxu0 0.0
  %1209 = vmatpush1.msra.mxu0 %v1088
  %1210 = vmatprep.subr.mxu0 0.0
  %1211 = vmatpush1.msra.mxu0 %v1089
  %1212 = vmatprep.subr.mxu0 0.0
  %1213 = vmatpush1.msra.mxu0 %v1090
  %1214 = vmatprep.subr.mxu0 0.0
  %1215 = vmatpush1.msra.mxu0 %v1091
  %1216 = vmatprep.subr.mxu0 0.0
  %1217 = vmatpush1.msra.mxu0 %v1092
  %1218 = vmatprep.subr.mxu0 0.0
  %1219 = vmatpush1.msra.mxu0 %v1095
  %1220 = vmatprep.subr.mxu0 0.0
  %1221 = vmatpush1.msra.mxu0 0.0
  %1222 = vmatprep.subr.mxu0 0.0
  %1223 = vmatpush1.msra.mxu0 0.0
  %1224 = vmatprep.subr.mxu0 0.0
  %1225 = vmatpush1.msra.mxu0 0.0
  %1226 = vmatprep.subr.mxu0 0.0
  %1227 = vmatpush1.msra.mxu0 0.0
  %1228 = vmatprep.subr.mxu0 0.0
  %1229 = vmatpush1.msra.mxu0 0.0
  %1230 = vmatprep.subr.mxu0 0.0
  %1231 = vmatpush1.msra.mxu0 0.0
  %1232 = vmatprep.subr.mxu0 0.0
  %1233 = vmatpush1.msra.mxu0 0.0
  %1234 = vmatprep.subr.mxu0 0.0
  %1235 = vmatpush1.msra.mxu0 0.0
  %1236 = vmatprep.mubr.f32.mxu0 %v556
  %1237 = vmatmul.mubr.f32.gmra.mrb[0].mxu0 %v437
  %v1238 = vpop.f32.mrb[0].mxu0
  %v1239 = vadd.f32 %v1164, %v1238
  %v1240 = vpop.f32.mrb[0].mxu0
  %1241 = vmatprep.mubr.f32.mxu0 %v559
  %1242 = vmatmul.mubr.f32.gmra.mrb[0].mxu0 %v441
  %v1243 = vpop.f32.mrb[0].mxu0
  %v1244 = vadd.f32 %v1169, %v1243
  %v1245 = vpop.f32.mrb[0].mxu0
  %1246 = vdwg.mxu0
  %s1247 = scalar_lea.vmem %s5, 672
  %v1248 = vld [vmem:[%s1247] sm:$0xf]
  %v1249 = vld [vmem:[%s1247 + $0x4] sm:$0xf]
  %v1250 = vld [vmem:[%s1247 + $0x8] sm:$0xf]
  %v1251 = vld [vmem:[%s1247 + $0xc] sm:$0xf]
  %v1252 = vld [vmem:[%s1247 + $0x10] sm:$0xf]
  %v1253 = vld [vmem:[%s1247 + $0x14] sm:$0xf]
  %v1254 = vld [vmem:[%s1247 + $0x18] sm:$0xf]
  %v1255 = vld [vmem:[%s1247 + $0x1c] sm:$0xf]
  %v1256 = vld [vmem:[%s1247 + $0x20] sm:$0xf]
  %v1257 = vld [vmem:[%s1247 + $0x24] sm:$0xf]
  %v1258 = vld [vmem:[%s1247 + $0x28] sm:$0xf]
  %v1259 = vld [vmem:[%s1247 + $0x2c] sm:$0xf]
  %v1260 = vld [vmem:[%s1247 + $0x30] sm:$0xf]
  %v1261 = vld [vmem:[%s1247 + $0x34] sm:$0xf]
  %v1262 = vld [vmem:[%s1247 + $0x38] sm:$0xf]
  %v1263 = vld [vmem:[%s1247 + $0x3c] sm:$0xf]
  %v1264 = vld [vmem:[%s1247 + $0x40] sm:$0xf]
  %v1265 = vld [vmem:[%s1247 + $0x44] sm:$0xf]
  %v1266 = vld [vmem:[%s1247 + $0x48] sm:$0xf]
  %v1267 = vld [vmem:[%s1247 + $0x4c] sm:$0xf]
  %v1268 = vld [vmem:[%s1247 + $0x50] sm:$0xf]
  %v1269 = vld [vmem:[%s1247 + $0x54] sm:$0xf]
  %v1270 = vld [vmem:[%s1247 + $0x58] sm:$0xf]
  %v1271 = vld [vmem:[%s1247 + $0x5c] sm:$0xf]
  %v1272 = vld [vmem:[%s1247 + $0x60] sm:$0xf]
  %v1273 = vld [vmem:[%s1247 + $0x64] sm:$0xf]
  %v1274 = vld [vmem:[%s1247 + $0x68] sm:$0xf]
  %v1275 = vld [vmem:[%s1247 + $0x6c] sm:$0xf]
  %v1276 = vld [vmem:[%s1247 + $0x70] sm:$0xf]
  %v1277 = vld [vmem:[%s1247 + $0x74] sm:$0xf]
  %v1278 = vld [vmem:[%s1247 + $0x78] sm:$0xf]
  %v1279 = vld [vmem:[%s1247 + $0x7c] sm:$0xf]
  %v1280 = vld [vmem:[%s1247 + $0x80] sm:$0xf]
  %v1281 = vld [vmem:[%s1247 + $0x84] sm:$0xf]
  %v1282 = vld [vmem:[%s1247 + $0x88] sm:$0xf]
  %v1283 = vld [vmem:[%s1247 + $0x8c] sm:$0xf]
  %v1284 = vld [vmem:[%s1247 + $0x90] sm:$0xf]
  %v1285 = vld [vmem:[%s1247 + $0x94] sm:$0xf]
  %v1286 = vld [vmem:[%s1247 + $0x98] sm:$0xf]
  %v1287 = vld [vmem:[%s1247 + $0x9c] sm:$0xf]
  %v1288 = vld [vmem:[%s1247 + $0xa0] sm:$0xf]
  %v1289 = vld [vmem:[%s1247 + $0xa4] sm:$0xf]
  %v1290 = vld [vmem:[%s1247 + $0xa8] sm:$0xf]
  %v1291 = vld [vmem:[%s1247 + $0xac] sm:$0xf]
  %v1292 = vld [vmem:[%s1247 + $0xb0] sm:$0xf]
  %v1293 = vld [vmem:[%s1247 + $0xb4] sm:$0xf]
  %v1294 = vld [vmem:[%s1247 + $0xb8] sm:$0xf]
  %v1295 = vld [vmem:[%s1247 + $0xbc] sm:$0xf]
  %v1296 = vld [vmem:[%s1247 + $0xc0] sm:$0xf]
  %v1297 = vld [vmem:[%s1247 + $0xc4] sm:$0xf]
  %v1298 = vld [vmem:[%s1247 + $0xc8] sm:$0xf]
  %v1299 = vld [vmem:[%s1247 + $0xcc] sm:$0xf]
  %v1300 = vld [vmem:[%s1247 + $0xd0] sm:$0xf]
  %v1301 = vld [vmem:[%s1247 + $0xd4] sm:$0xf]
  %v1302 = vld [vmem:[%s1247 + $0xd8] sm:$0xf]
  %v1303 = vld [vmem:[%s1247 + $0xdc] sm:$0x1]
  %v1304 = vunpack.c.l.bf16 %v1248
  %v1305 = vunpack.c.l.bf16 %v1249
  %v1306 = vunpack.c.l.bf16 %v1250
  %v1307 = vunpack.c.l.bf16 %v1251
  %v1308 = vunpack.c.l.bf16 %v1252
  %v1309 = vunpack.c.l.bf16 %v1253
  %v1310 = vunpack.c.l.bf16 %v1254
  %v1311 = vunpack.c.l.bf16 %v1255
  %v1312 = vunpack.c.l.bf16 %v1256
  %v1313 = vunpack.c.l.bf16 %v1257
  %v1314 = vunpack.c.l.bf16 %v1258
  %v1315 = vunpack.c.l.bf16 %v1259
  %v1316 = vunpack.c.l.bf16 %v1260
  %v1317 = vunpack.c.l.bf16 %v1261
  %v1318 = vunpack.c.l.bf16 %v1262
  %v1319 = vunpack.c.l.bf16 %v1263
  %v1320 = vunpack.c.l.bf16 %v1264
  %v1321 = vunpack.c.l.bf16 %v1265
  %v1322 = vunpack.c.l.bf16 %v1266
  %v1323 = vunpack.c.l.bf16 %v1267
  %v1324 = vunpack.c.l.bf16 %v1268
  %v1325 = vunpack.c.l.bf16 %v1269
  %v1326 = vunpack.c.l.bf16 %v1270
  %v1327 = vunpack.c.l.bf16 %v1271
  %v1328 = vunpack.c.l.bf16 %v1272
  %v1329 = vunpack.c.l.bf16 %v1273
  %v1330 = vunpack.c.l.bf16 %v1274
  %v1331 = vunpack.c.l.bf16 %v1275
  %v1332 = vunpack.c.l.bf16 %v1276
  %v1333 = vunpack.c.l.bf16 %v1277
  %v1334 = vunpack.c.l.bf16 %v1278
  %v1335 = vunpack.c.l.bf16 %v1279
  %v1336 = vunpack.c.l.bf16 %v1280
  %v1337 = vunpack.c.l.bf16 %v1281
  %v1338 = vunpack.c.l.bf16 %v1282
  %v1339 = vunpack.c.l.bf16 %v1283
  %v1340 = vunpack.c.l.bf16 %v1284
  %v1341 = vunpack.c.l.bf16 %v1285
  %v1342 = vunpack.c.l.bf16 %v1286
  %v1343 = vunpack.c.l.bf16 %v1287
  %v1344 = vunpack.c.l.bf16 %v1288
  %v1345 = vunpack.c.l.bf16 %v1289
  %v1346 = vunpack.c.l.bf16 %v1290
  %v1347 = vunpack.c.l.bf16 %v1291
  %v1348 = vunpack.c.l.bf16 %v1292
  %v1349 = vunpack.c.l.bf16 %v1293
  %v1350 = vunpack.c.l.bf16 %v1294
  %v1351 = vunpack.c.l.bf16 %v1295
  %v1352 = vunpack.c.l.bf16 %v1296
  %v1353 = vunpack.c.l.bf16 %v1297
  %v1354 = vunpack.c.l.bf16 %v1298
  %v1355 = vunpack.c.l.bf16 %v1299
  %v1356 = vunpack.c.l.bf16 %v1300
  %v1357 = vunpack.c.l.bf16 %v1301
  %v1358 = vunpack.c.l.bf16 %v1302
  %v1359 = vunpack.c.l.bf16 %v1303
  %v1361 = vsel %vm561, %v1359, 0
  %1363 = vmatprep.subr.mxu0 0.0
  %1364 = vmatpush1.msra.mxu0 %v1304
  %1365 = vmatprep.subr.mxu0 0.0
  %1366 = vmatpush1.msra.mxu0 %v1305
  %1367 = vmatprep.subr.mxu0 0.0
  %1368 = vmatpush1.msra.mxu0 %v1306
  %1369 = vmatprep.subr.mxu0 0.0
  %1370 = vmatpush1.msra.mxu0 %v1307
  %1371 = vmatprep.subr.mxu0 0.0
  %1372 = vmatpush1.msra.mxu0 %v1308
  %1373 = vmatprep.subr.mxu0 0.0
  %1374 = vmatpush1.msra.mxu0 %v1309
  %1375 = vmatprep.subr.mxu0 0.0
  %1376 = vmatpush1.msra.mxu0 %v1310
  %1377 = vmatprep.subr.mxu0 0.0
  %1378 = vmatpush1.msra.mxu0 %v1311
  %1379 = vmatprep.subr.mxu0 0.0
  %1380 = vmatpush1.msra.mxu0 %v1312
  %1381 = vmatprep.subr.mxu0 0.0
  %1382 = vmatpush1.msra.mxu0 %v1313
  %1383 = vmatprep.subr.mxu0 0.0
  %1384 = vmatpush1.msra.mxu0 %v1314
  %1385 = vmatprep.subr.mxu0 0.0
  %1386 = vmatpush1.msra.mxu0 %v1315
  %1387 = vmatprep.subr.mxu0 0.0
  %1388 = vmatpush1.msra.mxu0 %v1316
  %1389 = vmatprep.subr.mxu0 0.0
  %1390 = vmatpush1.msra.mxu0 %v1317
  %1391 = vmatprep.subr.mxu0 0.0
  %1392 = vmatpush1.msra.mxu0 %v1318
  %1393 = vmatprep.subr.mxu0 0.0
  %1394 = vmatpush1.msra.mxu0 %v1319
  %1395 = vmatprep.subr.mxu0 0.0
  %1396 = vmatpush1.msra.mxu0 %v1320
  %1397 = vmatprep.subr.mxu0 0.0
  %1398 = vmatpush1.msra.mxu0 %v1321
  %1399 = vmatprep.subr.mxu0 0.0
  %1400 = vmatpush1.msra.mxu0 %v1322
  %1401 = vmatprep.subr.mxu0 0.0
  %1402 = vmatpush1.msra.mxu0 %v1323
  %1403 = vmatprep.subr.mxu0 0.0
  %1404 = vmatpush1.msra.mxu0 %v1324
  %1405 = vmatprep.subr.mxu0 0.0
  %1406 = vmatpush1.msra.mxu0 %v1325
  %1407 = vmatprep.subr.mxu0 0.0
  %1408 = vmatpush1.msra.mxu0 %v1326
  %1409 = vmatprep.subr.mxu0 0.0
  %1410 = vmatpush1.msra.mxu0 %v1327
  %1411 = vmatprep.subr.mxu0 0.0
  %1412 = vmatpush1.msra.mxu0 %v1328
  %1413 = vmatprep.subr.mxu0 0.0
  %1414 = vmatpush1.msra.mxu0 %v1329
  %1415 = vmatprep.subr.mxu0 0.0
  %1416 = vmatpush1.msra.mxu0 %v1330
  %1417 = vmatprep.subr.mxu0 0.0
  %1418 = vmatpush1.msra.mxu0 %v1331
  %1419 = vmatprep.subr.mxu0 0.0
  %1420 = vmatpush1.msra.mxu0 %v1332
  %1421 = vmatprep.subr.mxu0 0.0
  %1422 = vmatpush1.msra.mxu0 %v1333
  %1423 = vmatprep.subr.mxu0 0.0
  %1424 = vmatpush1.msra.mxu0 %v1334
  %1425 = vmatprep.subr.mxu0 0.0
  %1426 = vmatpush1.msra.mxu0 %v1335
  %1427 = vmatprep.mubr.f32.mxu0 %v436
  %1428 = vmatmul.mubr.f32.gmra.mrb[0].mxu0 %v435
  %v1429 = vpop.f32.mrb[0].mxu0
  %v1430 = vadd.f32 0.0, %v1429
  %v1431 = vpop.f32.mrb[0].mxu0
  %1432 = vmatprep.mubr.f32.mxu0 %v440
  %1433 = vmatmul.mubr.f32.gmra.mrb[0].mxu0 %v439
  %v1434 = vpop.f32.mrb[0].mxu0
  %v1435 = vadd.f32 0.0, %v1434
  %v1436 = vpop.f32.mrb[0].mxu0
  %1437 = vdwg.mxu0
  %1438 = vmatprep.subr.mxu0 0.0
  %1439 = vmatpush1.msra.mxu0 %v1336
  %1440 = vmatprep.subr.mxu0 0.0
  %1441 = vmatpush1.msra.mxu0 %v1337
  %1442 = vmatprep.subr.mxu0 0.0
  %1443 = vmatpush1.msra.mxu0 %v1338
  %1444 = vmatprep.subr.mxu0 0.0
  %1445 = vmatpush1.msra.mxu0 %v1339
  %1446 = vmatprep.subr.mxu0 0.0
  %1447 = vmatpush1.msra.mxu0 %v1340
  %1448 = vmatprep.subr.mxu0 0.0
  %1449 = vmatpush1.msra.mxu0 %v1341
  %1450 = vmatprep.subr.mxu0 0.0
  %1451 = vmatpush1.msra.mxu0 %v1342
  %1452 = vmatprep.subr.mxu0 0.0
  %1453 = vmatpush1.msra.mxu0 %v1343
  %1454 = vmatprep.subr.mxu0 0.0
  %1455 = vmatpush1.msra.mxu0 %v1344
  %1456 = vmatprep.subr.mxu0 0.0
  %1457 = vmatpush1.msra.mxu0 %v1345
  %1458 = vmatprep.subr.mxu0 0.0
  %1459 = vmatpush1.msra.mxu0 %v1346
  %1460 = vmatprep.subr.mxu0 0.0
  %1461 = vmatpush1.msra.mxu0 %v1347
  %1462 = vmatprep.subr.mxu0 0.0
  %1463 = vmatpush1.msra.mxu0 %v1348
  %1464 = vmatprep.subr.mxu0 0.0
  %1465 = vmatpush1.msra.mxu0 %v1349
  %1466 = vmatprep.subr.mxu0 0.0
  %1467 = vmatpush1.msra.mxu0 %v1350
  %1468 = vmatprep.subr.mxu0 0.0
  %1469 = vmatpush1.msra.mxu0 %v1351
  %1470 = vmatprep.subr.mxu0 0.0
  %1471 = vmatpush1.msra.mxu0 %v1352
  %1472 = vmatprep.subr.mxu0 0.0
  %1473 = vmatpush1.msra.mxu0 %v1353
  %1474 = vmatprep.subr.mxu0 0.0
  %1475 = vmatpush1.msra.mxu0 %v1354
  %1476 = vmatprep.subr.mxu0 0.0
  %1477 = vmatpush1.msra.mxu0 %v1355
  %1478 = vmatprep.subr.mxu0 0.0
  %1479 = vmatpush1.msra.mxu0 %v1356
  %1480 = vmatprep.subr.mxu0 0.0
  %1481 = vmatpush1.msra.mxu0 %v1357
  %1482 = vmatprep.subr.mxu0 0.0
  %1483 = vmatpush1.msra.mxu0 %v1358
  %1484 = vmatprep.subr.mxu0 0.0
  %1485 = vmatpush1.msra.mxu0 %v1361
  %1486 = vmatprep.subr.mxu0 0.0
  %1487 = vmatpush1.msra.mxu0 0.0
  %1488 = vmatprep.subr.mxu0 0.0
  %1489 = vmatpush1.msra.mxu0 0.0
  %1490 = vmatprep.subr.mxu0 0.0
  %1491 = vmatpush1.msra.mxu0 0.0
  %1492 = vmatprep.subr.mxu0 0.0
  %1493 = vmatpush1.msra.mxu0 0.0
  %1494 = vmatprep.subr.mxu0 0.0
  %1495 = vmatpush1.msra.mxu0 0.0
  %1496 = vmatprep.subr.mxu0 0.0
  %1497 = vmatpush1.msra.mxu0 0.0
  %1498 = vmatprep.subr.mxu0 0.0
  %1499 = vmatpush1.msra.mxu0 0.0
  %1500 = vmatprep.subr.mxu0 0.0
  %1501 = vmatpush1.msra.mxu0 0.0
  %1502 = vmatprep.mubr.f32.mxu0 %v556
  %1503 = vmatmul.mubr.f32.gmra.mrb[0].mxu0 %v437
  %v1504 = vpop.f32.mrb[0].mxu0
  %v1505 = vadd.f32 %v1430, %v1504
  %v1506 = vpop.f32.mrb[0].mxu0
  %1507 = vmatprep.mubr.f32.mxu0 %v559
  %1508 = vmatmul.mubr.f32.gmra.mrb[0].mxu0 %v441
  %v1509 = vpop.f32.mrb[0].mxu0
  %v1510 = vadd.f32 %v1435, %v1509
  %v1511 = vpop.f32.mrb[0].mxu0
  %1512 = vdwg.mxu0
  %s1513 = scalar_lea.vmem %s5, 896
  %v1514 = vld [vmem:[%s1513] sm:$0xf]
  %v1515 = vld [vmem:[%s1513 + $0x4] sm:$0xf]
  %v1516 = vld [vmem:[%s1513 + $0x8] sm:$0xf]
  %v1517 = vld [vmem:[%s1513 + $0xc] sm:$0xf]
  %v1518 = vld [vmem:[%s1513 + $0x10] sm:$0xf]
  %v1519 = vld [vmem:[%s1513 + $0x14] sm:$0xf]
  %v1520 = vld [vmem:[%s1513 + $0x18] sm:$0xf]
  %v1521 = vld [vmem:[%s1513 + $0x1c] sm:$0xf]
  %v1522 = vld [vmem:[%s1513 + $0x20] sm:$0xf]
  %v1523 = vld [vmem:[%s1513 + $0x24] sm:$0xf]
  %v1524 = vld [vmem:[%s1513 + $0x28] sm:$0xf]
  %v1525 = vld [vmem:[%s1513 + $0x2c] sm:$0xf]
  %v1526 = vld [vmem:[%s1513 + $0x30] sm:$0xf]
  %v1527 = vld [vmem:[%s1513 + $0x34] sm:$0xf]
  %v1528 = vld [vmem:[%s1513 + $0x38] sm:$0xf]
  %v1529 = vld [vmem:[%s1513 + $0x3c] sm:$0xf]
  %v1530 = vld [vmem:[%s1513 + $0x40] sm:$0xf]
  %v1531 = vld [vmem:[%s1513 + $0x44] sm:$0xf]
  %v1532 = vld [vmem:[%s1513 + $0x48] sm:$0xf]
  %v1533 = vld [vmem:[%s1513 + $0x4c] sm:$0xf]
  %v1534 = vld [vmem:[%s1513 + $0x50] sm:$0xf]
  %v1535 = vld [vmem:[%s1513 + $0x54] sm:$0xf]
  %v1536 = vld [vmem:[%s1513 + $0x58] sm:$0xf]
  %v1537 = vld [vmem:[%s1513 + $0x5c] sm:$0xf]
  %v1538 = vld [vmem:[%s1513 + $0x60] sm:$0xf]
  %v1539 = vld [vmem:[%s1513 + $0x64] sm:$0xf]
  %v1540 = vld [vmem:[%s1513 + $0x68] sm:$0xf]
  %v1541 = vld [vmem:[%s1513 + $0x6c] sm:$0xf]
  %v1542 = vld [vmem:[%s1513 + $0x70] sm:$0xf]
  %v1543 = vld [vmem:[%s1513 + $0x74] sm:$0xf]
  %v1544 = vld [vmem:[%s1513 + $0x78] sm:$0xf]
  %v1545 = vld [vmem:[%s1513 + $0x7c] sm:$0xf]
  %v1546 = vld [vmem:[%s1513 + $0x80] sm:$0xf]
  %v1547 = vld [vmem:[%s1513 + $0x84] sm:$0xf]
  %v1548 = vld [vmem:[%s1513 + $0x88] sm:$0xf]
  %v1549 = vld [vmem:[%s1513 + $0x8c] sm:$0xf]
  %v1550 = vld [vmem:[%s1513 + $0x90] sm:$0xf]
  %v1551 = vld [vmem:[%s1513 + $0x94] sm:$0xf]
  %v1552 = vld [vmem:[%s1513 + $0x98] sm:$0xf]
  %v1553 = vld [vmem:[%s1513 + $0x9c] sm:$0xf]
  %v1554 = vld [vmem:[%s1513 + $0xa0] sm:$0xf]
  %v1555 = vld [vmem:[%s1513 + $0xa4] sm:$0xf]
  %v1556 = vld [vmem:[%s1513 + $0xa8] sm:$0xf]
  %v1557 = vld [vmem:[%s1513 + $0xac] sm:$0xf]
  %v1558 = vld [vmem:[%s1513 + $0xb0] sm:$0xf]
  %v1559 = vld [vmem:[%s1513 + $0xb4] sm:$0xf]
  %v1560 = vld [vmem:[%s1513 + $0xb8] sm:$0xf]
  %v1561 = vld [vmem:[%s1513 + $0xbc] sm:$0xf]
  %v1562 = vld [vmem:[%s1513 + $0xc0] sm:$0xf]
  %v1563 = vld [vmem:[%s1513 + $0xc4] sm:$0xf]
  %v1564 = vld [vmem:[%s1513 + $0xc8] sm:$0xf]
  %v1565 = vld [vmem:[%s1513 + $0xcc] sm:$0xf]
  %v1566 = vld [vmem:[%s1513 + $0xd0] sm:$0xf]
  %v1567 = vld [vmem:[%s1513 + $0xd4] sm:$0xf]
  %v1568 = vld [vmem:[%s1513 + $0xd8] sm:$0xf]
  %v1569 = vld [vmem:[%s1513 + $0xdc] sm:$0x1]
  %v1570 = vunpack.c.l.bf16 %v1514
  %v1571 = vunpack.c.l.bf16 %v1515
  %v1572 = vunpack.c.l.bf16 %v1516
  %v1573 = vunpack.c.l.bf16 %v1517
  %v1574 = vunpack.c.l.bf16 %v1518
  %v1575 = vunpack.c.l.bf16 %v1519
  %v1576 = vunpack.c.l.bf16 %v1520
  %v1577 = vunpack.c.l.bf16 %v1521
  %v1578 = vunpack.c.l.bf16 %v1522
  %v1579 = vunpack.c.l.bf16 %v1523
  %v1580 = vunpack.c.l.bf16 %v1524
  %v1581 = vunpack.c.l.bf16 %v1525
  %v1582 = vunpack.c.l.bf16 %v1526
  %v1583 = vunpack.c.l.bf16 %v1527
  %v1584 = vunpack.c.l.bf16 %v1528
  %v1585 = vunpack.c.l.bf16 %v1529
  %v1586 = vunpack.c.l.bf16 %v1530
  %v1587 = vunpack.c.l.bf16 %v1531
  %v1588 = vunpack.c.l.bf16 %v1532
  %v1589 = vunpack.c.l.bf16 %v1533
  %v1590 = vunpack.c.l.bf16 %v1534
  %v1591 = vunpack.c.l.bf16 %v1535
  %v1592 = vunpack.c.l.bf16 %v1536
  %v1593 = vunpack.c.l.bf16 %v1537
  %v1594 = vunpack.c.l.bf16 %v1538
  %v1595 = vunpack.c.l.bf16 %v1539
  %v1596 = vunpack.c.l.bf16 %v1540
  %v1597 = vunpack.c.l.bf16 %v1541
  %v1598 = vunpack.c.l.bf16 %v1542
  %v1599 = vunpack.c.l.bf16 %v1543
  %v1600 = vunpack.c.l.bf16 %v1544
  %v1601 = vunpack.c.l.bf16 %v1545
  %v1602 = vunpack.c.l.bf16 %v1546
  %v1603 = vunpack.c.l.bf16 %v1547
  %v1604 = vunpack.c.l.bf16 %v1548
  %v1605 = vunpack.c.l.bf16 %v1549
  %v1606 = vunpack.c.l.bf16 %v1550
  %v1607 = vunpack.c.l.bf16 %v1551
  %v1608 = vunpack.c.l.bf16 %v1552
  %v1609 = vunpack.c.l.bf16 %v1553
  %v1610 = vunpack.c.l.bf16 %v1554
  %v1611 = vunpack.c.l.bf16 %v1555
  %v1612 = vunpack.c.l.bf16 %v1556
  %v1613 = vunpack.c.l.bf16 %v1557
  %v1614 = vunpack.c.l.bf16 %v1558
  %v1615 = vunpack.c.l.bf16 %v1559
  %v1616 = vunpack.c.l.bf16 %v1560
  %v1617 = vunpack.c.l.bf16 %v1561
  %v1618 = vunpack.c.l.bf16 %v1562
  %v1619 = vunpack.c.l.bf16 %v1563
  %v1620 = vunpack.c.l.bf16 %v1564
  %v1621 = vunpack.c.l.bf16 %v1565
  %v1622 = vunpack.c.l.bf16 %v1566
  %v1623 = vunpack.c.l.bf16 %v1567
  %v1624 = vunpack.c.l.bf16 %v1568
  %v1625 = vunpack.c.l.bf16 %v1569
  %v1627 = vsel %vm561, %v1625, 0
  %1629 = vmatprep.subr.mxu0 0.0
  %1630 = vmatpush1.msra.mxu0 %v1570
  %1631 = vmatprep.subr.mxu0 0.0
  %1632 = vmatpush1.msra.mxu0 %v1571
  %1633 = vmatprep.subr.mxu0 0.0
  %1634 = vmatpush1.msra.mxu0 %v1572
  %1635 = vmatprep.subr.mxu0 0.0
  %1636 = vmatpush1.msra.mxu0 %v1573
  %1637 = vmatprep.subr.mxu0 0.0
  %1638 = vmatpush1.msra.mxu0 %v1574
  %1639 = vmatprep.subr.mxu0 0.0
  %1640 = vmatpush1.msra.mxu0 %v1575
  %1641 = vmatprep.subr.mxu0 0.0
  %1642 = vmatpush1.msra.mxu0 %v1576
  %1643 = vmatprep.subr.mxu0 0.0
  %1644 = vmatpush1.msra.mxu0 %v1577
  %1645 = vmatprep.subr.mxu0 0.0
  %1646 = vmatpush1.msra.mxu0 %v1578
  %1647 = vmatprep.subr.mxu0 0.0
  %1648 = vmatpush1.msra.mxu0 %v1579
  %1649 = vmatprep.subr.mxu0 0.0
  %1650 = vmatpush1.msra.mxu0 %v1580
  %1651 = vmatprep.subr.mxu0 0.0
  %1652 = vmatpush1.msra.mxu0 %v1581
  %1653 = vmatprep.subr.mxu0 0.0
  %1654 = vmatpush1.msra.mxu0 %v1582
  %1655 = vmatprep.subr.mxu0 0.0
  %1656 = vmatpush1.msra.mxu0 %v1583
  %1657 = vmatprep.subr.mxu0 0.0
  %1658 = vmatpush1.msra.mxu0 %v1584
  %1659 = vmatprep.subr.mxu0 0.0
  %1660 = vmatpush1.msra.mxu0 %v1585
  %1661 = vmatprep.subr.mxu0 0.0
  %1662 = vmatpush1.msra.mxu0 %v1586
  %1663 = vmatprep.subr.mxu0 0.0
  %1664 = vmatpush1.msra.mxu0 %v1587
  %1665 = vmatprep.subr.mxu0 0.0
  %1666 = vmatpush1.msra.mxu0 %v1588
  %1667 = vmatprep.subr.mxu0 0.0
  %1668 = vmatpush1.msra.mxu0 %v1589
  %1669 = vmatprep.subr.mxu0 0.0
  %1670 = vmatpush1.msra.mxu0 %v1590
  %1671 = vmatprep.subr.mxu0 0.0
  %1672 = vmatpush1.msra.mxu0 %v1591
  %1673 = vmatprep.subr.mxu0 0.0
  %1674 = vmatpush1.msra.mxu0 %v1592
  %1675 = vmatprep.subr.mxu0 0.0
  %1676 = vmatpush1.msra.mxu0 %v1593
  %1677 = vmatprep.subr.mxu0 0.0
  %1678 = vmatpush1.msra.mxu0 %v1594
  %1679 = vmatprep.subr.mxu0 0.0
  %1680 = vmatpush1.msra.mxu0 %v1595
  %1681 = vmatprep.subr.mxu0 0.0
  %1682 = vmatpush1.msra.mxu0 %v1596
  %1683 = vmatprep.subr.mxu0 0.0
  %1684 = vmatpush1.msra.mxu0 %v1597
  %1685 = vmatprep.subr.mxu0 0.0
  %1686 = vmatpush1.msra.mxu0 %v1598
  %1687 = vmatprep.subr.mxu0 0.0
  %1688 = vmatpush1.msra.mxu0 %v1599
  %1689 = vmatprep.subr.mxu0 0.0
  %1690 = vmatpush1.msra.mxu0 %v1600
  %1691 = vmatprep.subr.mxu0 0.0
  %1692 = vmatpush1.msra.mxu0 %v1601
  %1693 = vmatprep.mubr.f32.mxu0 %v436
  %1694 = vmatmul.mubr.f32.gmra.mrb[0].mxu0 %v435
  %v1695 = vpop.f32.mrb[0].mxu0
  %v1696 = vadd.f32 0.0, %v1695
  %v1697 = vpop.f32.mrb[0].mxu0
  %1698 = vmatprep.mubr.f32.mxu0 %v440
  %1699 = vmatmul.mubr.f32.gmra.mrb[0].mxu0 %v439
  %v1700 = vpop.f32.mrb[0].mxu0
  %v1701 = vadd.f32 0.0, %v1700
  %v1702 = vpop.f32.mrb[0].mxu0
  %1703 = vdwg.mxu0
  %1704 = vmatprep.subr.mxu0 0.0
  %1705 = vmatpush1.msra.mxu0 %v1602
  %1706 = vmatprep.subr.mxu0 0.0
  %1707 = vmatpush1.msra.mxu0 %v1603
  %1708 = vmatprep.subr.mxu0 0.0
  %1709 = vmatpush1.msra.mxu0 %v1604
  %1710 = vmatprep.subr.mxu0 0.0
  %1711 = vmatpush1.msra.mxu0 %v1605
  %1712 = vmatprep.subr.mxu0 0.0
  %1713 = vmatpush1.msra.mxu0 %v1606
  %1714 = vmatprep.subr.mxu0 0.0
  %1715 = vmatpush1.msra.mxu0 %v1607
  %1716 = vmatprep.subr.mxu0 0.0
  %1717 = vmatpush1.msra.mxu0 %v1608
  %1718 = vmatprep.subr.mxu0 0.0
  %1719 = vmatpush1.msra.mxu0 %v1609
  %1720 = vmatprep.subr.mxu0 0.0
  %1721 = vmatpush1.msra.mxu0 %v1610
  %1722 = vmatprep.subr.mxu0 0.0
  %1723 = vmatpush1.msra.mxu0 %v1611
  %1724 = vmatprep.subr.mxu0 0.0
  %1725 = vmatpush1.msra.mxu0 %v1612
  %1726 = vmatprep.subr.mxu0 0.0
  %1727 = vmatpush1.msra.mxu0 %v1613
  %1728 = vmatprep.subr.mxu0 0.0
  %1729 = vmatpush1.msra.mxu0 %v1614
  %1730 = vmatprep.subr.mxu0 0.0
  %1731 = vmatpush1.msra.mxu0 %v1615
  %1732 = vmatprep.subr.mxu0 0.0
  %1733 = vmatpush1.msra.mxu0 %v1616
  %1734 = vmatprep.subr.mxu0 0.0
  %1735 = vmatpush1.msra.mxu0 %v1617
  %1736 = vmatprep.subr.mxu0 0.0
  %1737 = vmatpush1.msra.mxu0 %v1618
  %1738 = vmatprep.subr.mxu0 0.0
  %1739 = vmatpush1.msra.mxu0 %v1619
  %1740 = vmatprep.subr.mxu0 0.0
  %1741 = vmatpush1.msra.mxu0 %v1620
  %1742 = vmatprep.subr.mxu0 0.0
  %1743 = vmatpush1.msra.mxu0 %v1621
  %1744 = vmatprep.subr.mxu0 0.0
  %1745 = vmatpush1.msra.mxu0 %v1622
  %1746 = vmatprep.subr.mxu0 0.0
  %1747 = vmatpush1.msra.mxu0 %v1623
  %1748 = vmatprep.subr.mxu0 0.0
  %1749 = vmatpush1.msra.mxu0 %v1624
  %1750 = vmatprep.subr.mxu0 0.0
  %1751 = vmatpush1.msra.mxu0 %v1627
  %1752 = vmatprep.subr.mxu0 0.0
  %1753 = vmatpush1.msra.mxu0 0.0
  %1754 = vmatprep.subr.mxu0 0.0
  %1755 = vmatpush1.msra.mxu0 0.0
  %1756 = vmatprep.subr.mxu0 0.0
  %1757 = vmatpush1.msra.mxu0 0.0
  %1758 = vmatprep.subr.mxu0 0.0
  %1759 = vmatpush1.msra.mxu0 0.0
  %1760 = vmatprep.subr.mxu0 0.0
  %1761 = vmatpush1.msra.mxu0 0.0
  %1762 = vmatprep.subr.mxu0 0.0
  %1763 = vmatpush1.msra.mxu0 0.0
  %1764 = vmatprep.subr.mxu0 0.0
  %1765 = vmatpush1.msra.mxu0 0.0
  %1766 = vmatprep.subr.mxu0 0.0
  %1767 = vmatpush1.msra.mxu0 0.0
  %1768 = vmatprep.mubr.f32.mxu0 %v556
  %1769 = vmatmul.mubr.f32.gmra.mrb[0].mxu0 %v437
  %v1770 = vpop.f32.mrb[0].mxu0
  %v1771 = vadd.f32 %v1696, %v1770
  %v1772 = vpop.f32.mrb[0].mxu0
  %1773 = vmatprep.mubr.f32.mxu0 %v559
  %1774 = vmatmul.mubr.f32.gmra.mrb[0].mxu0 %v441
  %v1775 = vpop.f32.mrb[0].mxu0
  %v1776 = vadd.f32 %v1701, %v1775
  %v1777 = vpop.f32.mrb[0].mxu0
  %1778 = vdwg.mxu0
  %s1779 = scalar_lea.vmem %s5, 1120
  %v1780 = vld [vmem:[%s1779] sm:$0xf]
  %v1781 = vld [vmem:[%s1779 + $0x4] sm:$0xf]
  %v1782 = vld [vmem:[%s1779 + $0x8] sm:$0xf]
  %v1783 = vld [vmem:[%s1779 + $0xc] sm:$0xf]
  %v1784 = vld [vmem:[%s1779 + $0x10] sm:$0xf]
  %v1785 = vld [vmem:[%s1779 + $0x14] sm:$0xf]
  %v1786 = vld [vmem:[%s1779 + $0x18] sm:$0xf]
  %v1787 = vld [vmem:[%s1779 + $0x1c] sm:$0xf]
  %v1788 = vld [vmem:[%s1779 + $0x20] sm:$0xf]
  %v1789 = vld [vmem:[%s1779 + $0x24] sm:$0xf]
  %v1790 = vld [vmem:[%s1779 + $0x28] sm:$0xf]
  %v1791 = vld [vmem:[%s1779 + $0x2c] sm:$0xf]
  %v1792 = vld [vmem:[%s1779 + $0x30] sm:$0xf]
  %v1793 = vld [vmem:[%s1779 + $0x34] sm:$0xf]
  %v1794 = vld [vmem:[%s1779 + $0x38] sm:$0xf]
  %v1795 = vld [vmem:[%s1779 + $0x3c] sm:$0xf]
  %v1796 = vld [vmem:[%s1779 + $0x40] sm:$0xf]
  %v1797 = vld [vmem:[%s1779 + $0x44] sm:$0xf]
  %v1798 = vld [vmem:[%s1779 + $0x48] sm:$0xf]
  %v1799 = vld [vmem:[%s1779 + $0x4c] sm:$0xf]
  %v1800 = vld [vmem:[%s1779 + $0x50] sm:$0xf]
  %v1801 = vld [vmem:[%s1779 + $0x54] sm:$0xf]
  %v1802 = vld [vmem:[%s1779 + $0x58] sm:$0xf]
  %v1803 = vld [vmem:[%s1779 + $0x5c] sm:$0xf]
  %v1804 = vld [vmem:[%s1779 + $0x60] sm:$0xf]
  %v1805 = vld [vmem:[%s1779 + $0x64] sm:$0xf]
  %v1806 = vld [vmem:[%s1779 + $0x68] sm:$0xf]
  %v1807 = vld [vmem:[%s1779 + $0x6c] sm:$0xf]
  %v1808 = vld [vmem:[%s1779 + $0x70] sm:$0xf]
  %v1809 = vld [vmem:[%s1779 + $0x74] sm:$0xf]
  %v1810 = vld [vmem:[%s1779 + $0x78] sm:$0xf]
  %v1811 = vld [vmem:[%s1779 + $0x7c] sm:$0xf]
  %v1812 = vld [vmem:[%s1779 + $0x80] sm:$0xf]
  %v1813 = vld [vmem:[%s1779 + $0x84] sm:$0xf]
  %v1814 = vld [vmem:[%s1779 + $0x88] sm:$0xf]
  %v1815 = vld [vmem:[%s1779 + $0x8c] sm:$0xf]
  %v1816 = vld [vmem:[%s1779 + $0x90] sm:$0xf]
  %v1817 = vld [vmem:[%s1779 + $0x94] sm:$0xf]
  %v1818 = vld [vmem:[%s1779 + $0x98] sm:$0xf]
  %v1819 = vld [vmem:[%s1779 + $0x9c] sm:$0xf]
  %v1820 = vld [vmem:[%s1779 + $0xa0] sm:$0xf]
  %v1821 = vld [vmem:[%s1779 + $0xa4] sm:$0xf]
  %v1822 = vld [vmem:[%s1779 + $0xa8] sm:$0xf]
  %v1823 = vld [vmem:[%s1779 + $0xac] sm:$0xf]
  %v1824 = vld [vmem:[%s1779 + $0xb0] sm:$0xf]
  %v1825 = vld [vmem:[%s1779 + $0xb4] sm:$0xf]
  %v1826 = vld [vmem:[%s1779 + $0xb8] sm:$0xf]
  %v1827 = vld [vmem:[%s1779 + $0xbc] sm:$0xf]
  %v1828 = vld [vmem:[%s1779 + $0xc0] sm:$0xf]
  %v1829 = vld [vmem:[%s1779 + $0xc4] sm:$0xf]
  %v1830 = vld [vmem:[%s1779 + $0xc8] sm:$0xf]
  %v1831 = vld [vmem:[%s1779 + $0xcc] sm:$0xf]
  %v1832 = vld [vmem:[%s1779 + $0xd0] sm:$0xf]
  %v1833 = vld [vmem:[%s1779 + $0xd4] sm:$0xf]
  %v1834 = vld [vmem:[%s1779 + $0xd8] sm:$0xf]
  %v1835 = vld [vmem:[%s1779 + $0xdc] sm:$0x1]
  %v1836 = vunpack.c.l.bf16 %v1780
  %v1837 = vunpack.c.l.bf16 %v1781
  %v1838 = vunpack.c.l.bf16 %v1782
  %v1839 = vunpack.c.l.bf16 %v1783
  %v1840 = vunpack.c.l.bf16 %v1784
  %v1841 = vunpack.c.l.bf16 %v1785
  %v1842 = vunpack.c.l.bf16 %v1786
  %v1843 = vunpack.c.l.bf16 %v1787
  %v1844 = vunpack.c.l.bf16 %v1788
  %v1845 = vunpack.c.l.bf16 %v1789
  %v1846 = vunpack.c.l.bf16 %v1790
  %v1847 = vunpack.c.l.bf16 %v1791
  %v1848 = vunpack.c.l.bf16 %v1792
  %v1849 = vunpack.c.l.bf16 %v1793
  %v1850 = vunpack.c.l.bf16 %v1794
  %v1851 = vunpack.c.l.bf16 %v1795
  %v1852 = vunpack.c.l.bf16 %v1796
  %v1853 = vunpack.c.l.bf16 %v1797
  %v1854 = vunpack.c.l.bf16 %v1798
  %v1855 = vunpack.c.l.bf16 %v1799
  %v1856 = vunpack.c.l.bf16 %v1800
  %v1857 = vunpack.c.l.bf16 %v1801
  %v1858 = vunpack.c.l.bf16 %v1802
  %v1859 = vunpack.c.l.bf16 %v1803
  %v1860 = vunpack.c.l.bf16 %v1804
  %v1861 = vunpack.c.l.bf16 %v1805
  %v1862 = vunpack.c.l.bf16 %v1806
  %v1863 = vunpack.c.l.bf16 %v1807
  %v1864 = vunpack.c.l.bf16 %v1808
  %v1865 = vunpack.c.l.bf16 %v1809
  %v1866 = vunpack.c.l.bf16 %v1810
  %v1867 = vunpack.c.l.bf16 %v1811
  %v1868 = vunpack.c.l.bf16 %v1812
  %v1869 = vunpack.c.l.bf16 %v1813
  %v1870 = vunpack.c.l.bf16 %v1814
  %v1871 = vunpack.c.l.bf16 %v1815
  %v1872 = vunpack.c.l.bf16 %v1816
  %v1873 = vunpack.c.l.bf16 %v1817
  %v1874 = vunpack.c.l.bf16 %v1818
  %v1875 = vunpack.c.l.bf16 %v1819
  %v1876 = vunpack.c.l.bf16 %v1820
  %v1877 = vunpack.c.l.bf16 %v1821
  %v1878 = vunpack.c.l.bf16 %v1822
  %v1879 = vunpack.c.l.bf16 %v1823
  %v1880 = vunpack.c.l.bf16 %v1824
  %v1881 = vunpack.c.l.bf16 %v1825
  %v1882 = vunpack.c.l.bf16 %v1826
  %v1883 = vunpack.c.l.bf16 %v1827
  %v1884 = vunpack.c.l.bf16 %v1828
  %v1885 = vunpack.c.l.bf16 %v1829
  %v1886 = vunpack.c.l.bf16 %v1830
  %v1887 = vunpack.c.l.bf16 %v1831
  %v1888 = vunpack.c.l.bf16 %v1832
  %v1889 = vunpack.c.l.bf16 %v1833
  %v1890 = vunpack.c.l.bf16 %v1834
  %v1891 = vunpack.c.l.bf16 %v1835
  %v1893 = vsel %vm561, %v1891, 0
  %1895 = vmatprep.subr.mxu0 0.0
  %1896 = vmatpush1.msra.mxu0 %v1836
  %1897 = vmatprep.subr.mxu0 0.0
  %1898 = vmatpush1.msra.mxu0 %v1837
  %1899 = vmatprep.subr.mxu0 0.0
  %1900 = vmatpush1.msra.mxu0 %v1838
  %1901 = vmatprep.subr.mxu0 0.0
  %1902 = vmatpush1.msra.mxu0 %v1839
  %1903 = vmatprep.subr.mxu0 0.0
  %1904 = vmatpush1.msra.mxu0 %v1840
  %1905 = vmatprep.subr.mxu0 0.0
  %1906 = vmatpush1.msra.mxu0 %v1841
  %1907 = vmatprep.subr.mxu0 0.0
  %1908 = vmatpush1.msra.mxu0 %v1842
  %1909 = vmatprep.subr.mxu0 0.0
  %1910 = vmatpush1.msra.mxu0 %v1843
  %1911 = vmatprep.subr.mxu0 0.0
  %1912 = vmatpush1.msra.mxu0 %v1844
  %1913 = vmatprep.subr.mxu0 0.0
  %1914 = vmatpush1.msra.mxu0 %v1845
  %1915 = vmatprep.subr.mxu0 0.0
  %1916 = vmatpush1.msra.mxu0 %v1846
  %1917 = vmatprep.subr.mxu0 0.0
  %1918 = vmatpush1.msra.mxu0 %v1847
  %1919 = vmatprep.subr.mxu0 0.0
  %1920 = vmatpush1.msra.mxu0 %v1848
  %1921 = vmatprep.subr.mxu0 0.0
  %1922 = vmatpush1.msra.mxu0 %v1849
  %1923 = vmatprep.subr.mxu0 0.0
  %1924 = vmatpush1.msra.mxu0 %v1850
  %1925 = vmatprep.subr.mxu0 0.0
  %1926 = vmatpush1.msra.mxu0 %v1851
  %1927 = vmatprep.subr.mxu0 0.0
  %1928 = vmatpush1.msra.mxu0 %v1852
  %1929 = vmatprep.subr.mxu0 0.0
  %1930 = vmatpush1.msra.mxu0 %v1853
  %1931 = vmatprep.subr.mxu0 0.0
  %1932 = vmatpush1.msra.mxu0 %v1854
  %1933 = vmatprep.subr.mxu0 0.0
  %1934 = vmatpush1.msra.mxu0 %v1855
  %1935 = vmatprep.subr.mxu0 0.0
  %1936 = vmatpush1.msra.mxu0 %v1856
  %1937 = vmatprep.subr.mxu0 0.0
  %1938 = vmatpush1.msra.mxu0 %v1857
  %1939 = vmatprep.subr.mxu0 0.0
  %1940 = vmatpush1.msra.mxu0 %v1858
  %1941 = vmatprep.subr.mxu0 0.0
  %1942 = vmatpush1.msra.mxu0 %v1859
  %1943 = vmatprep.subr.mxu0 0.0
  %1944 = vmatpush1.msra.mxu0 %v1860
  %1945 = vmatprep.subr.mxu0 0.0
  %1946 = vmatpush1.msra.mxu0 %v1861
  %1947 = vmatprep.subr.mxu0 0.0
  %1948 = vmatpush1.msra.mxu0 %v1862
  %1949 = vmatprep.subr.mxu0 0.0
  %1950 = vmatpush1.msra.mxu0 %v1863
  %1951 = vmatprep.subr.mxu0 0.0
  %1952 = vmatpush1.msra.mxu0 %v1864
  %1953 = vmatprep.subr.mxu0 0.0
  %1954 = vmatpush1.msra.mxu0 %v1865
  %1955 = vmatprep.subr.mxu0 0.0
  %1956 = vmatpush1.msra.mxu0 %v1866
  %1957 = vmatprep.subr.mxu0 0.0
  %1958 = vmatpush1.msra.mxu0 %v1867
  %1959 = vmatprep.mubr.f32.mxu0 %v436
  %1960 = vmatmul.mubr.f32.gmra.mrb[0].mxu0 %v435
  %v1961 = vpop.f32.mrb[0].mxu0
  %v1962 = vadd.f32 0.0, %v1961
  %v1963 = vpop.f32.mrb[0].mxu0
  %1964 = vmatprep.mubr.f32.mxu0 %v440
  %1965 = vmatmul.mubr.f32.gmra.mrb[0].mxu0 %v439
  %v1966 = vpop.f32.mrb[0].mxu0
  %v1967 = vadd.f32 0.0, %v1966
  %v1968 = vpop.f32.mrb[0].mxu0
  %1969 = vdwg.mxu0
  %1970 = vmatprep.subr.mxu0 0.0
  %1971 = vmatpush1.msra.mxu0 %v1868
  %1972 = vmatprep.subr.mxu0 0.0
  %1973 = vmatpush1.msra.mxu0 %v1869
  %1974 = vmatprep.subr.mxu0 0.0
  %1975 = vmatpush1.msra.mxu0 %v1870
  %1976 = vmatprep.subr.mxu0 0.0
  %1977 = vmatpush1.msra.mxu0 %v1871
  %1978 = vmatprep.subr.mxu0 0.0
  %1979 = vmatpush1.msra.mxu0 %v1872
  %1980 = vmatprep.subr.mxu0 0.0
  %1981 = vmatpush1.msra.mxu0 %v1873
  %1982 = vmatprep.subr.mxu0 0.0
  %1983 = vmatpush1.msra.mxu0 %v1874
  %1984 = vmatprep.subr.mxu0 0.0
  %1985 = vmatpush1.msra.mxu0 %v1875
  %1986 = vmatprep.subr.mxu0 0.0
  %1987 = vmatpush1.msra.mxu0 %v1876
  %1988 = vmatprep.subr.mxu0 0.0
  %1989 = vmatpush1.msra.mxu0 %v1877
  %1990 = vmatprep.subr.mxu0 0.0
  %1991 = vmatpush1.msra.mxu0 %v1878
  %1992 = vmatprep.subr.mxu0 0.0
  %1993 = vmatpush1.msra.mxu0 %v1879
  %1994 = vmatprep.subr.mxu0 0.0
  %1995 = vmatpush1.msra.mxu0 %v1880
  %1996 = vmatprep.subr.mxu0 0.0
  %1997 = vmatpush1.msra.mxu0 %v1881
  %1998 = vmatprep.subr.mxu0 0.0
  %1999 = vmatpush1.msra.mxu0 %v1882
  %2000 = vmatprep.subr.mxu0 0.0
  %2001 = vmatpush1.msra.mxu0 %v1883
  %2002 = vmatprep.subr.mxu0 0.0
  %2003 = vmatpush1.msra.mxu0 %v1884
  %2004 = vmatprep.subr.mxu0 0.0
  %2005 = vmatpush1.msra.mxu0 %v1885
  %2006 = vmatprep.subr.mxu0 0.0
  %2007 = vmatpush1.msra.mxu0 %v1886
  %2008 = vmatprep.subr.mxu0 0.0
  %2009 = vmatpush1.msra.mxu0 %v1887
  %2010 = vmatprep.subr.mxu0 0.0
  %2011 = vmatpush1.msra.mxu0 %v1888
  %2012 = vmatprep.subr.mxu0 0.0
  %2013 = vmatpush1.msra.mxu0 %v1889
  %2014 = vmatprep.subr.mxu0 0.0
  %2015 = vmatpush1.msra.mxu0 %v1890
  %2016 = vmatprep.subr.mxu0 0.0
  %2017 = vmatpush1.msra.mxu0 %v1893
  %2018 = vmatprep.subr.mxu0 0.0
  %2019 = vmatpush1.msra.mxu0 0.0
  %2020 = vmatprep.subr.mxu0 0.0
  %2021 = vmatpush1.msra.mxu0 0.0
  %2022 = vmatprep.subr.mxu0 0.0
  %2023 = vmatpush1.msra.mxu0 0.0
  %2024 = vmatprep.subr.mxu0 0.0
  %2025 = vmatpush1.msra.mxu0 0.0
  %2026 = vmatprep.subr.mxu0 0.0
  %2027 = vmatpush1.msra.mxu0 0.0
  %2028 = vmatprep.subr.mxu0 0.0
  %2029 = vmatpush1.msra.mxu0 0.0
  %2030 = vmatprep.subr.mxu0 0.0
  %2031 = vmatpush1.msra.mxu0 0.0
  %2032 = vmatprep.subr.mxu0 0.0
  %2033 = vmatpush1.msra.mxu0 0.0
  %2034 = vmatprep.mubr.f32.mxu0 %v556
  %2035 = vmatmul.mubr.f32.gmra.mrb[0].mxu0 %v437
  %v2036 = vpop.f32.mrb[0].mxu0
  %v2037 = vadd.f32 %v1962, %v2036
  %v2038 = vpop.f32.mrb[0].mxu0
  %2039 = vmatprep.mubr.f32.mxu0 %v559
  %2040 = vmatmul.mubr.f32.gmra.mrb[0].mxu0 %v441
  %v2041 = vpop.f32.mrb[0].mxu0
  %v2042 = vadd.f32 %v1967, %v2041
  %v2043 = vpop.f32.mrb[0].mxu0
  %2044 = vdwg.mxu0
  %s2045 = scalar_lea.vmem %s5, 1344
  %v2046 = vld [vmem:[%s2045] sm:$0xf]
  %v2047 = vld [vmem:[%s2045 + $0x4] sm:$0xf]
  %v2048 = vld [vmem:[%s2045 + $0x8] sm:$0xf]
  %v2049 = vld [vmem:[%s2045 + $0xc] sm:$0xf]
  %v2050 = vld [vmem:[%s2045 + $0x10] sm:$0xf]
  %v2051 = vld [vmem:[%s2045 + $0x14] sm:$0xf]
  %v2052 = vld [vmem:[%s2045 + $0x18] sm:$0xf]
  %v2053 = vld [vmem:[%s2045 + $0x1c] sm:$0xf]
  %v2054 = vld [vmem:[%s2045 + $0x20] sm:$0xf]
  %v2055 = vld [vmem:[%s2045 + $0x24] sm:$0xf]
  %v2056 = vld [vmem:[%s2045 + $0x28] sm:$0xf]
  %v2057 = vld [vmem:[%s2045 + $0x2c] sm:$0xf]
  %v2058 = vld [vmem:[%s2045 + $0x30] sm:$0xf]
  %v2059 = vld [vmem:[%s2045 + $0x34] sm:$0xf]
  %v2060 = vld [vmem:[%s2045 + $0x38] sm:$0xf]
  %v2061 = vld [vmem:[%s2045 + $0x3c] sm:$0xf]
  %v2062 = vld [vmem:[%s2045 + $0x40] sm:$0xf]
  %v2063 = vld [vmem:[%s2045 + $0x44] sm:$0xf]
  %v2064 = vld [vmem:[%s2045 + $0x48] sm:$0xf]
  %v2065 = vld [vmem:[%s2045 + $0x4c] sm:$0xf]
  %v2066 = vld [vmem:[%s2045 + $0x50] sm:$0xf]
  %v2067 = vld [vmem:[%s2045 + $0x54] sm:$0xf]
  %v2068 = vld [vmem:[%s2045 + $0x58] sm:$0xf]
  %v2069 = vld [vmem:[%s2045 + $0x5c] sm:$0xf]
  %v2070 = vld [vmem:[%s2045 + $0x60] sm:$0xf]
  %v2071 = vld [vmem:[%s2045 + $0x64] sm:$0xf]
  %v2072 = vld [vmem:[%s2045 + $0x68] sm:$0xf]
  %v2073 = vld [vmem:[%s2045 + $0x6c] sm:$0xf]
  %v2074 = vld [vmem:[%s2045 + $0x70] sm:$0xf]
  %v2075 = vld [vmem:[%s2045 + $0x74] sm:$0xf]
  %v2076 = vld [vmem:[%s2045 + $0x78] sm:$0xf]
  %v2077 = vld [vmem:[%s2045 + $0x7c] sm:$0xf]
  %v2078 = vld [vmem:[%s2045 + $0x80] sm:$0xf]
  %v2079 = vld [vmem:[%s2045 + $0x84] sm:$0xf]
  %v2080 = vld [vmem:[%s2045 + $0x88] sm:$0xf]
  %v2081 = vld [vmem:[%s2045 + $0x8c] sm:$0xf]
  %v2082 = vld [vmem:[%s2045 + $0x90] sm:$0xf]
  %v2083 = vld [vmem:[%s2045 + $0x94] sm:$0xf]
  %v2084 = vld [vmem:[%s2045 + $0x98] sm:$0xf]
  %v2085 = vld [vmem:[%s2045 + $0x9c] sm:$0xf]
  %v2086 = vld [vmem:[%s2045 + $0xa0] sm:$0xf]
  %v2087 = vld [vmem:[%s2045 + $0xa4] sm:$0xf]
  %v2088 = vld [vmem:[%s2045 + $0xa8] sm:$0xf]
  %v2089 = vld [vmem:[%s2045 + $0xac] sm:$0xf]
  %v2090 = vld [vmem:[%s2045 + $0xb0] sm:$0xf]
  %v2091 = vld [vmem:[%s2045 + $0xb4] sm:$0xf]
  %v2092 = vld [vmem:[%s2045 + $0xb8] sm:$0xf]
  %v2093 = vld [vmem:[%s2045 + $0xbc] sm:$0xf]
  %v2094 = vld [vmem:[%s2045 + $0xc0] sm:$0xf]
  %v2095 = vld [vmem:[%s2045 + $0xc4] sm:$0xf]
  %v2096 = vld [vmem:[%s2045 + $0xc8] sm:$0xf]
  %v2097 = vld [vmem:[%s2045 + $0xcc] sm:$0xf]
  %v2098 = vld [vmem:[%s2045 + $0xd0] sm:$0xf]
  %v2099 = vld [vmem:[%s2045 + $0xd4] sm:$0xf]
  %v2100 = vld [vmem:[%s2045 + $0xd8] sm:$0xf]
  %v2101 = vld [vmem:[%s2045 + $0xdc] sm:$0x1]
  %v2102 = vunpack.c.l.bf16 %v2046
  %v2103 = vunpack.c.l.bf16 %v2047
  %v2104 = vunpack.c.l.bf16 %v2048
  %v2105 = vunpack.c.l.bf16 %v2049
  %v2106 = vunpack.c.l.bf16 %v2050
  %v2107 = vunpack.c.l.bf16 %v2051
  %v2108 = vunpack.c.l.bf16 %v2052
  %v2109 = vunpack.c.l.bf16 %v2053
  %v2110 = vunpack.c.l.bf16 %v2054
  %v2111 = vunpack.c.l.bf16 %v2055
  %v2112 = vunpack.c.l.bf16 %v2056
  %v2113 = vunpack.c.l.bf16 %v2057
  %v2114 = vunpack.c.l.bf16 %v2058
  %v2115 = vunpack.c.l.bf16 %v2059
  %v2116 = vunpack.c.l.bf16 %v2060
  %v2117 = vunpack.c.l.bf16 %v2061
  %v2118 = vunpack.c.l.bf16 %v2062
  %v2119 = vunpack.c.l.bf16 %v2063
  %v2120 = vunpack.c.l.bf16 %v2064
  %v2121 = vunpack.c.l.bf16 %v2065
  %v2122 = vunpack.c.l.bf16 %v2066
  %v2123 = vunpack.c.l.bf16 %v2067
  %v2124 = vunpack.c.l.bf16 %v2068
  %v2125 = vunpack.c.l.bf16 %v2069
  %v2126 = vunpack.c.l.bf16 %v2070
  %v2127 = vunpack.c.l.bf16 %v2071
  %v2128 = vunpack.c.l.bf16 %v2072
  %v2129 = vunpack.c.l.bf16 %v2073
  %v2130 = vunpack.c.l.bf16 %v2074
  %v2131 = vunpack.c.l.bf16 %v2075
  %v2132 = vunpack.c.l.bf16 %v2076
  %v2133 = vunpack.c.l.bf16 %v2077
  %v2134 = vunpack.c.l.bf16 %v2078
  %v2135 = vunpack.c.l.bf16 %v2079
  %v2136 = vunpack.c.l.bf16 %v2080
  %v2137 = vunpack.c.l.bf16 %v2081
  %v2138 = vunpack.c.l.bf16 %v2082
  %v2139 = vunpack.c.l.bf16 %v2083
  %v2140 = vunpack.c.l.bf16 %v2084
  %v2141 = vunpack.c.l.bf16 %v2085
  %v2142 = vunpack.c.l.bf16 %v2086
  %v2143 = vunpack.c.l.bf16 %v2087
  %v2144 = vunpack.c.l.bf16 %v2088
  %v2145 = vunpack.c.l.bf16 %v2089
  %v2146 = vunpack.c.l.bf16 %v2090
  %v2147 = vunpack.c.l.bf16 %v2091
  %v2148 = vunpack.c.l.bf16 %v2092
  %v2149 = vunpack.c.l.bf16 %v2093
  %v2150 = vunpack.c.l.bf16 %v2094
  %v2151 = vunpack.c.l.bf16 %v2095
  %v2152 = vunpack.c.l.bf16 %v2096
  %v2153 = vunpack.c.l.bf16 %v2097
  %v2154 = vunpack.c.l.bf16 %v2098
  %v2155 = vunpack.c.l.bf16 %v2099
  %v2156 = vunpack.c.l.bf16 %v2100
  %v2157 = vunpack.c.l.bf16 %v2101
  %v2159 = vsel %vm561, %v2157, 0
  %2161 = vmatprep.subr.mxu0 0.0
  %2162 = vmatpush1.msra.mxu0 %v2102
  %2163 = vmatprep.subr.mxu0 0.0
  %2164 = vmatpush1.msra.mxu0 %v2103
  %2165 = vmatprep.subr.mxu0 0.0
  %2166 = vmatpush1.msra.mxu0 %v2104
  %2167 = vmatprep.subr.mxu0 0.0
  %2168 = vmatpush1.msra.mxu0 %v2105
  %2169 = vmatprep.subr.mxu0 0.0
  %2170 = vmatpush1.msra.mxu0 %v2106
  %2171 = vmatprep.subr.mxu0 0.0
  %2172 = vmatpush1.msra.mxu0 %v2107
  %2173 = vmatprep.subr.mxu0 0.0
  %2174 = vmatpush1.msra.mxu0 %v2108
  %2175 = vmatprep.subr.mxu0 0.0
  %2176 = vmatpush1.msra.mxu0 %v2109
  %2177 = vmatprep.subr.mxu0 0.0
  %2178 = vmatpush1.msra.mxu0 %v2110
  %2179 = vmatprep.subr.mxu0 0.0
  %2180 = vmatpush1.msra.mxu0 %v2111
  %2181 = vmatprep.subr.mxu0 0.0
  %2182 = vmatpush1.msra.mxu0 %v2112
  %2183 = vmatprep.subr.mxu0 0.0
  %2184 = vmatpush1.msra.mxu0 %v2113
  %2185 = vmatprep.subr.mxu0 0.0
  %2186 = vmatpush1.msra.mxu0 %v2114
  %2187 = vmatprep.subr.mxu0 0.0
  %2188 = vmatpush1.msra.mxu0 %v2115
  %2189 = vmatprep.subr.mxu0 0.0
  %2190 = vmatpush1.msra.mxu0 %v2116
  %2191 = vmatprep.subr.mxu0 0.0
  %2192 = vmatpush1.msra.mxu0 %v2117
  %2193 = vmatprep.subr.mxu0 0.0
  %2194 = vmatpush1.msra.mxu0 %v2118
  %2195 = vmatprep.subr.mxu0 0.0
  %2196 = vmatpush1.msra.mxu0 %v2119
  %2197 = vmatprep.subr.mxu0 0.0
  %2198 = vmatpush1.msra.mxu0 %v2120
  %2199 = vmatprep.subr.mxu0 0.0
  %2200 = vmatpush1.msra.mxu0 %v2121
  %2201 = vmatprep.subr.mxu0 0.0
  %2202 = vmatpush1.msra.mxu0 %v2122
  %2203 = vmatprep.subr.mxu0 0.0
  %2204 = vmatpush1.msra.mxu0 %v2123
  %2205 = vmatprep.subr.mxu0 0.0
  %2206 = vmatpush1.msra.mxu0 %v2124
  %2207 = vmatprep.subr.mxu0 0.0
  %2208 = vmatpush1.msra.mxu0 %v2125
  %2209 = vmatprep.subr.mxu0 0.0
  %2210 = vmatpush1.msra.mxu0 %v2126
  %2211 = vmatprep.subr.mxu0 0.0
  %2212 = vmatpush1.msra.mxu0 %v2127
  %2213 = vmatprep.subr.mxu0 0.0
  %2214 = vmatpush1.msra.mxu0 %v2128
  %2215 = vmatprep.subr.mxu0 0.0
  %2216 = vmatpush1.msra.mxu0 %v2129
  %2217 = vmatprep.subr.mxu0 0.0
  %2218 = vmatpush1.msra.mxu0 %v2130
  %2219 = vmatprep.subr.mxu0 0.0
  %2220 = vmatpush1.msra.mxu0 %v2131
  %2221 = vmatprep.subr.mxu0 0.0
  %2222 = vmatpush1.msra.mxu0 %v2132
  %2223 = vmatprep.subr.mxu0 0.0
  %2224 = vmatpush1.msra.mxu0 %v2133
  %2225 = vmatprep.mubr.f32.mxu0 %v436
  %2226 = vmatmul.mubr.f32.gmra.mrb[0].mxu0 %v435
  %v2227 = vpop.f32.mrb[0].mxu0
  %v2228 = vadd.f32 0.0, %v2227
  %v2229 = vpop.f32.mrb[0].mxu0
  %2230 = vmatprep.mubr.f32.mxu0 %v440
  %2231 = vmatmul.mubr.f32.gmra.mrb[0].mxu0 %v439
  %v2232 = vpop.f32.mrb[0].mxu0
  %v2233 = vadd.f32 0.0, %v2232
  %v2234 = vpop.f32.mrb[0].mxu0
  %2235 = vdwg.mxu0
  %2236 = vmatprep.subr.mxu0 0.0
  %2237 = vmatpush1.msra.mxu0 %v2134
  %2238 = vmatprep.subr.mxu0 0.0
  %2239 = vmatpush1.msra.mxu0 %v2135
  %2240 = vmatprep.subr.mxu0 0.0
  %2241 = vmatpush1.msra.mxu0 %v2136
  %2242 = vmatprep.subr.mxu0 0.0
  %2243 = vmatpush1.msra.mxu0 %v2137
  %2244 = vmatprep.subr.mxu0 0.0
  %2245 = vmatpush1.msra.mxu0 %v2138
  %2246 = vmatprep.subr.mxu0 0.0
  %2247 = vmatpush1.msra.mxu0 %v2139
  %2248 = vmatprep.subr.mxu0 0.0
  %2249 = vmatpush1.msra.mxu0 %v2140
  %2250 = vmatprep.subr.mxu0 0.0
  %2251 = vmatpush1.msra.mxu0 %v2141
  %2252 = vmatprep.subr.mxu0 0.0
  %2253 = vmatpush1.msra.mxu0 %v2142
  %2254 = vmatprep.subr.mxu0 0.0
  %2255 = vmatpush1.msra.mxu0 %v2143
  %2256 = vmatprep.subr.mxu0 0.0
  %2257 = vmatpush1.msra.mxu0 %v2144
  %2258 = vmatprep.subr.mxu0 0.0
  %2259 = vmatpush1.msra.mxu0 %v2145
  %2260 = vmatprep.subr.mxu0 0.0
  %2261 = vmatpush1.msra.mxu0 %v2146
  %2262 = vmatprep.subr.mxu0 0.0
  %2263 = vmatpush1.msra.mxu0 %v2147
  %2264 = vmatprep.subr.mxu0 0.0
  %2265 = vmatpush1.msra.mxu0 %v2148
  %2266 = vmatprep.subr.mxu0 0.0
  %2267 = vmatpush1.msra.mxu0 %v2149
  %2268 = vmatprep.subr.mxu0 0.0
  %2269 = vmatpush1.msra.mxu0 %v2150
  %2270 = vmatprep.subr.mxu0 0.0
  %2271 = vmatpush1.msra.mxu0 %v2151
  %2272 = vmatprep.subr.mxu0 0.0
  %2273 = vmatpush1.msra.mxu0 %v2152
  %2274 = vmatprep.subr.mxu0 0.0
  %2275 = vmatpush1.msra.mxu0 %v2153
  %2276 = vmatprep.subr.mxu0 0.0
  %2277 = vmatpush1.msra.mxu0 %v2154
  %2278 = vmatprep.subr.mxu0 0.0
  %2279 = vmatpush1.msra.mxu0 %v2155
  %2280 = vmatprep.subr.mxu0 0.0
  %2281 = vmatpush1.msra.mxu0 %v2156
  %2282 = vmatprep.subr.mxu0 0.0
  %2283 = vmatpush1.msra.mxu0 %v2159
  %2284 = vmatprep.subr.mxu0 0.0
  %2285 = vmatpush1.msra.mxu0 0.0
  %2286 = vmatprep.subr.mxu0 0.0
  %2287 = vmatpush1.msra.mxu0 0.0
  %2288 = vmatprep.subr.mxu0 0.0
  %2289 = vmatpush1.msra.mxu0 0.0
  %2290 = vmatprep.subr.mxu0 0.0
  %2291 = vmatpush1.msra.mxu0 0.0
  %2292 = vmatprep.subr.mxu0 0.0
  %2293 = vmatpush1.msra.mxu0 0.0
  %2294 = vmatprep.subr.mxu0 0.0
  %2295 = vmatpush1.msra.mxu0 0.0
  %2296 = vmatprep.subr.mxu0 0.0
  %2297 = vmatpush1.msra.mxu0 0.0
  %2298 = vmatprep.subr.mxu0 0.0
  %2299 = vmatpush1.msra.mxu0 0.0
  %2300 = vmatprep.mubr.f32.mxu0 %v556
  %2301 = vmatmul.mubr.f32.gmra.mrb[0].mxu0 %v437
  %v2302 = vpop.f32.mrb[0].mxu0
  %v2303 = vadd.f32 %v2228, %v2302
  %v2304 = vpop.f32.mrb[0].mxu0
  %2305 = vmatprep.mubr.f32.mxu0 %v559
  %2306 = vmatmul.mubr.f32.gmra.mrb[0].mxu0 %v441
  %v2307 = vpop.f32.mrb[0].mxu0
  %v2308 = vadd.f32 %v2233, %v2307
  %v2309 = vpop.f32.mrb[0].mxu0
  %2310 = vdwg.mxu0
  %s2311 = scalar_lea.vmem %s5, 1568
  %v2312 = vld [vmem:[%s2311] sm:$0xf]
  %v2313 = vld [vmem:[%s2311 + $0x4] sm:$0xf]
  %v2314 = vld [vmem:[%s2311 + $0x8] sm:$0xf]
  %v2315 = vld [vmem:[%s2311 + $0xc] sm:$0xf]
  %v2316 = vld [vmem:[%s2311 + $0x10] sm:$0xf]
  %v2317 = vld [vmem:[%s2311 + $0x14] sm:$0xf]
  %v2318 = vld [vmem:[%s2311 + $0x18] sm:$0xf]
  %v2319 = vld [vmem:[%s2311 + $0x1c] sm:$0xf]
  %v2320 = vld [vmem:[%s2311 + $0x20] sm:$0xf]
  %v2321 = vld [vmem:[%s2311 + $0x24] sm:$0xf]
  %v2322 = vld [vmem:[%s2311 + $0x28] sm:$0xf]
  %v2323 = vld [vmem:[%s2311 + $0x2c] sm:$0xf]
  %v2324 = vld [vmem:[%s2311 + $0x30] sm:$0xf]
  %v2325 = vld [vmem:[%s2311 + $0x34] sm:$0xf]
  %v2326 = vld [vmem:[%s2311 + $0x38] sm:$0xf]
  %v2327 = vld [vmem:[%s2311 + $0x3c] sm:$0xf]
  %v2328 = vld [vmem:[%s2311 + $0x40] sm:$0xf]
  %v2329 = vld [vmem:[%s2311 + $0x44] sm:$0xf]
  %v2330 = vld [vmem:[%s2311 + $0x48] sm:$0xf]
  %v2331 = vld [vmem:[%s2311 + $0x4c] sm:$0xf]
  %v2332 = vld [vmem:[%s2311 + $0x50] sm:$0xf]
  %v2333 = vld [vmem:[%s2311 + $0x54] sm:$0xf]
  %v2334 = vld [vmem:[%s2311 + $0x58] sm:$0xf]
  %v2335 = vld [vmem:[%s2311 + $0x5c] sm:$0xf]
  %v2336 = vld [vmem:[%s2311 + $0x60] sm:$0xf]
  %v2337 = vld [vmem:[%s2311 + $0x64] sm:$0xf]
  %v2338 = vld [vmem:[%s2311 + $0x68] sm:$0xf]
  %v2339 = vld [vmem:[%s2311 + $0x6c] sm:$0xf]
  %v2340 = vld [vmem:[%s2311 + $0x70] sm:$0xf]
  %v2341 = vld [vmem:[%s2311 + $0x74] sm:$0xf]
  %v2342 = vld [vmem:[%s2311 + $0x78] sm:$0xf]
  %v2343 = vld [vmem:[%s2311 + $0x7c] sm:$0xf]
  %v2344 = vld [vmem:[%s2311 + $0x80] sm:$0xf]
  %v2345 = vld [vmem:[%s2311 + $0x84] sm:$0xf]
  %v2346 = vld [vmem:[%s2311 + $0x88] sm:$0xf]
  %v2347 = vld [vmem:[%s2311 + $0x8c] sm:$0xf]
  %v2348 = vld [vmem:[%s2311 + $0x90] sm:$0xf]
  %v2349 = vld [vmem:[%s2311 + $0x94] sm:$0xf]
  %v2350 = vld [vmem:[%s2311 + $0x98] sm:$0xf]
  %v2351 = vld [vmem:[%s2311 + $0x9c] sm:$0xf]
  %v2352 = vld [vmem:[%s2311 + $0xa0] sm:$0xf]
  %v2353 = vld [vmem:[%s2311 + $0xa4] sm:$0xf]
  %v2354 = vld [vmem:[%s2311 + $0xa8] sm:$0xf]
  %v2355 = vld [vmem:[%s2311 + $0xac] sm:$0xf]
  %v2356 = vld [vmem:[%s2311 + $0xb0] sm:$0xf]
  %v2357 = vld [vmem:[%s2311 + $0xb4] sm:$0xf]
  %v2358 = vld [vmem:[%s2311 + $0xb8] sm:$0xf]
  %v2359 = vld [vmem:[%s2311 + $0xbc] sm:$0xf]
  %v2360 = vld [vmem:[%s2311 + $0xc0] sm:$0xf]
  %v2361 = vld [vmem:[%s2311 + $0xc4] sm:$0xf]
  %v2362 = vld [vmem:[%s2311 + $0xc8] sm:$0xf]
  %v2363 = vld [vmem:[%s2311 + $0xcc] sm:$0xf]
  %v2364 = vld [vmem:[%s2311 + $0xd0] sm:$0xf]
  %v2365 = vld [vmem:[%s2311 + $0xd4] sm:$0xf]
  %v2366 = vld [vmem:[%s2311 + $0xd8] sm:$0xf]
  %v2367 = vld [vmem:[%s2311 + $0xdc] sm:$0x1]
  %v2368 = vunpack.c.l.bf16 %v2312
  %v2369 = vunpack.c.l.bf16 %v2313
  %v2370 = vunpack.c.l.bf16 %v2314
  %v2371 = vunpack.c.l.bf16 %v2315
  %v2372 = vunpack.c.l.bf16 %v2316
  %v2373 = vunpack.c.l.bf16 %v2317
  %v2374 = vunpack.c.l.bf16 %v2318
  %v2375 = vunpack.c.l.bf16 %v2319
  %v2376 = vunpack.c.l.bf16 %v2320
  %v2377 = vunpack.c.l.bf16 %v2321
  %v2378 = vunpack.c.l.bf16 %v2322
  %v2379 = vunpack.c.l.bf16 %v2323
  %v2380 = vunpack.c.l.bf16 %v2324
  %v2381 = vunpack.c.l.bf16 %v2325
  %v2382 = vunpack.c.l.bf16 %v2326
  %v2383 = vunpack.c.l.bf16 %v2327
  %v2384 = vunpack.c.l.bf16 %v2328
  %v2385 = vunpack.c.l.bf16 %v2329
  %v2386 = vunpack.c.l.bf16 %v2330
  %v2387 = vunpack.c.l.bf16 %v2331
  %v2388 = vunpack.c.l.bf16 %v2332
  %v2389 = vunpack.c.l.bf16 %v2333
  %v2390 = vunpack.c.l.bf16 %v2334
  %v2391 = vunpack.c.l.bf16 %v2335
  %v2392 = vunpack.c.l.bf16 %v2336
  %v2393 = vunpack.c.l.bf16 %v2337
  %v2394 = vunpack.c.l.bf16 %v2338
  %v2395 = vunpack.c.l.bf16 %v2339
  %v2396 = vunpack.c.l.bf16 %v2340
  %v2397 = vunpack.c.l.bf16 %v2341
  %v2398 = vunpack.c.l.bf16 %v2342
  %v2399 = vunpack.c.l.bf16 %v2343
  %v2400 = vunpack.c.l.bf16 %v2344
  %v2401 = vunpack.c.l.bf16 %v2345
  %v2402 = vunpack.c.l.bf16 %v2346
  %v2403 = vunpack.c.l.bf16 %v2347
  %v2404 = vunpack.c.l.bf16 %v2348
  %v2405 = vunpack.c.l.bf16 %v2349
  %v2406 = vunpack.c.l.bf16 %v2350
  %v2407 = vunpack.c.l.bf16 %v2351
  %v2408 = vunpack.c.l.bf16 %v2352
  %v2409 = vunpack.c.l.bf16 %v2353
  %v2410 = vunpack.c.l.bf16 %v2354
  %v2411 = vunpack.c.l.bf16 %v2355
  %v2412 = vunpack.c.l.bf16 %v2356
  %v2413 = vunpack.c.l.bf16 %v2357
  %v2414 = vunpack.c.l.bf16 %v2358
  %v2415 = vunpack.c.l.bf16 %v2359
  %v2416 = vunpack.c.l.bf16 %v2360
  %v2417 = vunpack.c.l.bf16 %v2361
  %v2418 = vunpack.c.l.bf16 %v2362
  %v2419 = vunpack.c.l.bf16 %v2363
  %v2420 = vunpack.c.l.bf16 %v2364
  %v2421 = vunpack.c.l.bf16 %v2365
  %v2422 = vunpack.c.l.bf16 %v2366
  %v2423 = vunpack.c.l.bf16 %v2367
  %v2425 = vsel %vm561, %v2423, 0
  %2427 = vmatprep.subr.mxu0 0.0
  %2428 = vmatpush1.msra.mxu0 %v2368
  %2429 = vmatprep.subr.mxu0 0.0
  %2430 = vmatpush1.msra.mxu0 %v2369
  %2431 = vmatprep.subr.mxu0 0.0
  %2432 = vmatpush1.msra.mxu0 %v2370
  %2433 = vmatprep.subr.mxu0 0.0
  %2434 = vmatpush1.msra.mxu0 %v2371
  %2435 = vmatprep.subr.mxu0 0.0
  %2436 = vmatpush1.msra.mxu0 %v2372
  %2437 = vmatprep.subr.mxu0 0.0
  %2438 = vmatpush1.msra.mxu0 %v2373
  %2439 = vmatprep.subr.mxu0 0.0
  %2440 = vmatpush1.msra.mxu0 %v2374
  %2441 = vmatprep.subr.mxu0 0.0
  %2442 = vmatpush1.msra.mxu0 %v2375
  %2443 = vmatprep.subr.mxu0 0.0
  %2444 = vmatpush1.msra.mxu0 %v2376
  %2445 = vmatprep.subr.mxu0 0.0
  %2446 = vmatpush1.msra.mxu0 %v2377
  %2447 = vmatprep.subr.mxu0 0.0
  %2448 = vmatpush1.msra.mxu0 %v2378
  %2449 = vmatprep.subr.mxu0 0.0
  %2450 = vmatpush1.msra.mxu0 %v2379
  %2451 = vmatprep.subr.mxu0 0.0
  %2452 = vmatpush1.msra.mxu0 %v2380
  %2453 = vmatprep.subr.mxu0 0.0
  %2454 = vmatpush1.msra.mxu0 %v2381
  %2455 = vmatprep.subr.mxu0 0.0
  %2456 = vmatpush1.msra.mxu0 %v2382
  %2457 = vmatprep.subr.mxu0 0.0
  %2458 = vmatpush1.msra.mxu0 %v2383
  %2459 = vmatprep.subr.mxu0 0.0
  %2460 = vmatpush1.msra.mxu0 %v2384
  %2461 = vmatprep.subr.mxu0 0.0
  %2462 = vmatpush1.msra.mxu0 %v2385
  %2463 = vmatprep.subr.mxu0 0.0
  %2464 = vmatpush1.msra.mxu0 %v2386
  %2465 = vmatprep.subr.mxu0 0.0
  %2466 = vmatpush1.msra.mxu0 %v2387
  %2467 = vmatprep.subr.mxu0 0.0
  %2468 = vmatpush1.msra.mxu0 %v2388
  %2469 = vmatprep.subr.mxu0 0.0
  %2470 = vmatpush1.msra.mxu0 %v2389
  %2471 = vmatprep.subr.mxu0 0.0
  %2472 = vmatpush1.msra.mxu0 %v2390
  %2473 = vmatprep.subr.mxu0 0.0
  %2474 = vmatpush1.msra.mxu0 %v2391
  %2475 = vmatprep.subr.mxu0 0.0
  %2476 = vmatpush1.msra.mxu0 %v2392
  %2477 = vmatprep.subr.mxu0 0.0
  %2478 = vmatpush1.msra.mxu0 %v2393
  %2479 = vmatprep.subr.mxu0 0.0
  %2480 = vmatpush1.msra.mxu0 %v2394
  %2481 = vmatprep.subr.mxu0 0.0
  %2482 = vmatpush1.msra.mxu0 %v2395
  %2483 = vmatprep.subr.mxu0 0.0
  %2484 = vmatpush1.msra.mxu0 %v2396
  %2485 = vmatprep.subr.mxu0 0.0
  %2486 = vmatpush1.msra.mxu0 %v2397
  %2487 = vmatprep.subr.mxu0 0.0
  %2488 = vmatpush1.msra.mxu0 %v2398
  %2489 = vmatprep.subr.mxu0 0.0
  %2490 = vmatpush1.msra.mxu0 %v2399
  %2491 = vmatprep.mubr.f32.mxu0 %v436
  %2492 = vmatmul.mubr.f32.gmra.mrb[0].mxu0 %v435
  %v2493 = vpop.f32.mrb[0].mxu0
  %v2494 = vadd.f32 0.0, %v2493
  %v2495 = vpop.f32.mrb[0].mxu0
  %2496 = vmatprep.mubr.f32.mxu0 %v440
  %2497 = vmatmul.mubr.f32.gmra.mrb[0].mxu0 %v439
  %v2498 = vpop.f32.mrb[0].mxu0
  %v2499 = vadd.f32 0.0, %v2498
  %v2500 = vpop.f32.mrb[0].mxu0
  %2501 = vdwg.mxu0
  %2502 = vmatprep.subr.mxu0 0.0
  %2503 = vmatpush1.msra.mxu0 %v2400
  %2504 = vmatprep.subr.mxu0 0.0
  %2505 = vmatpush1.msra.mxu0 %v2401
  %2506 = vmatprep.subr.mxu0 0.0
  %2507 = vmatpush1.msra.mxu0 %v2402
  %2508 = vmatprep.subr.mxu0 0.0
  %2509 = vmatpush1.msra.mxu0 %v2403
  %2510 = vmatprep.subr.mxu0 0.0
  %2511 = vmatpush1.msra.mxu0 %v2404
  %2512 = vmatprep.subr.mxu0 0.0
  %2513 = vmatpush1.msra.mxu0 %v2405
  %2514 = vmatprep.subr.mxu0 0.0
  %2515 = vmatpush1.msra.mxu0 %v2406
  %2516 = vmatprep.subr.mxu0 0.0
  %2517 = vmatpush1.msra.mxu0 %v2407
  %2518 = vmatprep.subr.mxu0 0.0
  %2519 = vmatpush1.msra.mxu0 %v2408
  %2520 = vmatprep.subr.mxu0 0.0
  %2521 = vmatpush1.msra.mxu0 %v2409
  %2522 = vmatprep.subr.mxu0 0.0
  %2523 = vmatpush1.msra.mxu0 %v2410
  %2524 = vmatprep.subr.mxu0 0.0
  %2525 = vmatpush1.msra.mxu0 %v2411
  %2526 = vmatprep.subr.mxu0 0.0
  %2527 = vmatpush1.msra.mxu0 %v2412
  %2528 = vmatprep.subr.mxu0 0.0
  %2529 = vmatpush1.msra.mxu0 %v2413
  %2530 = vmatprep.subr.mxu0 0.0
  %2531 = vmatpush1.msra.mxu0 %v2414
  %2532 = vmatprep.subr.mxu0 0.0
  %2533 = vmatpush1.msra.mxu0 %v2415
  %2534 = vmatprep.subr.mxu0 0.0
  %2535 = vmatpush1.msra.mxu0 %v2416
  %2536 = vmatprep.subr.mxu0 0.0
  %2537 = vmatpush1.msra.mxu0 %v2417
  %2538 = vmatprep.subr.mxu0 0.0
  %2539 = vmatpush1.msra.mxu0 %v2418
  %2540 = vmatprep.subr.mxu0 0.0
  %2541 = vmatpush1.msra.mxu0 %v2419
  %2542 = vmatprep.subr.mxu0 0.0
  %2543 = vmatpush1.msra.mxu0 %v2420
  %2544 = vmatprep.subr.mxu0 0.0
  %2545 = vmatpush1.msra.mxu0 %v2421
  %2546 = vmatprep.subr.mxu0 0.0
  %2547 = vmatpush1.msra.mxu0 %v2422
  %2548 = vmatprep.subr.mxu0 0.0
  %2549 = vmatpush1.msra.mxu0 %v2425
  %2550 = vmatprep.subr.mxu0 0.0
  %2551 = vmatpush1.msra.mxu0 0.0
  %2552 = vmatprep.subr.mxu0 0.0
  %2553 = vmatpush1.msra.mxu0 0.0
  %2554 = vmatprep.subr.mxu0 0.0
  %2555 = vmatpush1.msra.mxu0 0.0
  %2556 = vmatprep.subr.mxu0 0.0
  %2557 = vmatpush1.msra.mxu0 0.0
  %2558 = vmatprep.subr.mxu0 0.0
  %2559 = vmatpush1.msra.mxu0 0.0
  %2560 = vmatprep.subr.mxu0 0.0
  %2561 = vmatpush1.msra.mxu0 0.0
  %2562 = vmatprep.subr.mxu0 0.0
  %2563 = vmatpush1.msra.mxu0 0.0
  %2564 = vmatprep.subr.mxu0 0.0
  %2565 = vmatpush1.msra.mxu0 0.0
  %2566 = vmatprep.mubr.f32.mxu0 %v556
  %2567 = vmatmul.mubr.f32.gmra.mrb[0].mxu0 %v437
  %v2568 = vpop.f32.mrb[0].mxu0
  %v2569 = vadd.f32 %v2494, %v2568
  %v2570 = vpop.f32.mrb[0].mxu0
  %2571 = vmatprep.mubr.f32.mxu0 %v559
  %2572 = vmatmul.mubr.f32.gmra.mrb[0].mxu0 %v441
  %v2573 = vpop.f32.mrb[0].mxu0
  %v2574 = vadd.f32 %v2499, %v2573
  %v2575 = vpop.f32.mrb[0].mxu0
  %2576 = vdwg.mxu0
  %s2577 = scalar_lea.vmem %s5, 1792
  %v2578 = vld [vmem:[%s2577] sm:$0xf]
  %v2579 = vld [vmem:[%s2577 + $0x4] sm:$0xf]
  %v2580 = vld [vmem:[%s2577 + $0x8] sm:$0xf]
  %v2581 = vld [vmem:[%s2577 + $0xc] sm:$0xf]
  %v2582 = vld [vmem:[%s2577 + $0x10] sm:$0xf]
  %v2583 = vld [vmem:[%s2577 + $0x14] sm:$0xf]
  %v2584 = vld [vmem:[%s2577 + $0x18] sm:$0xf]
  %v2585 = vld [vmem:[%s2577 + $0x1c] sm:$0xf]
  %v2586 = vld [vmem:[%s2577 + $0x20] sm:$0xf]
  %v2587 = vld [vmem:[%s2577 + $0x24] sm:$0xf]
  %v2588 = vld [vmem:[%s2577 + $0x28] sm:$0xf]
  %v2589 = vld [vmem:[%s2577 + $0x2c] sm:$0xf]
  %v2590 = vld [vmem:[%s2577 + $0x30] sm:$0xf]
  %v2591 = vld [vmem:[%s2577 + $0x34] sm:$0xf]
  %v2592 = vld [vmem:[%s2577 + $0x38] sm:$0xf]
  %v2593 = vld [vmem:[%s2577 + $0x3c] sm:$0xf]
  %v2594 = vld [vmem:[%s2577 + $0x40] sm:$0xf]
  %v2595 = vld [vmem:[%s2577 + $0x44] sm:$0xf]
  %v2596 = vld [vmem:[%s2577 + $0x48] sm:$0xf]
  %v2597 = vld [vmem:[%s2577 + $0x4c] sm:$0xf]
  %v2598 = vld [vmem:[%s2577 + $0x50] sm:$0xf]
  %v2599 = vld [vmem:[%s2577 + $0x54] sm:$0xf]
  %v2600 = vld [vmem:[%s2577 + $0x58] sm:$0xf]
  %v2601 = vld [vmem:[%s2577 + $0x5c] sm:$0xf]
  %v2602 = vld [vmem:[%s2577 + $0x60] sm:$0xf]
  %v2603 = vld [vmem:[%s2577 + $0x64] sm:$0xf]
  %v2604 = vld [vmem:[%s2577 + $0x68] sm:$0xf]
  %v2605 = vld [vmem:[%s2577 + $0x6c] sm:$0xf]
  %v2606 = vld [vmem:[%s2577 + $0x70] sm:$0xf]
  %v2607 = vld [vmem:[%s2577 + $0x74] sm:$0xf]
  %v2608 = vld [vmem:[%s2577 + $0x78] sm:$0xf]
  %v2609 = vld [vmem:[%s2577 + $0x7c] sm:$0xf]
  %v2610 = vld [vmem:[%s2577 + $0x80] sm:$0xf]
  %v2611 = vld [vmem:[%s2577 + $0x84] sm:$0xf]
  %v2612 = vld [vmem:[%s2577 + $0x88] sm:$0xf]
  %v2613 = vld [vmem:[%s2577 + $0x8c] sm:$0xf]
  %v2614 = vld [vmem:[%s2577 + $0x90] sm:$0xf]
  %v2615 = vld [vmem:[%s2577 + $0x94] sm:$0xf]
  %v2616 = vld [vmem:[%s2577 + $0x98] sm:$0xf]
  %v2617 = vld [vmem:[%s2577 + $0x9c] sm:$0xf]
  %v2618 = vld [vmem:[%s2577 + $0xa0] sm:$0xf]
  %v2619 = vld [vmem:[%s2577 + $0xa4] sm:$0xf]
  %v2620 = vld [vmem:[%s2577 + $0xa8] sm:$0xf]
  %v2621 = vld [vmem:[%s2577 + $0xac] sm:$0xf]
  %v2622 = vld [vmem:[%s2577 + $0xb0] sm:$0xf]
  %v2623 = vld [vmem:[%s2577 + $0xb4] sm:$0xf]
  %v2624 = vld [vmem:[%s2577 + $0xb8] sm:$0xf]
  %v2625 = vld [vmem:[%s2577 + $0xbc] sm:$0xf]
  %v2626 = vld [vmem:[%s2577 + $0xc0] sm:$0xf]
  %v2627 = vld [vmem:[%s2577 + $0xc4] sm:$0xf]
  %v2628 = vld [vmem:[%s2577 + $0xc8] sm:$0xf]
  %v2629 = vld [vmem:[%s2577 + $0xcc] sm:$0xf]
  %v2630 = vld [vmem:[%s2577 + $0xd0] sm:$0xf]
  %v2631 = vld [vmem:[%s2577 + $0xd4] sm:$0xf]
  %v2632 = vld [vmem:[%s2577 + $0xd8] sm:$0xf]
  %v2633 = vld [vmem:[%s2577 + $0xdc] sm:$0x1]
  %v2634 = vunpack.c.l.bf16 %v2578
  %v2635 = vunpack.c.l.bf16 %v2579
  %v2636 = vunpack.c.l.bf16 %v2580
  %v2637 = vunpack.c.l.bf16 %v2581
  %v2638 = vunpack.c.l.bf16 %v2582
  %v2639 = vunpack.c.l.bf16 %v2583
  %v2640 = vunpack.c.l.bf16 %v2584
  %v2641 = vunpack.c.l.bf16 %v2585
  %v2642 = vunpack.c.l.bf16 %v2586
  %v2643 = vunpack.c.l.bf16 %v2587
  %v2644 = vunpack.c.l.bf16 %v2588
  %v2645 = vunpack.c.l.bf16 %v2589
  %v2646 = vunpack.c.l.bf16 %v2590
  %v2647 = vunpack.c.l.bf16 %v2591
  %v2648 = vunpack.c.l.bf16 %v2592
  %v2649 = vunpack.c.l.bf16 %v2593
  %v2650 = vunpack.c.l.bf16 %v2594
  %v2651 = vunpack.c.l.bf16 %v2595
  %v2652 = vunpack.c.l.bf16 %v2596
  %v2653 = vunpack.c.l.bf16 %v2597
  %v2654 = vunpack.c.l.bf16 %v2598
  %v2655 = vunpack.c.l.bf16 %v2599
  %v2656 = vunpack.c.l.bf16 %v2600
  %v2657 = vunpack.c.l.bf16 %v2601
  %v2658 = vunpack.c.l.bf16 %v2602
  %v2659 = vunpack.c.l.bf16 %v2603
  %v2660 = vunpack.c.l.bf16 %v2604
  %v2661 = vunpack.c.l.bf16 %v2605
  %v2662 = vunpack.c.l.bf16 %v2606
  %v2663 = vunpack.c.l.bf16 %v2607
  %v2664 = vunpack.c.l.bf16 %v2608
  %v2665 = vunpack.c.l.bf16 %v2609
  %v2666 = vunpack.c.l.bf16 %v2610
  %v2667 = vunpack.c.l.bf16 %v2611
  %v2668 = vunpack.c.l.bf16 %v2612
  %v2669 = vunpack.c.l.bf16 %v2613
  %v2670 = vunpack.c.l.bf16 %v2614
  %v2671 = vunpack.c.l.bf16 %v2615
  %v2672 = vunpack.c.l.bf16 %v2616
  %v2673 = vunpack.c.l.bf16 %v2617
  %v2674 = vunpack.c.l.bf16 %v2618
  %v2675 = vunpack.c.l.bf16 %v2619
  %v2676 = vunpack.c.l.bf16 %v2620
  %v2677 = vunpack.c.l.bf16 %v2621
  %v2678 = vunpack.c.l.bf16 %v2622
  %v2679 = vunpack.c.l.bf16 %v2623
  %v2680 = vunpack.c.l.bf16 %v2624
  %v2681 = vunpack.c.l.bf16 %v2625
  %v2682 = vunpack.c.l.bf16 %v2626
  %v2683 = vunpack.c.l.bf16 %v2627
  %v2684 = vunpack.c.l.bf16 %v2628
  %v2685 = vunpack.c.l.bf16 %v2629
  %v2686 = vunpack.c.l.bf16 %v2630
  %v2687 = vunpack.c.l.bf16 %v2631
  %v2688 = vunpack.c.l.bf16 %v2632
  %v2689 = vunpack.c.l.bf16 %v2633
  %v2691 = vsel %vm561, %v2689, 0
  %2693 = vmatprep.subr.mxu0 0.0
  %2694 = vmatpush1.msra.mxu0 %v2634
  %2695 = vmatprep.subr.mxu0 0.0
  %2696 = vmatpush1.msra.mxu0 %v2635
  %2697 = vmatprep.subr.mxu0 0.0
  %2698 = vmatpush1.msra.mxu0 %v2636
  %2699 = vmatprep.subr.mxu0 0.0
  %2700 = vmatpush1.msra.mxu0 %v2637
  %2701 = vmatprep.subr.mxu0 0.0
  %2702 = vmatpush1.msra.mxu0 %v2638
  %2703 = vmatprep.subr.mxu0 0.0
  %2704 = vmatpush1.msra.mxu0 %v2639
  %2705 = vmatprep.subr.mxu0 0.0
  %2706 = vmatpush1.msra.mxu0 %v2640
  %2707 = vmatprep.subr.mxu0 0.0
  %2708 = vmatpush1.msra.mxu0 %v2641
  %2709 = vmatprep.subr.mxu0 0.0
  %2710 = vmatpush1.msra.mxu0 %v2642
  %2711 = vmatprep.subr.mxu0 0.0
  %2712 = vmatpush1.msra.mxu0 %v2643
  %2713 = vmatprep.subr.mxu0 0.0
  %2714 = vmatpush1.msra.mxu0 %v2644
  %2715 = vmatprep.subr.mxu0 0.0
  %2716 = vmatpush1.msra.mxu0 %v2645
  %2717 = vmatprep.subr.mxu0 0.0
  %2718 = vmatpush1.msra.mxu0 %v2646
  %2719 = vmatprep.subr.mxu0 0.0
  %2720 = vmatpush1.msra.mxu0 %v2647
  %2721 = vmatprep.subr.mxu0 0.0
  %2722 = vmatpush1.msra.mxu0 %v2648
  %2723 = vmatprep.subr.mxu0 0.0
  %2724 = vmatpush1.msra.mxu0 %v2649
  %2725 = vmatprep.subr.mxu0 0.0
  %2726 = vmatpush1.msra.mxu0 %v2650
  %2727 = vmatprep.subr.mxu0 0.0
  %2728 = vmatpush1.msra.mxu0 %v2651
  %2729 = vmatprep.subr.mxu0 0.0
  %2730 = vmatpush1.msra.mxu0 %v2652
  %2731 = vmatprep.subr.mxu0 0.0
  %2732 = vmatpush1.msra.mxu0 %v2653
  %2733 = vmatprep.subr.mxu0 0.0
  %2734 = vmatpush1.msra.mxu0 %v2654
  %2735 = vmatprep.subr.mxu0 0.0
  %2736 = vmatpush1.msra.mxu0 %v2655
  %2737 = vmatprep.subr.mxu0 0.0
  %2738 = vmatpush1.msra.mxu0 %v2656
  %2739 = vmatprep.subr.mxu0 0.0
  %2740 = vmatpush1.msra.mxu0 %v2657
  %2741 = vmatprep.subr.mxu0 0.0
  %2742 = vmatpush1.msra.mxu0 %v2658
  %2743 = vmatprep.subr.mxu0 0.0
  %2744 = vmatpush1.msra.mxu0 %v2659
  %2745 = vmatprep.subr.mxu0 0.0
  %2746 = vmatpush1.msra.mxu0 %v2660
  %2747 = vmatprep.subr.mxu0 0.0
  %2748 = vmatpush1.msra.mxu0 %v2661
  %2749 = vmatprep.subr.mxu0 0.0
  %2750 = vmatpush1.msra.mxu0 %v2662
  %2751 = vmatprep.subr.mxu0 0.0
  %2752 = vmatpush1.msra.mxu0 %v2663
  %2753 = vmatprep.subr.mxu0 0.0
  %2754 = vmatpush1.msra.mxu0 %v2664
  %2755 = vmatprep.subr.mxu0 0.0
  %2756 = vmatpush1.msra.mxu0 %v2665
  %2757 = vmatprep.mubr.f32.mxu0 %v436
  %2758 = vmatmul.mubr.f32.gmra.mrb[0].mxu0 %v435
  %v2759 = vpop.f32.mrb[0].mxu0
  %v2760 = vadd.f32 0.0, %v2759
  %v2761 = vpop.f32.mrb[0].mxu0
  %2762 = vmatprep.mubr.f32.mxu0 %v440
  %2763 = vmatmul.mubr.f32.gmra.mrb[0].mxu0 %v439
  %v2764 = vpop.f32.mrb[0].mxu0
  %v2765 = vadd.f32 0.0, %v2764
  %v2766 = vpop.f32.mrb[0].mxu0
  %2767 = vdwg.mxu0
  %2768 = vmatprep.subr.mxu0 0.0
  %2769 = vmatpush1.msra.mxu0 %v2666
  %2770 = vmatprep.subr.mxu0 0.0
  %2771 = vmatpush1.msra.mxu0 %v2667
  %2772 = vmatprep.subr.mxu0 0.0
  %2773 = vmatpush1.msra.mxu0 %v2668
  %2774 = vmatprep.subr.mxu0 0.0
  %2775 = vmatpush1.msra.mxu0 %v2669
  %2776 = vmatprep.subr.mxu0 0.0
  %2777 = vmatpush1.msra.mxu0 %v2670
  %2778 = vmatprep.subr.mxu0 0.0
  %2779 = vmatpush1.msra.mxu0 %v2671
  %2780 = vmatprep.subr.mxu0 0.0
  %2781 = vmatpush1.msra.mxu0 %v2672
  %2782 = vmatprep.subr.mxu0 0.0
  %2783 = vmatpush1.msra.mxu0 %v2673
  %2784 = vmatprep.subr.mxu0 0.0
  %2785 = vmatpush1.msra.mxu0 %v2674
  %2786 = vmatprep.subr.mxu0 0.0
  %2787 = vmatpush1.msra.mxu0 %v2675
  %2788 = vmatprep.subr.mxu0 0.0
  %2789 = vmatpush1.msra.mxu0 %v2676
  %2790 = vmatprep.subr.mxu0 0.0
  %2791 = vmatpush1.msra.mxu0 %v2677
  %2792 = vmatprep.subr.mxu0 0.0
  %2793 = vmatpush1.msra.mxu0 %v2678
  %2794 = vmatprep.subr.mxu0 0.0
  %2795 = vmatpush1.msra.mxu0 %v2679
  %2796 = vmatprep.subr.mxu0 0.0
  %2797 = vmatpush1.msra.mxu0 %v2680
  %2798 = vmatprep.subr.mxu0 0.0
  %2799 = vmatpush1.msra.mxu0 %v2681
  %2800 = vmatprep.subr.mxu0 0.0
  %2801 = vmatpush1.msra.mxu0 %v2682
  %2802 = vmatprep.subr.mxu0 0.0
  %2803 = vmatpush1.msra.mxu0 %v2683
  %2804 = vmatprep.subr.mxu0 0.0
  %2805 = vmatpush1.msra.mxu0 %v2684
  %2806 = vmatprep.subr.mxu0 0.0
  %2807 = vmatpush1.msra.mxu0 %v2685
  %2808 = vmatprep.subr.mxu0 0.0
  %2809 = vmatpush1.msra.mxu0 %v2686
  %2810 = vmatprep.subr.mxu0 0.0
  %2811 = vmatpush1.msra.mxu0 %v2687
  %2812 = vmatprep.subr.mxu0 0.0
  %2813 = vmatpush1.msra.mxu0 %v2688
  %2814 = vmatprep.subr.mxu0 0.0
  %2815 = vmatpush1.msra.mxu0 %v2691
  %2816 = vmatprep.subr.mxu0 0.0
  %2817 = vmatpush1.msra.mxu0 0.0
  %2818 = vmatprep.subr.mxu0 0.0
  %2819 = vmatpush1.msra.mxu0 0.0
  %2820 = vmatprep.subr.mxu0 0.0
  %2821 = vmatpush1.msra.mxu0 0.0
  %2822 = vmatprep.subr.mxu0 0.0
  %2823 = vmatpush1.msra.mxu0 0.0
  %2824 = vmatprep.subr.mxu0 0.0
  %2825 = vmatpush1.msra.mxu0 0.0
  %2826 = vmatprep.subr.mxu0 0.0
  %2827 = vmatpush1.msra.mxu0 0.0
  %2828 = vmatprep.subr.mxu0 0.0
  %2829 = vmatpush1.msra.mxu0 0.0
  %2830 = vmatprep.subr.mxu0 0.0
  %2831 = vmatpush1.msra.mxu0 0.0
  %2832 = vmatprep.mubr.f32.mxu0 %v556
  %2833 = vmatmul.mubr.f32.gmra.mrb[0].mxu0 %v437
  %v2834 = vpop.f32.mrb[0].mxu0
  %v2835 = vadd.f32 %v2760, %v2834
  %v2836 = vpop.f32.mrb[0].mxu0
  %2837 = vmatprep.mubr.f32.mxu0 %v559
  %2838 = vmatmul.mubr.f32.gmra.mrb[0].mxu0 %v441
  %v2839 = vpop.f32.mrb[0].mxu0
  %v2840 = vadd.f32 %v2765, %v2839
  %v2841 = vpop.f32.mrb[0].mxu0
  %2842 = vdwg.mxu0
  %s2843 = scalar_lea.vmem %s5, 2016
  %v2844 = vld [vmem:[%s2843] sm:$0xf]
  %v2845 = vld [vmem:[%s2843 + $0x4] sm:$0xf]
  %v2846 = vld [vmem:[%s2843 + $0x8] sm:$0xf]
  %v2847 = vld [vmem:[%s2843 + $0xc] sm:$0xf]
  %v2848 = vld [vmem:[%s2843 + $0x10] sm:$0xf]
  %v2849 = vld [vmem:[%s2843 + $0x14] sm:$0xf]
  %v2850 = vld [vmem:[%s2843 + $0x18] sm:$0xf]
  %v2851 = vld [vmem:[%s2843 + $0x1c] sm:$0xf]
  %v2852 = vld [vmem:[%s2843 + $0x20] sm:$0xf]
  %v2853 = vld [vmem:[%s2843 + $0x24] sm:$0xf]
  %v2854 = vld [vmem:[%s2843 + $0x28] sm:$0xf]
  %v2855 = vld [vmem:[%s2843 + $0x2c] sm:$0xf]
  %v2856 = vld [vmem:[%s2843 + $0x30] sm:$0xf]
  %v2857 = vld [vmem:[%s2843 + $0x34] sm:$0xf]
  %v2858 = vld [vmem:[%s2843 + $0x38] sm:$0xf]
  %v2859 = vld [vmem:[%s2843 + $0x3c] sm:$0xf]
  %v2860 = vld [vmem:[%s2843 + $0x40] sm:$0xf]
  %v2861 = vld [vmem:[%s2843 + $0x44] sm:$0xf]
  %v2862 = vld [vmem:[%s2843 + $0x48] sm:$0xf]
  %v2863 = vld [vmem:[%s2843 + $0x4c] sm:$0xf]
  %v2864 = vld [vmem:[%s2843 + $0x50] sm:$0xf]
  %v2865 = vld [vmem:[%s2843 + $0x54] sm:$0xf]
  %v2866 = vld [vmem:[%s2843 + $0x58] sm:$0xf]
  %v2867 = vld [vmem:[%s2843 + $0x5c] sm:$0xf]
  %v2868 = vld [vmem:[%s2843 + $0x60] sm:$0xf]
  %v2869 = vld [vmem:[%s2843 + $0x64] sm:$0xf]
  %v2870 = vld [vmem:[%s2843 + $0x68] sm:$0xf]
  %v2871 = vld [vmem:[%s2843 + $0x6c] sm:$0xf]
  %v2872 = vld [vmem:[%s2843 + $0x70] sm:$0xf]
  %v2873 = vld [vmem:[%s2843 + $0x74] sm:$0xf]
  %v2874 = vld [vmem:[%s2843 + $0x78] sm:$0xf]
  %v2875 = vld [vmem:[%s2843 + $0x7c] sm:$0xf]
  %v2876 = vld [vmem:[%s2843 + $0x80] sm:$0xf]
  %v2877 = vld [vmem:[%s2843 + $0x84] sm:$0xf]
  %v2878 = vld [vmem:[%s2843 + $0x88] sm:$0xf]
  %v2879 = vld [vmem:[%s2843 + $0x8c] sm:$0xf]
  %v2880 = vld [vmem:[%s2843 + $0x90] sm:$0xf]
  %v2881 = vld [vmem:[%s2843 + $0x94] sm:$0xf]
  %v2882 = vld [vmem:[%s2843 + $0x98] sm:$0xf]
  %v2883 = vld [vmem:[%s2843 + $0x9c] sm:$0xf]
  %v2884 = vld [vmem:[%s2843 + $0xa0] sm:$0xf]
  %v2885 = vld [vmem:[%s2843 + $0xa4] sm:$0xf]
  %v2886 = vld [vmem:[%s2843 + $0xa8] sm:$0xf]
  %v2887 = vld [vmem:[%s2843 + $0xac] sm:$0xf]
  %v2888 = vld [vmem:[%s2843 + $0xb0] sm:$0xf]
  %v2889 = vld [vmem:[%s2843 + $0xb4] sm:$0xf]
  %v2890 = vld [vmem:[%s2843 + $0xb8] sm:$0xf]
  %v2891 = vld [vmem:[%s2843 + $0xbc] sm:$0xf]
  %v2892 = vld [vmem:[%s2843 + $0xc0] sm:$0xf]
  %v2893 = vld [vmem:[%s2843 + $0xc4] sm:$0xf]
  %v2894 = vld [vmem:[%s2843 + $0xc8] sm:$0xf]
  %v2895 = vld [vmem:[%s2843 + $0xcc] sm:$0xf]
  %v2896 = vld [vmem:[%s2843 + $0xd0] sm:$0xf]
  %v2897 = vld [vmem:[%s2843 + $0xd4] sm:$0xf]
  %v2898 = vld [vmem:[%s2843 + $0xd8] sm:$0xf]
  %v2899 = vld [vmem:[%s2843 + $0xdc] sm:$0x1]
  %v2900 = vunpack.c.l.bf16 %v2844
  %v2901 = vunpack.c.l.bf16 %v2845
  %v2902 = vunpack.c.l.bf16 %v2846
  %v2903 = vunpack.c.l.bf16 %v2847
  %v2904 = vunpack.c.l.bf16 %v2848
  %v2905 = vunpack.c.l.bf16 %v2849
  %v2906 = vunpack.c.l.bf16 %v2850
  %v2907 = vunpack.c.l.bf16 %v2851
  %v2908 = vunpack.c.l.bf16 %v2852
  %v2909 = vunpack.c.l.bf16 %v2853
  %v2910 = vunpack.c.l.bf16 %v2854
  %v2911 = vunpack.c.l.bf16 %v2855
  %v2912 = vunpack.c.l.bf16 %v2856
  %v2913 = vunpack.c.l.bf16 %v2857
  %v2914 = vunpack.c.l.bf16 %v2858
  %v2915 = vunpack.c.l.bf16 %v2859
  %v2916 = vunpack.c.l.bf16 %v2860
  %v2917 = vunpack.c.l.bf16 %v2861
  %v2918 = vunpack.c.l.bf16 %v2862
  %v2919 = vunpack.c.l.bf16 %v2863
  %v2920 = vunpack.c.l.bf16 %v2864
  %v2921 = vunpack.c.l.bf16 %v2865
  %v2922 = vunpack.c.l.bf16 %v2866
  %v2923 = vunpack.c.l.bf16 %v2867
  %v2924 = vunpack.c.l.bf16 %v2868
  %v2925 = vunpack.c.l.bf16 %v2869
  %v2926 = vunpack.c.l.bf16 %v2870
  %v2927 = vunpack.c.l.bf16 %v2871
  %v2928 = vunpack.c.l.bf16 %v2872
  %v2929 = vunpack.c.l.bf16 %v2873
  %v2930 = vunpack.c.l.bf16 %v2874
  %v2931 = vunpack.c.l.bf16 %v2875
  %v2932 = vunpack.c.l.bf16 %v2876
  %v2933 = vunpack.c.l.bf16 %v2877
  %v2934 = vunpack.c.l.bf16 %v2878
  %v2935 = vunpack.c.l.bf16 %v2879
  %v2936 = vunpack.c.l.bf16 %v2880
  %v2937 = vunpack.c.l.bf16 %v2881
  %v2938 = vunpack.c.l.bf16 %v2882
  %v2939 = vunpack.c.l.bf16 %v2883
  %v2940 = vunpack.c.l.bf16 %v2884
  %v2941 = vunpack.c.l.bf16 %v2885
  %v2942 = vunpack.c.l.bf16 %v2886
  %v2943 = vunpack.c.l.bf16 %v2887
  %v2944 = vunpack.c.l.bf16 %v2888
  %v2945 = vunpack.c.l.bf16 %v2889
  %v2946 = vunpack.c.l.bf16 %v2890
  %v2947 = vunpack.c.l.bf16 %v2891
  %v2948 = vunpack.c.l.bf16 %v2892
  %v2949 = vunpack.c.l.bf16 %v2893
  %v2950 = vunpack.c.l.bf16 %v2894
  %v2951 = vunpack.c.l.bf16 %v2895
  %v2952 = vunpack.c.l.bf16 %v2896
  %v2953 = vunpack.c.l.bf16 %v2897
  %v2954 = vunpack.c.l.bf16 %v2898
  %v2955 = vunpack.c.l.bf16 %v2899
  %v2957 = vsel %vm561, %v2955, 0
  %2959 = vmatprep.subr.mxu0 0.0
  %2960 = vmatpush1.msra.mxu0 %v2900
  %2961 = vmatprep.subr.mxu0 0.0
  %2962 = vmatpush1.msra.mxu0 %v2901
  %2963 = vmatprep.subr.mxu0 0.0
  %2964 = vmatpush1.msra.mxu0 %v2902
  %2965 = vmatprep.subr.mxu0 0.0
  %2966 = vmatpush1.msra.mxu0 %v2903
  %2967 = vmatprep.subr.mxu0 0.0
  %2968 = vmatpush1.msra.mxu0 %v2904
  %2969 = vmatprep.subr.mxu0 0.0
  %2970 = vmatpush1.msra.mxu0 %v2905
  %2971 = vmatprep.subr.mxu0 0.0
  %2972 = vmatpush1.msra.mxu0 %v2906
  %2973 = vmatprep.subr.mxu0 0.0
  %2974 = vmatpush1.msra.mxu0 %v2907
  %2975 = vmatprep.subr.mxu0 0.0
  %2976 = vmatpush1.msra.mxu0 %v2908
  %2977 = vmatprep.subr.mxu0 0.0
  %2978 = vmatpush1.msra.mxu0 %v2909
  %2979 = vmatprep.subr.mxu0 0.0
  %2980 = vmatpush1.msra.mxu0 %v2910
  %2981 = vmatprep.subr.mxu0 0.0
  %2982 = vmatpush1.msra.mxu0 %v2911
  %2983 = vmatprep.subr.mxu0 0.0
  %2984 = vmatpush1.msra.mxu0 %v2912
  %2985 = vmatprep.subr.mxu0 0.0
  %2986 = vmatpush1.msra.mxu0 %v2913
  %2987 = vmatprep.subr.mxu0 0.0
  %2988 = vmatpush1.msra.mxu0 %v2914
  %2989 = vmatprep.subr.mxu0 0.0
  %2990 = vmatpush1.msra.mxu0 %v2915
  %2991 = vmatprep.subr.mxu0 0.0
  %2992 = vmatpush1.msra.mxu0 %v2916
  %2993 = vmatprep.subr.mxu0 0.0
  %2994 = vmatpush1.msra.mxu0 %v2917
  %2995 = vmatprep.subr.mxu0 0.0
  %2996 = vmatpush1.msra.mxu0 %v2918
  %2997 = vmatprep.subr.mxu0 0.0
  %2998 = vmatpush1.msra.mxu0 %v2919
  %2999 = vmatprep.subr.mxu0 0.0
  %3000 = vmatpush1.msra.mxu0 %v2920
  %3001 = vmatprep.subr.mxu0 0.0
  %3002 = vmatpush1.msra.mxu0 %v2921
  %3003 = vmatprep.subr.mxu0 0.0
  %3004 = vmatpush1.msra.mxu0 %v2922
  %3005 = vmatprep.subr.mxu0 0.0
  %3006 = vmatpush1.msra.mxu0 %v2923
  %3007 = vmatprep.subr.mxu0 0.0
  %3008 = vmatpush1.msra.mxu0 %v2924
  %3009 = vmatprep.subr.mxu0 0.0
  %3010 = vmatpush1.msra.mxu0 %v2925
  %3011 = vmatprep.subr.mxu0 0.0
  %3012 = vmatpush1.msra.mxu0 %v2926
  %3013 = vmatprep.subr.mxu0 0.0
  %3014 = vmatpush1.msra.mxu0 %v2927
  %3015 = vmatprep.subr.mxu0 0.0
  %3016 = vmatpush1.msra.mxu0 %v2928
  %3017 = vmatprep.subr.mxu0 0.0
  %3018 = vmatpush1.msra.mxu0 %v2929
  %3019 = vmatprep.subr.mxu0 0.0
  %3020 = vmatpush1.msra.mxu0 %v2930
  %3021 = vmatprep.subr.mxu0 0.0
  %3022 = vmatpush1.msra.mxu0 %v2931
  %3023 = vmatprep.mubr.f32.mxu0 %v436
  %3024 = vmatmul.mubr.f32.gmra.mrb[0].mxu0 %v435
  %v3025 = vpop.f32.mrb[0].mxu0
  %v3026 = vadd.f32 0.0, %v3025
  %v3027 = vpop.f32.mrb[0].mxu0
  %3028 = vmatprep.mubr.f32.mxu0 %v440
  %3029 = vmatmul.mubr.f32.gmra.mrb[0].mxu0 %v439
  %v3030 = vpop.f32.mrb[0].mxu0
  %v3031 = vadd.f32 0.0, %v3030
  %v3032 = vpop.f32.mrb[0].mxu0
  %3033 = vdwg.mxu0
  %3034 = vmatprep.subr.mxu0 0.0
  %3035 = vmatpush1.msra.mxu0 %v2932
  %3036 = vmatprep.subr.mxu0 0.0
  %3037 = vmatpush1.msra.mxu0 %v2933
  %3038 = vmatprep.subr.mxu0 0.0
  %3039 = vmatpush1.msra.mxu0 %v2934
  %3040 = vmatprep.subr.mxu0 0.0
  %3041 = vmatpush1.msra.mxu0 %v2935
  %3042 = vmatprep.subr.mxu0 0.0
  %3043 = vmatpush1.msra.mxu0 %v2936
  %3044 = vmatprep.subr.mxu0 0.0
  %3045 = vmatpush1.msra.mxu0 %v2937
  %3046 = vmatprep.subr.mxu0 0.0
  %3047 = vmatpush1.msra.mxu0 %v2938
  %3048 = vmatprep.subr.mxu0 0.0
  %3049 = vmatpush1.msra.mxu0 %v2939
  %3050 = vmatprep.subr.mxu0 0.0
  %3051 = vmatpush1.msra.mxu0 %v2940
  %3052 = vmatprep.subr.mxu0 0.0
  %3053 = vmatpush1.msra.mxu0 %v2941
  %3054 = vmatprep.subr.mxu0 0.0
  %3055 = vmatpush1.msra.mxu0 %v2942
  %3056 = vmatprep.subr.mxu0 0.0
  %3057 = vmatpush1.msra.mxu0 %v2943
  %3058 = vmatprep.subr.mxu0 0.0
  %3059 = vmatpush1.msra.mxu0 %v2944
  %3060 = vmatprep.subr.mxu0 0.0
  %3061 = vmatpush1.msra.mxu0 %v2945
  %3062 = vmatprep.subr.mxu0 0.0
  %3063 = vmatpush1.msra.mxu0 %v2946
  %3064 = vmatprep.subr.mxu0 0.0
  %3065 = vmatpush1.msra.mxu0 %v2947
  %3066 = vmatprep.subr.mxu0 0.0
  %3067 = vmatpush1.msra.mxu0 %v2948
  %3068 = vmatprep.subr.mxu0 0.0
  %3069 = vmatpush1.msra.mxu0 %v2949
  %3070 = vmatprep.subr.mxu0 0.0
  %3071 = vmatpush1.msra.mxu0 %v2950
  %3072 = vmatprep.subr.mxu0 0.0
  %3073 = vmatpush1.msra.mxu0 %v2951
  %3074 = vmatprep.subr.mxu0 0.0
  %3075 = vmatpush1.msra.mxu0 %v2952
  %3076 = vmatprep.subr.mxu0 0.0
  %3077 = vmatpush1.msra.mxu0 %v2953
  %3078 = vmatprep.subr.mxu0 0.0
  %3079 = vmatpush1.msra.mxu0 %v2954
  %3080 = vmatprep.subr.mxu0 0.0
  %3081 = vmatpush1.msra.mxu0 %v2957
  %3082 = vmatprep.subr.mxu0 0.0
  %3083 = vmatpush1.msra.mxu0 0.0
  %3084 = vmatprep.subr.mxu0 0.0
  %3085 = vmatpush1.msra.mxu0 0.0
  %3086 = vmatprep.subr.mxu0 0.0
  %3087 = vmatpush1.msra.mxu0 0.0
  %3088 = vmatprep.subr.mxu0 0.0
  %3089 = vmatpush1.msra.mxu0 0.0
  %3090 = vmatprep.subr.mxu0 0.0
  %3091 = vmatpush1.msra.mxu0 0.0
  %3092 = vmatprep.subr.mxu0 0.0
  %3093 = vmatpush1.msra.mxu0 0.0
  %3094 = vmatprep.subr.mxu0 0.0
  %3095 = vmatpush1.msra.mxu0 0.0
  %3096 = vmatprep.subr.mxu0 0.0
  %3097 = vmatpush1.msra.mxu0 0.0
  %3098 = vmatprep.mubr.f32.mxu0 %v556
  %3099 = vmatmul.mubr.f32.gmra.mrb[0].mxu0 %v437
  %v3100 = vpop.f32.mrb[0].mxu0
  %v3101 = vadd.f32 %v3026, %v3100
  %v3102 = vpop.f32.mrb[0].mxu0
  %3103 = vmatprep.mubr.f32.mxu0 %v559
  %3104 = vmatmul.mubr.f32.gmra.mrb[0].mxu0 %v441
  %v3105 = vpop.f32.mrb[0].mxu0
  %v3106 = vadd.f32 %v3031, %v3105
  %v3107 = vpop.f32.mrb[0].mxu0
  %3108 = vdwg.mxu0
  %s3109 = scalar_lea.vmem %s5, 2240
  %v3110 = vld [vmem:[%s3109] sm:$0xf]
  %v3111 = vld [vmem:[%s3109 + $0x4] sm:$0xf]
  %v3112 = vld [vmem:[%s3109 + $0x8] sm:$0xf]
  %v3113 = vld [vmem:[%s3109 + $0xc] sm:$0xf]
  %v3114 = vld [vmem:[%s3109 + $0x10] sm:$0xf]
  %v3115 = vld [vmem:[%s3109 + $0x14] sm:$0xf]
  %v3116 = vld [vmem:[%s3109 + $0x18] sm:$0xf]
  %v3117 = vld [vmem:[%s3109 + $0x1c] sm:$0xf]
  %v3118 = vld [vmem:[%s3109 + $0x20] sm:$0xf]
  %v3119 = vld [vmem:[%s3109 + $0x24] sm:$0xf]
  %v3120 = vld [vmem:[%s3109 + $0x28] sm:$0xf]
  %v3121 = vld [vmem:[%s3109 + $0x2c] sm:$0xf]
  %v3122 = vld [vmem:[%s3109 + $0x30] sm:$0xf]
  %v3123 = vld [vmem:[%s3109 + $0x34] sm:$0xf]
  %v3124 = vld [vmem:[%s3109 + $0x38] sm:$0xf]
  %v3125 = vld [vmem:[%s3109 + $0x3c] sm:$0xf]
  %v3126 = vld [vmem:[%s3109 + $0x40] sm:$0xf]
  %v3127 = vld [vmem:[%s3109 + $0x44] sm:$0xf]
  %v3128 = vld [vmem:[%s3109 + $0x48] sm:$0xf]
  %v3129 = vld [vmem:[%s3109 + $0x4c] sm:$0xf]
  %v3130 = vld [vmem:[%s3109 + $0x50] sm:$0xf]
  %v3131 = vld [vmem:[%s3109 + $0x54] sm:$0xf]
  %v3132 = vld [vmem:[%s3109 + $0x58] sm:$0xf]
  %v3133 = vld [vmem:[%s3109 + $0x5c] sm:$0xf]
  %v3134 = vld [vmem:[%s3109 + $0x60] sm:$0xf]
  %v3135 = vld [vmem:[%s3109 + $0x64] sm:$0xf]
  %v3136 = vld [vmem:[%s3109 + $0x68] sm:$0xf]
  %v3137 = vld [vmem:[%s3109 + $0x6c] sm:$0xf]
  %v3138 = vld [vmem:[%s3109 + $0x70] sm:$0xf]
  %v3139 = vld [vmem:[%s3109 + $0x74] sm:$0xf]
  %v3140 = vld [vmem:[%s3109 + $0x78] sm:$0xf]
  %v3141 = vld [vmem:[%s3109 + $0x7c] sm:$0xf]
  %v3142 = vld [vmem:[%s3109 + $0x80] sm:$0xf]
  %v3143 = vld [vmem:[%s3109 + $0x84] sm:$0xf]
  %v3144 = vld [vmem:[%s3109 + $0x88] sm:$0xf]
  %v3145 = vld [vmem:[%s3109 + $0x8c] sm:$0xf]
  %v3146 = vld [vmem:[%s3109 + $0x90] sm:$0xf]
  %v3147 = vld [vmem:[%s3109 + $0x94] sm:$0xf]
  %v3148 = vld [vmem:[%s3109 + $0x98] sm:$0xf]
  %v3149 = vld [vmem:[%s3109 + $0x9c] sm:$0xf]
  %v3150 = vld [vmem:[%s3109 + $0xa0] sm:$0xf]
  %v3151 = vld [vmem:[%s3109 + $0xa4] sm:$0xf]
  %v3152 = vld [vmem:[%s3109 + $0xa8] sm:$0xf]
  %v3153 = vld [vmem:[%s3109 + $0xac] sm:$0xf]
  %v3154 = vld [vmem:[%s3109 + $0xb0] sm:$0xf]
  %v3155 = vld [vmem:[%s3109 + $0xb4] sm:$0xf]
  %v3156 = vld [vmem:[%s3109 + $0xb8] sm:$0xf]
  %v3157 = vld [vmem:[%s3109 + $0xbc] sm:$0xf]
  %v3158 = vld [vmem:[%s3109 + $0xc0] sm:$0xf]
  %v3159 = vld [vmem:[%s3109 + $0xc4] sm:$0xf]
  %v3160 = vld [vmem:[%s3109 + $0xc8] sm:$0xf]
  %v3161 = vld [vmem:[%s3109 + $0xcc] sm:$0xf]
  %v3162 = vld [vmem:[%s3109 + $0xd0] sm:$0xf]
  %v3163 = vld [vmem:[%s3109 + $0xd4] sm:$0xf]
  %v3164 = vld [vmem:[%s3109 + $0xd8] sm:$0xf]
  %v3165 = vld [vmem:[%s3109 + $0xdc] sm:$0x1]
  %v3166 = vunpack.c.l.bf16 %v3110
  %v3167 = vunpack.c.l.bf16 %v3111
  %v3168 = vunpack.c.l.bf16 %v3112
  %v3169 = vunpack.c.l.bf16 %v3113
  %v3170 = vunpack.c.l.bf16 %v3114
  %v3171 = vunpack.c.l.bf16 %v3115
  %v3172 = vunpack.c.l.bf16 %v3116
  %v3173 = vunpack.c.l.bf16 %v3117
  %v3174 = vunpack.c.l.bf16 %v3118
  %v3175 = vunpack.c.l.bf16 %v3119
  %v3176 = vunpack.c.l.bf16 %v3120
  %v3177 = vunpack.c.l.bf16 %v3121
  %v3178 = vunpack.c.l.bf16 %v3122
  %v3179 = vunpack.c.l.bf16 %v3123
  %v3180 = vunpack.c.l.bf16 %v3124
  %v3181 = vunpack.c.l.bf16 %v3125
  %v3182 = vunpack.c.l.bf16 %v3126
  %v3183 = vunpack.c.l.bf16 %v3127
  %v3184 = vunpack.c.l.bf16 %v3128
  %v3185 = vunpack.c.l.bf16 %v3129
  %v3186 = vunpack.c.l.bf16 %v3130
  %v3187 = vunpack.c.l.bf16 %v3131
  %v3188 = vunpack.c.l.bf16 %v3132
  %v3189 = vunpack.c.l.bf16 %v3133
  %v3190 = vunpack.c.l.bf16 %v3134
  %v3191 = vunpack.c.l.bf16 %v3135
  %v3192 = vunpack.c.l.bf16 %v3136
  %v3193 = vunpack.c.l.bf16 %v3137
  %v3194 = vunpack.c.l.bf16 %v3138
  %v3195 = vunpack.c.l.bf16 %v3139
  %v3196 = vunpack.c.l.bf16 %v3140
  %v3197 = vunpack.c.l.bf16 %v3141
  %v3198 = vunpack.c.l.bf16 %v3142
  %v3199 = vunpack.c.l.bf16 %v3143
  %v3200 = vunpack.c.l.bf16 %v3144
  %v3201 = vunpack.c.l.bf16 %v3145
  %v3202 = vunpack.c.l.bf16 %v3146
  %v3203 = vunpack.c.l.bf16 %v3147
  %v3204 = vunpack.c.l.bf16 %v3148
  %v3205 = vunpack.c.l.bf16 %v3149
  %v3206 = vunpack.c.l.bf16 %v3150
  %v3207 = vunpack.c.l.bf16 %v3151
  %v3208 = vunpack.c.l.bf16 %v3152
  %v3209 = vunpack.c.l.bf16 %v3153
  %v3210 = vunpack.c.l.bf16 %v3154
  %v3211 = vunpack.c.l.bf16 %v3155
  %v3212 = vunpack.c.l.bf16 %v3156
  %v3213 = vunpack.c.l.bf16 %v3157
  %v3214 = vunpack.c.l.bf16 %v3158
  %v3215 = vunpack.c.l.bf16 %v3159
  %v3216 = vunpack.c.l.bf16 %v3160
  %v3217 = vunpack.c.l.bf16 %v3161
  %v3218 = vunpack.c.l.bf16 %v3162
  %v3219 = vunpack.c.l.bf16 %v3163
  %v3220 = vunpack.c.l.bf16 %v3164
  %v3221 = vunpack.c.l.bf16 %v3165
  %v3223 = vsel %vm561, %v3221, 0
  %3225 = vmatprep.subr.mxu0 0.0
  %3226 = vmatpush1.msra.mxu0 %v3166
  %3227 = vmatprep.subr.mxu0 0.0
  %3228 = vmatpush1.msra.mxu0 %v3167
  %3229 = vmatprep.subr.mxu0 0.0
  %3230 = vmatpush1.msra.mxu0 %v3168
  %3231 = vmatprep.subr.mxu0 0.0
  %3232 = vmatpush1.msra.mxu0 %v3169
  %3233 = vmatprep.subr.mxu0 0.0
  %3234 = vmatpush1.msra.mxu0 %v3170
  %3235 = vmatprep.subr.mxu0 0.0
  %3236 = vmatpush1.msra.mxu0 %v3171
  %3237 = vmatprep.subr.mxu0 0.0
  %3238 = vmatpush1.msra.mxu0 %v3172
  %3239 = vmatprep.subr.mxu0 0.0
  %3240 = vmatpush1.msra.mxu0 %v3173
  %3241 = vmatprep.subr.mxu0 0.0
  %3242 = vmatpush1.msra.mxu0 %v3174
  %3243 = vmatprep.subr.mxu0 0.0
  %3244 = vmatpush1.msra.mxu0 %v3175
  %3245 = vmatprep.subr.mxu0 0.0
  %3246 = vmatpush1.msra.mxu0 %v3176
  %3247 = vmatprep.subr.mxu0 0.0
  %3248 = vmatpush1.msra.mxu0 %v3177
  %3249 = vmatprep.subr.mxu0 0.0
  %3250 = vmatpush1.msra.mxu0 %v3178
  %3251 = vmatprep.subr.mxu0 0.0
  %3252 = vmatpush1.msra.mxu0 %v3179
  %3253 = vmatprep.subr.mxu0 0.0
  %3254 = vmatpush1.msra.mxu0 %v3180
  %3255 = vmatprep.subr.mxu0 0.0
  %3256 = vmatpush1.msra.mxu0 %v3181
  %3257 = vmatprep.subr.mxu0 0.0
  %3258 = vmatpush1.msra.mxu0 %v3182
  %3259 = vmatprep.subr.mxu0 0.0
  %3260 = vmatpush1.msra.mxu0 %v3183
  %3261 = vmatprep.subr.mxu0 0.0
  %3262 = vmatpush1.msra.mxu0 %v3184
  %3263 = vmatprep.subr.mxu0 0.0
  %3264 = vmatpush1.msra.mxu0 %v3185
  %3265 = vmatprep.subr.mxu0 0.0
  %3266 = vmatpush1.msra.mxu0 %v3186
  %3267 = vmatprep.subr.mxu0 0.0
  %3268 = vmatpush1.msra.mxu0 %v3187
  %3269 = vmatprep.subr.mxu0 0.0
  %3270 = vmatpush1.msra.mxu0 %v3188
  %3271 = vmatprep.subr.mxu0 0.0
  %3272 = vmatpush1.msra.mxu0 %v3189
  %3273 = vmatprep.subr.mxu0 0.0
  %3274 = vmatpush1.msra.mxu0 %v3190
  %3275 = vmatprep.subr.mxu0 0.0
  %3276 = vmatpush1.msra.mxu0 %v3191
  %3277 = vmatprep.subr.mxu0 0.0
  %3278 = vmatpush1.msra.mxu0 %v3192
  %3279 = vmatprep.subr.mxu0 0.0
  %3280 = vmatpush1.msra.mxu0 %v3193
  %3281 = vmatprep.subr.mxu0 0.0
  %3282 = vmatpush1.msra.mxu0 %v3194
  %3283 = vmatprep.subr.mxu0 0.0
  %3284 = vmatpush1.msra.mxu0 %v3195
  %3285 = vmatprep.subr.mxu0 0.0
  %3286 = vmatpush1.msra.mxu0 %v3196
  %3287 = vmatprep.subr.mxu0 0.0
  %3288 = vmatpush1.msra.mxu0 %v3197
  %3289 = vmatprep.mubr.f32.mxu0 %v436
  %3290 = vmatmul.mubr.f32.gmra.mrb[0].mxu0 %v435
  %v3291 = vpop.f32.mrb[0].mxu0
  %v3292 = vadd.f32 0.0, %v3291
  %v3293 = vpop.f32.mrb[0].mxu0
  %3294 = vmatprep.mubr.f32.mxu0 %v440
  %3295 = vmatmul.mubr.f32.gmra.mrb[0].mxu0 %v439
  %v3296 = vpop.f32.mrb[0].mxu0
  %v3297 = vadd.f32 0.0, %v3296
  %v3298 = vpop.f32.mrb[0].mxu0
  %3299 = vdwg.mxu0
  %3300 = vmatprep.subr.mxu0 0.0
  %3301 = vmatpush1.msra.mxu0 %v3198
  %3302 = vmatprep.subr.mxu0 0.0
  %3303 = vmatpush1.msra.mxu0 %v3199
  %3304 = vmatprep.subr.mxu0 0.0
  %3305 = vmatpush1.msra.mxu0 %v3200
  %3306 = vmatprep.subr.mxu0 0.0
  %3307 = vmatpush1.msra.mxu0 %v3201
  %3308 = vmatprep.subr.mxu0 0.0
  %3309 = vmatpush1.msra.mxu0 %v3202
  %3310 = vmatprep.subr.mxu0 0.0
  %3311 = vmatpush1.msra.mxu0 %v3203
  %3312 = vmatprep.subr.mxu0 0.0
  %3313 = vmatpush1.msra.mxu0 %v3204
  %3314 = vmatprep.subr.mxu0 0.0
  %3315 = vmatpush1.msra.mxu0 %v3205
  %3316 = vmatprep.subr.mxu0 0.0
  %3317 = vmatpush1.msra.mxu0 %v3206
  %3318 = vmatprep.subr.mxu0 0.0
  %3319 = vmatpush1.msra.mxu0 %v3207
  %3320 = vmatprep.subr.mxu0 0.0
  %3321 = vmatpush1.msra.mxu0 %v3208
  %3322 = vmatprep.subr.mxu0 0.0
  %3323 = vmatpush1.msra.mxu0 %v3209
  %3324 = vmatprep.subr.mxu0 0.0
  %3325 = vmatpush1.msra.mxu0 %v3210
  %3326 = vmatprep.subr.mxu0 0.0
  %3327 = vmatpush1.msra.mxu0 %v3211
  %3328 = vmatprep.subr.mxu0 0.0
  %3329 = vmatpush1.msra.mxu0 %v3212
  %3330 = vmatprep.subr.mxu0 0.0
  %3331 = vmatpush1.msra.mxu0 %v3213
  %3332 = vmatprep.subr.mxu0 0.0
  %3333 = vmatpush1.msra.mxu0 %v3214
  %3334 = vmatprep.subr.mxu0 0.0
  %3335 = vmatpush1.msra.mxu0 %v3215
  %3336 = vmatprep.subr.mxu0 0.0
  %3337 = vmatpush1.msra.mxu0 %v3216
  %3338 = vmatprep.subr.mxu0 0.0
  %3339 = vmatpush1.msra.mxu0 %v3217
  %3340 = vmatprep.subr.mxu0 0.0
  %3341 = vmatpush1.msra.mxu0 %v3218
  %3342 = vmatprep.subr.mxu0 0.0
  %3343 = vmatpush1.msra.mxu0 %v3219
  %3344 = vmatprep.subr.mxu0 0.0
  %3345 = vmatpush1.msra.mxu0 %v3220
  %3346 = vmatprep.subr.mxu0 0.0
  %3347 = vmatpush1.msra.mxu0 %v3223
  %3348 = vmatprep.subr.mxu0 0.0
  %3349 = vmatpush1.msra.mxu0 0.0
  %3350 = vmatprep.subr.mxu0 0.0
  %3351 = vmatpush1.msra.mxu0 0.0
  %3352 = vmatprep.subr.mxu0 0.0
  %3353 = vmatpush1.msra.mxu0 0.0
  %3354 = vmatprep.subr.mxu0 0.0
  %3355 = vmatpush1.msra.mxu0 0.0
  %3356 = vmatprep.subr.mxu0 0.0
  %3357 = vmatpush1.msra.mxu0 0.0
  %3358 = vmatprep.subr.mxu0 0.0
  %3359 = vmatpush1.msra.mxu0 0.0
  %3360 = vmatprep.subr.mxu0 0.0
  %3361 = vmatpush1.msra.mxu0 0.0
  %3362 = vmatprep.subr.mxu0 0.0
  %3363 = vmatpush1.msra.mxu0 0.0
  %3364 = vmatprep.mubr.f32.mxu0 %v556
  %3365 = vmatmul.mubr.f32.gmra.mrb[0].mxu0 %v437
  %v3366 = vpop.f32.mrb[0].mxu0
  %v3367 = vadd.f32 %v3292, %v3366
  %v3368 = vpop.f32.mrb[0].mxu0
  %3369 = vmatprep.mubr.f32.mxu0 %v559
  %3370 = vmatmul.mubr.f32.gmra.mrb[0].mxu0 %v441
  %v3371 = vpop.f32.mrb[0].mxu0
  %v3372 = vadd.f32 %v3297, %v3371
  %v3373 = vpop.f32.mrb[0].mxu0
  %3374 = vdwg.mxu0
  %s3375 = scalar_lea.vmem %s5, 2464
  %v3376 = vld [vmem:[%s3375] sm:$0xf]
  %v3377 = vld [vmem:[%s3375 + $0x4] sm:$0xf]
  %v3378 = vld [vmem:[%s3375 + $0x8] sm:$0xf]
  %v3379 = vld [vmem:[%s3375 + $0xc] sm:$0xf]
  %v3380 = vld [vmem:[%s3375 + $0x10] sm:$0xf]
  %v3381 = vld [vmem:[%s3375 + $0x14] sm:$0xf]
  %v3382 = vld [vmem:[%s3375 + $0x18] sm:$0xf]
  %v3383 = vld [vmem:[%s3375 + $0x1c] sm:$0xf]
  %v3384 = vld [vmem:[%s3375 + $0x20] sm:$0xf]
  %v3385 = vld [vmem:[%s3375 + $0x24] sm:$0xf]
  %v3386 = vld [vmem:[%s3375 + $0x28] sm:$0xf]
  %v3387 = vld [vmem:[%s3375 + $0x2c] sm:$0xf]
  %v3388 = vld [vmem:[%s3375 + $0x30] sm:$0xf]
  %v3389 = vld [vmem:[%s3375 + $0x34] sm:$0xf]
  %v3390 = vld [vmem:[%s3375 + $0x38] sm:$0xf]
  %v3391 = vld [vmem:[%s3375 + $0x3c] sm:$0xf]
  %v3392 = vld [vmem:[%s3375 + $0x40] sm:$0xf]
  %v3393 = vld [vmem:[%s3375 + $0x44] sm:$0xf]
  %v3394 = vld [vmem:[%s3375 + $0x48] sm:$0xf]
  %v3395 = vld [vmem:[%s3375 + $0x4c] sm:$0xf]
  %v3396 = vld [vmem:[%s3375 + $0x50] sm:$0xf]
  %v3397 = vld [vmem:[%s3375 + $0x54] sm:$0xf]
  %v3398 = vld [vmem:[%s3375 + $0x58] sm:$0xf]
  %v3399 = vld [vmem:[%s3375 + $0x5c] sm:$0xf]
  %v3400 = vld [vmem:[%s3375 + $0x60] sm:$0xf]
  %v3401 = vld [vmem:[%s3375 + $0x64] sm:$0xf]
  %v3402 = vld [vmem:[%s3375 + $0x68] sm:$0xf]
  %v3403 = vld [vmem:[%s3375 + $0x6c] sm:$0xf]
  %v3404 = vld [vmem:[%s3375 + $0x70] sm:$0xf]
  %v3405 = vld [vmem:[%s3375 + $0x74] sm:$0xf]
  %v3406 = vld [vmem:[%s3375 + $0x78] sm:$0xf]
  %v3407 = vld [vmem:[%s3375 + $0x7c] sm:$0xf]
  %v3408 = vld [vmem:[%s3375 + $0x80] sm:$0xf]
  %v3409 = vld [vmem:[%s3375 + $0x84] sm:$0xf]
  %v3410 = vld [vmem:[%s3375 + $0x88] sm:$0xf]
  %v3411 = vld [vmem:[%s3375 + $0x8c] sm:$0xf]
  %v3412 = vld [vmem:[%s3375 + $0x90] sm:$0xf]
  %v3413 = vld [vmem:[%s3375 + $0x94] sm:$0xf]
  %v3414 = vld [vmem:[%s3375 + $0x98] sm:$0xf]
  %v3415 = vld [vmem:[%s3375 + $0x9c] sm:$0xf]
  %v3416 = vld [vmem:[%s3375 + $0xa0] sm:$0xf]
  %v3417 = vld [vmem:[%s3375 + $0xa4] sm:$0xf]
  %v3418 = vld [vmem:[%s3375 + $0xa8] sm:$0xf]
  %v3419 = vld [vmem:[%s3375 + $0xac] sm:$0xf]
  %v3420 = vld [vmem:[%s3375 + $0xb0] sm:$0xf]
  %v3421 = vld [vmem:[%s3375 + $0xb4] sm:$0xf]
  %v3422 = vld [vmem:[%s3375 + $0xb8] sm:$0xf]
  %v3423 = vld [vmem:[%s3375 + $0xbc] sm:$0xf]
  %v3424 = vld [vmem:[%s3375 + $0xc0] sm:$0xf]
  %v3425 = vld [vmem:[%s3375 + $0xc4] sm:$0xf]
  %v3426 = vld [vmem:[%s3375 + $0xc8] sm:$0xf]
  %v3427 = vld [vmem:[%s3375 + $0xcc] sm:$0xf]
  %v3428 = vld [vmem:[%s3375 + $0xd0] sm:$0xf]
  %v3429 = vld [vmem:[%s3375 + $0xd4] sm:$0xf]
  %v3430 = vld [vmem:[%s3375 + $0xd8] sm:$0xf]
  %v3431 = vld [vmem:[%s3375 + $0xdc] sm:$0x1]
  %v3432 = vunpack.c.l.bf16 %v3376
  %v3433 = vunpack.c.l.bf16 %v3377
  %v3434 = vunpack.c.l.bf16 %v3378
  %v3435 = vunpack.c.l.bf16 %v3379
  %v3436 = vunpack.c.l.bf16 %v3380
  %v3437 = vunpack.c.l.bf16 %v3381
  %v3438 = vunpack.c.l.bf16 %v3382
  %v3439 = vunpack.c.l.bf16 %v3383
  %v3440 = vunpack.c.l.bf16 %v3384
  %v3441 = vunpack.c.l.bf16 %v3385
  %v3442 = vunpack.c.l.bf16 %v3386
  %v3443 = vunpack.c.l.bf16 %v3387
  %v3444 = vunpack.c.l.bf16 %v3388
  %v3445 = vunpack.c.l.bf16 %v3389
  %v3446 = vunpack.c.l.bf16 %v3390
  %v3447 = vunpack.c.l.bf16 %v3391
  %v3448 = vunpack.c.l.bf16 %v3392
  %v3449 = vunpack.c.l.bf16 %v3393
  %v3450 = vunpack.c.l.bf16 %v3394
  %v3451 = vunpack.c.l.bf16 %v3395
  %v3452 = vunpack.c.l.bf16 %v3396
  %v3453 = vunpack.c.l.bf16 %v3397
  %v3454 = vunpack.c.l.bf16 %v3398
  %v3455 = vunpack.c.l.bf16 %v3399
  %v3456 = vunpack.c.l.bf16 %v3400
  %v3457 = vunpack.c.l.bf16 %v3401
  %v3458 = vunpack.c.l.bf16 %v3402
  %v3459 = vunpack.c.l.bf16 %v3403
  %v3460 = vunpack.c.l.bf16 %v3404
  %v3461 = vunpack.c.l.bf16 %v3405
  %v3462 = vunpack.c.l.bf16 %v3406
  %v3463 = vunpack.c.l.bf16 %v3407
  %v3464 = vunpack.c.l.bf16 %v3408
  %v3465 = vunpack.c.l.bf16 %v3409
  %v3466 = vunpack.c.l.bf16 %v3410
  %v3467 = vunpack.c.l.bf16 %v3411
  %v3468 = vunpack.c.l.bf16 %v3412
  %v3469 = vunpack.c.l.bf16 %v3413
  %v3470 = vunpack.c.l.bf16 %v3414
  %v3471 = vunpack.c.l.bf16 %v3415
  %v3472 = vunpack.c.l.bf16 %v3416
  %v3473 = vunpack.c.l.bf16 %v3417
  %v3474 = vunpack.c.l.bf16 %v3418
  %v3475 = vunpack.c.l.bf16 %v3419
  %v3476 = vunpack.c.l.bf16 %v3420
  %v3477 = vunpack.c.l.bf16 %v3421
  %v3478 = vunpack.c.l.bf16 %v3422
  %v3479 = vunpack.c.l.bf16 %v3423
  %v3480 = vunpack.c.l.bf16 %v3424
  %v3481 = vunpack.c.l.bf16 %v3425
  %v3482 = vunpack.c.l.bf16 %v3426
  %v3483 = vunpack.c.l.bf16 %v3427
  %v3484 = vunpack.c.l.bf16 %v3428
  %v3485 = vunpack.c.l.bf16 %v3429
  %v3486 = vunpack.c.l.bf16 %v3430
  %v3487 = vunpack.c.l.bf16 %v3431
  %v3489 = vsel %vm561, %v3487, 0
  %3491 = vmatprep.subr.mxu0 0.0
  %3492 = vmatpush1.msra.mxu0 %v3432
  %3493 = vmatprep.subr.mxu0 0.0
  %3494 = vmatpush1.msra.mxu0 %v3433
  %3495 = vmatprep.subr.mxu0 0.0
  %3496 = vmatpush1.msra.mxu0 %v3434
  %3497 = vmatprep.subr.mxu0 0.0
  %3498 = vmatpush1.msra.mxu0 %v3435
  %3499 = vmatprep.subr.mxu0 0.0
  %3500 = vmatpush1.msra.mxu0 %v3436
  %3501 = vmatprep.subr.mxu0 0.0
  %3502 = vmatpush1.msra.mxu0 %v3437
  %3503 = vmatprep.subr.mxu0 0.0
  %3504 = vmatpush1.msra.mxu0 %v3438
  %3505 = vmatprep.subr.mxu0 0.0
  %3506 = vmatpush1.msra.mxu0 %v3439
  %3507 = vmatprep.subr.mxu0 0.0
  %3508 = vmatpush1.msra.mxu0 %v3440
  %3509 = vmatprep.subr.mxu0 0.0
  %3510 = vmatpush1.msra.mxu0 %v3441
  %3511 = vmatprep.subr.mxu0 0.0
  %3512 = vmatpush1.msra.mxu0 %v3442
  %3513 = vmatprep.subr.mxu0 0.0
  %3514 = vmatpush1.msra.mxu0 %v3443
  %3515 = vmatprep.subr.mxu0 0.0
  %3516 = vmatpush1.msra.mxu0 %v3444
  %3517 = vmatprep.subr.mxu0 0.0
  %3518 = vmatpush1.msra.mxu0 %v3445
  %3519 = vmatprep.subr.mxu0 0.0
  %3520 = vmatpush1.msra.mxu0 %v3446
  %3521 = vmatprep.subr.mxu0 0.0
  %3522 = vmatpush1.msra.mxu0 %v3447
  %3523 = vmatprep.subr.mxu0 0.0
  %3524 = vmatpush1.msra.mxu0 %v3448
  %3525 = vmatprep.subr.mxu0 0.0
  %3526 = vmatpush1.msra.mxu0 %v3449
  %3527 = vmatprep.subr.mxu0 0.0
  %3528 = vmatpush1.msra.mxu0 %v3450
  %3529 = vmatprep.subr.mxu0 0.0
  %3530 = vmatpush1.msra.mxu0 %v3451
  %3531 = vmatprep.subr.mxu0 0.0
  %3532 = vmatpush1.msra.mxu0 %v3452
  %3533 = vmatprep.subr.mxu0 0.0
  %3534 = vmatpush1.msra.mxu0 %v3453
  %3535 = vmatprep.subr.mxu0 0.0
  %3536 = vmatpush1.msra.mxu0 %v3454
  %3537 = vmatprep.subr.mxu0 0.0
  %3538 = vmatpush1.msra.mxu0 %v3455
  %3539 = vmatprep.subr.mxu0 0.0
  %3540 = vmatpush1.msra.mxu0 %v3456
  %3541 = vmatprep.subr.mxu0 0.0
  %3542 = vmatpush1.msra.mxu0 %v3457
  %3543 = vmatprep.subr.mxu0 0.0
  %3544 = vmatpush1.msra.mxu0 %v3458
  %3545 = vmatprep.subr.mxu0 0.0
  %3546 = vmatpush1.msra.mxu0 %v3459
  %3547 = vmatprep.subr.mxu0 0.0
  %3548 = vmatpush1.msra.mxu0 %v3460
  %3549 = vmatprep.subr.mxu0 0.0
  %3550 = vmatpush1.msra.mxu0 %v3461
  %3551 = vmatprep.subr.mxu0 0.0
  %3552 = vmatpush1.msra.mxu0 %v3462
  %3553 = vmatprep.subr.mxu0 0.0
  %3554 = vmatpush1.msra.mxu0 %v3463
  %3555 = vmatprep.mubr.f32.mxu0 %v436
  %3556 = vmatmul.mubr.f32.gmra.mrb[0].mxu0 %v435
  %v3557 = vpop.f32.mrb[0].mxu0
  %v3558 = vadd.f32 0.0, %v3557
  %v3559 = vpop.f32.mrb[0].mxu0
  %3560 = vmatprep.mubr.f32.mxu0 %v440
  %3561 = vmatmul.mubr.f32.gmra.mrb[0].mxu0 %v439
  %v3562 = vpop.f32.mrb[0].mxu0
  %v3563 = vadd.f32 0.0, %v3562
  %v3564 = vpop.f32.mrb[0].mxu0
  %3565 = vdwg.mxu0
  %3566 = vmatprep.subr.mxu0 0.0
  %3567 = vmatpush1.msra.mxu0 %v3464
  %3568 = vmatprep.subr.mxu0 0.0
  %3569 = vmatpush1.msra.mxu0 %v3465
  %3570 = vmatprep.subr.mxu0 0.0
  %3571 = vmatpush1.msra.mxu0 %v3466
  %3572 = vmatprep.subr.mxu0 0.0
  %3573 = vmatpush1.msra.mxu0 %v3467
  %3574 = vmatprep.subr.mxu0 0.0
  %3575 = vmatpush1.msra.mxu0 %v3468
  %3576 = vmatprep.subr.mxu0 0.0
  %3577 = vmatpush1.msra.mxu0 %v3469
  %3578 = vmatprep.subr.mxu0 0.0
  %3579 = vmatpush1.msra.mxu0 %v3470
  %3580 = vmatprep.subr.mxu0 0.0
  %3581 = vmatpush1.msra.mxu0 %v3471
  %3582 = vmatprep.subr.mxu0 0.0
  %3583 = vmatpush1.msra.mxu0 %v3472
  %3584 = vmatprep.subr.mxu0 0.0
  %3585 = vmatpush1.msra.mxu0 %v3473
  %3586 = vmatprep.subr.mxu0 0.0
  %3587 = vmatpush1.msra.mxu0 %v3474
  %3588 = vmatprep.subr.mxu0 0.0
  %3589 = vmatpush1.msra.mxu0 %v3475
  %3590 = vmatprep.subr.mxu0 0.0
  %3591 = vmatpush1.msra.mxu0 %v3476
  %3592 = vmatprep.subr.mxu0 0.0
  %3593 = vmatpush1.msra.mxu0 %v3477
  %3594 = vmatprep.subr.mxu0 0.0
  %3595 = vmatpush1.msra.mxu0 %v3478
  %3596 = vmatprep.subr.mxu0 0.0
  %3597 = vmatpush1.msra.mxu0 %v3479
  %3598 = vmatprep.subr.mxu0 0.0
  %3599 = vmatpush1.msra.mxu0 %v3480
  %3600 = vmatprep.subr.mxu0 0.0
  %3601 = vmatpush1.msra.mxu0 %v3481
  %3602 = vmatprep.subr.mxu0 0.0
  %3603 = vmatpush1.msra.mxu0 %v3482
  %3604 = vmatprep.subr.mxu0 0.0
  %3605 = vmatpush1.msra.mxu0 %v3483
  %3606 = vmatprep.subr.mxu0 0.0
  %3607 = vmatpush1.msra.mxu0 %v3484
  %3608 = vmatprep.subr.mxu0 0.0
  %3609 = vmatpush1.msra.mxu0 %v3485
  %3610 = vmatprep.subr.mxu0 0.0
  %3611 = vmatpush1.msra.mxu0 %v3486
  %3612 = vmatprep.subr.mxu0 0.0
  %3613 = vmatpush1.msra.mxu0 %v3489
  %3614 = vmatprep.subr.mxu0 0.0
  %3615 = vmatpush1.msra.mxu0 0.0
  %3616 = vmatprep.subr.mxu0 0.0
  %3617 = vmatpush1.msra.mxu0 0.0
  %3618 = vmatprep.subr.mxu0 0.0
  %3619 = vmatpush1.msra.mxu0 0.0
  %3620 = vmatprep.subr.mxu0 0.0
  %3621 = vmatpush1.msra.mxu0 0.0
  %3622 = vmatprep.subr.mxu0 0.0
  %3623 = vmatpush1.msra.mxu0 0.0
  %3624 = vmatprep.subr.mxu0 0.0
  %3625 = vmatpush1.msra.mxu0 0.0
  %3626 = vmatprep.subr.mxu0 0.0
  %3627 = vmatpush1.msra.mxu0 0.0
  %3628 = vmatprep.subr.mxu0 0.0
  %3629 = vmatpush1.msra.mxu0 0.0
  %3630 = vmatprep.mubr.f32.mxu0 %v556
  %3631 = vmatmul.mubr.f32.gmra.mrb[0].mxu0 %v437
  %v3632 = vpop.f32.mrb[0].mxu0
  %v3633 = vadd.f32 %v3558, %v3632
  %v3634 = vpop.f32.mrb[0].mxu0
  %3635 = vmatprep.mubr.f32.mxu0 %v559
  %3636 = vmatmul.mubr.f32.gmra.mrb[0].mxu0 %v441
  %v3637 = vpop.f32.mrb[0].mxu0
  %v3638 = vadd.f32 %v3563, %v3637
  %v3639 = vpop.f32.mrb[0].mxu0
  %3640 = vdwg.mxu0
  %s3641 = scalar_lea.vmem %s5, 2688
  %v3642 = vld [vmem:[%s3641] sm:$0xf]
  %v3643 = vld [vmem:[%s3641 + $0x4] sm:$0xf]
  %v3644 = vld [vmem:[%s3641 + $0x8] sm:$0xf]
  %v3645 = vld [vmem:[%s3641 + $0xc] sm:$0xf]
  %v3646 = vld [vmem:[%s3641 + $0x10] sm:$0xf]
  %v3647 = vld [vmem:[%s3641 + $0x14] sm:$0xf]
  %v3648 = vld [vmem:[%s3641 + $0x18] sm:$0xf]
  %v3649 = vld [vmem:[%s3641 + $0x1c] sm:$0xf]
  %v3650 = vld [vmem:[%s3641 + $0x20] sm:$0xf]
  %v3651 = vld [vmem:[%s3641 + $0x24] sm:$0xf]
  %v3652 = vld [vmem:[%s3641 + $0x28] sm:$0xf]
  %v3653 = vld [vmem:[%s3641 + $0x2c] sm:$0xf]
  %v3654 = vld [vmem:[%s3641 + $0x30] sm:$0xf]
  %v3655 = vld [vmem:[%s3641 + $0x34] sm:$0xf]
  %v3656 = vld [vmem:[%s3641 + $0x38] sm:$0xf]
  %v3657 = vld [vmem:[%s3641 + $0x3c] sm:$0xf]
  %v3658 = vld [vmem:[%s3641 + $0x40] sm:$0xf]
  %v3659 = vld [vmem:[%s3641 + $0x44] sm:$0xf]
  %v3660 = vld [vmem:[%s3641 + $0x48] sm:$0xf]
  %v3661 = vld [vmem:[%s3641 + $0x4c] sm:$0xf]
  %v3662 = vld [vmem:[%s3641 + $0x50] sm:$0xf]
  %v3663 = vld [vmem:[%s3641 + $0x54] sm:$0xf]
  %v3664 = vld [vmem:[%s3641 + $0x58] sm:$0xf]
  %v3665 = vld [vmem:[%s3641 + $0x5c] sm:$0xf]
  %v3666 = vld [vmem:[%s3641 + $0x60] sm:$0xf]
  %v3667 = vld [vmem:[%s3641 + $0x64] sm:$0xf]
  %v3668 = vld [vmem:[%s3641 + $0x68] sm:$0xf]
  %v3669 = vld [vmem:[%s3641 + $0x6c] sm:$0xf]
  %v3670 = vld [vmem:[%s3641 + $0x70] sm:$0xf]
  %v3671 = vld [vmem:[%s3641 + $0x74] sm:$0xf]
  %v3672 = vld [vmem:[%s3641 + $0x78] sm:$0xf]
  %v3673 = vld [vmem:[%s3641 + $0x7c] sm:$0xf]
  %v3674 = vld [vmem:[%s3641 + $0x80] sm:$0xf]
  %v3675 = vld [vmem:[%s3641 + $0x84] sm:$0xf]
  %v3676 = vld [vmem:[%s3641 + $0x88] sm:$0xf]
  %v3677 = vld [vmem:[%s3641 + $0x8c] sm:$0xf]
  %v3678 = vld [vmem:[%s3641 + $0x90] sm:$0xf]
  %v3679 = vld [vmem:[%s3641 + $0x94] sm:$0xf]
  %v3680 = vld [vmem:[%s3641 + $0x98] sm:$0xf]
  %v3681 = vld [vmem:[%s3641 + $0x9c] sm:$0xf]
  %v3682 = vld [vmem:[%s3641 + $0xa0] sm:$0xf]
  %v3683 = vld [vmem:[%s3641 + $0xa4] sm:$0xf]
  %v3684 = vld [vmem:[%s3641 + $0xa8] sm:$0xf]
  %v3685 = vld [vmem:[%s3641 + $0xac] sm:$0xf]
  %v3686 = vld [vmem:[%s3641 + $0xb0] sm:$0xf]
  %v3687 = vld [vmem:[%s3641 + $0xb4] sm:$0xf]
  %v3688 = vld [vmem:[%s3641 + $0xb8] sm:$0xf]
  %v3689 = vld [vmem:[%s3641 + $0xbc] sm:$0xf]
  %v3690 = vld [vmem:[%s3641 + $0xc0] sm:$0xf]
  %v3691 = vld [vmem:[%s3641 + $0xc4] sm:$0xf]
  %v3692 = vld [vmem:[%s3641 + $0xc8] sm:$0xf]
  %v3693 = vld [vmem:[%s3641 + $0xcc] sm:$0xf]
  %v3694 = vld [vmem:[%s3641 + $0xd0] sm:$0xf]
  %v3695 = vld [vmem:[%s3641 + $0xd4] sm:$0xf]
  %v3696 = vld [vmem:[%s3641 + $0xd8] sm:$0xf]
  %v3697 = vld [vmem:[%s3641 + $0xdc] sm:$0x1]
  %v3698 = vunpack.c.l.bf16 %v3642
  %v3699 = vunpack.c.l.bf16 %v3643
  %v3700 = vunpack.c.l.bf16 %v3644
  %v3701 = vunpack.c.l.bf16 %v3645
  %v3702 = vunpack.c.l.bf16 %v3646
  %v3703 = vunpack.c.l.bf16 %v3647
  %v3704 = vunpack.c.l.bf16 %v3648
  %v3705 = vunpack.c.l.bf16 %v3649
  %v3706 = vunpack.c.l.bf16 %v3650
  %v3707 = vunpack.c.l.bf16 %v3651
  %v3708 = vunpack.c.l.bf16 %v3652
  %v3709 = vunpack.c.l.bf16 %v3653
  %v3710 = vunpack.c.l.bf16 %v3654
  %v3711 = vunpack.c.l.bf16 %v3655
  %v3712 = vunpack.c.l.bf16 %v3656
  %v3713 = vunpack.c.l.bf16 %v3657
  %v3714 = vunpack.c.l.bf16 %v3658
  %v3715 = vunpack.c.l.bf16 %v3659
  %v3716 = vunpack.c.l.bf16 %v3660
  %v3717 = vunpack.c.l.bf16 %v3661
  %v3718 = vunpack.c.l.bf16 %v3662
  %v3719 = vunpack.c.l.bf16 %v3663
  %v3720 = vunpack.c.l.bf16 %v3664
  %v3721 = vunpack.c.l.bf16 %v3665
  %v3722 = vunpack.c.l.bf16 %v3666
  %v3723 = vunpack.c.l.bf16 %v3667
  %v3724 = vunpack.c.l.bf16 %v3668
  %v3725 = vunpack.c.l.bf16 %v3669
  %v3726 = vunpack.c.l.bf16 %v3670
  %v3727 = vunpack.c.l.bf16 %v3671
  %v3728 = vunpack.c.l.bf16 %v3672
  %v3729 = vunpack.c.l.bf16 %v3673
  %v3730 = vunpack.c.l.bf16 %v3674
  %v3731 = vunpack.c.l.bf16 %v3675
  %v3732 = vunpack.c.l.bf16 %v3676
  %v3733 = vunpack.c.l.bf16 %v3677
  %v3734 = vunpack.c.l.bf16 %v3678
  %v3735 = vunpack.c.l.bf16 %v3679
  %v3736 = vunpack.c.l.bf16 %v3680
  %v3737 = vunpack.c.l.bf16 %v3681
  %v3738 = vunpack.c.l.bf16 %v3682
  %v3739 = vunpack.c.l.bf16 %v3683
  %v3740 = vunpack.c.l.bf16 %v3684
  %v3741 = vunpack.c.l.bf16 %v3685
  %v3742 = vunpack.c.l.bf16 %v3686
  %v3743 = vunpack.c.l.bf16 %v3687
  %v3744 = vunpack.c.l.bf16 %v3688
  %v3745 = vunpack.c.l.bf16 %v3689
  %v3746 = vunpack.c.l.bf16 %v3690
  %v3747 = vunpack.c.l.bf16 %v3691
  %v3748 = vunpack.c.l.bf16 %v3692
  %v3749 = vunpack.c.l.bf16 %v3693
  %v3750 = vunpack.c.l.bf16 %v3694
  %v3751 = vunpack.c.l.bf16 %v3695
  %v3752 = vunpack.c.l.bf16 %v3696
  %v3753 = vunpack.c.l.bf16 %v3697
  %v3755 = vsel %vm561, %v3753, 0
  %3757 = vmatprep.subr.mxu0 0.0
  %3758 = vmatpush1.msra.mxu0 %v3698
  %3759 = vmatprep.subr.mxu0 0.0
  %3760 = vmatpush1.msra.mxu0 %v3699
  %3761 = vmatprep.subr.mxu0 0.0
  %3762 = vmatpush1.msra.mxu0 %v3700
  %3763 = vmatprep.subr.mxu0 0.0
  %3764 = vmatpush1.msra.mxu0 %v3701
  %3765 = vmatprep.subr.mxu0 0.0
  %3766 = vmatpush1.msra.mxu0 %v3702
  %3767 = vmatprep.subr.mxu0 0.0
  %3768 = vmatpush1.msra.mxu0 %v3703
  %3769 = vmatprep.subr.mxu0 0.0
  %3770 = vmatpush1.msra.mxu0 %v3704
  %3771 = vmatprep.subr.mxu0 0.0
  %3772 = vmatpush1.msra.mxu0 %v3705
  %3773 = vmatprep.subr.mxu0 0.0
  %3774 = vmatpush1.msra.mxu0 %v3706
  %3775 = vmatprep.subr.mxu0 0.0
  %3776 = vmatpush1.msra.mxu0 %v3707
  %3777 = vmatprep.subr.mxu0 0.0
  %3778 = vmatpush1.msra.mxu0 %v3708
  %3779 = vmatprep.subr.mxu0 0.0
  %3780 = vmatpush1.msra.mxu0 %v3709
  %3781 = vmatprep.subr.mxu0 0.0
  %3782 = vmatpush1.msra.mxu0 %v3710
  %3783 = vmatprep.subr.mxu0 0.0
  %3784 = vmatpush1.msra.mxu0 %v3711
  %3785 = vmatprep.subr.mxu0 0.0
  %3786 = vmatpush1.msra.mxu0 %v3712
  %3787 = vmatprep.subr.mxu0 0.0
  %3788 = vmatpush1.msra.mxu0 %v3713
  %3789 = vmatprep.subr.mxu0 0.0
  %3790 = vmatpush1.msra.mxu0 %v3714
  %3791 = vmatprep.subr.mxu0 0.0
  %3792 = vmatpush1.msra.mxu0 %v3715
  %3793 = vmatprep.subr.mxu0 0.0
  %3794 = vmatpush1.msra.mxu0 %v3716
  %3795 = vmatprep.subr.mxu0 0.0
  %3796 = vmatpush1.msra.mxu0 %v3717
  %3797 = vmatprep.subr.mxu0 0.0
  %3798 = vmatpush1.msra.mxu0 %v3718
  %3799 = vmatprep.subr.mxu0 0.0
  %3800 = vmatpush1.msra.mxu0 %v3719
  %3801 = vmatprep.subr.mxu0 0.0
  %3802 = vmatpush1.msra.mxu0 %v3720
  %3803 = vmatprep.subr.mxu0 0.0
  %3804 = vmatpush1.msra.mxu0 %v3721
  %3805 = vmatprep.subr.mxu0 0.0
  %3806 = vmatpush1.msra.mxu0 %v3722
  %3807 = vmatprep.subr.mxu0 0.0
  %3808 = vmatpush1.msra.mxu0 %v3723
  %3809 = vmatprep.subr.mxu0 0.0
  %3810 = vmatpush1.msra.mxu0 %v3724
  %3811 = vmatprep.subr.mxu0 0.0
  %3812 = vmatpush1.msra.mxu0 %v3725
  %3813 = vmatprep.subr.mxu0 0.0
  %3814 = vmatpush1.msra.mxu0 %v3726
  %3815 = vmatprep.subr.mxu0 0.0
  %3816 = vmatpush1.msra.mxu0 %v3727
  %3817 = vmatprep.subr.mxu0 0.0
  %3818 = vmatpush1.msra.mxu0 %v3728
  %3819 = vmatprep.subr.mxu0 0.0
  %3820 = vmatpush1.msra.mxu0 %v3729
  %3821 = vmatprep.mubr.f32.mxu0 %v436
  %3822 = vmatmul.mubr.f32.gmra.mrb[0].mxu0 %v435
  %v3823 = vpop.f32.mrb[0].mxu0
  %v3824 = vadd.f32 0.0, %v3823
  %v3825 = vpop.f32.mrb[0].mxu0
  %3826 = vmatprep.mubr.f32.mxu0 %v440
  %3827 = vmatmul.mubr.f32.gmra.mrb[0].mxu0 %v439
  %v3828 = vpop.f32.mrb[0].mxu0
  %v3829 = vadd.f32 0.0, %v3828
  %v3830 = vpop.f32.mrb[0].mxu0
  %3831 = vdwg.mxu0
  %3832 = vmatprep.subr.mxu0 0.0
  %3833 = vmatpush1.msra.mxu0 %v3730
  %3834 = vmatprep.subr.mxu0 0.0
  %3835 = vmatpush1.msra.mxu0 %v3731
  %3836 = vmatprep.subr.mxu0 0.0
  %3837 = vmatpush1.msra.mxu0 %v3732
  %3838 = vmatprep.subr.mxu0 0.0
  %3839 = vmatpush1.msra.mxu0 %v3733
  %3840 = vmatprep.subr.mxu0 0.0
  %3841 = vmatpush1.msra.mxu0 %v3734
  %3842 = vmatprep.subr.mxu0 0.0
  %3843 = vmatpush1.msra.mxu0 %v3735
  %3844 = vmatprep.subr.mxu0 0.0
  %3845 = vmatpush1.msra.mxu0 %v3736
  %3846 = vmatprep.subr.mxu0 0.0
  %3847 = vmatpush1.msra.mxu0 %v3737
  %3848 = vmatprep.subr.mxu0 0.0
  %3849 = vmatpush1.msra.mxu0 %v3738
  %3850 = vmatprep.subr.mxu0 0.0
  %3851 = vmatpush1.msra.mxu0 %v3739
  %3852 = vmatprep.subr.mxu0 0.0
  %3853 = vmatpush1.msra.mxu0 %v3740
  %3854 = vmatprep.subr.mxu0 0.0
  %3855 = vmatpush1.msra.mxu0 %v3741
  %3856 = vmatprep.subr.mxu0 0.0
  %3857 = vmatpush1.msra.mxu0 %v3742
  %3858 = vmatprep.subr.mxu0 0.0
  %3859 = vmatpush1.msra.mxu0 %v3743
  %3860 = vmatprep.subr.mxu0 0.0
  %3861 = vmatpush1.msra.mxu0 %v3744
  %3862 = vmatprep.subr.mxu0 0.0
  %3863 = vmatpush1.msra.mxu0 %v3745
  %3864 = vmatprep.subr.mxu0 0.0
  %3865 = vmatpush1.msra.mxu0 %v3746
  %3866 = vmatprep.subr.mxu0 0.0
  %3867 = vmatpush1.msra.mxu0 %v3747
  %3868 = vmatprep.subr.mxu0 0.0
  %3869 = vmatpush1.msra.mxu0 %v3748
  %3870 = vmatprep.subr.mxu0 0.0
  %3871 = vmatpush1.msra.mxu0 %v3749
  %3872 = vmatprep.subr.mxu0 0.0
  %3873 = vmatpush1.msra.mxu0 %v3750
  %3874 = vmatprep.subr.mxu0 0.0
  %3875 = vmatpush1.msra.mxu0 %v3751
  %3876 = vmatprep.subr.mxu0 0.0
  %3877 = vmatpush1.msra.mxu0 %v3752
  %3878 = vmatprep.subr.mxu0 0.0
  %3879 = vmatpush1.msra.mxu0 %v3755
  %3880 = vmatprep.subr.mxu0 0.0
  %3881 = vmatpush1.msra.mxu0 0.0
  %3882 = vmatprep.subr.mxu0 0.0
  %3883 = vmatpush1.msra.mxu0 0.0
  %3884 = vmatprep.subr.mxu0 0.0
  %3885 = vmatpush1.msra.mxu0 0.0
  %3886 = vmatprep.subr.mxu0 0.0
  %3887 = vmatpush1.msra.mxu0 0.0
  %3888 = vmatprep.subr.mxu0 0.0
  %3889 = vmatpush1.msra.mxu0 0.0
  %3890 = vmatprep.subr.mxu0 0.0
  %3891 = vmatpush1.msra.mxu0 0.0
  %3892 = vmatprep.subr.mxu0 0.0
  %3893 = vmatpush1.msra.mxu0 0.0
  %3894 = vmatprep.subr.mxu0 0.0
  %3895 = vmatpush1.msra.mxu0 0.0
  %3896 = vmatprep.mubr.f32.mxu0 %v556
  %3897 = vmatmul.mubr.f32.gmra.mrb[0].mxu0 %v437
  %v3898 = vpop.f32.mrb[0].mxu0
  %v3899 = vadd.f32 %v3824, %v3898
  %v3900 = vpop.f32.mrb[0].mxu0
  %3901 = vmatprep.mubr.f32.mxu0 %v559
  %3902 = vmatmul.mubr.f32.gmra.mrb[0].mxu0 %v441
  %v3903 = vpop.f32.mrb[0].mxu0
  %v3904 = vadd.f32 %v3829, %v3903
  %v3905 = vpop.f32.mrb[0].mxu0
  %3906 = vdwg.mxu0
  %s3907 = scalar_lea.vmem %s5, 2912
  %v3908 = vld [vmem:[%s3907] sm:$0xf]
  %v3909 = vld [vmem:[%s3907 + $0x4] sm:$0xf]
  %v3910 = vld [vmem:[%s3907 + $0x8] sm:$0xf]
  %v3911 = vld [vmem:[%s3907 + $0xc] sm:$0xf]
  %v3912 = vld [vmem:[%s3907 + $0x10] sm:$0xf]
  %v3913 = vld [vmem:[%s3907 + $0x14] sm:$0xf]
  %v3914 = vld [vmem:[%s3907 + $0x18] sm:$0xf]
  %v3915 = vld [vmem:[%s3907 + $0x1c] sm:$0xf]
  %v3916 = vld [vmem:[%s3907 + $0x20] sm:$0xf]
  %v3917 = vld [vmem:[%s3907 + $0x24] sm:$0xf]
  %v3918 = vld [vmem:[%s3907 + $0x28] sm:$0xf]
  %v3919 = vld [vmem:[%s3907 + $0x2c] sm:$0xf]
  %v3920 = vld [vmem:[%s3907 + $0x30] sm:$0xf]
  %v3921 = vld [vmem:[%s3907 + $0x34] sm:$0xf]
  %v3922 = vld [vmem:[%s3907 + $0x38] sm:$0xf]
  %v3923 = vld [vmem:[%s3907 + $0x3c] sm:$0xf]
  %v3924 = vld [vmem:[%s3907 + $0x40] sm:$0xf]
  %v3925 = vld [vmem:[%s3907 + $0x44] sm:$0xf]
  %v3926 = vld [vmem:[%s3907 + $0x48] sm:$0xf]
  %v3927 = vld [vmem:[%s3907 + $0x4c] sm:$0xf]
  %v3928 = vld [vmem:[%s3907 + $0x50] sm:$0xf]
  %v3929 = vld [vmem:[%s3907 + $0x54] sm:$0xf]
  %v3930 = vld [vmem:[%s3907 + $0x58] sm:$0xf]
  %v3931 = vld [vmem:[%s3907 + $0x5c] sm:$0xf]
  %v3932 = vld [vmem:[%s3907 + $0x60] sm:$0xf]
  %v3933 = vld [vmem:[%s3907 + $0x64] sm:$0xf]
  %v3934 = vld [vmem:[%s3907 + $0x68] sm:$0xf]
  %v3935 = vld [vmem:[%s3907 + $0x6c] sm:$0xf]
  %v3936 = vld [vmem:[%s3907 + $0x70] sm:$0xf]
  %v3937 = vld [vmem:[%s3907 + $0x74] sm:$0xf]
  %v3938 = vld [vmem:[%s3907 + $0x78] sm:$0xf]
  %v3939 = vld [vmem:[%s3907 + $0x7c] sm:$0xf]
  %v3940 = vld [vmem:[%s3907 + $0x80] sm:$0xf]
  %v3941 = vld [vmem:[%s3907 + $0x84] sm:$0xf]
  %v3942 = vld [vmem:[%s3907 + $0x88] sm:$0xf]
  %v3943 = vld [vmem:[%s3907 + $0x8c] sm:$0xf]
  %v3944 = vld [vmem:[%s3907 + $0x90] sm:$0xf]
  %v3945 = vld [vmem:[%s3907 + $0x94] sm:$0xf]
  %v3946 = vld [vmem:[%s3907 + $0x98] sm:$0xf]
  %v3947 = vld [vmem:[%s3907 + $0x9c] sm:$0xf]
  %v3948 = vld [vmem:[%s3907 + $0xa0] sm:$0xf]
  %v3949 = vld [vmem:[%s3907 + $0xa4] sm:$0xf]
  %v3950 = vld [vmem:[%s3907 + $0xa8] sm:$0xf]
  %v3951 = vld [vmem:[%s3907 + $0xac] sm:$0xf]
  %v3952 = vld [vmem:[%s3907 + $0xb0] sm:$0xf]
  %v3953 = vld [vmem:[%s3907 + $0xb4] sm:$0xf]
  %v3954 = vld [vmem:[%s3907 + $0xb8] sm:$0xf]
  %v3955 = vld [vmem:[%s3907 + $0xbc] sm:$0xf]
  %v3956 = vld [vmem:[%s3907 + $0xc0] sm:$0xf]
  %v3957 = vld [vmem:[%s3907 + $0xc4] sm:$0xf]
  %v3958 = vld [vmem:[%s3907 + $0xc8] sm:$0xf]
  %v3959 = vld [vmem:[%s3907 + $0xcc] sm:$0xf]
  %v3960 = vld [vmem:[%s3907 + $0xd0] sm:$0xf]
  %v3961 = vld [vmem:[%s3907 + $0xd4] sm:$0xf]
  %v3962 = vld [vmem:[%s3907 + $0xd8] sm:$0xf]
  %v3963 = vld [vmem:[%s3907 + $0xdc] sm:$0x1]
  %v3964 = vunpack.c.l.bf16 %v3908
  %v3965 = vunpack.c.l.bf16 %v3909
  %v3966 = vunpack.c.l.bf16 %v3910
  %v3967 = vunpack.c.l.bf16 %v3911
  %v3968 = vunpack.c.l.bf16 %v3912
  %v3969 = vunpack.c.l.bf16 %v3913
  %v3970 = vunpack.c.l.bf16 %v3914
  %v3971 = vunpack.c.l.bf16 %v3915
  %v3972 = vunpack.c.l.bf16 %v3916
  %v3973 = vunpack.c.l.bf16 %v3917
  %v3974 = vunpack.c.l.bf16 %v3918
  %v3975 = vunpack.c.l.bf16 %v3919
  %v3976 = vunpack.c.l.bf16 %v3920
  %v3977 = vunpack.c.l.bf16 %v3921
  %v3978 = vunpack.c.l.bf16 %v3922
  %v3979 = vunpack.c.l.bf16 %v3923
  %v3980 = vunpack.c.l.bf16 %v3924
  %v3981 = vunpack.c.l.bf16 %v3925
  %v3982 = vunpack.c.l.bf16 %v3926
  %v3983 = vunpack.c.l.bf16 %v3927
  %v3984 = vunpack.c.l.bf16 %v3928
  %v3985 = vunpack.c.l.bf16 %v3929
  %v3986 = vunpack.c.l.bf16 %v3930
  %v3987 = vunpack.c.l.bf16 %v3931
  %v3988 = vunpack.c.l.bf16 %v3932
  %v3989 = vunpack.c.l.bf16 %v3933
  %v3990 = vunpack.c.l.bf16 %v3934
  %v3991 = vunpack.c.l.bf16 %v3935
  %v3992 = vunpack.c.l.bf16 %v3936
  %v3993 = vunpack.c.l.bf16 %v3937
  %v3994 = vunpack.c.l.bf16 %v3938
  %v3995 = vunpack.c.l.bf16 %v3939
  %v3996 = vunpack.c.l.bf16 %v3940
  %v3997 = vunpack.c.l.bf16 %v3941
  %v3998 = vunpack.c.l.bf16 %v3942
  %v3999 = vunpack.c.l.bf16 %v3943
  %v4000 = vunpack.c.l.bf16 %v3944
  %v4001 = vunpack.c.l.bf16 %v3945
  %v4002 = vunpack.c.l.bf16 %v3946
  %v4003 = vunpack.c.l.bf16 %v3947
  %v4004 = vunpack.c.l.bf16 %v3948
  %v4005 = vunpack.c.l.bf16 %v3949
  %v4006 = vunpack.c.l.bf16 %v3950
  %v4007 = vunpack.c.l.bf16 %v3951
  %v4008 = vunpack.c.l.bf16 %v3952
  %v4009 = vunpack.c.l.bf16 %v3953
  %v4010 = vunpack.c.l.bf16 %v3954
  %v4011 = vunpack.c.l.bf16 %v3955
  %v4012 = vunpack.c.l.bf16 %v3956
  %v4013 = vunpack.c.l.bf16 %v3957
  %v4014 = vunpack.c.l.bf16 %v3958
  %v4015 = vunpack.c.l.bf16 %v3959
  %v4016 = vunpack.c.l.bf16 %v3960
  %v4017 = vunpack.c.l.bf16 %v3961
  %v4018 = vunpack.c.l.bf16 %v3962
  %v4019 = vunpack.c.l.bf16 %v3963
  %v4021 = vsel %vm561, %v4019, 0
  %4023 = vmatprep.subr.mxu0 0.0
  %4024 = vmatpush1.msra.mxu0 %v3964
  %4025 = vmatprep.subr.mxu0 0.0
  %4026 = vmatpush1.msra.mxu0 %v3965
  %4027 = vmatprep.subr.mxu0 0.0
  %4028 = vmatpush1.msra.mxu0 %v3966
  %4029 = vmatprep.subr.mxu0 0.0
  %4030 = vmatpush1.msra.mxu0 %v3967
  %4031 = vmatprep.subr.mxu0 0.0
  %4032 = vmatpush1.msra.mxu0 %v3968
  %4033 = vmatprep.subr.mxu0 0.0
  %4034 = vmatpush1.msra.mxu0 %v3969
  %4035 = vmatprep.subr.mxu0 0.0
  %4036 = vmatpush1.msra.mxu0 %v3970
  %4037 = vmatprep.subr.mxu0 0.0
  %4038 = vmatpush1.msra.mxu0 %v3971
  %4039 = vmatprep.subr.mxu0 0.0
  %4040 = vmatpush1.msra.mxu0 %v3972
  %4041 = vmatprep.subr.mxu0 0.0
  %4042 = vmatpush1.msra.mxu0 %v3973
  %4043 = vmatprep.subr.mxu0 0.0
  %4044 = vmatpush1.msra.mxu0 %v3974
  %4045 = vmatprep.subr.mxu0 0.0
  %4046 = vmatpush1.msra.mxu0 %v3975
  %4047 = vmatprep.subr.mxu0 0.0
  %4048 = vmatpush1.msra.mxu0 %v3976
  %4049 = vmatprep.subr.mxu0 0.0
  %4050 = vmatpush1.msra.mxu0 %v3977
  %4051 = vmatprep.subr.mxu0 0.0
  %4052 = vmatpush1.msra.mxu0 %v3978
  %4053 = vmatprep.subr.mxu0 0.0
  %4054 = vmatpush1.msra.mxu0 %v3979
  %4055 = vmatprep.subr.mxu0 0.0
  %4056 = vmatpush1.msra.mxu0 %v3980
  %4057 = vmatprep.subr.mxu0 0.0
  %4058 = vmatpush1.msra.mxu0 %v3981
  %4059 = vmatprep.subr.mxu0 0.0
  %4060 = vmatpush1.msra.mxu0 %v3982
  %4061 = vmatprep.subr.mxu0 0.0
  %4062 = vmatpush1.msra.mxu0 %v3983
  %4063 = vmatprep.subr.mxu0 0.0
  %4064 = vmatpush1.msra.mxu0 %v3984
  %4065 = vmatprep.subr.mxu0 0.0
  %4066 = vmatpush1.msra.mxu0 %v3985
  %4067 = vmatprep.subr.mxu0 0.0
  %4068 = vmatpush1.msra.mxu0 %v3986
  %4069 = vmatprep.subr.mxu0 0.0
  %4070 = vmatpush1.msra.mxu0 %v3987
  %4071 = vmatprep.subr.mxu0 0.0
  %4072 = vmatpush1.msra.mxu0 %v3988
  %4073 = vmatprep.subr.mxu0 0.0
  %4074 = vmatpush1.msra.mxu0 %v3989
  %4075 = vmatprep.subr.mxu0 0.0
  %4076 = vmatpush1.msra.mxu0 %v3990
  %4077 = vmatprep.subr.mxu0 0.0
  %4078 = vmatpush1.msra.mxu0 %v3991
  %4079 = vmatprep.subr.mxu0 0.0
  %4080 = vmatpush1.msra.mxu0 %v3992
  %4081 = vmatprep.subr.mxu0 0.0
  %4082 = vmatpush1.msra.mxu0 %v3993
  %4083 = vmatprep.subr.mxu0 0.0
  %4084 = vmatpush1.msra.mxu0 %v3994
  %4085 = vmatprep.subr.mxu0 0.0
  %4086 = vmatpush1.msra.mxu0 %v3995
  %4087 = vmatprep.mubr.f32.mxu0 %v436
  %4088 = vmatmul.mubr.f32.gmra.mrb[0].mxu0 %v435
  %v4089 = vpop.f32.mrb[0].mxu0
  %v4090 = vadd.f32 0.0, %v4089
  %v4091 = vpop.f32.mrb[0].mxu0
  %4092 = vmatprep.mubr.f32.mxu0 %v440
  %4093 = vmatmul.mubr.f32.gmra.mrb[0].mxu0 %v439
  %v4094 = vpop.f32.mrb[0].mxu0
  %v4095 = vadd.f32 0.0, %v4094
  %v4096 = vpop.f32.mrb[0].mxu0
  %4097 = vdwg.mxu0
  %4098 = vmatprep.subr.mxu0 0.0
  %4099 = vmatpush1.msra.mxu0 %v3996
  %4100 = vmatprep.subr.mxu0 0.0
  %4101 = vmatpush1.msra.mxu0 %v3997
  %4102 = vmatprep.subr.mxu0 0.0
  %4103 = vmatpush1.msra.mxu0 %v3998
  %4104 = vmatprep.subr.mxu0 0.0
  %4105 = vmatpush1.msra.mxu0 %v3999
  %4106 = vmatprep.subr.mxu0 0.0
  %4107 = vmatpush1.msra.mxu0 %v4000
  %4108 = vmatprep.subr.mxu0 0.0
  %4109 = vmatpush1.msra.mxu0 %v4001
  %4110 = vmatprep.subr.mxu0 0.0
  %4111 = vmatpush1.msra.mxu0 %v4002
  %4112 = vmatprep.subr.mxu0 0.0
  %4113 = vmatpush1.msra.mxu0 %v4003
  %4114 = vmatprep.subr.mxu0 0.0
  %4115 = vmatpush1.msra.mxu0 %v4004
  %4116 = vmatprep.subr.mxu0 0.0
  %4117 = vmatpush1.msra.mxu0 %v4005
  %4118 = vmatprep.subr.mxu0 0.0
  %4119 = vmatpush1.msra.mxu0 %v4006
  %4120 = vmatprep.subr.mxu0 0.0
  %4121 = vmatpush1.msra.mxu0 %v4007
  %4122 = vmatprep.subr.mxu0 0.0
  %4123 = vmatpush1.msra.mxu0 %v4008
  %4124 = vmatprep.subr.mxu0 0.0
  %4125 = vmatpush1.msra.mxu0 %v4009
  %4126 = vmatprep.subr.mxu0 0.0
  %4127 = vmatpush1.msra.mxu0 %v4010
  %4128 = vmatprep.subr.mxu0 0.0
  %4129 = vmatpush1.msra.mxu0 %v4011
  %4130 = vmatprep.subr.mxu0 0.0
  %4131 = vmatpush1.msra.mxu0 %v4012
  %4132 = vmatprep.subr.mxu0 0.0
  %4133 = vmatpush1.msra.mxu0 %v4013
  %4134 = vmatprep.subr.mxu0 0.0
  %4135 = vmatpush1.msra.mxu0 %v4014
  %4136 = vmatprep.subr.mxu0 0.0
  %4137 = vmatpush1.msra.mxu0 %v4015
  %4138 = vmatprep.subr.mxu0 0.0
  %4139 = vmatpush1.msra.mxu0 %v4016
  %4140 = vmatprep.subr.mxu0 0.0
  %4141 = vmatpush1.msra.mxu0 %v4017
  %4142 = vmatprep.subr.mxu0 0.0
  %4143 = vmatpush1.msra.mxu0 %v4018
  %4144 = vmatprep.subr.mxu0 0.0
  %4145 = vmatpush1.msra.mxu0 %v4021
  %4146 = vmatprep.subr.mxu0 0.0
  %4147 = vmatpush1.msra.mxu0 0.0
  %4148 = vmatprep.subr.mxu0 0.0
  %4149 = vmatpush1.msra.mxu0 0.0
  %4150 = vmatprep.subr.mxu0 0.0
  %4151 = vmatpush1.msra.mxu0 0.0
  %4152 = vmatprep.subr.mxu0 0.0
  %4153 = vmatpush1.msra.mxu0 0.0
  %4154 = vmatprep.subr.mxu0 0.0
  %4155 = vmatpush1.msra.mxu0 0.0
  %4156 = vmatprep.subr.mxu0 0.0
  %4157 = vmatpush1.msra.mxu0 0.0
  %4158 = vmatprep.subr.mxu0 0.0
  %4159 = vmatpush1.msra.mxu0 0.0
  %4160 = vmatprep.subr.mxu0 0.0
  %4161 = vmatpush1.msra.mxu0 0.0
  %4162 = vmatprep.mubr.f32.mxu0 %v556
  %4163 = vmatmul.mubr.f32.gmra.mrb[0].mxu0 %v437
  %v4164 = vpop.f32.mrb[0].mxu0
  %v4165 = vadd.f32 %v4090, %v4164
  %v4166 = vpop.f32.mrb[0].mxu0
  %4167 = vmatprep.mubr.f32.mxu0 %v559
  %4168 = vmatmul.mubr.f32.gmra.mrb[0].mxu0 %v441
  %v4169 = vpop.f32.mrb[0].mxu0
  %v4170 = vadd.f32 %v4095, %v4169
  %v4171 = vpop.f32.mrb[0].mxu0
  %4172 = vdwg.mxu0
  %s4173 = scalar_lea.vmem %s5, 3136
  %v4174 = vld [vmem:[%s4173] sm:$0xf]
  %v4175 = vld [vmem:[%s4173 + $0x4] sm:$0xf]
  %v4176 = vld [vmem:[%s4173 + $0x8] sm:$0xf]
  %v4177 = vld [vmem:[%s4173 + $0xc] sm:$0xf]
  %v4178 = vld [vmem:[%s4173 + $0x10] sm:$0xf]
  %v4179 = vld [vmem:[%s4173 + $0x14] sm:$0xf]
  %v4180 = vld [vmem:[%s4173 + $0x18] sm:$0xf]
  %v4181 = vld [vmem:[%s4173 + $0x1c] sm:$0xf]
  %v4182 = vld [vmem:[%s4173 + $0x20] sm:$0xf]
  %v4183 = vld [vmem:[%s4173 + $0x24] sm:$0xf]
  %v4184 = vld [vmem:[%s4173 + $0x28] sm:$0xf]
  %v4185 = vld [vmem:[%s4173 + $0x2c] sm:$0xf]
  %v4186 = vld [vmem:[%s4173 + $0x30] sm:$0xf]
  %v4187 = vld [vmem:[%s4173 + $0x34] sm:$0xf]
  %v4188 = vld [vmem:[%s4173 + $0x38] sm:$0xf]
  %v4189 = vld [vmem:[%s4173 + $0x3c] sm:$0xf]
  %v4190 = vld [vmem:[%s4173 + $0x40] sm:$0xf]
  %v4191 = vld [vmem:[%s4173 + $0x44] sm:$0xf]
  %v4192 = vld [vmem:[%s4173 + $0x48] sm:$0xf]
  %v4193 = vld [vmem:[%s4173 + $0x4c] sm:$0xf]
  %v4194 = vld [vmem:[%s4173 + $0x50] sm:$0xf]
  %v4195 = vld [vmem:[%s4173 + $0x54] sm:$0xf]
  %v4196 = vld [vmem:[%s4173 + $0x58] sm:$0xf]
  %v4197 = vld [vmem:[%s4173 + $0x5c] sm:$0xf]
  %v4198 = vld [vmem:[%s4173 + $0x60] sm:$0xf]
  %v4199 = vld [vmem:[%s4173 + $0x64] sm:$0xf]
  %v4200 = vld [vmem:[%s4173 + $0x68] sm:$0xf]
  %v4201 = vld [vmem:[%s4173 + $0x6c] sm:$0xf]
  %v4202 = vld [vmem:[%s4173 + $0x70] sm:$0xf]
  %v4203 = vld [vmem:[%s4173 + $0x74] sm:$0xf]
  %v4204 = vld [vmem:[%s4173 + $0x78] sm:$0xf]
  %v4205 = vld [vmem:[%s4173 + $0x7c] sm:$0xf]
  %v4206 = vld [vmem:[%s4173 + $0x80] sm:$0xf]
  %v4207 = vld [vmem:[%s4173 + $0x84] sm:$0xf]
  %v4208 = vld [vmem:[%s4173 + $0x88] sm:$0xf]
  %v4209 = vld [vmem:[%s4173 + $0x8c] sm:$0xf]
  %v4210 = vld [vmem:[%s4173 + $0x90] sm:$0xf]
  %v4211 = vld [vmem:[%s4173 + $0x94] sm:$0xf]
  %v4212 = vld [vmem:[%s4173 + $0x98] sm:$0xf]
  %v4213 = vld [vmem:[%s4173 + $0x9c] sm:$0xf]
  %v4214 = vld [vmem:[%s4173 + $0xa0] sm:$0xf]
  %v4215 = vld [vmem:[%s4173 + $0xa4] sm:$0xf]
  %v4216 = vld [vmem:[%s4173 + $0xa8] sm:$0xf]
  %v4217 = vld [vmem:[%s4173 + $0xac] sm:$0xf]
  %v4218 = vld [vmem:[%s4173 + $0xb0] sm:$0xf]
  %v4219 = vld [vmem:[%s4173 + $0xb4] sm:$0xf]
  %v4220 = vld [vmem:[%s4173 + $0xb8] sm:$0xf]
  %v4221 = vld [vmem:[%s4173 + $0xbc] sm:$0xf]
  %v4222 = vld [vmem:[%s4173 + $0xc0] sm:$0xf]
  %v4223 = vld [vmem:[%s4173 + $0xc4] sm:$0xf]
  %v4224 = vld [vmem:[%s4173 + $0xc8] sm:$0xf]
  %v4225 = vld [vmem:[%s4173 + $0xcc] sm:$0xf]
  %v4226 = vld [vmem:[%s4173 + $0xd0] sm:$0xf]
  %v4227 = vld [vmem:[%s4173 + $0xd4] sm:$0xf]
  %v4228 = vld [vmem:[%s4173 + $0xd8] sm:$0xf]
  %v4229 = vld [vmem:[%s4173 + $0xdc] sm:$0x1]
  %v4230 = vunpack.c.l.bf16 %v4174
  %v4231 = vunpack.c.l.bf16 %v4175
  %v4232 = vunpack.c.l.bf16 %v4176
  %v4233 = vunpack.c.l.bf16 %v4177
  %v4234 = vunpack.c.l.bf16 %v4178
  %v4235 = vunpack.c.l.bf16 %v4179
  %v4236 = vunpack.c.l.bf16 %v4180
  %v4237 = vunpack.c.l.bf16 %v4181
  %v4238 = vunpack.c.l.bf16 %v4182
  %v4239 = vunpack.c.l.bf16 %v4183
  %v4240 = vunpack.c.l.bf16 %v4184
  %v4241 = vunpack.c.l.bf16 %v4185
  %v4242 = vunpack.c.l.bf16 %v4186
  %v4243 = vunpack.c.l.bf16 %v4187
  %v4244 = vunpack.c.l.bf16 %v4188
  %v4245 = vunpack.c.l.bf16 %v4189
  %v4246 = vunpack.c.l.bf16 %v4190
  %v4247 = vunpack.c.l.bf16 %v4191
  %v4248 = vunpack.c.l.bf16 %v4192
  %v4249 = vunpack.c.l.bf16 %v4193
  %v4250 = vunpack.c.l.bf16 %v4194
  %v4251 = vunpack.c.l.bf16 %v4195
  %v4252 = vunpack.c.l.bf16 %v4196
  %v4253 = vunpack.c.l.bf16 %v4197
  %v4254 = vunpack.c.l.bf16 %v4198
  %v4255 = vunpack.c.l.bf16 %v4199
  %v4256 = vunpack.c.l.bf16 %v4200
  %v4257 = vunpack.c.l.bf16 %v4201
  %v4258 = vunpack.c.l.bf16 %v4202
  %v4259 = vunpack.c.l.bf16 %v4203
  %v4260 = vunpack.c.l.bf16 %v4204
  %v4261 = vunpack.c.l.bf16 %v4205
  %v4262 = vunpack.c.l.bf16 %v4206
  %v4263 = vunpack.c.l.bf16 %v4207
  %v4264 = vunpack.c.l.bf16 %v4208
  %v4265 = vunpack.c.l.bf16 %v4209
  %v4266 = vunpack.c.l.bf16 %v4210
  %v4267 = vunpack.c.l.bf16 %v4211
  %v4268 = vunpack.c.l.bf16 %v4212
  %v4269 = vunpack.c.l.bf16 %v4213
  %v4270 = vunpack.c.l.bf16 %v4214
  %v4271 = vunpack.c.l.bf16 %v4215
  %v4272 = vunpack.c.l.bf16 %v4216
  %v4273 = vunpack.c.l.bf16 %v4217
  %v4274 = vunpack.c.l.bf16 %v4218
  %v4275 = vunpack.c.l.bf16 %v4219
  %v4276 = vunpack.c.l.bf16 %v4220
  %v4277 = vunpack.c.l.bf16 %v4221
  %v4278 = vunpack.c.l.bf16 %v4222
  %v4279 = vunpack.c.l.bf16 %v4223
  %v4280 = vunpack.c.l.bf16 %v4224
  %v4281 = vunpack.c.l.bf16 %v4225
  %v4282 = vunpack.c.l.bf16 %v4226
  %v4283 = vunpack.c.l.bf16 %v4227
  %v4284 = vunpack.c.l.bf16 %v4228
  %v4285 = vunpack.c.l.bf16 %v4229
  %v4287 = vsel %vm561, %v4285, 0
  %4289 = vmatprep.subr.mxu0 0.0
  %4290 = vmatpush1.msra.mxu0 %v4230
  %4291 = vmatprep.subr.mxu0 0.0
  %4292 = vmatpush1.msra.mxu0 %v4231
  %4293 = vmatprep.subr.mxu0 0.0
  %4294 = vmatpush1.msra.mxu0 %v4232
  %4295 = vmatprep.subr.mxu0 0.0
  %4296 = vmatpush1.msra.mxu0 %v4233
  %4297 = vmatprep.subr.mxu0 0.0
  %4298 = vmatpush1.msra.mxu0 %v4234
  %4299 = vmatprep.subr.mxu0 0.0
  %4300 = vmatpush1.msra.mxu0 %v4235
  %4301 = vmatprep.subr.mxu0 0.0
  %4302 = vmatpush1.msra.mxu0 %v4236
  %4303 = vmatprep.subr.mxu0 0.0
  %4304 = vmatpush1.msra.mxu0 %v4237
  %4305 = vmatprep.subr.mxu0 0.0
  %4306 = vmatpush1.msra.mxu0 %v4238
  %4307 = vmatprep.subr.mxu0 0.0
  %4308 = vmatpush1.msra.mxu0 %v4239
  %4309 = vmatprep.subr.mxu0 0.0
  %4310 = vmatpush1.msra.mxu0 %v4240
  %4311 = vmatprep.subr.mxu0 0.0
  %4312 = vmatpush1.msra.mxu0 %v4241
  %4313 = vmatprep.subr.mxu0 0.0
  %4314 = vmatpush1.msra.mxu0 %v4242
  %4315 = vmatprep.subr.mxu0 0.0
  %4316 = vmatpush1.msra.mxu0 %v4243
  %4317 = vmatprep.subr.mxu0 0.0
  %4318 = vmatpush1.msra.mxu0 %v4244
  %4319 = vmatprep.subr.mxu0 0.0
  %4320 = vmatpush1.msra.mxu0 %v4245
  %4321 = vmatprep.subr.mxu0 0.0
  %4322 = vmatpush1.msra.mxu0 %v4246
  %4323 = vmatprep.subr.mxu0 0.0
  %4324 = vmatpush1.msra.mxu0 %v4247
  %4325 = vmatprep.subr.mxu0 0.0
  %4326 = vmatpush1.msra.mxu0 %v4248
  %4327 = vmatprep.subr.mxu0 0.0
  %4328 = vmatpush1.msra.mxu0 %v4249
  %4329 = vmatprep.subr.mxu0 0.0
  %4330 = vmatpush1.msra.mxu0 %v4250
  %4331 = vmatprep.subr.mxu0 0.0
  %4332 = vmatpush1.msra.mxu0 %v4251
  %4333 = vmatprep.subr.mxu0 0.0
  %4334 = vmatpush1.msra.mxu0 %v4252
  %4335 = vmatprep.subr.mxu0 0.0
  %4336 = vmatpush1.msra.mxu0 %v4253
  %4337 = vmatprep.subr.mxu0 0.0
  %4338 = vmatpush1.msra.mxu0 %v4254
  %4339 = vmatprep.subr.mxu0 0.0
  %4340 = vmatpush1.msra.mxu0 %v4255
  %4341 = vmatprep.subr.mxu0 0.0
  %4342 = vmatpush1.msra.mxu0 %v4256
  %4343 = vmatprep.subr.mxu0 0.0
  %4344 = vmatpush1.msra.mxu0 %v4257
  %4345 = vmatprep.subr.mxu0 0.0
  %4346 = vmatpush1.msra.mxu0 %v4258
  %4347 = vmatprep.subr.mxu0 0.0
  %4348 = vmatpush1.msra.mxu0 %v4259
  %4349 = vmatprep.subr.mxu0 0.0
  %4350 = vmatpush1.msra.mxu0 %v4260
  %4351 = vmatprep.subr.mxu0 0.0
  %4352 = vmatpush1.msra.mxu0 %v4261
  %4353 = vmatprep.mubr.f32.mxu0 %v436
  %4354 = vmatmul.mubr.f32.gmra.mrb[0].mxu0 %v435
  %v4355 = vpop.f32.mrb[0].mxu0
  %v4356 = vadd.f32 0.0, %v4355
  %v4357 = vpop.f32.mrb[0].mxu0
  %4358 = vmatprep.mubr.f32.mxu0 %v440
  %4359 = vmatmul.mubr.f32.gmra.mrb[0].mxu0 %v439
  %v4360 = vpop.f32.mrb[0].mxu0
  %v4361 = vadd.f32 0.0, %v4360
  %v4362 = vpop.f32.mrb[0].mxu0
  %4363 = vdwg.mxu0
  %4364 = vmatprep.subr.mxu0 0.0
  %4365 = vmatpush1.msra.mxu0 %v4262
  %4366 = vmatprep.subr.mxu0 0.0
  %4367 = vmatpush1.msra.mxu0 %v4263
  %4368 = vmatprep.subr.mxu0 0.0
  %4369 = vmatpush1.msra.mxu0 %v4264
  %4370 = vmatprep.subr.mxu0 0.0
  %4371 = vmatpush1.msra.mxu0 %v4265
  %4372 = vmatprep.subr.mxu0 0.0
  %4373 = vmatpush1.msra.mxu0 %v4266
  %4374 = vmatprep.subr.mxu0 0.0
  %4375 = vmatpush1.msra.mxu0 %v4267
  %4376 = vmatprep.subr.mxu0 0.0
  %4377 = vmatpush1.msra.mxu0 %v4268
  %4378 = vmatprep.subr.mxu0 0.0
  %4379 = vmatpush1.msra.mxu0 %v4269
  %4380 = vmatprep.subr.mxu0 0.0
  %4381 = vmatpush1.msra.mxu0 %v4270
  %4382 = vmatprep.subr.mxu0 0.0
  %4383 = vmatpush1.msra.mxu0 %v4271
  %4384 = vmatprep.subr.mxu0 0.0
  %4385 = vmatpush1.msra.mxu0 %v4272
  %4386 = vmatprep.subr.mxu0 0.0
  %4387 = vmatpush1.msra.mxu0 %v4273
  %4388 = vmatprep.subr.mxu0 0.0
  %4389 = vmatpush1.msra.mxu0 %v4274
  %4390 = vmatprep.subr.mxu0 0.0
  %4391 = vmatpush1.msra.mxu0 %v4275
  %4392 = vmatprep.subr.mxu0 0.0
  %4393 = vmatpush1.msra.mxu0 %v4276
  %4394 = vmatprep.subr.mxu0 0.0
  %4395 = vmatpush1.msra.mxu0 %v4277
  %4396 = vmatprep.subr.mxu0 0.0
  %4397 = vmatpush1.msra.mxu0 %v4278
  %4398 = vmatprep.subr.mxu0 0.0
  %4399 = vmatpush1.msra.mxu0 %v4279
  %4400 = vmatprep.subr.mxu0 0.0
  %4401 = vmatpush1.msra.mxu0 %v4280
  %4402 = vmatprep.subr.mxu0 0.0
  %4403 = vmatpush1.msra.mxu0 %v4281
  %4404 = vmatprep.subr.mxu0 0.0
  %4405 = vmatpush1.msra.mxu0 %v4282
  %4406 = vmatprep.subr.mxu0 0.0
  %4407 = vmatpush1.msra.mxu0 %v4283
  %4408 = vmatprep.subr.mxu0 0.0
  %4409 = vmatpush1.msra.mxu0 %v4284
  %4410 = vmatprep.subr.mxu0 0.0
  %4411 = vmatpush1.msra.mxu0 %v4287
  %4412 = vmatprep.subr.mxu0 0.0
  %4413 = vmatpush1.msra.mxu0 0.0
  %4414 = vmatprep.subr.mxu0 0.0
  %4415 = vmatpush1.msra.mxu0 0.0
  %4416 = vmatprep.subr.mxu0 0.0
  %4417 = vmatpush1.msra.mxu0 0.0
  %4418 = vmatprep.subr.mxu0 0.0
  %4419 = vmatpush1.msra.mxu0 0.0
  %4420 = vmatprep.subr.mxu0 0.0
  %4421 = vmatpush1.msra.mxu0 0.0
  %4422 = vmatprep.subr.mxu0 0.0
  %4423 = vmatpush1.msra.mxu0 0.0
  %4424 = vmatprep.subr.mxu0 0.0
  %4425 = vmatpush1.msra.mxu0 0.0
  %4426 = vmatprep.subr.mxu0 0.0
  %4427 = vmatpush1.msra.mxu0 0.0
  %4428 = vmatprep.mubr.f32.mxu0 %v556
  %4429 = vmatmul.mubr.f32.gmra.mrb[0].mxu0 %v437
  %v4430 = vpop.f32.mrb[0].mxu0
  %v4431 = vadd.f32 %v4356, %v4430
  %v4432 = vpop.f32.mrb[0].mxu0
  %4433 = vmatprep.mubr.f32.mxu0 %v559
  %4434 = vmatmul.mubr.f32.gmra.mrb[0].mxu0 %v441
  %v4435 = vpop.f32.mrb[0].mxu0
  %v4436 = vadd.f32 %v4361, %v4435
  %v4437 = vpop.f32.mrb[0].mxu0
  %4438 = vdwg.mxu0
  %s4439 = scalar_lea.vmem %s5, 3360
  %v4440 = vld [vmem:[%s4439] sm:$0xf]
  %v4441 = vld [vmem:[%s4439 + $0x4] sm:$0xf]
  %v4442 = vld [vmem:[%s4439 + $0x8] sm:$0xf]
  %v4443 = vld [vmem:[%s4439 + $0xc] sm:$0xf]
  %v4444 = vld [vmem:[%s4439 + $0x10] sm:$0xf]
  %v4445 = vld [vmem:[%s4439 + $0x14] sm:$0xf]
  %v4446 = vld [vmem:[%s4439 + $0x18] sm:$0xf]
  %v4447 = vld [vmem:[%s4439 + $0x1c] sm:$0xf]
  %v4448 = vld [vmem:[%s4439 + $0x20] sm:$0xf]
  %v4449 = vld [vmem:[%s4439 + $0x24] sm:$0xf]
  %v4450 = vld [vmem:[%s4439 + $0x28] sm:$0xf]
  %v4451 = vld [vmem:[%s4439 + $0x2c] sm:$0xf]
  %v4452 = vld [vmem:[%s4439 + $0x30] sm:$0xf]
  %v4453 = vld [vmem:[%s4439 + $0x34] sm:$0xf]
  %v4454 = vld [vmem:[%s4439 + $0x38] sm:$0xf]
  %v4455 = vld [vmem:[%s4439 + $0x3c] sm:$0xf]
  %v4456 = vld [vmem:[%s4439 + $0x40] sm:$0xf]
  %v4457 = vld [vmem:[%s4439 + $0x44] sm:$0xf]
  %v4458 = vld [vmem:[%s4439 + $0x48] sm:$0xf]
  %v4459 = vld [vmem:[%s4439 + $0x4c] sm:$0xf]
  %v4460 = vld [vmem:[%s4439 + $0x50] sm:$0xf]
  %v4461 = vld [vmem:[%s4439 + $0x54] sm:$0xf]
  %v4462 = vld [vmem:[%s4439 + $0x58] sm:$0xf]
  %v4463 = vld [vmem:[%s4439 + $0x5c] sm:$0xf]
  %v4464 = vld [vmem:[%s4439 + $0x60] sm:$0xf]
  %v4465 = vld [vmem:[%s4439 + $0x64] sm:$0xf]
  %v4466 = vld [vmem:[%s4439 + $0x68] sm:$0xf]
  %v4467 = vld [vmem:[%s4439 + $0x6c] sm:$0xf]
  %v4468 = vld [vmem:[%s4439 + $0x70] sm:$0xf]
  %v4469 = vld [vmem:[%s4439 + $0x74] sm:$0xf]
  %v4470 = vld [vmem:[%s4439 + $0x78] sm:$0xf]
  %v4471 = vld [vmem:[%s4439 + $0x7c] sm:$0xf]
  %v4472 = vld [vmem:[%s4439 + $0x80] sm:$0xf]
  %v4473 = vld [vmem:[%s4439 + $0x84] sm:$0xf]
  %v4474 = vld [vmem:[%s4439 + $0x88] sm:$0xf]
  %v4475 = vld [vmem:[%s4439 + $0x8c] sm:$0xf]
  %v4476 = vld [vmem:[%s4439 + $0x90] sm:$0xf]
  %v4477 = vld [vmem:[%s4439 + $0x94] sm:$0xf]
  %v4478 = vld [vmem:[%s4439 + $0x98] sm:$0xf]
  %v4479 = vld [vmem:[%s4439 + $0x9c] sm:$0xf]
  %v4480 = vld [vmem:[%s4439 + $0xa0] sm:$0xf]
  %v4481 = vld [vmem:[%s4439 + $0xa4] sm:$0xf]
  %v4482 = vld [vmem:[%s4439 + $0xa8] sm:$0xf]
  %v4483 = vld [vmem:[%s4439 + $0xac] sm:$0xf]
  %v4484 = vld [vmem:[%s4439 + $0xb0] sm:$0xf]
  %v4485 = vld [vmem:[%s4439 + $0xb4] sm:$0xf]
  %v4486 = vld [vmem:[%s4439 + $0xb8] sm:$0xf]
  %v4487 = vld [vmem:[%s4439 + $0xbc] sm:$0xf]
  %v4488 = vld [vmem:[%s4439 + $0xc0] sm:$0xf]
  %v4489 = vld [vmem:[%s4439 + $0xc4] sm:$0xf]
  %v4490 = vld [vmem:[%s4439 + $0xc8] sm:$0xf]
  %v4491 = vld [vmem:[%s4439 + $0xcc] sm:$0xf]
  %v4492 = vld [vmem:[%s4439 + $0xd0] sm:$0xf]
  %v4493 = vld [vmem:[%s4439 + $0xd4] sm:$0xf]
  %v4494 = vld [vmem:[%s4439 + $0xd8] sm:$0xf]
  %v4495 = vld [vmem:[%s4439 + $0xdc] sm:$0x1]
  %v4496 = vunpack.c.l.bf16 %v4440
  %v4497 = vunpack.c.l.bf16 %v4441
  %v4498 = vunpack.c.l.bf16 %v4442
  %v4499 = vunpack.c.l.bf16 %v4443
  %v4500 = vunpack.c.l.bf16 %v4444
  %v4501 = vunpack.c.l.bf16 %v4445
  %v4502 = vunpack.c.l.bf16 %v4446
  %v4503 = vunpack.c.l.bf16 %v4447
  %v4504 = vunpack.c.l.bf16 %v4448
  %v4505 = vunpack.c.l.bf16 %v4449
  %v4506 = vunpack.c.l.bf16 %v4450
  %v4507 = vunpack.c.l.bf16 %v4451
  %v4508 = vunpack.c.l.bf16 %v4452
  %v4509 = vunpack.c.l.bf16 %v4453
  %v4510 = vunpack.c.l.bf16 %v4454
  %v4511 = vunpack.c.l.bf16 %v4455
  %v4512 = vunpack.c.l.bf16 %v4456
  %v4513 = vunpack.c.l.bf16 %v4457
  %v4514 = vunpack.c.l.bf16 %v4458
  %v4515 = vunpack.c.l.bf16 %v4459
  %v4516 = vunpack.c.l.bf16 %v4460
  %v4517 = vunpack.c.l.bf16 %v4461
  %v4518 = vunpack.c.l.bf16 %v4462
  %v4519 = vunpack.c.l.bf16 %v4463
  %v4520 = vunpack.c.l.bf16 %v4464
  %v4521 = vunpack.c.l.bf16 %v4465
  %v4522 = vunpack.c.l.bf16 %v4466
  %v4523 = vunpack.c.l.bf16 %v4467
  %v4524 = vunpack.c.l.bf16 %v4468
  %v4525 = vunpack.c.l.bf16 %v4469
  %v4526 = vunpack.c.l.bf16 %v4470
  %v4527 = vunpack.c.l.bf16 %v4471
  %v4528 = vunpack.c.l.bf16 %v4472
  %v4529 = vunpack.c.l.bf16 %v4473
  %v4530 = vunpack.c.l.bf16 %v4474
  %v4531 = vunpack.c.l.bf16 %v4475
  %v4532 = vunpack.c.l.bf16 %v4476
  %v4533 = vunpack.c.l.bf16 %v4477
  %v4534 = vunpack.c.l.bf16 %v4478
  %v4535 = vunpack.c.l.bf16 %v4479
  %v4536 = vunpack.c.l.bf16 %v4480
  %v4537 = vunpack.c.l.bf16 %v4481
  %v4538 = vunpack.c.l.bf16 %v4482
  %v4539 = vunpack.c.l.bf16 %v4483
  %v4540 = vunpack.c.l.bf16 %v4484
  %v4541 = vunpack.c.l.bf16 %v4485
  %v4542 = vunpack.c.l.bf16 %v4486
  %v4543 = vunpack.c.l.bf16 %v4487
  %v4544 = vunpack.c.l.bf16 %v4488
  %v4545 = vunpack.c.l.bf16 %v4489
  %v4546 = vunpack.c.l.bf16 %v4490
  %v4547 = vunpack.c.l.bf16 %v4491
  %v4548 = vunpack.c.l.bf16 %v4492
  %v4549 = vunpack.c.l.bf16 %v4493
  %v4550 = vunpack.c.l.bf16 %v4494
  %v4551 = vunpack.c.l.bf16 %v4495
  %v4553 = vsel %vm561, %v4551, 0
  %4555 = vmatprep.subr.mxu0 0.0
  %4556 = vmatpush1.msra.mxu0 %v4496
  %4557 = vmatprep.subr.mxu0 0.0
  %4558 = vmatpush1.msra.mxu0 %v4497
  %4559 = vmatprep.subr.mxu0 0.0
  %4560 = vmatpush1.msra.mxu0 %v4498
  %4561 = vmatprep.subr.mxu0 0.0
  %4562 = vmatpush1.msra.mxu0 %v4499
  %4563 = vmatprep.subr.mxu0 0.0
  %4564 = vmatpush1.msra.mxu0 %v4500
  %4565 = vmatprep.subr.mxu0 0.0
  %4566 = vmatpush1.msra.mxu0 %v4501
  %4567 = vmatprep.subr.mxu0 0.0
  %4568 = vmatpush1.msra.mxu0 %v4502
  %4569 = vmatprep.subr.mxu0 0.0
  %4570 = vmatpush1.msra.mxu0 %v4503
  %4571 = vmatprep.subr.mxu0 0.0
  %4572 = vmatpush1.msra.mxu0 %v4504
  %4573 = vmatprep.subr.mxu0 0.0
  %4574 = vmatpush1.msra.mxu0 %v4505
  %4575 = vmatprep.subr.mxu0 0.0
  %4576 = vmatpush1.msra.mxu0 %v4506
  %4577 = vmatprep.subr.mxu0 0.0
  %4578 = vmatpush1.msra.mxu0 %v4507
  %4579 = vmatprep.subr.mxu0 0.0
  %4580 = vmatpush1.msra.mxu0 %v4508
  %4581 = vmatprep.subr.mxu0 0.0
  %4582 = vmatpush1.msra.mxu0 %v4509
  %4583 = vmatprep.subr.mxu0 0.0
  %4584 = vmatpush1.msra.mxu0 %v4510
  %4585 = vmatprep.subr.mxu0 0.0
  %4586 = vmatpush1.msra.mxu0 %v4511
  %4587 = vmatprep.subr.mxu0 0.0
  %4588 = vmatpush1.msra.mxu0 %v4512
  %4589 = vmatprep.subr.mxu0 0.0
  %4590 = vmatpush1.msra.mxu0 %v4513
  %4591 = vmatprep.subr.mxu0 0.0
  %4592 = vmatpush1.msra.mxu0 %v4514
  %4593 = vmatprep.subr.mxu0 0.0
  %4594 = vmatpush1.msra.mxu0 %v4515
  %4595 = vmatprep.subr.mxu0 0.0
  %4596 = vmatpush1.msra.mxu0 %v4516
  %4597 = vmatprep.subr.mxu0 0.0
  %4598 = vmatpush1.msra.mxu0 %v4517
  %4599 = vmatprep.subr.mxu0 0.0
  %4600 = vmatpush1.msra.mxu0 %v4518
  %4601 = vmatprep.subr.mxu0 0.0
  %4602 = vmatpush1.msra.mxu0 %v4519
  %4603 = vmatprep.subr.mxu0 0.0
  %4604 = vmatpush1.msra.mxu0 %v4520
  %4605 = vmatprep.subr.mxu0 0.0
  %4606 = vmatpush1.msra.mxu0 %v4521
  %4607 = vmatprep.subr.mxu0 0.0
  %4608 = vmatpush1.msra.mxu0 %v4522
  %4609 = vmatprep.subr.mxu0 0.0
  %4610 = vmatpush1.msra.mxu0 %v4523
  %4611 = vmatprep.subr.mxu0 0.0
  %4612 = vmatpush1.msra.mxu0 %v4524
  %4613 = vmatprep.subr.mxu0 0.0
  %4614 = vmatpush1.msra.mxu0 %v4525
  %4615 = vmatprep.subr.mxu0 0.0
  %4616 = vmatpush1.msra.mxu0 %v4526
  %4617 = vmatprep.subr.mxu0 0.0
  %4618 = vmatpush1.msra.mxu0 %v4527
  %4619 = vmatprep.mubr.f32.mxu0 %v436
  %4620 = vmatmul.mubr.f32.gmra.mrb[0].mxu0 %v435
  %v4621 = vpop.f32.mrb[0].mxu0
  %v4622 = vadd.f32 0.0, %v4621
  %v4623 = vpop.f32.mrb[0].mxu0
  %4624 = vmatprep.mubr.f32.mxu0 %v440
  %4625 = vmatmul.mubr.f32.gmra.mrb[0].mxu0 %v439
  %v4626 = vpop.f32.mrb[0].mxu0
  %v4627 = vadd.f32 0.0, %v4626
  %v4628 = vpop.f32.mrb[0].mxu0
  %4629 = vdwg.mxu0
  %4630 = vmatprep.subr.mxu0 0.0
  %4631 = vmatpush1.msra.mxu0 %v4528
  %4632 = vmatprep.subr.mxu0 0.0
  %4633 = vmatpush1.msra.mxu0 %v4529
  %4634 = vmatprep.subr.mxu0 0.0
  %4635 = vmatpush1.msra.mxu0 %v4530
  %4636 = vmatprep.subr.mxu0 0.0
  %4637 = vmatpush1.msra.mxu0 %v4531
  %4638 = vmatprep.subr.mxu0 0.0
  %4639 = vmatpush1.msra.mxu0 %v4532
  %4640 = vmatprep.subr.mxu0 0.0
  %4641 = vmatpush1.msra.mxu0 %v4533
  %4642 = vmatprep.subr.mxu0 0.0
  %4643 = vmatpush1.msra.mxu0 %v4534
  %4644 = vmatprep.subr.mxu0 0.0
  %4645 = vmatpush1.msra.mxu0 %v4535
  %4646 = vmatprep.subr.mxu0 0.0
  %4647 = vmatpush1.msra.mxu0 %v4536
  %4648 = vmatprep.subr.mxu0 0.0
  %4649 = vmatpush1.msra.mxu0 %v4537
  %4650 = vmatprep.subr.mxu0 0.0
  %4651 = vmatpush1.msra.mxu0 %v4538
  %4652 = vmatprep.subr.mxu0 0.0
  %4653 = vmatpush1.msra.mxu0 %v4539
  %4654 = vmatprep.subr.mxu0 0.0
  %4655 = vmatpush1.msra.mxu0 %v4540
  %4656 = vmatprep.subr.mxu0 0.0
  %4657 = vmatpush1.msra.mxu0 %v4541
  %4658 = vmatprep.subr.mxu0 0.0
  %4659 = vmatpush1.msra.mxu0 %v4542
  %4660 = vmatprep.subr.mxu0 0.0
  %4661 = vmatpush1.msra.mxu0 %v4543
  %4662 = vmatprep.subr.mxu0 0.0
  %4663 = vmatpush1.msra.mxu0 %v4544
  %4664 = vmatprep.subr.mxu0 0.0
  %4665 = vmatpush1.msra.mxu0 %v4545
  %4666 = vmatprep.subr.mxu0 0.0
  %4667 = vmatpush1.msra.mxu0 %v4546
  %4668 = vmatprep.subr.mxu0 0.0
  %4669 = vmatpush1.msra.mxu0 %v4547
  %4670 = vmatprep.subr.mxu0 0.0
  %4671 = vmatpush1.msra.mxu0 %v4548
  %4672 = vmatprep.subr.mxu0 0.0
  %4673 = vmatpush1.msra.mxu0 %v4549
  %4674 = vmatprep.subr.mxu0 0.0
  %4675 = vmatpush1.msra.mxu0 %v4550
  %4676 = vmatprep.subr.mxu0 0.0
  %4677 = vmatpush1.msra.mxu0 %v4553
  %4678 = vmatprep.subr.mxu0 0.0
  %4679 = vmatpush1.msra.mxu0 0.0
  %4680 = vmatprep.subr.mxu0 0.0
  %4681 = vmatpush1.msra.mxu0 0.0
  %4682 = vmatprep.subr.mxu0 0.0
  %4683 = vmatpush1.msra.mxu0 0.0
  %4684 = vmatprep.subr.mxu0 0.0
  %4685 = vmatpush1.msra.mxu0 0.0
  %4686 = vmatprep.subr.mxu0 0.0
  %4687 = vmatpush1.msra.mxu0 0.0
  %4688 = vmatprep.subr.mxu0 0.0
  %4689 = vmatpush1.msra.mxu0 0.0
  %4690 = vmatprep.subr.mxu0 0.0
  %4691 = vmatpush1.msra.mxu0 0.0
  %4692 = vmatprep.subr.mxu0 0.0
  %4693 = vmatpush1.msra.mxu0 0.0
  %4694 = vmatprep.mubr.f32.mxu0 %v556
  %4695 = vmatmul.mubr.f32.gmra.mrb[0].mxu0 %v437
  %v4696 = vpop.f32.mrb[0].mxu0
  %v4697 = vadd.f32 %v4622, %v4696
  %v4698 = vpop.f32.mrb[0].mxu0
  %4699 = vmatprep.mubr.f32.mxu0 %v559
  %4700 = vmatmul.mubr.f32.gmra.mrb[0].mxu0 %v441
  %v4701 = vpop.f32.mrb[0].mxu0
  %v4702 = vadd.f32 %v4627, %v4701
  %v4703 = vpop.f32.mrb[0].mxu0
  %4704 = vdwg.mxu0
  %v4705 = vld [vmem:[%s6] sm:$0xff]
  %v4706 = vld [vmem:[%s6 + $0x8] sm:$0xff]
  %v4707 = vld [vmem:[%s6 + $0x10] sm:$0xff]
  %v4708 = vld [vmem:[%s6 + $0x18] sm:$0xff]
  %v4709 = vld [vmem:[%s6 + $0x20] sm:$0xff]
  %v4710 = vld [vmem:[%s6 + $0x28] sm:$0xff]
  %v4711 = vld [vmem:[%s6 + $0x30] sm:$0xff]
  %v4712 = vld [vmem:[%s6 + $0x38] sm:$0xff]
  %v4713 = vld [vmem:[%s7] sm:$0xff]
  %v4714 = vld [vmem:[%s7 + $0x8] sm:$0xff]
  %v4715 = vld [vmem:[%s7 + $0x10] sm:$0xff]
  %v4716 = vld [vmem:[%s7 + $0x18] sm:$0xff]
  %4718 = vset.pattern.permute.xlu0 0
  %4719 = vperm.xlu0 %4718, %v4713
  %v4720 = vpop.permute.xlu0 %4719
  %4723 = vset.pattern.permute.xlu0 0
  %4724 = vperm.xlu0 %4723, %v4714
  %v4725 = vpop.permute.xlu0 %4724
  %4728 = vset.pattern.permute.xlu0 0
  %4729 = vperm.xlu0 %4728, %v4715
  %v4730 = vpop.permute.xlu0 %4729
  %4733 = vset.pattern.permute.xlu0 0
  %4734 = vperm.xlu0 %4733, %v4716
  %v4735 = vpop.permute.xlu0 %4734
  %4737 = vmatprep.subr.mxu0 0.0
  %4738 = vmatpush1.msra.mxu0 %v707
  %4739 = vmatprep.subr.mxu0 0.0
  %4740 = vmatpush1.msra.mxu0 %v712
  %4741 = vmatprep.subr.mxu0 0.0
  %4742 = vmatpush1.msra.mxu0 %v973
  %4743 = vmatprep.subr.mxu0 0.0
  %4744 = vmatpush1.msra.mxu0 %v978
  %4745 = vmatprep.subr.mxu0 0.0
  %4746 = vmatpush1.msra.mxu0 %v1239
  %4747 = vmatprep.subr.mxu0 0.0
  %4748 = vmatpush1.msra.mxu0 %v1244
  %4749 = vmatprep.subr.mxu0 0.0
  %4750 = vmatpush1.msra.mxu0 %v1505
  %4751 = vmatprep.subr.mxu0 0.0
  %4752 = vmatpush1.msra.mxu0 %v1510
  %4753 = vmatprep.subr.mxu0 0.0
  %4754 = vmatpush1.msra.mxu0 %v1771
  %4755 = vmatprep.subr.mxu0 0.0
  %4756 = vmatpush1.msra.mxu0 %v1776
  %4757 = vmatprep.subr.mxu0 0.0
  %4758 = vmatpush1.msra.mxu0 %v2037
  %4759 = vmatprep.subr.mxu0 0.0
  %4760 = vmatpush1.msra.mxu0 %v2042
  %4761 = vmatprep.subr.mxu0 0.0
  %4762 = vmatpush1.msra.mxu0 %v2303
  %4763 = vmatprep.subr.mxu0 0.0
  %4764 = vmatpush1.msra.mxu0 %v2308
  %4765 = vmatprep.subr.mxu0 0.0
  %4766 = vmatpush1.msra.mxu0 %v2569
  %4767 = vmatprep.subr.mxu0 0.0
  %4768 = vmatpush1.msra.mxu0 %v2574
  %4769 = vmatprep.subr.mxu0 0.0
  %4770 = vmatpush1.msra.mxu0 %v2835
  %4771 = vmatprep.subr.mxu0 0.0
  %4772 = vmatpush1.msra.mxu0 %v2840
  %4773 = vmatprep.subr.mxu0 0.0
  %4774 = vmatpush1.msra.mxu0 %v3101
  %4775 = vmatprep.subr.mxu0 0.0
  %4776 = vmatpush1.msra.mxu0 %v3106
  %4777 = vmatprep.subr.mxu0 0.0
  %4778 = vmatpush1.msra.mxu0 %v3367
  %4779 = vmatprep.subr.mxu0 0.0
  %4780 = vmatpush1.msra.mxu0 %v3372
  %4781 = vmatprep.subr.mxu0 0.0
  %4782 = vmatpush1.msra.mxu0 %v3633
  %4783 = vmatprep.subr.mxu0 0.0
  %4784 = vmatpush1.msra.mxu0 %v3638
  %4785 = vmatprep.subr.mxu0 0.0
  %4786 = vmatpush1.msra.mxu0 %v3899
  %4787 = vmatprep.subr.mxu0 0.0
  %4788 = vmatpush1.msra.mxu0 %v3904
  %4789 = vmatprep.subr.mxu0 0.0
  %4790 = vmatpush1.msra.mxu0 %v4165
  %4791 = vmatprep.subr.mxu0 0.0
  %4792 = vmatpush1.msra.mxu0 %v4170
  %4793 = vmatprep.subr.mxu0 0.0
  %4794 = vmatpush1.msra.mxu0 %v4431
  %4795 = vmatprep.subr.mxu0 0.0
  %4796 = vmatpush1.msra.mxu0 %v4436
  %4797 = vmatprep.subr.mxu0 0.0
  %4798 = vmatpush1.msra.mxu0 %v4697
  %4799 = vmatprep.subr.mxu0 0.0
  %4800 = vmatpush1.msra.mxu0 %v4702
  %4801 = vmatprep.mubr.f32.mxu0 %v4706
  %4802 = vmatmul.mubr.f32.gmra.mrb[0].mxu0 %v4705
  %v4803 = vpop.f32.mrb[0].mxu0
  %v4804 = vadd.f32 %v4720, %v4803
  %v4805 = vpop.f32.mrb[0].mxu0
  %4806 = vmatprep.mubr.f32.mxu0 %v4708
  %4807 = vmatmul.mubr.f32.gmra.mrb[0].mxu0 %v4707
  %v4808 = vpop.f32.mrb[0].mxu0
  %v4809 = vadd.f32 %v4725, %v4808
  %v4810 = vpop.f32.mrb[0].mxu0
  %4811 = vmatprep.mubr.f32.mxu0 %v4710
  %4812 = vmatmul.mubr.f32.gmra.mrb[0].mxu0 %v4709
  %v4813 = vpop.f32.mrb[0].mxu0
  %v4814 = vadd.f32 %v4730, %v4813
  %v4815 = vpop.f32.mrb[0].mxu0
  %4816 = vmatprep.mubr.f32.mxu0 %v4712
  %4817 = vmatmul.mubr.f32.gmra.mrb[0].mxu0 %v4711
  %v4818 = vpop.f32.mrb[0].mxu0
  %v4819 = vadd.f32 %v4735, %v4818
  %v4820 = vpop.f32.mrb[0].mxu0
  %4821 = vdwg.mxu0
  %v4822 = vmax.f32 %v4804, 0.0
  %v4823 = vmax.f32 %v4809, 0.0
  %v4824 = vmax.f32 %v4814, 0.0
  %v4825 = vmax.f32 %v4819, 0.0
  %vm4826 = vcmask 818176
  %v4827 = vsel %vm4826, %v4822, 0.0
  %4828 = vadd.xlane.f32.xlu0 %v4827
  %v4829 = vpop.xlane.xlu0 %4828
  %v4830 = vsel %vm4826, %v4823, 0.0
  %4831 = vadd.xlane.f32.xlu0 %v4830
  %v4832 = vpop.xlane.xlu0 %4831
  %v4833 = vsel %vm4826, %v4824, 0.0
  %4834 = vadd.xlane.f32.xlu0 %v4833
  %v4835 = vpop.xlane.xlu0 %4834
  %v4836 = vsel %vm4826, %v4825, 0.0
  %4837 = vadd.xlane.f32.xlu0 %v4836
  %v4838 = vpop.xlane.xlu0 %4837
  %v4839 = vrcp.pop 100.0
  %v4840 = vmul.f32 %v4829, %v4839
  %v4841 = vmul.f32 %v4832, %v4839
  %v4842 = vmul.f32 %v4835, %v4839
  %v4843 = vmul.f32 %v4838, %v4839
  %v4844 = vmul.f32 %v4822, %v4822
  %v4845 = vmul.f32 %v4823, %v4823
  %v4846 = vmul.f32 %v4824, %v4824
  %v4847 = vmul.f32 %v4825, %v4825
  %v4848 = vsel %vm4826, %v4844, 0.0
  %4849 = vadd.xlane.f32.xlu0 %v4848
  %v4850 = vpop.xlane.xlu0 %4849
  %v4851 = vsel %vm4826, %v4845, 0.0
  %4852 = vadd.xlane.f32.xlu0 %v4851
  %v4853 = vpop.xlane.xlu0 %4852
  %v4854 = vsel %vm4826, %v4846, 0.0
  %4855 = vadd.xlane.f32.xlu0 %v4854
  %v4856 = vpop.xlane.xlu0 %4855
  %v4857 = vsel %vm4826, %v4847, 0.0
  %4858 = vadd.xlane.f32.xlu0 %v4857
  %v4859 = vpop.xlane.xlu0 %4858
  %v4860 = vmul.f32 %v4850, %v4839
  %v4861 = vmul.f32 %v4853, %v4839
  %v4862 = vmul.f32 %v4856, %v4839
  %v4863 = vmul.f32 %v4859, %v4839
  %v4864 = vmul.f32 %v4840, %v4840
  %v4865 = vmul.f32 %v4841, %v4841
  %v4866 = vmul.f32 %v4842, %v4842
  %v4867 = vmul.f32 %v4843, %v4843
  %v4868 = vsub.f32 %v4860, %v4864
  %v4869 = vsub.f32 %v4861, %v4865
  %v4870 = vsub.f32 %v4862, %v4866
  %v4871 = vsub.f32 %v4863, %v4867
  %v4872 = vsub.f32 %v4822, %v4840
  %v4873 = vsub.f32 %v4823, %v4841
  %v4874 = vsub.f32 %v4824, %v4842
  %v4875 = vsub.f32 %v4825, %v4843
  %v4876 = vadd.f32 %v4868, 1e-05
  %v4877 = vadd.f32 %v4869, 1e-05
  %v4878 = vadd.f32 %v4870, 1e-05
  %v4879 = vadd.f32 %v4871, 1e-05
  %v4880 = vrsqrt.pop %v4876
  %v4881 = vrsqrt.pop %v4877
  %v4882 = vrsqrt.pop %v4878
  %v4883 = vrsqrt.pop %v4879
  %v4884 = vmul.f32 %v4872, %v4880
  %v4885 = vmul.f32 %v4873, %v4881
  %v4886 = vmul.f32 %v4874, %v4882
  %v4887 = vmul.f32 %v4875, %v4883
  %v4888 = vld [vmem:[%s8] sm:$0xff]
  %v4889 = vld [vmem:[%s8 + $0x8] sm:$0xff]
  %v4890 = vld [vmem:[%s8 + $0x10] sm:$0xff]
  %v4891 = vld [vmem:[%s8 + $0x18] sm:$0xff]
  %4893 = vset.pattern.permute.xlu0 0
  %4894 = vperm.xlu0 %4893, %v4888
  %v4895 = vpop.permute.xlu0 %4894
  %4898 = vset.pattern.permute.xlu0 0
  %4899 = vperm.xlu0 %4898, %v4889
  %v4900 = vpop.permute.xlu0 %4899
  %4903 = vset.pattern.permute.xlu0 0
  %4904 = vperm.xlu0 %4903, %v4890
  %v4905 = vpop.permute.xlu0 %4904
  %4908 = vset.pattern.permute.xlu0 0
  %4909 = vperm.xlu0 %4908, %v4891
  %v4910 = vpop.permute.xlu0 %4909
  %v4912 = vmul.f32 %v4884, %v4895
  %v4913 = vmul.f32 %v4885, %v4900
  %v4914 = vmul.f32 %v4886, %v4905
  %v4915 = vmul.f32 %v4887, %v4910
  %v4916 = vld [vmem:[%s9] sm:$0xff]
  %v4917 = vld [vmem:[%s9 + $0x8] sm:$0xff]
  %v4918 = vld [vmem:[%s9 + $0x10] sm:$0xff]
  %v4919 = vld [vmem:[%s9 + $0x18] sm:$0xff]
  %4921 = vset.pattern.permute.xlu0 0
  %4922 = vperm.xlu0 %4921, %v4916
  %v4923 = vpop.permute.xlu0 %4922
  %4926 = vset.pattern.permute.xlu0 0
  %4927 = vperm.xlu0 %4926, %v4917
  %v4928 = vpop.permute.xlu0 %4927
  %4931 = vset.pattern.permute.xlu0 0
  %4932 = vperm.xlu0 %4931, %v4918
  %v4933 = vpop.permute.xlu0 %4932
  %4936 = vset.pattern.permute.xlu0 0
  %4937 = vperm.xlu0 %4936, %v4919
  %v4938 = vpop.permute.xlu0 %4937
  %v4940 = vadd.f32 %v4912, %v4923
  %v4941 = vadd.f32 %v4913, %v4928
  %v4942 = vadd.f32 %v4914, %v4933
  %v4943 = vadd.f32 %v4915, %v4938
  %4944 = vst.msk [vmem:[%s10] sm:$0xff] %vm4826, %v4940
  %4945 = vst.msk [vmem:[%s10 + $0x8] sm:$0xff] %vm4826, %v4941
  %4946 = vst.msk [vmem:[%s10 + $0x10] sm:$0xff] %vm4826, %v4942
  %4947 = vst.msk [vmem:[%s10 + $0x18] sm:$0xff] %vm4826, %v4943
  // Predicated region
  $region42: #{lstm_dqn_forward.2} parent=0 // pred_check
    _
  $region43: #{lstm_dqn_forward.2} parent=0 // pred_check_branch
    %4949 = sbr.rel (0) target = $region45
  $region44: #{lstm_dqn_forward.2} parent=0 // pred_region
    _
  $region45: #{lstm_dqn_forward.2} parent=0 // pred_fallthru
    _
  // Predicated region
  $region46: #{lstm_dqn_forward.2} parent=0 // pred_check
    _
  $region47: #{lstm_dqn_forward.2} parent=0 // pred_check_branch
    %4951 = sbr.rel (0) target = $region49
  $region48: #{lstm_dqn_forward.2} parent=0 // pred_region
    _
  $region49: #{lstm_dqn_forward.2} parent=0 // pred_fallthru
    _

</llo_original>
